<compile_context>
chip_gen: v5e
topology: v5e:2x2
jax: 0.10.0
libtpu: 0.0.40
codegen_flags: <defaults>
</compile_context>

<pallas_src>
import jax
import jax.numpy as jnp
from jax import lax
from jax.experimental import pallas as pl
from jax.experimental.pallas import tpu as pltpu

_INV_SQRT2 = 0.7071067811865476
_EPS = 1e-5


def _conv_in_gelu(a, w_ref, pad_ref, patch_ref, H, W):
    """One ConvNormAct block (3x3 conv s=1 p=1 -> InstanceNorm2d(affine=False,
    eps=1e-5) -> exact erf-GELU) on a single instance, channel-major layout.

    a:         (Cin, H*W)    f32 activation, spatial flattened row-major on lanes
    w_ref:     (Cout, 9*Cin) bf16 conv weights, column index = (ky*3+kx)*Cin + cin
    pad_ref:   VMEM (Cin, H*W + 2*(W+1)) scratch (slab dtype), zero-halo flat act
    patch_ref: VMEM (9*Cin, H*W) scratch (slab dtype), im2col slab
    returns    (Cout, H*W) f32
    """
    Cin = pad_ref.shape[0]
    HW = H * W
    halo = W + 1
    dt = patch_ref.dtype

    # Zero ONLY the two halo regions; the interior is fully overwritten by `a`.
    zeros_halo = jnp.zeros((Cin, halo), dt)
    pad_ref[:, pl.ds(0, halo)] = zeros_halo
    pad_ref[:, pl.ds(halo + HW, halo)] = zeros_halo
    pad_ref[:, pl.ds(halo, HW)] = a.astype(dt)

    # Column masks hoisted out of the tap loop, built once at full (Cin, HW)
    # shape so no per-use re-broadcast is traced.
    col = lax.broadcasted_iota(jnp.int32, (Cin, HW), 1) % W
    has_left = col >= 1            # column 0 has no left neighbour
    has_right = col <= W - 2       # last column has no right neighbour

    # im2col: each 3x3 tap (dy,dx) is a static contiguous lane slice of the flat
    # zero-padded buffer; only the column wrap needs masking (row over/underflow
    # lands in the zero halos).
    k = 0
    for dy in (-1, 0, 1):
        for dx in (-1, 0, 1):
            tap = pad_ref[:, pl.ds(halo + dy * W + dx, HW)]
            if dx == -1:
                tap = jnp.where(has_left, tap, 0)
            elif dx == 1:
                tap = jnp.where(has_right, tap, 0)
            patch_ref[pl.ds(k * Cin, Cin), :] = tap      # sublane-aligned block
            k += 1

    # Single MXU matmul, contraction depth 9*Cin, native bf16 operands.
    rhs = patch_ref[...]
    if rhs.dtype != jnp.bfloat16:
        rhs = rhs.astype(jnp.bfloat16)
    y = jnp.dot(w_ref[...], rhs, preferred_element_type=jnp.float32)   # (Cout, HW)

    # InstanceNorm2d(affine=False, eps=1e-5): one-pass biased stats over H*W.
    # (Conv bias omitted: it is cancelled exactly by the mean subtraction.)
    inv_hw = 1.0 / HW
    mean = jnp.sum(y, axis=1, keepdims=True) * inv_hw
    ex2 = jnp.sum(y * y, axis=1, keepdims=True) * inv_hw
    var = jnp.maximum(ex2 - mean * mean, 0.0)
    yn = (y - mean) * lax.rsqrt(var + _EPS)

    # nn.GELU() default = exact erf formulation.
    return 0.5 * yn * (1.0 + lax.erf(yn * _INV_SQRT2))


def _make_encoder_kernel(spatial, n_layers):
    """spatial: tuple of (H, W) per conv layer (before its following pool)."""

    def kernel(*refs):
        x_ref = refs[0]
        w_refs = refs[1:1 + n_layers]
        p_refs = refs[1 + n_layers:2 * n_layers]          # n_layers - 1 pool matrices
        o_refs = refs[2 * n_layers:3 * n_layers]
        pad_refs = refs[3 * n_layers:4 * n_layers]
        patch_refs = refs[4 * n_layers:5 * n_layers]

        a = x_ref[0]                                      # (Cin0, H0*W0) f32
        for i in range(n_layers):
            H, W = spatial[i]
            a = _conv_in_gelu(a, w_refs[i], pad_refs[i], patch_refs[i], H, W)
            o_refs[i][0] = a.astype(o_refs[i].dtype)      # lane-dense (Cout, H*W) store
            if i < n_layers - 1:
                # AvgPool2d(2,2) as a bf16 matmul against a constant 0/0.25 matrix.
                a = jnp.dot(a.astype(jnp.bfloat16), p_refs[i][...],
                            preferred_element_type=jnp.float32)

    return kernel


def _pool_matrix(H, W, dtype=jnp.bfloat16):
    """(H*W, (H//2)*(W//2)) matrix implementing AvgPool2d(2, stride=2) on the
    row-major flattened spatial axis (entries 0 or 0.25 — exact in bf16)."""
    Ho, Wo = H // 2, W // 2
    i = jnp.arange(H * W)
    tgt = ((i // W) // 2) * Wo + (i % W) // 2
    return (0.25 * (tgt[:, None] == jnp.arange(Ho * Wo)[None, :])).astype(dtype)


def conv_encoder(x_nchw, params):
    """ConvEncoder.forward.  x_nchw: (N, Cin, H, W); params: list of (w, b) with
    w in PyTorch (Cout, Cin, 3, 3) layout.  Returns [x_1, ..., x_5] in NCHW."""
    N, Cin, H, W = x_nchw.shape
    n_layers = len(params)
    assert H % (1 << (n_layers - 1)) == 0 and W % (1 << (n_layers - 1)) == 0, \
        "H and W must be divisible by 2**(n_layers-1)"

    # Per-layer spatial sizes (2x2 pool between conv blocks).
    spatial = []
    h, w = H, W
    for i in range(n_layers):
        spatial.append((h, w))
        if i < n_layers - 1:
            h, w = h // 2, w // 2
    hws = [hh * ww for hh, ww in spatial]

    couts = [p[0].shape[0] for p in params]
    # Channel counts feeding each conv; the first is padded up to a multiple of 8
    # (sublane tile) with zero channels / zero weight columns (exact no-op).
    cin0 = -(-Cin // 8) * 8
    cins = [cin0] + couts[:-1]
    assert all(c % 8 == 0 for c in cins), "channel counts must be multiples of 8"

    # Slab dtype per layer: bf16 where the 9 tap blocks land on packed (16,128)
    # bf16 tile boundaries (Cin % 16 == 0), f32 otherwise (keeps every sublane-
    # offset store natively aligned; those layers cast to bf16 at the MXU operand).
    slab_dtypes = [jnp.bfloat16 if c % 16 == 0 else jnp.float32 for c in cins]

    # Input: NCHW -> channel-major flattened (N, Cin0, H*W), spatial on lanes.
    x_cm = x_nchw.reshape(N, Cin, H * W)
    if cin0 != Cin:
        x_cm = jnp.pad(x_cm, ((0, 0), (0, cin0 - Cin), (0, 0)))

    # Conv weights -> bf16 (Cout, 9*Cin), column index (ky*3+kx)*Cin + cin.
    # NOTE: the conv bias is intentionally NOT passed.  InstanceNorm2d(affine=False)
    # immediately follows every conv and subtracts the per-channel mean, which
    # cancels a per-channel constant bias exactly (variance unchanged).  If the
    # norm is ever changed, the bias must be re-introduced here.
    w_mats = []
    for i, (w_t, _b) in enumerate(params):
        cout, cin_w = w_t.shape[0], w_t.shape[1]
        if cins[i] != cin_w:
            w_t = jnp.pad(w_t, ((0, 0), (0, cins[i] - cin_w), (0, 0), (0, 0)))
        w_mats.append(
            jnp.transpose(w_t, (0, 2, 3, 1)).reshape(cout, 9 * cins[i]).astype(jnp.bfloat16))

    pools = [_pool_matrix(*spatial[i]) for i in range(n_layers - 1)]

    out_shape = tuple(
        jax.ShapeDtypeStruct((N, couts[i], hws[i]), x_nchw.dtype) for i in range(n_layers))

    in_specs = [pl.BlockSpec((1, cin0, hws[0]), lambda n: (n, 0, 0))]
    in_specs += [pl.BlockSpec(wm.shape, lambda n: (0, 0)) for wm in w_mats]
    in_specs += [pl.BlockSpec(pm.shape, lambda n: (0, 0)) for pm in pools]
    out_specs = [pl.BlockSpec((1, couts[i], hws[i]), lambda n: (n, 0, 0))
                 for i in range(n_layers)]

    scratch_shapes = (
        [pltpu.VMEM((cins[i], hws[i] + 2 * (spatial[i][1] + 1)), slab_dtypes[i])
         for i in range(n_layers)]                        # padded flat activations
        + [pltpu.VMEM((9 * cins[i], hws[i]), slab_dtypes[i])
           for i in range(n_layers)]                      # im2col slabs
    )

    feats = pl.pallas_call(
        _make_encoder_kernel(tuple(spatial), n_layers),
        out_shape=out_shape,
        grid_spec=pltpu.PrefetchScalarGridSpec(
            num_scalar_prefetch=0,
            grid=(N,),
            in_specs=in_specs,
            out_specs=out_specs,
            scratch_shapes=scratch_shapes,
        ),
        compiler_params=pltpu.CompilerParams(
            dimension_semantics=("parallel",)),   # v7x: one batch element per TensorCore
    )(x_cm, *w_mats, *pools)

    # Back to the PyTorch NCHW feature layout (pure glue reshape).
    return [feats[i].reshape(N, couts[i], *spatial[i]) for i in range(n_layers)]


def _reference_encoder(x_nchw, params):
    """Pure-JAX NCHW reference of the PyTorch forward (keeps the conv bias, f32)."""
    feats = []
    h = x_nchw
    for i, (w, b) in enumerate(params):
        y = lax.conv_general_dilated(
            h, w, window_strides=(1, 1), padding=((1, 1), (1, 1)),
            dimension_numbers=('NCHW', 'OIHW', 'NCHW'))
        y = y + b[None, :, None, None]
        mean = jnp.mean(y, axis=(2, 3), keepdims=True)
        var = jnp.mean((y - mean) ** 2, axis=(2, 3), keepdims=True)
        yn = (y - mean) * lax.rsqrt(var + _EPS)
        g = 0.5 * yn * (1.0 + lax.erf(yn * _INV_SQRT2))
        feats.append(g)
        if i < len(params) - 1:
            N, C, H, W = g.shape
            h = g.reshape(N, C, H // 2, 2, W // 2, 2).mean(axis=(3, 5))
    return feats


def init_conv_params(key, cin, cout, k=3):
    """Deterministic synthetic Conv2d params (PyTorch-style uniform fan-in init),
    in PyTorch (Cout, Cin, kH, kW) layout."""
    fan_in = cin * k * k
    bound = 1.0 / (fan_in ** 0.5)
    wkey, bkey = jax.random.split(key)
    w = jax.random.uniform(wkey, (cout, cin, k, k), jnp.float32, -bound, bound)
    b = jax.random.uniform(bkey, (cout,), jnp.float32, -bound, bound)
    return w, b


if __name__ == "__main__":
    key = jax.random.PRNGKey(0)
    in_channels, channel_num = 3, 8
    N, H, W = 2, 32, 32

    chans = [in_channels, channel_num, channel_num * 2, channel_num * 4,
             channel_num * 8, channel_num * 16]

    keys = jax.random.split(key, 6)
    params = [init_conv_params(keys[i + 1], chans[i], chans[i + 1]) for i in range(5)]
    x_nchw = jax.random.normal(keys[0], (N, in_channels, H, W), jnp.float32)

    feats = conv_encoder(x_nchw, params)
    feats = [jax.block_until_ready(f) for f in feats]

    # Shape check: matches x_1..x_5 of the PyTorch module (NCHW).
    expected = [(N, chans[i + 1], H >> i, W >> i) for i in range(5)]
    assert [tuple(f.shape) for f in feats] == expected, [f.shape for f in feats]

    # Numeric check against the pure-f32 reference.  The kernel uses bf16 conv
    # weights / im2col operands / pool matrices (f32 accumulation + f32 norm/GELU),
    # so allow a small bounded delta; post-norm activations are O(1).
    refs = _reference_encoder(x_nchw, params)
    for f, r in zip(feats, refs):
        assert bool(jnp.all(jnp.isfinite(f)))
        max_err = float(jnp.max(jnp.abs(f - r)))
        mean_err = float(jnp.mean(jnp.abs(f - r)))
        assert max_err < 2e-1, max_err
        assert mean_err < 1.5e-2, mean_err

    print("KERNEL_OK")
</pallas_src>

<mosaic_0001>
module attributes {stable_mosaic.version = 11 : i64} {
  func.func @kernel(%arg0: i32, %arg1: memref<1x8x1024xf32, #tpu.memory_space<vmem>>, %arg2: memref<8x72xbf16, #tpu.memory_space<vmem>>, %arg3: memref<16x72xbf16, #tpu.memory_space<vmem>>, %arg4: memref<32x144xbf16, #tpu.memory_space<vmem>>, %arg5: memref<64x288xbf16, #tpu.memory_space<vmem>>, %arg6: memref<128x576xbf16, #tpu.memory_space<vmem>>, %arg7: memref<1024x256xbf16, #tpu.memory_space<vmem>>, %arg8: memref<256x64xbf16, #tpu.memory_space<vmem>>, %arg9: memref<64x16xbf16, #tpu.memory_space<vmem>>, %arg10: memref<16x4xbf16, #tpu.memory_space<vmem>>, %arg11: memref<1x8x1024xf32, #tpu.memory_space<vmem>>, %arg12: memref<1x16x256xf32, #tpu.memory_space<vmem>>, %arg13: memref<1x32x64xf32, #tpu.memory_space<vmem>>, %arg14: memref<1x64x16xf32, #tpu.memory_space<vmem>>, %arg15: memref<1x128x4xf32, #tpu.memory_space<vmem>>, %arg16: memref<8x1090xf32, #tpu.memory_space<vmem>>, %arg17: memref<8x290xf32, #tpu.memory_space<vmem>>, %arg18: memref<16x82xbf16, #tpu.memory_space<vmem>>, %arg19: memref<32x26xbf16, #tpu.memory_space<vmem>>, %arg20: memref<64x10xbf16, #tpu.memory_space<vmem>>, %arg21: memref<72x1024xf32, #tpu.memory_space<vmem>>, %arg22: memref<72x256xf32, #tpu.memory_space<vmem>>, %arg23: memref<144x64xbf16, #tpu.memory_space<vmem>>, %arg24: memref<288x16xbf16, #tpu.memory_space<vmem>>, %arg25: memref<576x4xbf16, #tpu.memory_space<vmem>>) attributes {dimension_semantics = [#tpu.dimension_semantics<parallel>], iteration_bounds = array<i64: 2>, scalar_prefetch = 0 : i64, scratch_operands = 10 : i64, tpu.core_type = #tpu.core_type<tc>, window_params = [{transform_indices = @transform_0, window_bounds = array<i64: 1, 8, 1024>}, {pipeline_mode = #tpu.pipeline_mode<synchronous>, transform_indices = @transform_1, window_bounds = array<i64: 8, 72>}, {pipeline_mode = #tpu.pipeline_mode<synchronous>, transform_indices = @transform_2, window_bounds = array<i64: 16, 72>}, {pipeline_mode = #tpu.pipeline_mode<synchronous>, transform_indices = @transform_3, window_bounds = array<i64: 32, 144>}, {pipeline_mode = #tpu.pipeline_mode<synchronous>, transform_indices = @transform_4, window_bounds = array<i64: 64, 288>}, {pipeline_mode = #tpu.pipeline_mode<synchronous>, transform_indices = @transform_5, window_bounds = array<i64: 128, 576>}, {pipeline_mode = #tpu.pipeline_mode<synchronous>, transform_indices = @transform_6, window_bounds = array<i64: 1024, 256>}, {pipeline_mode = #tpu.pipeline_mode<synchronous>, transform_indices = @transform_7, window_bounds = array<i64: 256, 64>}, {pipeline_mode = #tpu.pipeline_mode<synchronous>, transform_indices = @transform_8, window_bounds = array<i64: 64, 16>}, {pipeline_mode = #tpu.pipeline_mode<synchronous>, transform_indices = @transform_9, window_bounds = array<i64: 16, 4>}, {transform_indices = @transform_10, window_bounds = array<i64: 1, 8, 1024>}, {transform_indices = @transform_11, window_bounds = array<i64: 1, 16, 256>}, {transform_indices = @transform_12, window_bounds = array<i64: 1, 32, 64>}, {transform_indices = @transform_13, window_bounds = array<i64: 1, 64, 16>}, {transform_indices = @transform_14, window_bounds = array<i64: 1, 128, 4>}]} {
    %c0 = arith.constant 0 : index
    %c0_0 = arith.constant 0 : index
    %c0_1 = arith.constant 0 : index
    %0 = vector.load %arg1[%c0, %c0_0, %c0_1] : memref<1x8x1024xf32, #tpu.memory_space<vmem>>, vector<1x8x1024xf32>
    %1 = vector.shape_cast %0 : vector<1x8x1024xf32> to vector<8x1024xf32>
    %cst = arith.constant 0.000000e+00 : f32
    %2 = vector.broadcast %cst : f32 to vector<8x33xf32>
    %c0_2 = arith.constant 0 : index
    %c0_3 = arith.constant 0 : index
    %3 = vector.load %arg16[%c0_2, %c0_3] : memref<8x1090xf32, #tpu.memory_space<vmem>>, vector<8x33xf32>
    tpu.vector_store %arg16[%c0_2, %c0_3], %2 {strides = array<i32>} : memref<8x1090xf32, #tpu.memory_space<vmem>>, vector<8x33xf32>,
    %c0_4 = arith.constant 0 : index
    %c1057 = arith.constant 1057 : index
    %4 = vector.load %arg16[%c0_4, %c1057] : memref<8x1090xf32, #tpu.memory_space<vmem>>, vector<8x33xf32>
    tpu.vector_store %arg16[%c0_4, %c1057], %2 {strides = array<i32>} : memref<8x1090xf32, #tpu.memory_space<vmem>>, vector<8x33xf32>,
    %c0_5 = arith.constant 0 : index
    %c33 = arith.constant 33 : index
    %5 = vector.load %arg16[%c0_5, %c33] : memref<8x1090xf32, #tpu.memory_space<vmem>>, vector<8x1024xf32>
    tpu.vector_store %arg16[%c0_5, %c33], %1 {strides = array<i32>} : memref<8x1090xf32, #tpu.memory_space<vmem>>, vector<8x1024xf32>,
    %6 = tpu.iota {dimensions = array<i32: 1>} : vector<8x1024xi32>
    %c32_i32 = arith.constant 32 : i32
    %c0_i32 = arith.constant 0 : i32
    %7 = arith.cmpi eq, %c32_i32, %c0_i32 : i32
    %c1_i32 = arith.constant 1 : i32
    %8 = arith.select %7, %c1_i32, %c32_i32 : i32
    %9 = vector.broadcast %8 : i32 to vector<8x1024xi32>
    %10 = arith.remsi %6, %9 : vector<8x1024xi32>
    %c0_i32_6 = arith.constant 0 : i32
    %11 = vector.broadcast %c0_i32_6 : i32 to vector<8x1024xi32>
    %12 = arith.cmpi ne, %10, %11 : vector<8x1024xi32>
    %c0_i32_7 = arith.constant 0 : i32
    %13 = vector.broadcast %c0_i32_7 : i32 to vector<8x1024xi32>
    %14 = arith.cmpi slt, %10, %13 : vector<8x1024xi32>
    %c0_i32_8 = arith.constant 0 : i32
    %15 = arith.cmpi slt, %8, %c0_i32_8 : i32
    %16 = vector.broadcast %15 : i1 to vector<8x1024xi1>
    %17 = vector.broadcast %16 : vector<8x1024xi1> to vector<8x1024xi1>
    %18 = arith.xori %14, %17 : vector<8x1024xi1>
    %19 = arith.andi %18, %12 : vector<8x1024xi1>
    %20 = vector.broadcast %8 : i32 to vector<8x1024xi32>
    %21 = arith.addi %10, %20 : vector<8x1024xi32>
    %22 = arith.select %19, %21, %10 : vector<8x1024xi1>, vector<8x1024xi32>
    %c1_i32_9 = arith.constant 1 : i32
    %23 = vector.broadcast %c1_i32_9 : i32 to vector<8x1024xi32>
    %24 = arith.cmpi sge, %22, %23 : vector<8x1024xi32>
    %c30_i32 = arith.constant 30 : i32
    %25 = vector.broadcast %c30_i32 : i32 to vector<8x1024xi32>
    %26 = arith.cmpi sle, %22, %25 : vector<8x1024xi32>
    %c0_10 = arith.constant 0 : index
    %c0_11 = arith.constant 0 : index
    %27 = vector.load %arg16[%c0_10, %c0_11] : memref<8x1090xf32, #tpu.memory_space<vmem>>, vector<8x1024xf32>
    %c0_i32_12 = arith.constant 0 : i32
    %28 = arith.sitofp %c0_i32_12 : i32 to f32
    %29 = vector.broadcast %28 : f32 to vector<8x1024xf32>
    %30 = arith.select %24, %27, %29 : vector<8x1024xi1>, vector<8x1024xf32>
    %c0_13 = arith.constant 0 : index
    %c0_14 = arith.constant 0 : index
    %31 = vector.load %arg21[%c0_13, %c0_14] : memref<72x1024xf32, #tpu.memory_space<vmem>>, vector<8x1024xf32>
    tpu.vector_store %arg21[%c0_13, %c0_14], %30 {strides = array<i32>} : memref<72x1024xf32, #tpu.memory_space<vmem>>, vector<8x1024xf32>,
    %c0_15 = arith.constant 0 : index
    %c1 = arith.constant 1 : index
    %32 = vector.load %arg16[%c0_15, %c1] : memref<8x1090xf32, #tpu.memory_space<vmem>>, vector<8x1024xf32>
    %c8 = arith.constant 8 : index
    %c0_16 = arith.constant 0 : index
    %33 = vector.load %arg21[%c8, %c0_16] : memref<72x1024xf32, #tpu.memory_space<vmem>>, vector<8x1024xf32>
    tpu.vector_store %arg21[%c8, %c0_16], %32 {strides = array<i32>} : memref<72x1024xf32, #tpu.memory_space<vmem>>, vector<8x1024xf32>,
    %c0_17 = arith.constant 0 : index
    %c2 = arith.constant 2 : index
    %34 = vector.load %arg16[%c0_17, %c2] : memref<8x1090xf32, #tpu.memory_space<vmem>>, vector<8x1024xf32>
    %c0_i32_18 = arith.constant 0 : i32
    %35 = arith.sitofp %c0_i32_18 : i32 to f32
    %36 = vector.broadcast %35 : f32 to vector<8x1024xf32>
    %37 = arith.select %26, %34, %36 : vector<8x1024xi1>, vector<8x1024xf32>
    %c16 = arith.constant 16 : index
    %c0_19 = arith.constant 0 : index
    %38 = vector.load %arg21[%c16, %c0_19] : memref<72x1024xf32, #tpu.memory_space<vmem>>, vector<8x1024xf32>
    tpu.vector_store %arg21[%c16, %c0_19], %37 {strides = array<i32>} : memref<72x1024xf32, #tpu.memory_space<vmem>>, vector<8x1024xf32>,
    %c0_20 = arith.constant 0 : index
    %c32 = arith.constant 32 : index
    %39 = vector.load %arg16[%c0_20, %c32] : memref<8x1090xf32, #tpu.memory_space<vmem>>, vector<8x1024xf32>
    %c0_i32_21 = arith.constant 0 : i32
    %40 = arith.sitofp %c0_i32_21 : i32 to f32
    %41 = vector.broadcast %40 : f32 to vector<8x1024xf32>
    %42 = arith.select %24, %39, %41 : vector<8x1024xi1>, vector<8x1024xf32>
    %c24 = arith.constant 24 : index
    %c0_22 = arith.constant 0 : index
    %43 = vector.load %arg21[%c24, %c0_22] : memref<72x1024xf32, #tpu.memory_space<vmem>>, vector<8x1024xf32>
    tpu.vector_store %arg21[%c24, %c0_22], %42 {strides = array<i32>} : memref<72x1024xf32, #tpu.memory_space<vmem>>, vector<8x1024xf32>,
    %c0_23 = arith.constant 0 : index
    %c33_24 = arith.constant 33 : index
    %44 = vector.load %arg16[%c0_23, %c33_24] : memref<8x1090xf32, #tpu.memory_space<vmem>>, vector<8x1024xf32>
    %c32_25 = arith.constant 32 : index
    %c0_26 = arith.constant 0 : index
    %45 = vector.load %arg21[%c32_25, %c0_26] : memref<72x1024xf32, #tpu.memory_space<vmem>>, vector<8x1024xf32>
    tpu.vector_store %arg21[%c32_25, %c0_26], %44 {strides = array<i32>} : memref<72x1024xf32, #tpu.memory_space<vmem>>, vector<8x1024xf32>,
    %c0_27 = arith.constant 0 : index
    %c34 = arith.constant 34 : index
    %46 = vector.load %arg16[%c0_27, %c34] : memref<8x1090xf32, #tpu.memory_space<vmem>>, vector<8x1024xf32>
    %c0_i32_28 = arith.constant 0 : i32
    %47 = arith.sitofp %c0_i32_28 : i32 to f32
    %48 = vector.broadcast %47 : f32 to vector<8x1024xf32>
    %49 = arith.select %26, %46, %48 : vector<8x1024xi1>, vector<8x1024xf32>
    %c40 = arith.constant 40 : index
    %c0_29 = arith.constant 0 : index
    %50 = vector.load %arg21[%c40, %c0_29] : memref<72x1024xf32, #tpu.memory_space<vmem>>, vector<8x1024xf32>
    tpu.vector_store %arg21[%c40, %c0_29], %49 {strides = array<i32>} : memref<72x1024xf32, #tpu.memory_space<vmem>>, vector<8x1024xf32>,
    %c0_30 = arith.constant 0 : index
    %c64 = arith.constant 64 : index
    %51 = vector.load %arg16[%c0_30, %c64] : memref<8x1090xf32, #tpu.memory_space<vmem>>, vector<8x1024xf32>
    %c0_i32_31 = arith.constant 0 : i32
    %52 = arith.sitofp %c0_i32_31 : i32 to f32
    %53 = vector.broadcast %52 : f32 to vector<8x1024xf32>
    %54 = arith.select %24, %51, %53 : vector<8x1024xi1>, vector<8x1024xf32>
    %c48 = arith.constant 48 : index
    %c0_32 = arith.constant 0 : index
    %55 = vector.load %arg21[%c48, %c0_32] : memref<72x1024xf32, #tpu.memory_space<vmem>>, vector<8x1024xf32>
    tpu.vector_store %arg21[%c48, %c0_32], %54 {strides = array<i32>} : memref<72x1024xf32, #tpu.memory_space<vmem>>, vector<8x1024xf32>,
    %c0_33 = arith.constant 0 : index
    %c65 = arith.constant 65 : index
    %56 = vector.load %arg16[%c0_33, %c65] : memref<8x1090xf32, #tpu.memory_space<vmem>>, vector<8x1024xf32>
    %c56 = arith.constant 56 : index
    %c0_34 = arith.constant 0 : index
    %57 = vector.load %arg21[%c56, %c0_34] : memref<72x1024xf32, #tpu.memory_space<vmem>>, vector<8x1024xf32>
    tpu.vector_store %arg21[%c56, %c0_34], %56 {strides = array<i32>} : memref<72x1024xf32, #tpu.memory_space<vmem>>, vector<8x1024xf32>,
    %c0_35 = arith.constant 0 : index
    %c66 = arith.constant 66 : index
    %58 = vector.load %arg16[%c0_35, %c66] : memref<8x1090xf32, #tpu.memory_space<vmem>>, vector<8x1024xf32>
    %c0_i32_36 = arith.constant 0 : i32
    %59 = arith.sitofp %c0_i32_36 : i32 to f32
    %60 = vector.broadcast %59 : f32 to vector<8x1024xf32>
    %61 = arith.select %26, %58, %60 : vector<8x1024xi1>, vector<8x1024xf32>
    %c64_37 = arith.constant 64 : index
    %c0_38 = arith.constant 0 : index
    %62 = vector.load %arg21[%c64_37, %c0_38] : memref<72x1024xf32, #tpu.memory_space<vmem>>, vector<8x1024xf32>
    tpu.vector_store %arg21[%c64_37, %c0_38], %61 {strides = array<i32>} : memref<72x1024xf32, #tpu.memory_space<vmem>>, vector<8x1024xf32>,
    %c0_39 = arith.constant 0 : index
    %c0_40 = arith.constant 0 : index
    %63 = vector.load %arg21[%c0_39, %c0_40] : memref<72x1024xf32, #tpu.memory_space<vmem>>, vector<72x1024xf32>
    %64 = arith.truncf %63 : vector<72x1024xf32> to vector<72x1024xbf16>
    %c0_41 = arith.constant 0 : index
    %c0_42 = arith.constant 0 : index
    %65 = vector.load %arg2[%c0_41, %c0_42] : memref<8x72xbf16, #tpu.memory_space<vmem>>, vector<8x72xbf16>
    %cst_43 = arith.constant dense<0.000000e+00> : vector<8x1024xf32>
    %66 = tpu.matmul %65, %64, %cst_43 {dimension_numbers = #tpu.dot_dimension_numbers<[1], [0], [0], [1], [0, 0, 1, 1], [], []>} : vector<8x72xbf16>, vector<72x1024xbf16>, vector<8x1024xf32> -> vector<8x1024xf32>
    %cst_44 = arith.constant dense<0.000000e+00> : vector<8xf32>
    %67 = vector.multi_reduction <add>, %66, %cst_44 [1] : vector<8x1024xf32> to vector<8xf32>
    %68 = vector.shape_cast %67 : vector<8xf32> to vector<8x1xf32>
    %cst_45 = arith.constant 9.765625E-4 : f32
    %69 = vector.broadcast %cst_45 : f32 to vector<8x1xf32>
    %70 = arith.mulf %68, %69 : vector<8x1xf32>
    %71 = arith.mulf %66, %66 : vector<8x1024xf32>
    %cst_46 = arith.constant dense<0.000000e+00> : vector<8xf32>
    %72 = vector.multi_reduction <add>, %71, %cst_46 [1] : vector<8x1024xf32> to vector<8xf32>
    %73 = vector.shape_cast %72 : vector<8xf32> to vector<8x1xf32>
    %cst_47 = arith.constant 9.765625E-4 : f32
    %74 = vector.broadcast %cst_47 : f32 to vector<8x1xf32>
    %75 = arith.mulf %73, %74 : vector<8x1xf32>
    %76 = arith.mulf %70, %70 : vector<8x1xf32>
    %77 = arith.subf %75, %76 : vector<8x1xf32>
    %cst_48 = arith.constant 0.000000e+00 : f32
    %78 = vector.broadcast %cst_48 : f32 to vector<8x1xf32>
    %79 = arith.maximumf %77, %78 : vector<8x1xf32>
    %80 = vector.broadcast %70 : vector<8x1xf32> to vector<8x1024xf32>
    %81 = arith.subf %66, %80 : vector<8x1024xf32>
    %cst_49 = arith.constant 9.99999974E-6 : f32
    %82 = vector.broadcast %cst_49 : f32 to vector<8x1xf32>
    %83 = arith.addf %79, %82 : vector<8x1xf32>
    %84 = math.rsqrt %83 : vector<8x1xf32>
    %85 = vector.broadcast %84 : vector<8x1xf32> to vector<8x1024xf32>
    %86 = arith.mulf %81, %85 : vector<8x1024xf32>
    %cst_50 = arith.constant 5.000000e-01 : f32
    %87 = vector.broadcast %cst_50 : f32 to vector<8x1024xf32>
    %88 = arith.mulf %87, %86 : vector<8x1024xf32>
    %cst_51 = arith.constant 0.707106769 : f32
    %89 = vector.broadcast %cst_51 : f32 to vector<8x1024xf32>
    %90 = arith.mulf %86, %89 : vector<8x1024xf32>
    %91 = math.erf %90 : vector<8x1024xf32>
    %cst_52 = arith.constant 1.000000e+00 : f32
    %92 = vector.broadcast %cst_52 : f32 to vector<8x1024xf32>
    %93 = arith.addf %92, %91 : vector<8x1024xf32>
    %94 = arith.mulf %88, %93 : vector<8x1024xf32>
    %c0_53 = arith.constant 0 : index
    %c0_54 = arith.constant 0 : index
    %c0_55 = arith.constant 0 : index
    %95 = vector.load %arg11[%c0_53, %c0_54, %c0_55] : memref<1x8x1024xf32, #tpu.memory_space<vmem>>, vector<1x8x1024xf32>
    %96 = vector.shape_cast %95 : vector<1x8x1024xf32> to vector<8x1024xf32>
    %97 = vector.shape_cast %94 : vector<8x1024xf32> to vector<1x8x1024xf32>
    tpu.vector_store %arg11[%c0_53, %c0_54, %c0_55], %97 {strides = array<i32>} : memref<1x8x1024xf32, #tpu.memory_space<vmem>>, vector<1x8x1024xf32>,
    %98 = arith.truncf %94 : vector<8x1024xf32> to vector<8x1024xbf16>
    %c0_56 = arith.constant 0 : index
    %c0_57 = arith.constant 0 : index
    %99 = vector.load %arg7[%c0_56, %c0_57] : memref<1024x256xbf16, #tpu.memory_space<vmem>>, vector<1024x256xbf16>
    %cst_58 = arith.constant dense<0.000000e+00> : vector<8x256xf32>
    %100 = tpu.matmul %98, %99, %cst_58 {dimension_numbers = #tpu.dot_dimension_numbers<[1], [0], [0], [1], [0, 0, 1, 1], [], []>} : vector<8x1024xbf16>, vector<1024x256xbf16>, vector<8x256xf32> -> vector<8x256xf32>
    %cst_59 = arith.constant 0.000000e+00 : f32
    %101 = vector.broadcast %cst_59 : f32 to vector<8x17xf32>
    %c0_60 = arith.constant 0 : index
    %c0_61 = arith.constant 0 : index
    %102 = vector.load %arg17[%c0_60, %c0_61] : memref<8x290xf32, #tpu.memory_space<vmem>>, vector<8x17xf32>
    tpu.vector_store %arg17[%c0_60, %c0_61], %101 {strides = array<i32>} : memref<8x290xf32, #tpu.memory_space<vmem>>, vector<8x17xf32>,
    %c0_62 = arith.constant 0 : index
    %c273 = arith.constant 273 : index
    %103 = vector.load %arg17[%c0_62, %c273] : memref<8x290xf32, #tpu.memory_space<vmem>>, vector<8x17xf32>
    tpu.vector_store %arg17[%c0_62, %c273], %101 {strides = array<i32>} : memref<8x290xf32, #tpu.memory_space<vmem>>, vector<8x17xf32>,
    %c0_63 = arith.constant 0 : index
    %c17 = arith.constant 17 : index
    %104 = vector.load %arg17[%c0_63, %c17] : memref<8x290xf32, #tpu.memory_space<vmem>>, vector<8x256xf32>
    tpu.vector_store %arg17[%c0_63, %c17], %100 {strides = array<i32>} : memref<8x290xf32, #tpu.memory_space<vmem>>, vector<8x256xf32>,
    %105 = tpu.iota {dimensions = array<i32: 1>} : vector<8x256xi32>
    %c16_i32 = arith.constant 16 : i32
    %c0_i32_64 = arith.constant 0 : i32
    %106 = arith.cmpi eq, %c16_i32, %c0_i32_64 : i32
    %c1_i32_65 = arith.constant 1 : i32
    %107 = arith.select %106, %c1_i32_65, %c16_i32 : i32
    %108 = vector.broadcast %107 : i32 to vector<8x256xi32>
    %109 = arith.remsi %105, %108 : vector<8x256xi32>
    %c0_i32_66 = arith.constant 0 : i32
    %110 = vector.broadcast %c0_i32_66 : i32 to vector<8x256xi32>
    %111 = arith.cmpi ne, %109, %110 : vector<8x256xi32>
    %c0_i32_67 = arith.constant 0 : i32
    %112 = vector.broadcast %c0_i32_67 : i32 to vector<8x256xi32>
    %113 = arith.cmpi slt, %109, %112 : vector<8x256xi32>
    %c0_i32_68 = arith.constant 0 : i32
    %114 = arith.cmpi slt, %107, %c0_i32_68 : i32
    %115 = vector.broadcast %114 : i1 to vector<8x256xi1>
    %116 = vector.broadcast %115 : vector<8x256xi1> to vector<8x256xi1>
    %117 = arith.xori %113, %116 : vector<8x256xi1>
    %118 = arith.andi %117, %111 : vector<8x256xi1>
    %119 = vector.broadcast %107 : i32 to vector<8x256xi32>
    %120 = arith.addi %109, %119 : vector<8x256xi32>
    %121 = arith.select %118, %120, %109 : vector<8x256xi1>, vector<8x256xi32>
    %c1_i32_69 = arith.constant 1 : i32
    %122 = vector.broadcast %c1_i32_69 : i32 to vector<8x256xi32>
    %123 = arith.cmpi sge, %121, %122 : vector<8x256xi32>
    %c14_i32 = arith.constant 14 : i32
    %124 = vector.broadcast %c14_i32 : i32 to vector<8x256xi32>
    %125 = arith.cmpi sle, %121, %124 : vector<8x256xi32>
    %c0_70 = arith.constant 0 : index
    %c0_71 = arith.constant 0 : index
    %126 = vector.load %arg17[%c0_70, %c0_71] : memref<8x290xf32, #tpu.memory_space<vmem>>, vector<8x256xf32>
    %c0_i32_72 = arith.constant 0 : i32
    %127 = arith.sitofp %c0_i32_72 : i32 to f32
    %128 = vector.broadcast %127 : f32 to vector<8x256xf32>
    %129 = arith.select %123, %126, %128 : vector<8x256xi1>, vector<8x256xf32>
    %c0_73 = arith.constant 0 : index
    %c0_74 = arith.constant 0 : index
    %130 = vector.load %arg22[%c0_73, %c0_74] : memref<72x256xf32, #tpu.memory_space<vmem>>, vector<8x256xf32>
    tpu.vector_store %arg22[%c0_73, %c0_74], %129 {strides = array<i32>} : memref<72x256xf32, #tpu.memory_space<vmem>>, vector<8x256xf32>,
    %c0_75 = arith.constant 0 : index
    %c1_76 = arith.constant 1 : index
    %131 = vector.load %arg17[%c0_75, %c1_76] : memref<8x290xf32, #tpu.memory_space<vmem>>, vector<8x256xf32>
    %c8_77 = arith.constant 8 : index
    %c0_78 = arith.constant 0 : index
    %132 = vector.load %arg22[%c8_77, %c0_78] : memref<72x256xf32, #tpu.memory_space<vmem>>, vector<8x256xf32>
    tpu.vector_store %arg22[%c8_77, %c0_78], %131 {strides = array<i32>} : memref<72x256xf32, #tpu.memory_space<vmem>>, vector<8x256xf32>,
    %c0_79 = arith.constant 0 : index
    %c2_80 = arith.constant 2 : index
    %133 = vector.load %arg17[%c0_79, %c2_80] : memref<8x290xf32, #tpu.memory_space<vmem>>, vector<8x256xf32>
    %c0_i32_81 = arith.constant 0 : i32
    %134 = arith.sitofp %c0_i32_81 : i32 to f32
    %135 = vector.broadcast %134 : f32 to vector<8x256xf32>
    %136 = arith.select %125, %133, %135 : vector<8x256xi1>, vector<8x256xf32>
    %c16_82 = arith.constant 16 : index
    %c0_83 = arith.constant 0 : index
    %137 = vector.load %arg22[%c16_82, %c0_83] : memref<72x256xf32, #tpu.memory_space<vmem>>, vector<8x256xf32>
    tpu.vector_store %arg22[%c16_82, %c0_83], %136 {strides = array<i32>} : memref<72x256xf32, #tpu.memory_space<vmem>>, vector<8x256xf32>,
    %c0_84 = arith.constant 0 : index
    %c16_85 = arith.constant 16 : index
    %138 = vector.load %arg17[%c0_84, %c16_85] : memref<8x290xf32, #tpu.memory_space<vmem>>, vector<8x256xf32>
    %c0_i32_86 = arith.constant 0 : i32
    %139 = arith.sitofp %c0_i32_86 : i32 to f32
    %140 = vector.broadcast %139 : f32 to vector<8x256xf32>
    %141 = arith.select %123, %138, %140 : vector<8x256xi1>, vector<8x256xf32>
    %c24_87 = arith.constant 24 : index
    %c0_88 = arith.constant 0 : index
    %142 = vector.load %arg22[%c24_87, %c0_88] : memref<72x256xf32, #tpu.memory_space<vmem>>, vector<8x256xf32>
    tpu.vector_store %arg22[%c24_87, %c0_88], %141 {strides = array<i32>} : memref<72x256xf32, #tpu.memory_space<vmem>>, vector<8x256xf32>,
    %c0_89 = arith.constant 0 : index
    %c17_90 = arith.constant 17 : index
    %143 = vector.load %arg17[%c0_89, %c17_90] : memref<8x290xf32, #tpu.memory_space<vmem>>, vector<8x256xf32>
    %c32_91 = arith.constant 32 : index
    %c0_92 = arith.constant 0 : index
    %144 = vector.load %arg22[%c32_91, %c0_92] : memref<72x256xf32, #tpu.memory_space<vmem>>, vector<8x256xf32>
    tpu.vector_store %arg22[%c32_91, %c0_92], %143 {strides = array<i32>} : memref<72x256xf32, #tpu.memory_space<vmem>>, vector<8x256xf32>,
    %c0_93 = arith.constant 0 : index
    %c18 = arith.constant 18 : index
    %145 = vector.load %arg17[%c0_93, %c18] : memref<8x290xf32, #tpu.memory_space<vmem>>, vector<8x256xf32>
    %c0_i32_94 = arith.constant 0 : i32
    %146 = arith.sitofp %c0_i32_94 : i32 to f32
    %147 = vector.broadcast %146 : f32 to vector<8x256xf32>
    %148 = arith.select %125, %145, %147 : vector<8x256xi1>, vector<8x256xf32>
    %c40_95 = arith.constant 40 : index
    %c0_96 = arith.constant 0 : index
    %149 = vector.load %arg22[%c40_95, %c0_96] : memref<72x256xf32, #tpu.memory_space<vmem>>, vector<8x256xf32>
    tpu.vector_store %arg22[%c40_95, %c0_96], %148 {strides = array<i32>} : memref<72x256xf32, #tpu.memory_space<vmem>>, vector<8x256xf32>,
    %c0_97 = arith.constant 0 : index
    %c32_98 = arith.constant 32 : index
    %150 = vector.load %arg17[%c0_97, %c32_98] : memref<8x290xf32, #tpu.memory_space<vmem>>, vector<8x256xf32>
    %c0_i32_99 = arith.constant 0 : i32
    %151 = arith.sitofp %c0_i32_99 : i32 to f32
    %152 = vector.broadcast %151 : f32 to vector<8x256xf32>
    %153 = arith.select %123, %150, %152 : vector<8x256xi1>, vector<8x256xf32>
    %c48_100 = arith.constant 48 : index
    %c0_101 = arith.constant 0 : index
    %154 = vector.load %arg22[%c48_100, %c0_101] : memref<72x256xf32, #tpu.memory_space<vmem>>, vector<8x256xf32>
    tpu.vector_store %arg22[%c48_100, %c0_101], %153 {strides = array<i32>} : memref<72x256xf32, #tpu.memory_space<vmem>>, vector<8x256xf32>,
    %c0_102 = arith.constant 0 : index
    %c33_103 = arith.constant 33 : index
    %155 = vector.load %arg17[%c0_102, %c33_103] : memref<8x290xf32, #tpu.memory_space<vmem>>, vector<8x256xf32>
    %c56_104 = arith.constant 56 : index
    %c0_105 = arith.constant 0 : index
    %156 = vector.load %arg22[%c56_104, %c0_105] : memref<72x256xf32, #tpu.memory_space<vmem>>, vector<8x256xf32>
    tpu.vector_store %arg22[%c56_104, %c0_105], %155 {strides = array<i32>} : memref<72x256xf32, #tpu.memory_space<vmem>>, vector<8x256xf32>,
    %c0_106 = arith.constant 0 : index
    %c34_107 = arith.constant 34 : index
    %157 = vector.load %arg17[%c0_106, %c34_107] : memref<8x290xf32, #tpu.memory_space<vmem>>, vector<8x256xf32>
    %c0_i32_108 = arith.constant 0 : i32
    %158 = arith.sitofp %c0_i32_108 : i32 to f32
    %159 = vector.broadcast %158 : f32 to vector<8x256xf32>
    %160 = arith.select %125, %157, %159 : vector<8x256xi1>, vector<8x256xf32>
    %c64_109 = arith.constant 64 : index
    %c0_110 = arith.constant 0 : index
    %161 = vector.load %arg22[%c64_109, %c0_110] : memref<72x256xf32, #tpu.memory_space<vmem>>, vector<8x256xf32>
    tpu.vector_store %arg22[%c64_109, %c0_110], %160 {strides = array<i32>} : memref<72x256xf32, #tpu.memory_space<vmem>>, vector<8x256xf32>,
    %c0_111 = arith.constant 0 : index
    %c0_112 = arith.constant 0 : index
    %162 = vector.load %arg22[%c0_111, %c0_112] : memref<72x256xf32, #tpu.memory_space<vmem>>, vector<72x256xf32>
    %163 = arith.truncf %162 : vector<72x256xf32> to vector<72x256xbf16>
    %c0_113 = arith.constant 0 : index
    %c0_114 = arith.constant 0 : index
    %164 = vector.load %arg3[%c0_113, %c0_114] : memref<16x72xbf16, #tpu.memory_space<vmem>>, vector<16x72xbf16>
    %cst_115 = arith.constant dense<0.000000e+00> : vector<16x256xf32>
    %165 = tpu.matmul %164, %163, %cst_115 {dimension_numbers = #tpu.dot_dimension_numbers<[1], [0], [0], [1], [0, 0, 1, 1], [], []>} : vector<16x72xbf16>, vector<72x256xbf16>, vector<16x256xf32> -> vector<16x256xf32>
    %cst_116 = arith.constant dense<0.000000e+00> : vector<16xf32>
    %166 = vector.multi_reduction <add>, %165, %cst_116 [1] : vector<16x256xf32> to vector<16xf32>
    %167 = vector.shape_cast %166 : vector<16xf32> to vector<16x1xf32>
    %cst_117 = arith.constant 3.906250e-03 : f32
    %168 = vector.broadcast %cst_117 : f32 to vector<16x1xf32>
    %169 = arith.mulf %167, %168 : vector<16x1xf32>
    %170 = arith.mulf %165, %165 : vector<16x256xf32>
    %cst_118 = arith.constant dense<0.000000e+00> : vector<16xf32>
    %171 = vector.multi_reduction <add>, %170, %cst_118 [1] : vector<16x256xf32> to vector<16xf32>
    %172 = vector.shape_cast %171 : vector<16xf32> to vector<16x1xf32>
    %cst_119 = arith.constant 3.906250e-03 : f32
    %173 = vector.broadcast %cst_119 : f32 to vector<16x1xf32>
    %174 = arith.mulf %172, %173 : vector<16x1xf32>
    %175 = arith.mulf %169, %169 : vector<16x1xf32>
    %176 = arith.subf %174, %175 : vector<16x1xf32>
    %cst_120 = arith.constant 0.000000e+00 : f32
    %177 = vector.broadcast %cst_120 : f32 to vector<16x1xf32>
    %178 = arith.maximumf %176, %177 : vector<16x1xf32>
    %179 = vector.broadcast %169 : vector<16x1xf32> to vector<16x256xf32>
    %180 = arith.subf %165, %179 : vector<16x256xf32>
    %cst_121 = arith.constant 9.99999974E-6 : f32
    %181 = vector.broadcast %cst_121 : f32 to vector<16x1xf32>
    %182 = arith.addf %178, %181 : vector<16x1xf32>
    %183 = math.rsqrt %182 : vector<16x1xf32>
    %184 = vector.broadcast %183 : vector<16x1xf32> to vector<16x256xf32>
    %185 = arith.mulf %180, %184 : vector<16x256xf32>
    %cst_122 = arith.constant 5.000000e-01 : f32
    %186 = vector.broadcast %cst_122 : f32 to vector<16x256xf32>
    %187 = arith.mulf %186, %185 : vector<16x256xf32>
    %cst_123 = arith.constant 0.707106769 : f32
    %188 = vector.broadcast %cst_123 : f32 to vector<16x256xf32>
    %189 = arith.mulf %185, %188 : vector<16x256xf32>
    %190 = math.erf %189 : vector<16x256xf32>
    %cst_124 = arith.constant 1.000000e+00 : f32
    %191 = vector.broadcast %cst_124 : f32 to vector<16x256xf32>
    %192 = arith.addf %191, %190 : vector<16x256xf32>
    %193 = arith.mulf %187, %192 : vector<16x256xf32>
    %c0_125 = arith.constant 0 : index
    %c0_126 = arith.constant 0 : index
    %c0_127 = arith.constant 0 : index
    %194 = vector.load %arg12[%c0_125, %c0_126, %c0_127] : memref<1x16x256xf32, #tpu.memory_space<vmem>>, vector<1x16x256xf32>
    %195 = vector.shape_cast %194 : vector<1x16x256xf32> to vector<16x256xf32>
    %196 = vector.shape_cast %193 : vector<16x256xf32> to vector<1x16x256xf32>
    tpu.vector_store %arg12[%c0_125, %c0_126, %c0_127], %196 {strides = array<i32>} : memref<1x16x256xf32, #tpu.memory_space<vmem>>, vector<1x16x256xf32>,
    %197 = arith.truncf %193 : vector<16x256xf32> to vector<16x256xbf16>
    %c0_128 = arith.constant 0 : index
    %c0_129 = arith.constant 0 : index
    %198 = vector.load %arg8[%c0_128, %c0_129] : memref<256x64xbf16, #tpu.memory_space<vmem>>, vector<256x64xbf16>
    %cst_130 = arith.constant dense<0.000000e+00> : vector<16x64xf32>
    %199 = tpu.matmul %197, %198, %cst_130 {dimension_numbers = #tpu.dot_dimension_numbers<[1], [0], [0], [1], [0, 0, 1, 1], [], []>} : vector<16x256xbf16>, vector<256x64xbf16>, vector<16x64xf32> -> vector<16x64xf32>
    %cst_131 = arith.constant 0.000000e+00 : bf16
    %200 = vector.broadcast %cst_131 : bf16 to vector<16x9xbf16>
    %c0_132 = arith.constant 0 : index
    %c0_133 = arith.constant 0 : index
    %201 = vector.load %arg18[%c0_132, %c0_133] : memref<16x82xbf16, #tpu.memory_space<vmem>>, vector<16x9xbf16>
    tpu.vector_store %arg18[%c0_132, %c0_133], %200 {strides = array<i32>} : memref<16x82xbf16, #tpu.memory_space<vmem>>, vector<16x9xbf16>,
    %c0_134 = arith.constant 0 : index
    %c73 = arith.constant 73 : index
    %202 = vector.load %arg18[%c0_134, %c73] : memref<16x82xbf16, #tpu.memory_space<vmem>>, vector<16x9xbf16>
    tpu.vector_store %arg18[%c0_134, %c73], %200 {strides = array<i32>} : memref<16x82xbf16, #tpu.memory_space<vmem>>, vector<16x9xbf16>,
    %203 = arith.truncf %199 : vector<16x64xf32> to vector<16x64xbf16>
    %c0_135 = arith.constant 0 : index
    %c9 = arith.constant 9 : index
    %204 = vector.load %arg18[%c0_135, %c9] : memref<16x82xbf16, #tpu.memory_space<vmem>>, vector<16x64xbf16>
    tpu.vector_store %arg18[%c0_135, %c9], %203 {strides = array<i32>} : memref<16x82xbf16, #tpu.memory_space<vmem>>, vector<16x64xbf16>,
    %205 = tpu.iota {dimensions = array<i32: 1>} : vector<16x64xi32>
    %c8_i32 = arith.constant 8 : i32
    %c0_i32_136 = arith.constant 0 : i32
    %206 = arith.cmpi eq, %c8_i32, %c0_i32_136 : i32
    %c1_i32_137 = arith.constant 1 : i32
    %207 = arith.select %206, %c1_i32_137, %c8_i32 : i32
    %208 = vector.broadcast %207 : i32 to vector<16x64xi32>
    %209 = arith.remsi %205, %208 : vector<16x64xi32>
    %c0_i32_138 = arith.constant 0 : i32
    %210 = vector.broadcast %c0_i32_138 : i32 to vector<16x64xi32>
    %211 = arith.cmpi ne, %209, %210 : vector<16x64xi32>
    %c0_i32_139 = arith.constant 0 : i32
    %212 = vector.broadcast %c0_i32_139 : i32 to vector<16x64xi32>
    %213 = arith.cmpi slt, %209, %212 : vector<16x64xi32>
    %c0_i32_140 = arith.constant 0 : i32
    %214 = arith.cmpi slt, %207, %c0_i32_140 : i32
    %215 = vector.broadcast %214 : i1 to vector<16x64xi1>
    %216 = vector.broadcast %215 : vector<16x64xi1> to vector<16x64xi1>
    %217 = arith.xori %213, %216 : vector<16x64xi1>
    %218 = arith.andi %217, %211 : vector<16x64xi1>
    %219 = vector.broadcast %207 : i32 to vector<16x64xi32>
    %220 = arith.addi %209, %219 : vector<16x64xi32>
    %221 = arith.select %218, %220, %209 : vector<16x64xi1>, vector<16x64xi32>
    %c1_i32_141 = arith.constant 1 : i32
    %222 = vector.broadcast %c1_i32_141 : i32 to vector<16x64xi32>
    %223 = arith.cmpi sge, %221, %222 : vector<16x64xi32>
    %c6_i32 = arith.constant 6 : i32
    %224 = vector.broadcast %c6_i32 : i32 to vector<16x64xi32>
    %225 = arith.cmpi sle, %221, %224 : vector<16x64xi32>
    %c0_142 = arith.constant 0 : index
    %c0_143 = arith.constant 0 : index
    %226 = vector.load %arg18[%c0_142, %c0_143] : memref<16x82xbf16, #tpu.memory_space<vmem>>, vector<16x64xbf16>
    %c0_i32_144 = arith.constant 0 : i32
    %227 = arith.sitofp %c0_i32_144 : i32 to bf16
    %228 = vector.broadcast %227 : bf16 to vector<16x64xbf16>
    %229 = arith.select %223, %226, %228 : vector<16x64xi1>, vector<16x64xbf16>
    %c0_145 = arith.constant 0 : index
    %c0_146 = arith.constant 0 : index
    %230 = vector.load %arg23[%c0_145, %c0_146] : memref<144x64xbf16, #tpu.memory_space<vmem>>, vector<16x64xbf16>
    tpu.vector_store %arg23[%c0_145, %c0_146], %229 {strides = array<i32>} : memref<144x64xbf16, #tpu.memory_space<vmem>>, vector<16x64xbf16>,
    %c0_147 = arith.constant 0 : index
    %c1_148 = arith.constant 1 : index
    %231 = vector.load %arg18[%c0_147, %c1_148] : memref<16x82xbf16, #tpu.memory_space<vmem>>, vector<16x64xbf16>
    %c16_149 = arith.constant 16 : index
    %c0_150 = arith.constant 0 : index
    %232 = vector.load %arg23[%c16_149, %c0_150] : memref<144x64xbf16, #tpu.memory_space<vmem>>, vector<16x64xbf16>
    tpu.vector_store %arg23[%c16_149, %c0_150], %231 {strides = array<i32>} : memref<144x64xbf16, #tpu.memory_space<vmem>>, vector<16x64xbf16>,
    %c0_151 = arith.constant 0 : index
    %c2_152 = arith.constant 2 : index
    %233 = vector.load %arg18[%c0_151, %c2_152] : memref<16x82xbf16, #tpu.memory_space<vmem>>, vector<16x64xbf16>
    %c0_i32_153 = arith.constant 0 : i32
    %234 = arith.sitofp %c0_i32_153 : i32 to bf16
    %235 = vector.broadcast %234 : bf16 to vector<16x64xbf16>
    %236 = arith.select %225, %233, %235 : vector<16x64xi1>, vector<16x64xbf16>
    %c32_154 = arith.constant 32 : index
    %c0_155 = arith.constant 0 : index
    %237 = vector.load %arg23[%c32_154, %c0_155] : memref<144x64xbf16, #tpu.memory_space<vmem>>, vector<16x64xbf16>
    tpu.vector_store %arg23[%c32_154, %c0_155], %236 {strides = array<i32>} : memref<144x64xbf16, #tpu.memory_space<vmem>>, vector<16x64xbf16>,
    %c0_156 = arith.constant 0 : index
    %c8_157 = arith.constant 8 : index
    %238 = vector.load %arg18[%c0_156, %c8_157] : memref<16x82xbf16, #tpu.memory_space<vmem>>, vector<16x64xbf16>
    %c0_i32_158 = arith.constant 0 : i32
    %239 = arith.sitofp %c0_i32_158 : i32 to bf16
    %240 = vector.broadcast %239 : bf16 to vector<16x64xbf16>
    %241 = arith.select %223, %238, %240 : vector<16x64xi1>, vector<16x64xbf16>
    %c48_159 = arith.constant 48 : index
    %c0_160 = arith.constant 0 : index
    %242 = vector.load %arg23[%c48_159, %c0_160] : memref<144x64xbf16, #tpu.memory_space<vmem>>, vector<16x64xbf16>
    tpu.vector_store %arg23[%c48_159, %c0_160], %241 {strides = array<i32>} : memref<144x64xbf16, #tpu.memory_space<vmem>>, vector<16x64xbf16>,
    %c0_161 = arith.constant 0 : index
    %c9_162 = arith.constant 9 : index
    %243 = vector.load %arg18[%c0_161, %c9_162] : memref<16x82xbf16, #tpu.memory_space<vmem>>, vector<16x64xbf16>
    %c64_163 = arith.constant 64 : index
    %c0_164 = arith.constant 0 : index
    %244 = vector.load %arg23[%c64_163, %c0_164] : memref<144x64xbf16, #tpu.memory_space<vmem>>, vector<16x64xbf16>
    tpu.vector_store %arg23[%c64_163, %c0_164], %243 {strides = array<i32>} : memref<144x64xbf16, #tpu.memory_space<vmem>>, vector<16x64xbf16>,
    %c0_165 = arith.constant 0 : index
    %c10 = arith.constant 10 : index
    %245 = vector.load %arg18[%c0_165, %c10] : memref<16x82xbf16, #tpu.memory_space<vmem>>, vector<16x64xbf16>
    %c0_i32_166 = arith.constant 0 : i32
    %246 = arith.sitofp %c0_i32_166 : i32 to bf16
    %247 = vector.broadcast %246 : bf16 to vector<16x64xbf16>
    %248 = arith.select %225, %245, %247 : vector<16x64xi1>, vector<16x64xbf16>
    %c80 = arith.constant 80 : index
    %c0_167 = arith.constant 0 : index
    %249 = vector.load %arg23[%c80, %c0_167] : memref<144x64xbf16, #tpu.memory_space<vmem>>, vector<16x64xbf16>
    tpu.vector_store %arg23[%c80, %c0_167], %248 {strides = array<i32>} : memref<144x64xbf16, #tpu.memory_space<vmem>>, vector<16x64xbf16>,
    %c0_168 = arith.constant 0 : index
    %c16_169 = arith.constant 16 : index
    %250 = vector.load %arg18[%c0_168, %c16_169] : memref<16x82xbf16, #tpu.memory_space<vmem>>, vector<16x64xbf16>
    %c0_i32_170 = arith.constant 0 : i32
    %251 = arith.sitofp %c0_i32_170 : i32 to bf16
    %252 = vector.broadcast %251 : bf16 to vector<16x64xbf16>
    %253 = arith.select %223, %250, %252 : vector<16x64xi1>, vector<16x64xbf16>
    %c96 = arith.constant 96 : index
    %c0_171 = arith.constant 0 : index
    %254 = vector.load %arg23[%c96, %c0_171] : memref<144x64xbf16, #tpu.memory_space<vmem>>, vector<16x64xbf16>
    tpu.vector_store %arg23[%c96, %c0_171], %253 {strides = array<i32>} : memref<144x64xbf16, #tpu.memory_space<vmem>>, vector<16x64xbf16>,
    %c0_172 = arith.constant 0 : index
    %c17_173 = arith.constant 17 : index
    %255 = vector.load %arg18[%c0_172, %c17_173] : memref<16x82xbf16, #tpu.memory_space<vmem>>, vector<16x64xbf16>
    %c112 = arith.constant 112 : index
    %c0_174 = arith.constant 0 : index
    %256 = vector.load %arg23[%c112, %c0_174] : memref<144x64xbf16, #tpu.memory_space<vmem>>, vector<16x64xbf16>
    tpu.vector_store %arg23[%c112, %c0_174], %255 {strides = array<i32>} : memref<144x64xbf16, #tpu.memory_space<vmem>>, vector<16x64xbf16>,
    %c0_175 = arith.constant 0 : index
    %c18_176 = arith.constant 18 : index
    %257 = vector.load %arg18[%c0_175, %c18_176] : memref<16x82xbf16, #tpu.memory_space<vmem>>, vector<16x64xbf16>
    %c0_i32_177 = arith.constant 0 : i32
    %258 = arith.sitofp %c0_i32_177 : i32 to bf16
    %259 = vector.broadcast %258 : bf16 to vector<16x64xbf16>
    %260 = arith.select %225, %257, %259 : vector<16x64xi1>, vector<16x64xbf16>
    %c128 = arith.constant 128 : index
    %c0_178 = arith.constant 0 : index
    %261 = vector.load %arg23[%c128, %c0_178] : memref<144x64xbf16, #tpu.memory_space<vmem>>, vector<16x64xbf16>
    tpu.vector_store %arg23[%c128, %c0_178], %260 {strides = array<i32>} : memref<144x64xbf16, #tpu.memory_space<vmem>>, vector<16x64xbf16>,
    %c0_179 = arith.constant 0 : index
    %c0_180 = arith.constant 0 : index
    %262 = vector.load %arg23[%c0_179, %c0_180] : memref<144x64xbf16, #tpu.memory_space<vmem>>, vector<144x64xbf16>
    %c0_181 = arith.constant 0 : index
    %c0_182 = arith.constant 0 : index
    %263 = vector.load %arg4[%c0_181, %c0_182] : memref<32x144xbf16, #tpu.memory_space<vmem>>, vector<32x144xbf16>
    %cst_183 = arith.constant dense<0.000000e+00> : vector<32x64xf32>
    %264 = tpu.matmul %263, %262, %cst_183 {dimension_numbers = #tpu.dot_dimension_numbers<[1], [0], [0], [1], [0, 0, 1, 1], [], []>} : vector<32x144xbf16>, vector<144x64xbf16>, vector<32x64xf32> -> vector<32x64xf32>
    %cst_184 = arith.constant dense<0.000000e+00> : vector<32xf32>
    %265 = vector.multi_reduction <add>, %264, %cst_184 [1] : vector<32x64xf32> to vector<32xf32>
    %266 = vector.shape_cast %265 : vector<32xf32> to vector<32x1xf32>
    %cst_185 = arith.constant 1.562500e-02 : f32
    %267 = vector.broadcast %cst_185 : f32 to vector<32x1xf32>
    %268 = arith.mulf %266, %267 : vector<32x1xf32>
    %269 = arith.mulf %264, %264 : vector<32x64xf32>
    %cst_186 = arith.constant dense<0.000000e+00> : vector<32xf32>
    %270 = vector.multi_reduction <add>, %269, %cst_186 [1] : vector<32x64xf32> to vector<32xf32>
    %271 = vector.shape_cast %270 : vector<32xf32> to vector<32x1xf32>
    %cst_187 = arith.constant 1.562500e-02 : f32
    %272 = vector.broadcast %cst_187 : f32 to vector<32x1xf32>
    %273 = arith.mulf %271, %272 : vector<32x1xf32>
    %274 = arith.mulf %268, %268 : vector<32x1xf32>
    %275 = arith.subf %273, %274 : vector<32x1xf32>
    %cst_188 = arith.constant 0.000000e+00 : f32
    %276 = vector.broadcast %cst_188 : f32 to vector<32x1xf32>
    %277 = arith.maximumf %275, %276 : vector<32x1xf32>
    %278 = vector.broadcast %268 : vector<32x1xf32> to vector<32x64xf32>
    %279 = arith.subf %264, %278 : vector<32x64xf32>
    %cst_189 = arith.constant 9.99999974E-6 : f32
    %280 = vector.broadcast %cst_189 : f32 to vector<32x1xf32>
    %281 = arith.addf %277, %280 : vector<32x1xf32>
    %282 = math.rsqrt %281 : vector<32x1xf32>
    %283 = vector.broadcast %282 : vector<32x1xf32> to vector<32x64xf32>
    %284 = arith.mulf %279, %283 : vector<32x64xf32>
    %cst_190 = arith.constant 5.000000e-01 : f32
    %285 = vector.broadcast %cst_190 : f32 to vector<32x64xf32>
    %286 = arith.mulf %285, %284 : vector<32x64xf32>
    %cst_191 = arith.constant 0.707106769 : f32
    %287 = vector.broadcast %cst_191 : f32 to vector<32x64xf32>
    %288 = arith.mulf %284, %287 : vector<32x64xf32>
    %289 = math.erf %288 : vector<32x64xf32>
    %cst_192 = arith.constant 1.000000e+00 : f32
    %290 = vector.broadcast %cst_192 : f32 to vector<32x64xf32>
    %291 = arith.addf %290, %289 : vector<32x64xf32>
    %292 = arith.mulf %286, %291 : vector<32x64xf32>
    %c0_193 = arith.constant 0 : index
    %c0_194 = arith.constant 0 : index
    %c0_195 = arith.constant 0 : index
    %293 = vector.load %arg13[%c0_193, %c0_194, %c0_195] : memref<1x32x64xf32, #tpu.memory_space<vmem>>, vector<1x32x64xf32>
    %294 = vector.shape_cast %293 : vector<1x32x64xf32> to vector<32x64xf32>
    %295 = vector.shape_cast %292 : vector<32x64xf32> to vector<1x32x64xf32>
    tpu.vector_store %arg13[%c0_193, %c0_194, %c0_195], %295 {strides = array<i32>} : memref<1x32x64xf32, #tpu.memory_space<vmem>>, vector<1x32x64xf32>,
    %296 = arith.truncf %292 : vector<32x64xf32> to vector<32x64xbf16>
    %c0_196 = arith.constant 0 : index
    %c0_197 = arith.constant 0 : index
    %297 = vector.load %arg9[%c0_196, %c0_197] : memref<64x16xbf16, #tpu.memory_space<vmem>>, vector<64x16xbf16>
    %cst_198 = arith.constant dense<0.000000e+00> : vector<32x16xf32>
    %298 = tpu.matmul %296, %297, %cst_198 {dimension_numbers = #tpu.dot_dimension_numbers<[1], [0], [0], [1], [0, 0, 1, 1], [], []>} : vector<32x64xbf16>, vector<64x16xbf16>, vector<32x16xf32> -> vector<32x16xf32>
    %cst_199 = arith.constant 0.000000e+00 : bf16
    %299 = vector.broadcast %cst_199 : bf16 to vector<32x5xbf16>
    %c0_200 = arith.constant 0 : index
    %c0_201 = arith.constant 0 : index
    %300 = vector.load %arg19[%c0_200, %c0_201] : memref<32x26xbf16, #tpu.memory_space<vmem>>, vector<32x5xbf16>
    tpu.vector_store %arg19[%c0_200, %c0_201], %299 {strides = array<i32>} : memref<32x26xbf16, #tpu.memory_space<vmem>>, vector<32x5xbf16>,
    %c0_202 = arith.constant 0 : index
    %c21 = arith.constant 21 : index
    %301 = vector.load %arg19[%c0_202, %c21] : memref<32x26xbf16, #tpu.memory_space<vmem>>, vector<32x5xbf16>
    tpu.vector_store %arg19[%c0_202, %c21], %299 {strides = array<i32>} : memref<32x26xbf16, #tpu.memory_space<vmem>>, vector<32x5xbf16>,
    %302 = arith.truncf %298 : vector<32x16xf32> to vector<32x16xbf16>
    %c0_203 = arith.constant 0 : index
    %c5 = arith.constant 5 : index
    %303 = vector.load %arg19[%c0_203, %c5] : memref<32x26xbf16, #tpu.memory_space<vmem>>, vector<32x16xbf16>
    tpu.vector_store %arg19[%c0_203, %c5], %302 {strides = array<i32>} : memref<32x26xbf16, #tpu.memory_space<vmem>>, vector<32x16xbf16>,
    %304 = tpu.iota {dimensions = array<i32: 1>} : vector<32x16xi32>
    %c4_i32 = arith.constant 4 : i32
    %c0_i32_204 = arith.constant 0 : i32
    %305 = arith.cmpi eq, %c4_i32, %c0_i32_204 : i32
    %c1_i32_205 = arith.constant 1 : i32
    %306 = arith.select %305, %c1_i32_205, %c4_i32 : i32
    %307 = vector.broadcast %306 : i32 to vector<32x16xi32>
    %308 = arith.remsi %304, %307 : vector<32x16xi32>
    %c0_i32_206 = arith.constant 0 : i32
    %309 = vector.broadcast %c0_i32_206 : i32 to vector<32x16xi32>
    %310 = arith.cmpi ne, %308, %309 : vector<32x16xi32>
    %c0_i32_207 = arith.constant 0 : i32
    %311 = vector.broadcast %c0_i32_207 : i32 to vector<32x16xi32>
    %312 = arith.cmpi slt, %308, %311 : vector<32x16xi32>
    %c0_i32_208 = arith.constant 0 : i32
    %313 = arith.cmpi slt, %306, %c0_i32_208 : i32
    %314 = vector.broadcast %313 : i1 to vector<32x16xi1>
    %315 = vector.broadcast %314 : vector<32x16xi1> to vector<32x16xi1>
    %316 = arith.xori %312, %315 : vector<32x16xi1>
    %317 = arith.andi %316, %310 : vector<32x16xi1>
    %318 = vector.broadcast %306 : i32 to vector<32x16xi32>
    %319 = arith.addi %308, %318 : vector<32x16xi32>
    %320 = arith.select %317, %319, %308 : vector<32x16xi1>, vector<32x16xi32>
    %c1_i32_209 = arith.constant 1 : i32
    %321 = vector.broadcast %c1_i32_209 : i32 to vector<32x16xi32>
    %322 = arith.cmpi sge, %320, %321 : vector<32x16xi32>
    %c2_i32 = arith.constant 2 : i32
    %323 = vector.broadcast %c2_i32 : i32 to vector<32x16xi32>
    %324 = arith.cmpi sle, %320, %323 : vector<32x16xi32>
    %c0_210 = arith.constant 0 : index
    %c0_211 = arith.constant 0 : index
    %325 = vector.load %arg19[%c0_210, %c0_211] : memref<32x26xbf16, #tpu.memory_space<vmem>>, vector<32x16xbf16>
    %c0_i32_212 = arith.constant 0 : i32
    %326 = arith.sitofp %c0_i32_212 : i32 to bf16
    %327 = vector.broadcast %326 : bf16 to vector<32x16xbf16>
    %328 = arith.select %322, %325, %327 : vector<32x16xi1>, vector<32x16xbf16>
    %c0_213 = arith.constant 0 : index
    %c0_214 = arith.constant 0 : index
    %329 = vector.load %arg24[%c0_213, %c0_214] : memref<288x16xbf16, #tpu.memory_space<vmem>>, vector<32x16xbf16>
    tpu.vector_store %arg24[%c0_213, %c0_214], %328 {strides = array<i32>} : memref<288x16xbf16, #tpu.memory_space<vmem>>, vector<32x16xbf16>,
    %c0_215 = arith.constant 0 : index
    %c1_216 = arith.constant 1 : index
    %330 = vector.load %arg19[%c0_215, %c1_216] : memref<32x26xbf16, #tpu.memory_space<vmem>>, vector<32x16xbf16>
    %c32_217 = arith.constant 32 : index
    %c0_218 = arith.constant 0 : index
    %331 = vector.load %arg24[%c32_217, %c0_218] : memref<288x16xbf16, #tpu.memory_space<vmem>>, vector<32x16xbf16>
    tpu.vector_store %arg24[%c32_217, %c0_218], %330 {strides = array<i32>} : memref<288x16xbf16, #tpu.memory_space<vmem>>, vector<32x16xbf16>,
    %c0_219 = arith.constant 0 : index
    %c2_220 = arith.constant 2 : index
    %332 = vector.load %arg19[%c0_219, %c2_220] : memref<32x26xbf16, #tpu.memory_space<vmem>>, vector<32x16xbf16>
    %c0_i32_221 = arith.constant 0 : i32
    %333 = arith.sitofp %c0_i32_221 : i32 to bf16
    %334 = vector.broadcast %333 : bf16 to vector<32x16xbf16>
    %335 = arith.select %324, %332, %334 : vector<32x16xi1>, vector<32x16xbf16>
    %c64_222 = arith.constant 64 : index
    %c0_223 = arith.constant 0 : index
    %336 = vector.load %arg24[%c64_222, %c0_223] : memref<288x16xbf16, #tpu.memory_space<vmem>>, vector<32x16xbf16>
    tpu.vector_store %arg24[%c64_222, %c0_223], %335 {strides = array<i32>} : memref<288x16xbf16, #tpu.memory_space<vmem>>, vector<32x16xbf16>,
    %c0_224 = arith.constant 0 : index
    %c4 = arith.constant 4 : index
    %337 = vector.load %arg19[%c0_224, %c4] : memref<32x26xbf16, #tpu.memory_space<vmem>>, vector<32x16xbf16>
    %c0_i32_225 = arith.constant 0 : i32
    %338 = arith.sitofp %c0_i32_225 : i32 to bf16
    %339 = vector.broadcast %338 : bf16 to vector<32x16xbf16>
    %340 = arith.select %322, %337, %339 : vector<32x16xi1>, vector<32x16xbf16>
    %c96_226 = arith.constant 96 : index
    %c0_227 = arith.constant 0 : index
    %341 = vector.load %arg24[%c96_226, %c0_227] : memref<288x16xbf16, #tpu.memory_space<vmem>>, vector<32x16xbf16>
    tpu.vector_store %arg24[%c96_226, %c0_227], %340 {strides = array<i32>} : memref<288x16xbf16, #tpu.memory_space<vmem>>, vector<32x16xbf16>,
    %c0_228 = arith.constant 0 : index
    %c5_229 = arith.constant 5 : index
    %342 = vector.load %arg19[%c0_228, %c5_229] : memref<32x26xbf16, #tpu.memory_space<vmem>>, vector<32x16xbf16>
    %c128_230 = arith.constant 128 : index
    %c0_231 = arith.constant 0 : index
    %343 = vector.load %arg24[%c128_230, %c0_231] : memref<288x16xbf16, #tpu.memory_space<vmem>>, vector<32x16xbf16>
    tpu.vector_store %arg24[%c128_230, %c0_231], %342 {strides = array<i32>} : memref<288x16xbf16, #tpu.memory_space<vmem>>, vector<32x16xbf16>,
    %c0_232 = arith.constant 0 : index
    %c6 = arith.constant 6 : index
    %344 = vector.load %arg19[%c0_232, %c6] : memref<32x26xbf16, #tpu.memory_space<vmem>>, vector<32x16xbf16>
    %c0_i32_233 = arith.constant 0 : i32
    %345 = arith.sitofp %c0_i32_233 : i32 to bf16
    %346 = vector.broadcast %345 : bf16 to vector<32x16xbf16>
    %347 = arith.select %324, %344, %346 : vector<32x16xi1>, vector<32x16xbf16>
    %c160 = arith.constant 160 : index
    %c0_234 = arith.constant 0 : index
    %348 = vector.load %arg24[%c160, %c0_234] : memref<288x16xbf16, #tpu.memory_space<vmem>>, vector<32x16xbf16>
    tpu.vector_store %arg24[%c160, %c0_234], %347 {strides = array<i32>} : memref<288x16xbf16, #tpu.memory_space<vmem>>, vector<32x16xbf16>,
    %c0_235 = arith.constant 0 : index
    %c8_236 = arith.constant 8 : index
    %349 = vector.load %arg19[%c0_235, %c8_236] : memref<32x26xbf16, #tpu.memory_space<vmem>>, vector<32x16xbf16>
    %c0_i32_237 = arith.constant 0 : i32
    %350 = arith.sitofp %c0_i32_237 : i32 to bf16
    %351 = vector.broadcast %350 : bf16 to vector<32x16xbf16>
    %352 = arith.select %322, %349, %351 : vector<32x16xi1>, vector<32x16xbf16>
    %c192 = arith.constant 192 : index
    %c0_238 = arith.constant 0 : index
    %353 = vector.load %arg24[%c192, %c0_238] : memref<288x16xbf16, #tpu.memory_space<vmem>>, vector<32x16xbf16>
    tpu.vector_store %arg24[%c192, %c0_238], %352 {strides = array<i32>} : memref<288x16xbf16, #tpu.memory_space<vmem>>, vector<32x16xbf16>,
    %c0_239 = arith.constant 0 : index
    %c9_240 = arith.constant 9 : index
    %354 = vector.load %arg19[%c0_239, %c9_240] : memref<32x26xbf16, #tpu.memory_space<vmem>>, vector<32x16xbf16>
    %c224 = arith.constant 224 : index
    %c0_241 = arith.constant 0 : index
    %355 = vector.load %arg24[%c224, %c0_241] : memref<288x16xbf16, #tpu.memory_space<vmem>>, vector<32x16xbf16>
    tpu.vector_store %arg24[%c224, %c0_241], %354 {strides = array<i32>} : memref<288x16xbf16, #tpu.memory_space<vmem>>, vector<32x16xbf16>,
    %c0_242 = arith.constant 0 : index
    %c10_243 = arith.constant 10 : index
    %356 = vector.load %arg19[%c0_242, %c10_243] : memref<32x26xbf16, #tpu.memory_space<vmem>>, vector<32x16xbf16>
    %c0_i32_244 = arith.constant 0 : i32
    %357 = arith.sitofp %c0_i32_244 : i32 to bf16
    %358 = vector.broadcast %357 : bf16 to vector<32x16xbf16>
    %359 = arith.select %324, %356, %358 : vector<32x16xi1>, vector<32x16xbf16>
    %c256 = arith.constant 256 : index
    %c0_245 = arith.constant 0 : index
    %360 = vector.load %arg24[%c256, %c0_245] : memref<288x16xbf16, #tpu.memory_space<vmem>>, vector<32x16xbf16>
    tpu.vector_store %arg24[%c256, %c0_245], %359 {strides = array<i32>} : memref<288x16xbf16, #tpu.memory_space<vmem>>, vector<32x16xbf16>,
    %c0_246 = arith.constant 0 : index
    %c0_247 = arith.constant 0 : index
    %361 = vector.load %arg24[%c0_246, %c0_247] : memref<288x16xbf16, #tpu.memory_space<vmem>>, vector<288x16xbf16>
    %c0_248 = arith.constant 0 : index
    %c0_249 = arith.constant 0 : index
    %362 = vector.load %arg5[%c0_248, %c0_249] : memref<64x288xbf16, #tpu.memory_space<vmem>>, vector<64x288xbf16>
    %cst_250 = arith.constant dense<0.000000e+00> : vector<64x16xf32>
    %363 = tpu.matmul %362, %361, %cst_250 {dimension_numbers = #tpu.dot_dimension_numbers<[1], [0], [0], [1], [0, 0, 1, 1], [], []>} : vector<64x288xbf16>, vector<288x16xbf16>, vector<64x16xf32> -> vector<64x16xf32>
    %cst_251 = arith.constant dense<0.000000e+00> : vector<64xf32>
    %364 = vector.multi_reduction <add>, %363, %cst_251 [1] : vector<64x16xf32> to vector<64xf32>
    %365 = vector.shape_cast %364 : vector<64xf32> to vector<64x1xf32>
    %cst_252 = arith.constant 6.250000e-02 : f32
    %366 = vector.broadcast %cst_252 : f32 to vector<64x1xf32>
    %367 = arith.mulf %365, %366 : vector<64x1xf32>
    %368 = arith.mulf %363, %363 : vector<64x16xf32>
    %cst_253 = arith.constant dense<0.000000e+00> : vector<64xf32>
    %369 = vector.multi_reduction <add>, %368, %cst_253 [1] : vector<64x16xf32> to vector<64xf32>
    %370 = vector.shape_cast %369 : vector<64xf32> to vector<64x1xf32>
    %cst_254 = arith.constant 6.250000e-02 : f32
    %371 = vector.broadcast %cst_254 : f32 to vector<64x1xf32>
    %372 = arith.mulf %370, %371 : vector<64x1xf32>
    %373 = arith.mulf %367, %367 : vector<64x1xf32>
    %374 = arith.subf %372, %373 : vector<64x1xf32>
    %cst_255 = arith.constant 0.000000e+00 : f32
    %375 = vector.broadcast %cst_255 : f32 to vector<64x1xf32>
    %376 = arith.maximumf %374, %375 : vector<64x1xf32>
    %377 = vector.broadcast %367 : vector<64x1xf32> to vector<64x16xf32>
    %378 = arith.subf %363, %377 : vector<64x16xf32>
    %cst_256 = arith.constant 9.99999974E-6 : f32
    %379 = vector.broadcast %cst_256 : f32 to vector<64x1xf32>
    %380 = arith.addf %376, %379 : vector<64x1xf32>
    %381 = math.rsqrt %380 : vector<64x1xf32>
    %382 = vector.broadcast %381 : vector<64x1xf32> to vector<64x16xf32>
    %383 = arith.mulf %378, %382 : vector<64x16xf32>
    %cst_257 = arith.constant 5.000000e-01 : f32
    %384 = vector.broadcast %cst_257 : f32 to vector<64x16xf32>
    %385 = arith.mulf %384, %383 : vector<64x16xf32>
    %cst_258 = arith.constant 0.707106769 : f32
    %386 = vector.broadcast %cst_258 : f32 to vector<64x16xf32>
    %387 = arith.mulf %383, %386 : vector<64x16xf32>
    %388 = math.erf %387 : vector<64x16xf32>
    %cst_259 = arith.constant 1.000000e+00 : f32
    %389 = vector.broadcast %cst_259 : f32 to vector<64x16xf32>
    %390 = arith.addf %389, %388 : vector<64x16xf32>
    %391 = arith.mulf %385, %390 : vector<64x16xf32>
    %c0_260 = arith.constant 0 : index
    %c0_261 = arith.constant 0 : index
    %c0_262 = arith.constant 0 : index
    %392 = vector.load %arg14[%c0_260, %c0_261, %c0_262] : memref<1x64x16xf32, #tpu.memory_space<vmem>>, vector<1x64x16xf32>
    %393 = vector.shape_cast %392 : vector<1x64x16xf32> to vector<64x16xf32>
    %394 = vector.shape_cast %391 : vector<64x16xf32> to vector<1x64x16xf32>
    tpu.vector_store %arg14[%c0_260, %c0_261, %c0_262], %394 {strides = array<i32>} : memref<1x64x16xf32, #tpu.memory_space<vmem>>, vector<1x64x16xf32>,
    %395 = arith.truncf %391 : vector<64x16xf32> to vector<64x16xbf16>
    %c0_263 = arith.constant 0 : index
    %c0_264 = arith.constant 0 : index
    %396 = vector.load %arg10[%c0_263, %c0_264] : memref<16x4xbf16, #tpu.memory_space<vmem>>, vector<16x4xbf16>
    %cst_265 = arith.constant dense<0.000000e+00> : vector<64x4xf32>
    %397 = tpu.matmul %395, %396, %cst_265 {dimension_numbers = #tpu.dot_dimension_numbers<[1], [0], [0], [1], [0, 0, 1, 1], [], []>} : vector<64x16xbf16>, vector<16x4xbf16>, vector<64x4xf32> -> vector<64x4xf32>
    %cst_266 = arith.constant 0.000000e+00 : bf16
    %398 = vector.broadcast %cst_266 : bf16 to vector<64x3xbf16>
    %c0_267 = arith.constant 0 : index
    %c0_268 = arith.constant 0 : index
    %399 = vector.load %arg20[%c0_267, %c0_268] : memref<64x10xbf16, #tpu.memory_space<vmem>>, vector<64x3xbf16>
    tpu.vector_store %arg20[%c0_267, %c0_268], %398 {strides = array<i32>} : memref<64x10xbf16, #tpu.memory_space<vmem>>, vector<64x3xbf16>,
    %c0_269 = arith.constant 0 : index
    %c7 = arith.constant 7 : index
    %400 = vector.load %arg20[%c0_269, %c7] : memref<64x10xbf16, #tpu.memory_space<vmem>>, vector<64x3xbf16>
    tpu.vector_store %arg20[%c0_269, %c7], %398 {strides = array<i32>} : memref<64x10xbf16, #tpu.memory_space<vmem>>, vector<64x3xbf16>,
    %401 = arith.truncf %397 : vector<64x4xf32> to vector<64x4xbf16>
    %c0_270 = arith.constant 0 : index
    %c3 = arith.constant 3 : index
    %402 = vector.load %arg20[%c0_270, %c3] : memref<64x10xbf16, #tpu.memory_space<vmem>>, vector<64x4xbf16>
    tpu.vector_store %arg20[%c0_270, %c3], %401 {strides = array<i32>} : memref<64x10xbf16, #tpu.memory_space<vmem>>, vector<64x4xbf16>,
    %403 = tpu.iota {dimensions = array<i32: 1>} : vector<64x4xi32>
    %c2_i32_271 = arith.constant 2 : i32
    %c0_i32_272 = arith.constant 0 : i32
    %404 = arith.cmpi eq, %c2_i32_271, %c0_i32_272 : i32
    %c1_i32_273 = arith.constant 1 : i32
    %405 = arith.select %404, %c1_i32_273, %c2_i32_271 : i32
    %406 = vector.broadcast %405 : i32 to vector<64x4xi32>
    %407 = arith.remsi %403, %406 : vector<64x4xi32>
    %c0_i32_274 = arith.constant 0 : i32
    %408 = vector.broadcast %c0_i32_274 : i32 to vector<64x4xi32>
    %409 = arith.cmpi ne, %407, %408 : vector<64x4xi32>
    %c0_i32_275 = arith.constant 0 : i32
    %410 = vector.broadcast %c0_i32_275 : i32 to vector<64x4xi32>
    %411 = arith.cmpi slt, %407, %410 : vector<64x4xi32>
    %c0_i32_276 = arith.constant 0 : i32
    %412 = arith.cmpi slt, %405, %c0_i32_276 : i32
    %413 = vector.broadcast %412 : i1 to vector<64x4xi1>
    %414 = vector.broadcast %413 : vector<64x4xi1> to vector<64x4xi1>
    %415 = arith.xori %411, %414 : vector<64x4xi1>
    %416 = arith.andi %415, %409 : vector<64x4xi1>
    %417 = vector.broadcast %405 : i32 to vector<64x4xi32>
    %418 = arith.addi %407, %417 : vector<64x4xi32>
    %419 = arith.select %416, %418, %407 : vector<64x4xi1>, vector<64x4xi32>
    %c1_i32_277 = arith.constant 1 : i32
    %420 = vector.broadcast %c1_i32_277 : i32 to vector<64x4xi32>
    %421 = arith.cmpi sge, %419, %420 : vector<64x4xi32>
    %c0_i32_278 = arith.constant 0 : i32
    %422 = vector.broadcast %c0_i32_278 : i32 to vector<64x4xi32>
    %423 = arith.cmpi sle, %419, %422 : vector<64x4xi32>
    %c0_279 = arith.constant 0 : index
    %c0_280 = arith.constant 0 : index
    %424 = vector.load %arg20[%c0_279, %c0_280] : memref<64x10xbf16, #tpu.memory_space<vmem>>, vector<64x4xbf16>
    %c0_i32_281 = arith.constant 0 : i32
    %425 = arith.sitofp %c0_i32_281 : i32 to bf16
    %426 = vector.broadcast %425 : bf16 to vector<64x4xbf16>
    %427 = arith.select %421, %424, %426 : vector<64x4xi1>, vector<64x4xbf16>
    %c0_282 = arith.constant 0 : index
    %c0_283 = arith.constant 0 : index
    %428 = vector.load %arg25[%c0_282, %c0_283] : memref<576x4xbf16, #tpu.memory_space<vmem>>, vector<64x4xbf16>
    tpu.vector_store %arg25[%c0_282, %c0_283], %427 {strides = array<i32>} : memref<576x4xbf16, #tpu.memory_space<vmem>>, vector<64x4xbf16>,
    %c0_284 = arith.constant 0 : index
    %c1_285 = arith.constant 1 : index
    %429 = vector.load %arg20[%c0_284, %c1_285] : memref<64x10xbf16, #tpu.memory_space<vmem>>, vector<64x4xbf16>
    %c64_286 = arith.constant 64 : index
    %c0_287 = arith.constant 0 : index
    %430 = vector.load %arg25[%c64_286, %c0_287] : memref<576x4xbf16, #tpu.memory_space<vmem>>, vector<64x4xbf16>
    tpu.vector_store %arg25[%c64_286, %c0_287], %429 {strides = array<i32>} : memref<576x4xbf16, #tpu.memory_space<vmem>>, vector<64x4xbf16>,
    %c0_288 = arith.constant 0 : index
    %c2_289 = arith.constant 2 : index
    %431 = vector.load %arg20[%c0_288, %c2_289] : memref<64x10xbf16, #tpu.memory_space<vmem>>, vector<64x4xbf16>
    %c0_i32_290 = arith.constant 0 : i32
    %432 = arith.sitofp %c0_i32_290 : i32 to bf16
    %433 = vector.broadcast %432 : bf16 to vector<64x4xbf16>
    %434 = arith.select %423, %431, %433 : vector<64x4xi1>, vector<64x4xbf16>
    %c128_291 = arith.constant 128 : index
    %c0_292 = arith.constant 0 : index
    %435 = vector.load %arg25[%c128_291, %c0_292] : memref<576x4xbf16, #tpu.memory_space<vmem>>, vector<64x4xbf16>
    tpu.vector_store %arg25[%c128_291, %c0_292], %434 {strides = array<i32>} : memref<576x4xbf16, #tpu.memory_space<vmem>>, vector<64x4xbf16>,
    %c0_293 = arith.constant 0 : index
    %c2_294 = arith.constant 2 : index
    %436 = vector.load %arg20[%c0_293, %c2_294] : memref<64x10xbf16, #tpu.memory_space<vmem>>, vector<64x4xbf16>
    %c0_i32_295 = arith.constant 0 : i32
    %437 = arith.sitofp %c0_i32_295 : i32 to bf16
    %438 = vector.broadcast %437 : bf16 to vector<64x4xbf16>
    %439 = arith.select %421, %436, %438 : vector<64x4xi1>, vector<64x4xbf16>
    %c192_296 = arith.constant 192 : index
    %c0_297 = arith.constant 0 : index
    %440 = vector.load %arg25[%c192_296, %c0_297] : memref<576x4xbf16, #tpu.memory_space<vmem>>, vector<64x4xbf16>
    tpu.vector_store %arg25[%c192_296, %c0_297], %439 {strides = array<i32>} : memref<576x4xbf16, #tpu.memory_space<vmem>>, vector<64x4xbf16>,
    %c0_298 = arith.constant 0 : index
    %c3_299 = arith.constant 3 : index
    %441 = vector.load %arg20[%c0_298, %c3_299] : memref<64x10xbf16, #tpu.memory_space<vmem>>, vector<64x4xbf16>
    %c256_300 = arith.constant 256 : index
    %c0_301 = arith.constant 0 : index
    %442 = vector.load %arg25[%c256_300, %c0_301] : memref<576x4xbf16, #tpu.memory_space<vmem>>, vector<64x4xbf16>
    tpu.vector_store %arg25[%c256_300, %c0_301], %441 {strides = array<i32>} : memref<576x4xbf16, #tpu.memory_space<vmem>>, vector<64x4xbf16>,
    %c0_302 = arith.constant 0 : index
    %c4_303 = arith.constant 4 : index
    %443 = vector.load %arg20[%c0_302, %c4_303] : memref<64x10xbf16, #tpu.memory_space<vmem>>, vector<64x4xbf16>
    %c0_i32_304 = arith.constant 0 : i32
    %444 = arith.sitofp %c0_i32_304 : i32 to bf16
    %445 = vector.broadcast %444 : bf16 to vector<64x4xbf16>
    %446 = arith.select %423, %443, %445 : vector<64x4xi1>, vector<64x4xbf16>
    %c320 = arith.constant 320 : index
    %c0_305 = arith.constant 0 : index
    %447 = vector.load %arg25[%c320, %c0_305] : memref<576x4xbf16, #tpu.memory_space<vmem>>, vector<64x4xbf16>
    tpu.vector_store %arg25[%c320, %c0_305], %446 {strides = array<i32>} : memref<576x4xbf16, #tpu.memory_space<vmem>>, vector<64x4xbf16>,
    %c0_306 = arith.constant 0 : index
    %c4_307 = arith.constant 4 : index
    %448 = vector.load %arg20[%c0_306, %c4_307] : memref<64x10xbf16, #tpu.memory_space<vmem>>, vector<64x4xbf16>
    %c0_i32_308 = arith.constant 0 : i32
    %449 = arith.sitofp %c0_i32_308 : i32 to bf16
    %450 = vector.broadcast %449 : bf16 to vector<64x4xbf16>
    %451 = arith.select %421, %448, %450 : vector<64x4xi1>, vector<64x4xbf16>
    %c384 = arith.constant 384 : index
    %c0_309 = arith.constant 0 : index
    %452 = vector.load %arg25[%c384, %c0_309] : memref<576x4xbf16, #tpu.memory_space<vmem>>, vector<64x4xbf16>
    tpu.vector_store %arg25[%c384, %c0_309], %451 {strides = array<i32>} : memref<576x4xbf16, #tpu.memory_space<vmem>>, vector<64x4xbf16>,
    %c0_310 = arith.constant 0 : index
    %c5_311 = arith.constant 5 : index
    %453 = vector.load %arg20[%c0_310, %c5_311] : memref<64x10xbf16, #tpu.memory_space<vmem>>, vector<64x4xbf16>
    %c448 = arith.constant 448 : index
    %c0_312 = arith.constant 0 : index
    %454 = vector.load %arg25[%c448, %c0_312] : memref<576x4xbf16, #tpu.memory_space<vmem>>, vector<64x4xbf16>
    tpu.vector_store %arg25[%c448, %c0_312], %453 {strides = array<i32>} : memref<576x4xbf16, #tpu.memory_space<vmem>>, vector<64x4xbf16>,
    %c0_313 = arith.constant 0 : index
    %c6_314 = arith.constant 6 : index
    %455 = vector.load %arg20[%c0_313, %c6_314] : memref<64x10xbf16, #tpu.memory_space<vmem>>, vector<64x4xbf16>
    %c0_i32_315 = arith.constant 0 : i32
    %456 = arith.sitofp %c0_i32_315 : i32 to bf16
    %457 = vector.broadcast %456 : bf16 to vector<64x4xbf16>
    %458 = arith.select %423, %455, %457 : vector<64x4xi1>, vector<64x4xbf16>
    %c512 = arith.constant 512 : index
    %c0_316 = arith.constant 0 : index
    %459 = vector.load %arg25[%c512, %c0_316] : memref<576x4xbf16, #tpu.memory_space<vmem>>, vector<64x4xbf16>
    tpu.vector_store %arg25[%c512, %c0_316], %458 {strides = array<i32>} : memref<576x4xbf16, #tpu.memory_space<vmem>>, vector<64x4xbf16>,
    %c0_317 = arith.constant 0 : index
    %c0_318 = arith.constant 0 : index
    %460 = vector.load %arg25[%c0_317, %c0_318] : memref<576x4xbf16, #tpu.memory_space<vmem>>, vector<576x4xbf16>
    %c0_319 = arith.constant 0 : index
    %c0_320 = arith.constant 0 : index
    %461 = vector.load %arg6[%c0_319, %c0_320] : memref<128x576xbf16, #tpu.memory_space<vmem>>, vector<128x576xbf16>
    %cst_321 = arith.constant dense<0.000000e+00> : vector<128x4xf32>
    %462 = tpu.matmul %461, %460, %cst_321 {dimension_numbers = #tpu.dot_dimension_numbers<[1], [0], [0], [1], [0, 0, 1, 1], [], []>} : vector<128x576xbf16>, vector<576x4xbf16>, vector<128x4xf32> -> vector<128x4xf32>
    %cst_322 = arith.constant dense<0.000000e+00> : vector<128xf32>
    %463 = vector.multi_reduction <add>, %462, %cst_322 [1] : vector<128x4xf32> to vector<128xf32>
    %464 = vector.shape_cast %463 : vector<128xf32> to vector<128x1xf32>
    %cst_323 = arith.constant 2.500000e-01 : f32
    %465 = vector.broadcast %cst_323 : f32 to vector<128x1xf32>
    %466 = arith.mulf %464, %465 : vector<128x1xf32>
    %467 = arith.mulf %462, %462 : vector<128x4xf32>
    %cst_324 = arith.constant dense<0.000000e+00> : vector<128xf32>
    %468 = vector.multi_reduction <add>, %467, %cst_324 [1] : vector<128x4xf32> to vector<128xf32>
    %469 = vector.shape_cast %468 : vector<128xf32> to vector<128x1xf32>
    %cst_325 = arith.constant 2.500000e-01 : f32
    %470 = vector.broadcast %cst_325 : f32 to vector<128x1xf32>
    %471 = arith.mulf %469, %470 : vector<128x1xf32>
    %472 = arith.mulf %466, %466 : vector<128x1xf32>
    %473 = arith.subf %471, %472 : vector<128x1xf32>
    %cst_326 = arith.constant 0.000000e+00 : f32
    %474 = vector.broadcast %cst_326 : f32 to vector<128x1xf32>
    %475 = arith.maximumf %473, %474 : vector<128x1xf32>
    %476 = vector.broadcast %466 : vector<128x1xf32> to vector<128x4xf32>
    %477 = arith.subf %462, %476 : vector<128x4xf32>
    %cst_327 = arith.constant 9.99999974E-6 : f32
    %478 = vector.broadcast %cst_327 : f32 to vector<128x1xf32>
    %479 = arith.addf %475, %478 : vector<128x1xf32>
    %480 = math.rsqrt %479 : vector<128x1xf32>
    %481 = vector.broadcast %480 : vector<128x1xf32> to vector<128x4xf32>
    %482 = arith.mulf %477, %481 : vector<128x4xf32>
    %cst_328 = arith.constant 5.000000e-01 : f32
    %483 = vector.broadcast %cst_328 : f32 to vector<128x4xf32>
    %484 = arith.mulf %483, %482 : vector<128x4xf32>
    %cst_329 = arith.constant 0.707106769 : f32
    %485 = vector.broadcast %cst_329 : f32 to vector<128x4xf32>
    %486 = arith.mulf %482, %485 : vector<128x4xf32>
    %487 = math.erf %486 : vector<128x4xf32>
    %cst_330 = arith.constant 1.000000e+00 : f32
    %488 = vector.broadcast %cst_330 : f32 to vector<128x4xf32>
    %489 = arith.addf %488, %487 : vector<128x4xf32>
    %490 = arith.mulf %484, %489 : vector<128x4xf32>
    %c0_331 = arith.constant 0 : index
    %c0_332 = arith.constant 0 : index
    %c0_333 = arith.constant 0 : index
    %491 = vector.load %arg15[%c0_331, %c0_332, %c0_333] : memref<1x128x4xf32, #tpu.memory_space<vmem>>, vector<1x128x4xf32>
    %492 = vector.shape_cast %491 : vector<1x128x4xf32> to vector<128x4xf32>
    %493 = vector.shape_cast %490 : vector<128x4xf32> to vector<1x128x4xf32>
    tpu.vector_store %arg15[%c0_331, %c0_332, %c0_333], %493 {strides = array<i32>} : memref<1x128x4xf32, #tpu.memory_space<vmem>>, vector<1x128x4xf32>,
    return
  }
  func.func @transform_0(%arg0: i32) -> (i32, i32, i32) {
    %c0_i32 = arith.constant 0 : i32
    %c0_i32_0 = arith.constant 0 : i32
    %c0_i32_1 = arith.constant 0 : i32
    return %arg0, %c0_i32, %c0_i32_0 : i32, i32, i32
  }
  func.func @transform_1(%arg0: i32) -> (i32, i32) {
    %c0_i32 = arith.constant 0 : i32
    %c0_i32_0 = arith.constant 0 : i32
    %c0_i32_1 = arith.constant 0 : i32
    return %c0_i32, %c0_i32_0 : i32, i32
  }
  func.func @transform_2(%arg0: i32) -> (i32, i32) {
    %c0_i32 = arith.constant 0 : i32
    %c0_i32_0 = arith.constant 0 : i32
    %c0_i32_1 = arith.constant 0 : i32
    return %c0_i32, %c0_i32_0 : i32, i32
  }
  func.func @transform_3(%arg0: i32) -> (i32, i32) {
    %c0_i32 = arith.constant 0 : i32
    %c0_i32_0 = arith.constant 0 : i32
    %c0_i32_1 = arith.constant 0 : i32
    return %c0_i32, %c0_i32_0 : i32, i32
  }
  func.func @transform_4(%arg0: i32) -> (i32, i32) {
    %c0_i32 = arith.constant 0 : i32
    %c0_i32_0 = arith.constant 0 : i32
    %c0_i32_1 = arith.constant 0 : i32
    return %c0_i32, %c0_i32_0 : i32, i32
  }
  func.func @transform_5(%arg0: i32) -> (i32, i32) {
    %c0_i32 = arith.constant 0 : i32
    %c0_i32_0 = arith.constant 0 : i32
    %c0_i32_1 = arith.constant 0 : i32
    return %c0_i32, %c0_i32_0 : i32, i32
  }
  func.func @transform_6(%arg0: i32) -> (i32, i32) {
    %c0_i32 = arith.constant 0 : i32
    %c0_i32_0 = arith.constant 0 : i32
    %c0_i32_1 = arith.constant 0 : i32
    return %c0_i32, %c0_i32_0 : i32, i32
  }
  func.func @transform_7(%arg0: i32) -> (i32, i32) {
    %c0_i32 = arith.constant 0 : i32
    %c0_i32_0 = arith.constant 0 : i32
    %c0_i32_1 = arith.constant 0 : i32
    return %c0_i32, %c0_i32_0 : i32, i32
  }
  func.func @transform_8(%arg0: i32) -> (i32, i32) {
    %c0_i32 = arith.constant 0 : i32
    %c0_i32_0 = arith.constant 0 : i32
    %c0_i32_1 = arith.constant 0 : i32
    return %c0_i32, %c0_i32_0 : i32, i32
  }
  func.func @transform_9(%arg0: i32) -> (i32, i32) {
    %c0_i32 = arith.constant 0 : i32
    %c0_i32_0 = arith.constant 0 : i32
    %c0_i32_1 = arith.constant 0 : i32
    return %c0_i32, %c0_i32_0 : i32, i32
  }
  func.func @transform_10(%arg0: i32) -> (i32, i32, i32) {
    %c0_i32 = arith.constant 0 : i32
    %c0_i32_0 = arith.constant 0 : i32
    %c0_i32_1 = arith.constant 0 : i32
    return %arg0, %c0_i32, %c0_i32_0 : i32, i32, i32
  }
  func.func @transform_11(%arg0: i32) -> (i32, i32, i32) {
    %c0_i32 = arith.constant 0 : i32
    %c0_i32_0 = arith.constant 0 : i32
    %c0_i32_1 = arith.constant 0 : i32
    return %arg0, %c0_i32, %c0_i32_0 : i32, i32, i32
  }
  func.func @transform_12(%arg0: i32) -> (i32, i32, i32) {
    %c0_i32 = arith.constant 0 : i32
    %c0_i32_0 = arith.constant 0 : i32
    %c0_i32_1 = arith.constant 0 : i32
    return %arg0, %c0_i32, %c0_i32_0 : i32, i32, i32
  }
  func.func @transform_13(%arg0: i32) -> (i32, i32, i32) {
    %c0_i32 = arith.constant 0 : i32
    %c0_i32_0 = arith.constant 0 : i32
    %c0_i32_1 = arith.constant 0 : i32
    return %arg0, %c0_i32, %c0_i32_0 : i32, i32, i32
  }
  func.func @transform_14(%arg0: i32) -> (i32, i32, i32) {
    %c0_i32 = arith.constant 0 : i32
    %c0_i32_0 = arith.constant 0 : i32
    %c0_i32_1 = arith.constant 0 : i32
    return %arg0, %c0_i32, %c0_i32_0 : i32, i32, i32
  }
}

</mosaic_0001>

<llo_original>
// kernel: tpu_custom_call.1
$region0: #{tpu_custom_call.1}
  #allocation0 [shape = 'u32[]', space=smem, size = 0x4, offset = 0x4, fixed_abs, tag = 'smem constant byte address 0x4 - core index']
  #allocation1 [shape = 'u32[72,128]{1,0:T(1,128)}', space=vmem, size = 0x9000, scoped, tag = 'internal scratch']
  #allocation2 [shape = 'f32[8,1090]{1,0:T(8,128)}', space=vmem, size = 0x9000, scoped, tag = 'scratch operand']
  #allocation3 [shape = 'f32[8,290]{1,0:T(8,128)}', space=vmem, size = 0x3000, scoped, tag = 'scratch operand']
  #allocation4 [shape = 'bf16[16,82]{1,0:T(8,128)(2,1)}', space=vmem, size = 0x1000, scoped, tag = 'scratch operand']
  #allocation5 [shape = 'bf16[32,26]{1,0:T(8,128)(2,1)}', space=vmem, size = 0x2000, scoped, tag = 'scratch operand']
  #allocation6 [shape = 'bf16[64,10]{1,0:T(8,128)(2,1)}', space=vmem, size = 0x4000, scoped, tag = 'scratch operand']
  #allocation7 [shape = 'f32[72,1024]{1,0:T(8,128)}', space=vmem, size = 0x48000, scoped, tag = 'scratch operand']
  #allocation8 [shape = 'f32[72,256]{1,0:T(8,128)}', space=vmem, size = 0x12000, scoped, tag = 'scratch operand']
  #allocation9 [shape = 'bf16[144,64]{1,0:T(8,128)(2,1)}', space=vmem, size = 0x9000, scoped, tag = 'scratch operand']
  #allocation10 [shape = 'bf16[288,16]{1,0:T(8,128)(2,1)}', space=vmem, size = 0x12000, scoped, tag = 'scratch operand']
  #allocation11 [shape = 'bf16[576,4]{1,0:T(8,128)(2,1)}', space=vmem, size = 0x24000, scoped, tag = 'scratch operand']
  %s0 = inlined_call_operand.vmem [shape: f32[2,8,1024], index: 0, kind: input, shape index: {}]
  %s1 = inlined_call_operand.vmem [shape: bf16[8,72], index: 1, kind: input, shape index: {}]
  %s2 = inlined_call_operand.vmem [shape: bf16[16,72], index: 2, kind: input, shape index: {}]
  %s3 = inlined_call_operand.vmem [shape: bf16[32,144], index: 3, kind: input, shape index: {}]
  %s4 = inlined_call_operand.vmem [shape: bf16[64,288], index: 4, kind: input, shape index: {}]
  %s5 = inlined_call_operand.vmem [shape: bf16[128,576], index: 5, kind: input, shape index: {}]
  %s6 = inlined_call_operand.hbm [shape: bf16[1024,256], index: 6, kind: input, shape index: {}]
  %s7 = inlined_call_operand.vmem [shape: bf16[256,64], index: 7, kind: input, shape index: {}]
  %s8 = inlined_call_operand.vmem [shape: bf16[64,16], index: 8, kind: input, shape index: {}]
  %s9 = inlined_call_operand.vmem [shape: bf16[16,4], index: 9, kind: input, shape index: {}]
  %s10 = inlined_call_operand.hbm [shape: f32[2,8,1024], index: 10, kind: output, shape index: {0}]
  %s11 = inlined_call_operand.hbm [shape: f32[2,16,256], index: 11, kind: output, shape index: {1}]
  %s12 = inlined_call_operand.hbm [shape: f32[2,32,64], index: 12, kind: output, shape index: {2}]
  %s13 = inlined_call_operand.vmem [shape: f32[2,64,16], index: 13, kind: output, shape index: {3}]
  %s14 = inlined_call_operand.vmem [shape: f32[2,128,4], index: 14, kind: output, shape index: {4}]
  %15 = xla_tuple %s10, %s11, %s12, %s13, %s14
  %s16 = sld [smem:[#allocation0]]
  $region109: #{tpu_custom_call.1} parent=0
    _
  %s18 = ssub.s32 1, %s16
  %s19 = scalar_select 0, %s18, %s16
  $region1: #{tpu_custom_call.1} parent=0
    #allocation12 [shape = 'u8[524288]{0}', space=vmem, size = 0x80000, scoped, tag = 'input window, operand 6, single buffered']
    #allocation13 [shape = 's32[2]{0}', space=sflag, size = 0x8, scoped, tag = 'scoped memory for tpu_custom_call.1']
    #allocation14 [shape = 's32[2]{0}', space=sflag, size = 0x8, scoped, tag = 'scoped memory for tpu_custom_call.1']
    #allocation15 [shape = 'u8[65536]{0}', space=vmem, size = 0x10000, scoped, tag = 'output window, operand 0']
    #allocation16 [shape = 'u8[32768]{0}', space=vmem, size = 0x8000, scoped, tag = 'output window, operand 1']
    #allocation17 [shape = 's32[2]{0}', space=sflag, size = 0x8, scoped, tag = 'scoped memory for tpu_custom_call.1']
    #allocation18 [shape = 'u8[32768]{0}', space=vmem, size = 0x8000, scoped, tag = 'output window, operand 2']
    %20 = vsyncpa [#allocation13], 0
    %21 = vsyncpa [#allocation14], 0
    %s22 = scalar_lea.sflag [#allocation14], 1
    %23 = vsyncpa %s22, 0
    %24 = vsyncpa [#allocation17], 0
    %s25 = scalar_lea.sflag [#allocation17], 1
    %26 = vsyncpa %s25, 0
    loop: start=0, step=1, limit=4
    $region2: #{tpu_custom_call.1} parent=1 // loop_pre_header
      _
    $region3: #{tpu_custom_call.1} parent=1 // loop_header
      %s28 = sphi 0, %s32
      %p29 = scmp.ge.s32.totalorder %s28, 4
      %s38 = sphi 0, %s40
      %s41 = sphi 0, %s38
      %s42 = sphi 0, %s41
      %s58 = sphi 0, %s42
      %s62 = sphi 0, %s62
      %s64 = sphi 0, %s62
      %s65 = sphi 0, %s64
      %s79 = sphi 0, %s65
      %s83 = sphi 0, %s83
      %s85 = sphi 0, %s83
      %s86 = sphi 0, %s85
      %s100 = sphi 0, %s86
      %s104 = sphi 0, %s104
      %s106 = sphi 0, %s104
      %s107 = sphi 0, %s106
      %s121 = sphi 0, %s107
      %s125 = sphi 0, %s125
      %s127 = sphi 0, %s125
      %s128 = sphi 0, %s127
      %s142 = sphi 0, %s128
      %s146 = sphi 0, %s146
      %s148 = sphi 0, %s146
      %s149 = sphi 0, %s148
      %s163 = sphi 0, %s149
      %s167 = sphi 0, %s167
      %s169 = sphi 0, %s167
      %s170 = sphi 0, %s169
      %s184 = sphi 0, %s170
      %s188 = sphi 0, %s188
      %s190 = sphi 0, %s188
      %s191 = sphi 0, %s190
      %s205 = sphi 0, %s191
      %s209 = sphi 0, %s209
      %s211 = sphi 0, %s209
      %s212 = sphi 0, %s211
      %s226 = sphi 0, %s212
      %s230 = sphi 0, %s230
      %s232 = sphi 0, %s230
      %s233 = sphi 0, %s232
      %s247 = sphi 0, %s233
      %s253 = sphi 0, %s255
      %s256 = sphi 0, %s253
      %s257 = sphi 0, %s256
      %s273 = sphi 0, %s257
      %s279 = sphi 0, %s281
      %s282 = sphi 0, %s279
      %s283 = sphi 0, %s282
      %s299 = sphi 0, %s283
      %s305 = sphi 0, %s307
      %s308 = sphi 0, %s305
      %s309 = sphi 0, %s308
      %s325 = sphi 0, %s309
      %s331 = sphi 0, %s333
      %s334 = sphi 0, %s331
      %s335 = sphi 0, %s334
      %s351 = sphi 0, %s335
      %s357 = sphi 0, %s359
      %s360 = sphi 0, %s357
      %s361 = sphi 0, %s360
      %s377 = sphi 0, %s361
    $region4: #{tpu_custom_call.1} parent=1 // loop_header_branch
      %31 = sbr.rel (%p29) target = $region8
    $region5: #{tpu_custom_call.1} parent=1 // loop_body
      %s33 = ssub.s32 %s28, 1
      %s34 = ssub.s32 %s28, 2
      %s35 = sadd.s32 %s28, 1
      %s36 = ssub.s32 %s28, %s35
      %p37 = scmp.eq.s32.totalorder %s36, 0
      %s39 = sadd.s32 %s38, 1
      %s40 = scalar_select %p37, %s38, %s39
      %p43 = pneg %p37
      %p44 = scmp.eq.s32.totalorder %s28, 1
      %p45 = por %p43, %p44
      %p46 = scmp.ne.s32.totalorder %s38, %s41
      %p47 = scmp.eq.s32.totalorder %s28, 0
      %p48 = por %p46, %p47
      %p49 = scmp.ne.s32.totalorder %s38, %s41
      %p50 = scmp.eq.s32.totalorder %s33, 1
      %p51 = por %p49, %p50
      %p52 = scmp.ne.s32.totalorder %s41, %s42
      %p53 = scmp.eq.s32.totalorder %s33, 0
      %p54 = por %p52, %p53
      %p55 = scmp.ne.s32.totalorder %s41, %s42
      %p56 = scmp.eq.s32.totalorder %s34, 1
      %p57 = por %p55, %p56
      %p59 = scmp.ne.s32.totalorder %s42, %s58
      %p60 = scmp.eq.s32.totalorder %s34, 0
      %p61 = por %p59, %p60
      %s63 = sadd.s32 %s62, 1
      %p66 = scmp.eq.s32.totalorder %s28, 1
      %p67 = scmp.ne.s32.totalorder %s62, %s64
      %p68 = scmp.eq.s32.totalorder %s28, 0
      %p69 = por %p67, %p68
      %p70 = scmp.ne.s32.totalorder %s62, %s64
      %p71 = scmp.eq.s32.totalorder %s33, 1
      %p72 = por %p70, %p71
      %p73 = scmp.ne.s32.totalorder %s64, %s65
      %p74 = scmp.eq.s32.totalorder %s33, 0
      %p75 = por %p73, %p74
      %p76 = scmp.ne.s32.totalorder %s64, %s65
      %p77 = scmp.eq.s32.totalorder %s34, 1
      %p78 = por %p76, %p77
      %p80 = scmp.ne.s32.totalorder %s65, %s79
      %p81 = scmp.eq.s32.totalorder %s34, 0
      %p82 = por %p80, %p81
      %s84 = sadd.s32 %s83, 1
      %p87 = scmp.eq.s32.totalorder %s28, 1
      %p88 = scmp.ne.s32.totalorder %s83, %s85
      %p89 = scmp.eq.s32.totalorder %s28, 0
      %p90 = por %p88, %p89
      %p91 = scmp.ne.s32.totalorder %s83, %s85
      %p92 = scmp.eq.s32.totalorder %s33, 1
      %p93 = por %p91, %p92
      %p94 = scmp.ne.s32.totalorder %s85, %s86
      %p95 = scmp.eq.s32.totalorder %s33, 0
      %p96 = por %p94, %p95
      %p97 = scmp.ne.s32.totalorder %s85, %s86
      %p98 = scmp.eq.s32.totalorder %s34, 1
      %p99 = por %p97, %p98
      %p101 = scmp.ne.s32.totalorder %s86, %s100
      %p102 = scmp.eq.s32.totalorder %s34, 0
      %p103 = por %p101, %p102
      %s105 = sadd.s32 %s104, 1
      %p108 = scmp.eq.s32.totalorder %s28, 1
      %p109 = scmp.ne.s32.totalorder %s104, %s106
      %p110 = scmp.eq.s32.totalorder %s28, 0
      %p111 = por %p109, %p110
      %p112 = scmp.ne.s32.totalorder %s104, %s106
      %p113 = scmp.eq.s32.totalorder %s33, 1
      %p114 = por %p112, %p113
      %p115 = scmp.ne.s32.totalorder %s106, %s107
      %p116 = scmp.eq.s32.totalorder %s33, 0
      %p117 = por %p115, %p116
      %p118 = scmp.ne.s32.totalorder %s106, %s107
      %p119 = scmp.eq.s32.totalorder %s34, 1
      %p120 = por %p118, %p119
      %p122 = scmp.ne.s32.totalorder %s107, %s121
      %p123 = scmp.eq.s32.totalorder %s34, 0
      %p124 = por %p122, %p123
      %s126 = sadd.s32 %s125, 1
      %p129 = scmp.eq.s32.totalorder %s28, 1
      %p130 = scmp.ne.s32.totalorder %s125, %s127
      %p131 = scmp.eq.s32.totalorder %s28, 0
      %p132 = por %p130, %p131
      %p133 = scmp.ne.s32.totalorder %s125, %s127
      %p134 = scmp.eq.s32.totalorder %s33, 1
      %p135 = por %p133, %p134
      %p136 = scmp.ne.s32.totalorder %s127, %s128
      %p137 = scmp.eq.s32.totalorder %s33, 0
      %p138 = por %p136, %p137
      %p139 = scmp.ne.s32.totalorder %s127, %s128
      %p140 = scmp.eq.s32.totalorder %s34, 1
      %p141 = por %p139, %p140
      %p143 = scmp.ne.s32.totalorder %s128, %s142
      %p144 = scmp.eq.s32.totalorder %s34, 0
      %p145 = por %p143, %p144
      %s147 = sadd.s32 %s146, 1
      %p150 = scmp.eq.s32.totalorder %s28, 1
      %p151 = scmp.ne.s32.totalorder %s146, %s148
      %p152 = scmp.eq.s32.totalorder %s28, 0
      %p153 = por %p151, %p152
      %p154 = scmp.ne.s32.totalorder %s146, %s148
      %p155 = scmp.eq.s32.totalorder %s33, 1
      %p156 = por %p154, %p155
      %p157 = scmp.ne.s32.totalorder %s148, %s149
      %p158 = scmp.eq.s32.totalorder %s33, 0
      %p159 = por %p157, %p158
      %p160 = scmp.ne.s32.totalorder %s148, %s149
      %p161 = scmp.eq.s32.totalorder %s34, 1
      %p162 = por %p160, %p161
      %p164 = scmp.ne.s32.totalorder %s149, %s163
      %p165 = scmp.eq.s32.totalorder %s34, 0
      %p166 = por %p164, %p165
      %s168 = sadd.s32 %s167, 1
      %p171 = scmp.eq.s32.totalorder %s28, 1
      %p172 = scmp.ne.s32.totalorder %s167, %s169
      %p173 = scmp.eq.s32.totalorder %s28, 0
      %p174 = por %p172, %p173
      %p175 = scmp.ne.s32.totalorder %s167, %s169
      %p176 = scmp.eq.s32.totalorder %s33, 1
      %p177 = por %p175, %p176
      %p178 = scmp.ne.s32.totalorder %s169, %s170
      %p179 = scmp.eq.s32.totalorder %s33, 0
      %p180 = por %p178, %p179
      %p181 = scmp.ne.s32.totalorder %s169, %s170
      %p182 = scmp.eq.s32.totalorder %s34, 1
      %p183 = por %p181, %p182
      %p185 = scmp.ne.s32.totalorder %s170, %s184
      %p186 = scmp.eq.s32.totalorder %s34, 0
      %p187 = por %p185, %p186
      %s189 = sadd.s32 %s188, 1
      %p192 = scmp.eq.s32.totalorder %s28, 1
      %p193 = scmp.ne.s32.totalorder %s188, %s190
      %p194 = scmp.eq.s32.totalorder %s28, 0
      %p195 = por %p193, %p194
      %p196 = scmp.ne.s32.totalorder %s188, %s190
      %p197 = scmp.eq.s32.totalorder %s33, 1
      %p198 = por %p196, %p197
      %p199 = scmp.ne.s32.totalorder %s190, %s191
      %p200 = scmp.eq.s32.totalorder %s33, 0
      %p201 = por %p199, %p200
      %p202 = scmp.ne.s32.totalorder %s190, %s191
      %p203 = scmp.eq.s32.totalorder %s34, 1
      %p204 = por %p202, %p203
      %p206 = scmp.ne.s32.totalorder %s191, %s205
      %p207 = scmp.eq.s32.totalorder %s34, 0
      %p208 = por %p206, %p207
      %s210 = sadd.s32 %s209, 1
      %p213 = scmp.eq.s32.totalorder %s28, 1
      %p214 = scmp.ne.s32.totalorder %s209, %s211
      %p215 = scmp.eq.s32.totalorder %s28, 0
      %p216 = por %p214, %p215
      %p217 = scmp.ne.s32.totalorder %s209, %s211
      %p218 = scmp.eq.s32.totalorder %s33, 1
      %p219 = por %p217, %p218
      %p220 = scmp.ne.s32.totalorder %s211, %s212
      %p221 = scmp.eq.s32.totalorder %s33, 0
      %p222 = por %p220, %p221
      %p223 = scmp.ne.s32.totalorder %s211, %s212
      %p224 = scmp.eq.s32.totalorder %s34, 1
      %p225 = por %p223, %p224
      %p227 = scmp.ne.s32.totalorder %s212, %s226
      %p228 = scmp.eq.s32.totalorder %s34, 0
      %p229 = por %p227, %p228
      %s231 = sadd.s32 %s230, 1
      %p234 = scmp.eq.s32.totalorder %s28, 1
      %p235 = scmp.ne.s32.totalorder %s230, %s232
      %p236 = scmp.eq.s32.totalorder %s28, 0
      %p237 = por %p235, %p236
      %p238 = scmp.ne.s32.totalorder %s230, %s232
      %p239 = scmp.eq.s32.totalorder %s33, 1
      %p240 = por %p238, %p239
      %p241 = scmp.ne.s32.totalorder %s232, %s233
      %p242 = scmp.eq.s32.totalorder %s33, 0
      %p243 = por %p241, %p242
      %p244 = scmp.ne.s32.totalorder %s232, %s233
      %p245 = scmp.eq.s32.totalorder %s34, 1
      %p246 = por %p244, %p245
      %p248 = scmp.ne.s32.totalorder %s233, %s247
      %p249 = scmp.eq.s32.totalorder %s34, 0
      %p250 = por %p248, %p249
      %s251 = ssub.s32 %s28, %s35
      %p252 = scmp.eq.s32.totalorder %s251, 0
      %s254 = sadd.s32 %s253, 1
      %s255 = scalar_select %p252, %s253, %s254
      %p258 = pneg %p252
      %p259 = scmp.eq.s32.totalorder %s28, 1
      %p260 = por %p258, %p259
      %p261 = scmp.ne.s32.totalorder %s253, %s256
      %p262 = scmp.eq.s32.totalorder %s28, 0
      %p263 = por %p261, %p262
      %p264 = scmp.ne.s32.totalorder %s253, %s256
      %p265 = scmp.eq.s32.totalorder %s33, 1
      %p266 = por %p264, %p265
      %p267 = scmp.ne.s32.totalorder %s256, %s257
      %p268 = scmp.eq.s32.totalorder %s33, 0
      %p269 = por %p267, %p268
      %p270 = scmp.ne.s32.totalorder %s256, %s257
      %p271 = scmp.eq.s32.totalorder %s34, 1
      %p272 = por %p270, %p271
      %p274 = scmp.ne.s32.totalorder %s257, %s273
      %p275 = scmp.eq.s32.totalorder %s34, 0
      %p276 = por %p274, %p275
      %s277 = ssub.s32 %s28, %s35
      %p278 = scmp.eq.s32.totalorder %s277, 0
      %s280 = sadd.s32 %s279, 1
      %s281 = scalar_select %p278, %s279, %s280
      %p284 = pneg %p278
      %p285 = scmp.eq.s32.totalorder %s28, 1
      %p286 = por %p284, %p285
      %p287 = scmp.ne.s32.totalorder %s279, %s282
      %p288 = scmp.eq.s32.totalorder %s28, 0
      %p289 = por %p287, %p288
      %p290 = scmp.ne.s32.totalorder %s279, %s282
      %p291 = scmp.eq.s32.totalorder %s33, 1
      %p292 = por %p290, %p291
      %p293 = scmp.ne.s32.totalorder %s282, %s283
      %p294 = scmp.eq.s32.totalorder %s33, 0
      %p295 = por %p293, %p294
      %p296 = scmp.ne.s32.totalorder %s282, %s283
      %p297 = scmp.eq.s32.totalorder %s34, 1
      %p298 = por %p296, %p297
      %p300 = scmp.ne.s32.totalorder %s283, %s299
      %p301 = scmp.eq.s32.totalorder %s34, 0
      %p302 = por %p300, %p301
      %s303 = ssub.s32 %s28, %s35
      %p304 = scmp.eq.s32.totalorder %s303, 0
      %s306 = sadd.s32 %s305, 1
      %s307 = scalar_select %p304, %s305, %s306
      %p310 = pneg %p304
      %p311 = scmp.eq.s32.totalorder %s28, 1
      %p312 = por %p310, %p311
      %p313 = scmp.ne.s32.totalorder %s305, %s308
      %p314 = scmp.eq.s32.totalorder %s28, 0
      %p315 = por %p313, %p314
      %p316 = scmp.ne.s32.totalorder %s305, %s308
      %p317 = scmp.eq.s32.totalorder %s33, 1
      %p318 = por %p316, %p317
      %p319 = scmp.ne.s32.totalorder %s308, %s309
      %p320 = scmp.eq.s32.totalorder %s33, 0
      %p321 = por %p319, %p320
      %p322 = scmp.ne.s32.totalorder %s308, %s309
      %p323 = scmp.eq.s32.totalorder %s34, 1
      %p324 = por %p322, %p323
      %p326 = scmp.ne.s32.totalorder %s309, %s325
      %p327 = scmp.eq.s32.totalorder %s34, 0
      %p328 = por %p326, %p327
      %s329 = ssub.s32 %s28, %s35
      %p330 = scmp.eq.s32.totalorder %s329, 0
      %s332 = sadd.s32 %s331, 1
      %s333 = scalar_select %p330, %s331, %s332
      %p336 = pneg %p330
      %p337 = scmp.eq.s32.totalorder %s28, 1
      %p338 = por %p336, %p337
      %p339 = scmp.ne.s32.totalorder %s331, %s334
      %p340 = scmp.eq.s32.totalorder %s28, 0
      %p341 = por %p339, %p340
      %p342 = scmp.ne.s32.totalorder %s331, %s334
      %p343 = scmp.eq.s32.totalorder %s33, 1
      %p344 = por %p342, %p343
      %p345 = scmp.ne.s32.totalorder %s334, %s335
      %p346 = scmp.eq.s32.totalorder %s33, 0
      %p347 = por %p345, %p346
      %p348 = scmp.ne.s32.totalorder %s334, %s335
      %p349 = scmp.eq.s32.totalorder %s34, 1
      %p350 = por %p348, %p349
      %p352 = scmp.ne.s32.totalorder %s335, %s351
      %p353 = scmp.eq.s32.totalorder %s34, 0
      %p354 = por %p352, %p353
      %s355 = ssub.s32 %s28, %s35
      %p356 = scmp.eq.s32.totalorder %s355, 0
      %s358 = sadd.s32 %s357, 1
      %s359 = scalar_select %p356, %s357, %s358
      %p362 = pneg %p356
      %p363 = scmp.eq.s32.totalorder %s28, 1
      %p364 = por %p362, %p363
      %p365 = scmp.ne.s32.totalorder %s357, %s360
      %p366 = scmp.eq.s32.totalorder %s28, 0
      %p367 = por %p365, %p366
      %p368 = scmp.ne.s32.totalorder %s357, %s360
      %p369 = scmp.eq.s32.totalorder %s33, 1
      %p370 = por %p368, %p369
      %p371 = scmp.ne.s32.totalorder %s360, %s361
      %p372 = scmp.eq.s32.totalorder %s33, 0
      %p373 = por %p371, %p372
      %p374 = scmp.ne.s32.totalorder %s360, %s361
      %p375 = scmp.eq.s32.totalorder %s34, 1
      %p376 = por %p374, %p375
      %p378 = scmp.ne.s32.totalorder %s361, %s377
      %p379 = scmp.eq.s32.totalorder %s34, 0
      %p380 = por %p378, %p379
      %p381 = scmp.le.s32.totalorder 1, %s28
      %p382 = scmp.lt.s32.totalorder %s28, 3
      %p383 = pnand %p381, %p382
      %p384 = pneg %p383
      // Predicated region
      $region9: #{tpu_custom_call.1} parent=5 // pred_check
        _
      $region10: #{tpu_custom_call.1} parent=5 // pred_check_branch
        %386 = sbr.rel (%p383) target = $region12
      $region11: #{tpu_custom_call.1} parent=5 // pred_region
        %s387 = ssub.s32 %s28, 1
        // Predicated region
        $region13: #{tpu_custom_call.1} parent=11 // pred_check
          %p388 = pneg %p75
        $region14: #{tpu_custom_call.1} parent=11 // pred_check_branch
          %390 = sbr.rel (%p388) target = $region16
        $region15: #{tpu_custom_call.1} parent=11 // pred_region
          _
        $region16: #{tpu_custom_call.1} parent=11 // pred_fallthru
          _
        // Predicated region
        $region17: #{tpu_custom_call.1} parent=11 // pred_check
          %p391 = pneg %p96
        $region18: #{tpu_custom_call.1} parent=11 // pred_check_branch
          %393 = sbr.rel (%p391) target = $region20
        $region19: #{tpu_custom_call.1} parent=11 // pred_region
          _
        $region20: #{tpu_custom_call.1} parent=11 // pred_fallthru
          _
        // Predicated region
        $region21: #{tpu_custom_call.1} parent=11 // pred_check
          %p394 = pneg %p117
        $region22: #{tpu_custom_call.1} parent=11 // pred_check_branch
          %396 = sbr.rel (%p394) target = $region24
        $region23: #{tpu_custom_call.1} parent=11 // pred_region
          _
        $region24: #{tpu_custom_call.1} parent=11 // pred_fallthru
          _
        // Predicated region
        $region25: #{tpu_custom_call.1} parent=11 // pred_check
          %p397 = pneg %p138
        $region26: #{tpu_custom_call.1} parent=11 // pred_check_branch
          %399 = sbr.rel (%p397) target = $region28
        $region27: #{tpu_custom_call.1} parent=11 // pred_region
          _
        $region28: #{tpu_custom_call.1} parent=11 // pred_fallthru
          _
        // Predicated region
        $region29: #{tpu_custom_call.1} parent=11 // pred_check
          %p400 = pneg %p159
        $region30: #{tpu_custom_call.1} parent=11 // pred_check_branch
          %402 = sbr.rel (%p400) target = $region32
        $region31: #{tpu_custom_call.1} parent=11 // pred_region
          _
        $region32: #{tpu_custom_call.1} parent=11 // pred_fallthru
          _
        // Predicated region
        $region33: #{tpu_custom_call.1} parent=11 // pred_check
          %p403 = pneg %p180
        $region34: #{tpu_custom_call.1} parent=11 // pred_check_branch
          %405 = sbr.rel (%p403) target = $region36
        $region35: #{tpu_custom_call.1} parent=11 // pred_region
          %407 = vsyncadd [#allocation13], 0
          %s408 = sshll.u32 %s6, 4
          %s409 = int_to_ptr.hbm [resolvable:$true] %s408
          %s410 = sshll.u32 [#allocation12], 4
          %s411 = int_to_ptr.vmem [resolvable:$true] %s410
          %416 = dma.hbm_to_vmem [thread:$0]  %s409, 16384, %s411, [#allocation13], 128, 128, 8
        $region36: #{tpu_custom_call.1} parent=11 // pred_fallthru
          _
        // Predicated region
        $region37: #{tpu_custom_call.1} parent=11 // pred_check
          %p417 = pneg %p201
        $region38: #{tpu_custom_call.1} parent=11 // pred_check_branch
          %419 = sbr.rel (%p417) target = $region40
        $region39: #{tpu_custom_call.1} parent=11 // pred_region
          _
        $region40: #{tpu_custom_call.1} parent=11 // pred_fallthru
          _
        // Predicated region
        $region41: #{tpu_custom_call.1} parent=11 // pred_check
          %p420 = pneg %p222
        $region42: #{tpu_custom_call.1} parent=11 // pred_check_branch
          %422 = sbr.rel (%p420) target = $region44
        $region43: #{tpu_custom_call.1} parent=11 // pred_region
          _
        $region44: #{tpu_custom_call.1} parent=11 // pred_fallthru
          _
        // Predicated region
        $region45: #{tpu_custom_call.1} parent=11 // pred_check
          %p423 = pneg %p243
        $region46: #{tpu_custom_call.1} parent=11 // pred_check_branch
          %425 = sbr.rel (%p423) target = $region48
        $region47: #{tpu_custom_call.1} parent=11 // pred_region
          _
        $region48: #{tpu_custom_call.1} parent=11 // pred_fallthru
          _
      $region12: #{tpu_custom_call.1} parent=5 // pred_fallthru
        _
      %p426 = scmp.lt.s32.totalorder %s28, 2
      // Predicated region
      $region49: #{tpu_custom_call.1} parent=5 // pred_check
        %p427 = pneg %p426
      $region50: #{tpu_custom_call.1} parent=5 // pred_check_branch
        %429 = sbr.rel (%p427) target = $region52
      $region51: #{tpu_custom_call.1} parent=5 // pred_region
        // Predicated region
        $region53: #{tpu_custom_call.1} parent=51 // pred_check
          %p430 = pneg %p48
        $region54: #{tpu_custom_call.1} parent=51 // pred_check_branch
          %432 = sbr.rel (%p430) target = $region56
        $region55: #{tpu_custom_call.1} parent=51 // pred_region
          %p433 = scmp.lt.s32.totalorder %s28, 1
          %s434 = scalar_select %p433, %s28, 1
          %s435 = smul.addr %s434, 8
          %s436 = smul.addr %s435, 8
          %s437 = scalar_lea.vmem %s0, %s436
        $region56: #{tpu_custom_call.1} parent=51 // pred_fallthru
          _
      $region52: #{tpu_custom_call.1} parent=5 // pred_fallthru
        _
      %p438 = scmp.le.s32.totalorder 1, %s28
      %p439 = scmp.lt.s32.totalorder %s28, 3
      %p440 = pnand %p438, %p439
      %p441 = pneg %p440
      // Predicated region
      $region57: #{tpu_custom_call.1} parent=5 // pred_check
        _
      $region58: #{tpu_custom_call.1} parent=5 // pred_check_branch
        %443 = sbr.rel (%p440) target = $region60
      $region59: #{tpu_custom_call.1} parent=5 // pred_region
        %s444 = ssub.s32 %s28, 1
        // Predicated region
        $region61: #{tpu_custom_call.1} parent=59 // pred_check
          %p445 = pneg %p180
        $region62: #{tpu_custom_call.1} parent=59 // pred_check_branch
          %447 = sbr.rel (%p445) target = $region64
        $region63: #{tpu_custom_call.1} parent=59 // pred_region
          %449 = dma.done [#allocation13], 16384
        $region64: #{tpu_custom_call.1} parent=59 // pred_fallthru
          _
        %p450 = scmp.lt.s32.totalorder %s33, 1
        %s451 = scalar_select %p450, %s33, 1
        %s452 = smul.addr %s451, 8
        %s453 = smul.addr %s452, 8
        %s454 = scalar_lea.vmem %s0, %s453
        %p455 = pneg %p54
        %p456 = pneg %p51
        %p457 = pneg %p75
        %p458 = pneg %p72
        %p459 = pneg %p96
        %p460 = pneg %p93
        %p461 = pneg %p117
        %p462 = pneg %p114
        %p463 = pneg %p138
        %p464 = pneg %p135
        %p465 = pneg %p159
        %p466 = pneg %p156
        %p467 = pneg %p180
        %p468 = pneg %p177
        %p469 = pneg %p201
        %p470 = pneg %p198
        %p471 = pneg %p222
        %p472 = pneg %p219
        %p473 = pneg %p243
        %p474 = pneg %p240
        %p475 = pneg %p269
        %p476 = pneg %p266
        %s477 = sand.u32 %s256, 1
        %s478 = scalar_lea.sflag [#allocation14], %s477
        %s479 = sand.u32 %s256, 1
        %s480 = smul.addr %s479, 64
        %s481 = scalar_lea.vmem [#allocation15], %s480
        %p482 = pneg %p295
        %p483 = pneg %p292
        %s484 = sand.u32 %s33, 1
        %s485 = scalar_lea.sflag [#allocation17], %s484
        %s486 = sand.u32 %s282, 1
        %s487 = smul.addr %s486, 32
        %s488 = scalar_lea.vmem [#allocation16], %s487
        %p489 = pneg %p321
        %p490 = pneg %p318
        %s491 = sand.u32 %s33, 1
        %s492 = scalar_lea.sflag [#allocation17], %s491
        %s493 = sand.u32 %s308, 1
        %s494 = smul.addr %s493, 32
        %s495 = scalar_lea.vmem [#allocation18], %s494
        %p496 = pneg %p347
        %p497 = pneg %p344
        %p498 = scmp.lt.s32.totalorder %s33, 1
        %s499 = scalar_select %p498, %s33, 1
        %s500 = smul.addr %s499, 8
        %s501 = smul.addr %s500, 8
        %s502 = scalar_lea.vmem %s13, %s501
        %p503 = pneg %p373
        %p504 = pneg %p370
        %p505 = scmp.lt.s32.totalorder %s33, 1
        %s506 = scalar_select %p505, %s33, 1
        %s507 = smul.addr %s506, 16
        %s508 = smul.addr %s507, 8
        %s509 = scalar_lea.vmem %s14, %s508
        %p510 = scmp.lt.s32.totalorder %s33, 1
        %s511 = scalar_select %p510, %s33, 1
        %s512 = smul.addr %s511, 8
        %s513 = smul.addr %s512, 8
        %s514 = scalar_lea.vmem %s0, %s513
        %p515 = scmp.lt.s32.totalorder %s33, 1
        %s516 = scalar_select %p515, %s33, 1
        %s517 = smul.addr %s516, 8
        %s518 = smul.addr %s517, 8
        %s519 = scalar_lea.vmem %s13, %s518
        %p520 = scmp.lt.s32.totalorder %s33, 1
        %s521 = scalar_select %p520, %s33, 1
        %s522 = smul.addr %s521, 16
        %s523 = smul.addr %s522, 8
        %s524 = scalar_lea.vmem %s14, %s523
        %v528 = vld [vmem:[%s514] sm:$0xff]
        %v529 = vld [vmem:[%s514 + $0x8] sm:$0xff]
        %v530 = vld [vmem:[%s514 + $0x10] sm:$0xff]
        %v531 = vld [vmem:[%s514 + $0x18] sm:$0xff]
        %v532 = vld [vmem:[%s514 + $0x20] sm:$0xff]
        %v533 = vld [vmem:[%s514 + $0x28] sm:$0xff]
        %v534 = vld [vmem:[%s514 + $0x30] sm:$0xff]
        %v535 = vld [vmem:[%s514 + $0x38] sm:$0xff]
        %vm536 = vcmask 269312
        %537 = vst.msk [vmem:[#allocation2] sm:$0xff] %vm536, 0.0
        %vm538 = vcmask 539912
        %539 = vst.msk [vmem:[#allocation2 + $0x40] sm:$0xff] %vm538, 0.0
        %548 = vrot.lane.b32.xlu0 %v528, 33
        %v549 = vpop.permute.xlu0 %548
        %550 = vrot.lane.b32.xlu0 %v529, 33
        %v551 = vpop.permute.xlu0 %550
        %552 = vrot.lane.b32.xlu0 %v530, 33
        %v553 = vpop.permute.xlu0 %552
        %554 = vrot.lane.b32.xlu0 %v531, 33
        %v555 = vpop.permute.xlu0 %554
        %556 = vrot.lane.b32.xlu0 %v532, 33
        %v557 = vpop.permute.xlu0 %556
        %558 = vrot.lane.b32.xlu0 %v533, 33
        %v559 = vpop.permute.xlu0 %558
        %560 = vrot.lane.b32.xlu0 %v534, 33
        %v561 = vpop.permute.xlu0 %560
        %562 = vrot.lane.b32.xlu0 %v535, 33
        %v563 = vpop.permute.xlu0 %562
        %v564 = vsel %vm536, %v549, %v551
        %v565 = vsel %vm536, %v551, %v553
        %v566 = vsel %vm536, %v553, %v555
        %v567 = vsel %vm536, %v555, %v557
        %v568 = vsel %vm536, %v557, %v559
        %v569 = vsel %vm536, %v559, %v561
        %v570 = vsel %vm536, %v561, %v563
        %vm580 = vcmask 1047816
        %581 = vst.msk [vmem:[#allocation2] sm:$0xff] %vm580, %v549
        %582 = vst [vmem:[#allocation2 + $0x8] sm:$0xff] %v564
        %583 = vst [vmem:[#allocation2 + $0x10] sm:$0xff] %v565
        %584 = vst [vmem:[#allocation2 + $0x18] sm:$0xff] %v566
        %585 = vst [vmem:[#allocation2 + $0x20] sm:$0xff] %v567
        %586 = vst [vmem:[#allocation2 + $0x28] sm:$0xff] %v568
        %587 = vst [vmem:[#allocation2 + $0x30] sm:$0xff] %v569
        %588 = vst [vmem:[#allocation2 + $0x38] sm:$0xff] %v570
        %589 = vst.msk [vmem:[#allocation2 + $0x40] sm:$0xff] %vm536, %v563
        %v590 = vlaneseq
        %v591 = vand.u32 %v590, 127
        %v592 = vadd.s32 %v591, 128
        %v593 = vadd.s32 %v591, 256
        %v594 = vadd.s32 %v591, 384
        %v595 = vadd.s32 %v591, 512
        %v596 = vadd.s32 %v591, 640
        %v597 = vadd.s32 %v591, 768
        %v598 = vadd.s32 %v591, 896
        %vm599 = vcmp.lt.s32.totalorder %v591, 0
        %v600 = vsub.s32 0, %v591
        %v601 = vsel %vm599, %v600, %v591
        %v602 = vshrl.u32 %v601, 5
        %v603 = vand.u32 %v601, 31
        %v604 = vsub.s32 0, %v603
        %v605 = vsel %vm599, %v604, %v603
        %vm606 = vcmp.lt.s32.totalorder %v592, 0
        %v607 = vsub.s32 0, %v592
        %v608 = vsel %vm606, %v607, %v592
        %v609 = vshrl.u32 %v608, 5
        %v610 = vand.u32 %v608, 31
        %v611 = vsub.s32 0, %v610
        %v612 = vsel %vm606, %v611, %v610
        %vm613 = vcmp.lt.s32.totalorder %v593, 0
        %v614 = vsub.s32 0, %v593
        %v615 = vsel %vm613, %v614, %v593
        %v616 = vshrl.u32 %v615, 5
        %v617 = vand.u32 %v615, 31
        %v618 = vsub.s32 0, %v617
        %v619 = vsel %vm613, %v618, %v617
        %vm620 = vcmp.lt.s32.totalorder %v594, 0
        %v621 = vsub.s32 0, %v594
        %v622 = vsel %vm620, %v621, %v594
        %v623 = vshrl.u32 %v622, 5
        %v624 = vand.u32 %v622, 31
        %v625 = vsub.s32 0, %v624
        %v626 = vsel %vm620, %v625, %v624
        %vm627 = vcmp.lt.s32.totalorder %v595, 0
        %v628 = vsub.s32 0, %v595
        %v629 = vsel %vm627, %v628, %v595
        %v630 = vshrl.u32 %v629, 5
        %v631 = vand.u32 %v629, 31
        %v632 = vsub.s32 0, %v631
        %v633 = vsel %vm627, %v632, %v631
        %vm634 = vcmp.lt.s32.totalorder %v596, 0
        %v635 = vsub.s32 0, %v596
        %v636 = vsel %vm634, %v635, %v596
        %v637 = vshrl.u32 %v636, 5
        %v638 = vand.u32 %v636, 31
        %v639 = vsub.s32 0, %v638
        %v640 = vsel %vm634, %v639, %v638
        %vm641 = vcmp.lt.s32.totalorder %v597, 0
        %v642 = vsub.s32 0, %v597
        %v643 = vsel %vm641, %v642, %v597
        %v644 = vshrl.u32 %v643, 5
        %v645 = vand.u32 %v643, 31
        %v646 = vsub.s32 0, %v645
        %v647 = vsel %vm641, %v646, %v645
        %vm648 = vcmp.lt.s32.totalorder %v598, 0
        %v649 = vsub.s32 0, %v598
        %v650 = vsel %vm648, %v649, %v598
        %v651 = vshrl.u32 %v650, 5
        %v652 = vand.u32 %v650, 31
        %v653 = vsub.s32 0, %v652
        %v654 = vsel %vm648, %v653, %v652
        %vm655 = vcmp.ne.s32.totalorder %v605, 0
        %vm656 = vcmp.ne.s32.totalorder %v612, 0
        %vm657 = vcmp.ne.s32.totalorder %v619, 0
        %vm658 = vcmp.ne.s32.totalorder %v626, 0
        %vm659 = vcmp.ne.s32.totalorder %v633, 0
        %vm660 = vcmp.ne.s32.totalorder %v640, 0
        %vm661 = vcmp.ne.s32.totalorder %v647, 0
        %vm662 = vcmp.ne.s32.totalorder %v654, 0
        %vm663 = vcmp.lt.s32.totalorder %v605, 0
        %vm664 = vcmp.lt.s32.totalorder %v612, 0
        %vm665 = vcmp.lt.s32.totalorder %v619, 0
        %vm666 = vcmp.lt.s32.totalorder %v626, 0
        %vm667 = vcmp.lt.s32.totalorder %v633, 0
        %vm668 = vcmp.lt.s32.totalorder %v640, 0
        %vm669 = vcmp.lt.s32.totalorder %v647, 0
        %vm670 = vcmp.lt.s32.totalorder %v654, 0
        %vm671 = vmand %vm663, %vm655
        %vm672 = vmand %vm664, %vm656
        %vm673 = vmand %vm665, %vm657
        %vm674 = vmand %vm666, %vm658
        %vm675 = vmand %vm667, %vm659
        %vm676 = vmand %vm668, %vm660
        %vm677 = vmand %vm669, %vm661
        %vm678 = vmand %vm670, %vm662
        %v679 = vadd.s32 %v605, 32
        %v680 = vadd.s32 %v612, 32
        %v681 = vadd.s32 %v619, 32
        %v682 = vadd.s32 %v626, 32
        %v683 = vadd.s32 %v633, 32
        %v684 = vadd.s32 %v640, 32
        %v685 = vadd.s32 %v647, 32
        %v686 = vadd.s32 %v654, 32
        %v687 = vsel %vm671, %v679, %v605
        %v688 = vsel %vm672, %v680, %v612
        %v689 = vsel %vm673, %v681, %v619
        %v690 = vsel %vm674, %v682, %v626
        %v691 = vsel %vm675, %v683, %v633
        %v692 = vsel %vm676, %v684, %v640
        %v693 = vsel %vm677, %v685, %v647
        %v694 = vsel %vm678, %v686, %v654
        %vm695 = vcmp.ge.s32.totalorder %v687, 1
        %vm696 = vcmp.ge.s32.totalorder %v688, 1
        %vm697 = vcmp.ge.s32.totalorder %v689, 1
        %vm698 = vcmp.ge.s32.totalorder %v690, 1
        %vm699 = vcmp.ge.s32.totalorder %v691, 1
        %vm700 = vcmp.ge.s32.totalorder %v692, 1
        %vm701 = vcmp.ge.s32.totalorder %v693, 1
        %vm702 = vcmp.ge.s32.totalorder %v694, 1
        %vm703 = vcmp.le.s32.totalorder %v687, 30
        %vm704 = vcmp.le.s32.totalorder %v688, 30
        %vm705 = vcmp.le.s32.totalorder %v689, 30
        %vm706 = vcmp.le.s32.totalorder %v690, 30
        %vm707 = vcmp.le.s32.totalorder %v691, 30
        %vm708 = vcmp.le.s32.totalorder %v692, 30
        %vm709 = vcmp.le.s32.totalorder %v693, 30
        %vm710 = vcmp.le.s32.totalorder %v694, 30
        %v711 = vld [vmem:[#allocation2] sm:$0xff]
        %v712 = vld [vmem:[#allocation2 + $0x8] sm:$0xff]
        %v713 = vld [vmem:[#allocation2 + $0x10] sm:$0xff]
        %v714 = vld [vmem:[#allocation2 + $0x18] sm:$0xff]
        %v715 = vld [vmem:[#allocation2 + $0x20] sm:$0xff]
        %v716 = vld [vmem:[#allocation2 + $0x28] sm:$0xff]
        %v717 = vld [vmem:[#allocation2 + $0x30] sm:$0xff]
        %v718 = vld [vmem:[#allocation2 + $0x38] sm:$0xff]
        %v719 = vsel %vm695, %v711, 0.0
        %v720 = vsel %vm696, %v712, 0.0
        %v721 = vsel %vm697, %v713, 0.0
        %v722 = vsel %vm698, %v714, 0.0
        %v723 = vsel %vm699, %v715, 0.0
        %v724 = vsel %vm700, %v716, 0.0
        %v725 = vsel %vm701, %v717, 0.0
        %v726 = vsel %vm702, %v718, 0.0
        %727 = vst [vmem:[#allocation7] sm:$0xff] %v719
        %728 = vst [vmem:[#allocation7 + $0x8] sm:$0xff] %v720
        %729 = vst [vmem:[#allocation7 + $0x10] sm:$0xff] %v721
        %730 = vst [vmem:[#allocation7 + $0x18] sm:$0xff] %v722
        %731 = vst [vmem:[#allocation7 + $0x20] sm:$0xff] %v723
        %732 = vst [vmem:[#allocation7 + $0x28] sm:$0xff] %v724
        %733 = vst [vmem:[#allocation7 + $0x30] sm:$0xff] %v725
        %734 = vst [vmem:[#allocation7 + $0x38] sm:$0xff] %v726
        %v735 = vld [vmem:[#allocation2] sm:$0xff]
        %v736 = vld [vmem:[#allocation2 + $0x8] sm:$0xff]
        %v737 = vld [vmem:[#allocation2 + $0x10] sm:$0xff]
        %v738 = vld [vmem:[#allocation2 + $0x18] sm:$0xff]
        %v739 = vld [vmem:[#allocation2 + $0x20] sm:$0xff]
        %v740 = vld [vmem:[#allocation2 + $0x28] sm:$0xff]
        %v741 = vld [vmem:[#allocation2 + $0x30] sm:$0xff]
        %v742 = vld [vmem:[#allocation2 + $0x38] sm:$0xff]
        %v743 = vld [vmem:[#allocation2 + $0x40] sm:$0xff]
        %753 = vrot.lane.b32.xlu0 %v735, 127
        %v754 = vpop.permute.xlu0 %753
        %755 = vrot.lane.b32.xlu0 %v736, 127
        %v756 = vpop.permute.xlu0 %755
        %757 = vrot.lane.b32.xlu0 %v737, 127
        %v758 = vpop.permute.xlu0 %757
        %759 = vrot.lane.b32.xlu0 %v738, 127
        %v760 = vpop.permute.xlu0 %759
        %761 = vrot.lane.b32.xlu0 %v739, 127
        %v762 = vpop.permute.xlu0 %761
        %763 = vrot.lane.b32.xlu0 %v740, 127
        %v764 = vpop.permute.xlu0 %763
        %765 = vrot.lane.b32.xlu0 %v741, 127
        %v766 = vpop.permute.xlu0 %765
        %767 = vrot.lane.b32.xlu0 %v742, 127
        %v768 = vpop.permute.xlu0 %767
        %769 = vrot.lane.b32.xlu0 %v743, 127
        %v770 = vpop.permute.xlu0 %769
        %vm771 = vcmask 1039360
        %v772 = vsel %vm771, %v754, %v756
        %v773 = vsel %vm771, %v756, %v758
        %v774 = vsel %vm771, %v758, %v760
        %v775 = vsel %vm771, %v760, %v762
        %v776 = vsel %vm771, %v762, %v764
        %v777 = vsel %vm771, %v764, %v766
        %v778 = vsel %vm771, %v766, %v768
        %v779 = vsel %vm771, %v768, %v770
        %788 = vst [vmem:[#allocation7 + $0x40] sm:$0xff] %v772
        %789 = vst [vmem:[#allocation7 + $0x48] sm:$0xff] %v773
        %790 = vst [vmem:[#allocation7 + $0x50] sm:$0xff] %v774
        %791 = vst [vmem:[#allocation7 + $0x58] sm:$0xff] %v775
        %792 = vst [vmem:[#allocation7 + $0x60] sm:$0xff] %v776
        %793 = vst [vmem:[#allocation7 + $0x68] sm:$0xff] %v777
        %794 = vst [vmem:[#allocation7 + $0x70] sm:$0xff] %v778
        %795 = vst [vmem:[#allocation7 + $0x78] sm:$0xff] %v779
        %v796 = vld [vmem:[#allocation2] sm:$0xff]
        %v797 = vld [vmem:[#allocation2 + $0x8] sm:$0xff]
        %v798 = vld [vmem:[#allocation2 + $0x10] sm:$0xff]
        %v799 = vld [vmem:[#allocation2 + $0x18] sm:$0xff]
        %v800 = vld [vmem:[#allocation2 + $0x20] sm:$0xff]
        %v801 = vld [vmem:[#allocation2 + $0x28] sm:$0xff]
        %v802 = vld [vmem:[#allocation2 + $0x30] sm:$0xff]
        %v803 = vld [vmem:[#allocation2 + $0x38] sm:$0xff]
        %v804 = vld [vmem:[#allocation2 + $0x40] sm:$0xff]
        %814 = vrot.lane.b32.xlu0 %v796, 126
        %v815 = vpop.permute.xlu0 %814
        %816 = vrot.lane.b32.xlu0 %v797, 126
        %v817 = vpop.permute.xlu0 %816
        %818 = vrot.lane.b32.xlu0 %v798, 126
        %v819 = vpop.permute.xlu0 %818
        %820 = vrot.lane.b32.xlu0 %v799, 126
        %v821 = vpop.permute.xlu0 %820
        %822 = vrot.lane.b32.xlu0 %v800, 126
        %v823 = vpop.permute.xlu0 %822
        %824 = vrot.lane.b32.xlu0 %v801, 126
        %v825 = vpop.permute.xlu0 %824
        %826 = vrot.lane.b32.xlu0 %v802, 126
        %v827 = vpop.permute.xlu0 %826
        %828 = vrot.lane.b32.xlu0 %v803, 126
        %v829 = vpop.permute.xlu0 %828
        %830 = vrot.lane.b32.xlu0 %v804, 126
        %v831 = vpop.permute.xlu0 %830
        %vm832 = vcmask 1031168
        %v833 = vsel %vm832, %v815, %v817
        %v834 = vsel %vm832, %v817, %v819
        %v835 = vsel %vm832, %v819, %v821
        %v836 = vsel %vm832, %v821, %v823
        %v837 = vsel %vm832, %v823, %v825
        %v838 = vsel %vm832, %v825, %v827
        %v839 = vsel %vm832, %v827, %v829
        %v840 = vsel %vm832, %v829, %v831
        %v849 = vsel %vm703, %v833, 0.0
        %v850 = vsel %vm704, %v834, 0.0
        %v851 = vsel %vm705, %v835, 0.0
        %v852 = vsel %vm706, %v836, 0.0
        %v853 = vsel %vm707, %v837, 0.0
        %v854 = vsel %vm708, %v838, 0.0
        %v855 = vsel %vm709, %v839, 0.0
        %v856 = vsel %vm710, %v840, 0.0
        %857 = vst [vmem:[#allocation7 + $0x80] sm:$0xff] %v849
        %858 = vst [vmem:[#allocation7 + $0x88] sm:$0xff] %v850
        %859 = vst [vmem:[#allocation7 + $0x90] sm:$0xff] %v851
        %860 = vst [vmem:[#allocation7 + $0x98] sm:$0xff] %v852
        %861 = vst [vmem:[#allocation7 + $0xa0] sm:$0xff] %v853
        %862 = vst [vmem:[#allocation7 + $0xa8] sm:$0xff] %v854
        %863 = vst [vmem:[#allocation7 + $0xb0] sm:$0xff] %v855
        %864 = vst [vmem:[#allocation7 + $0xb8] sm:$0xff] %v856
        %v865 = vld [vmem:[#allocation2] sm:$0xff]
        %v866 = vld [vmem:[#allocation2 + $0x8] sm:$0xff]
        %v867 = vld [vmem:[#allocation2 + $0x10] sm:$0xff]
        %v868 = vld [vmem:[#allocation2 + $0x18] sm:$0xff]
        %v869 = vld [vmem:[#allocation2 + $0x20] sm:$0xff]
        %v870 = vld [vmem:[#allocation2 + $0x28] sm:$0xff]
        %v871 = vld [vmem:[#allocation2 + $0x30] sm:$0xff]
        %v872 = vld [vmem:[#allocation2 + $0x38] sm:$0xff]
        %v873 = vld [vmem:[#allocation2 + $0x40] sm:$0xff]
        %883 = vrot.lane.b32.xlu0 %v865, 96
        %v884 = vpop.permute.xlu0 %883
        %885 = vrot.lane.b32.xlu0 %v866, 96
        %v886 = vpop.permute.xlu0 %885
        %887 = vrot.lane.b32.xlu0 %v867, 96
        %v888 = vpop.permute.xlu0 %887
        %889 = vrot.lane.b32.xlu0 %v868, 96
        %v890 = vpop.permute.xlu0 %889
        %891 = vrot.lane.b32.xlu0 %v869, 96
        %v892 = vpop.permute.xlu0 %891
        %893 = vrot.lane.b32.xlu0 %v870, 96
        %v894 = vpop.permute.xlu0 %893
        %895 = vrot.lane.b32.xlu0 %v871, 96
        %v896 = vpop.permute.xlu0 %895
        %897 = vrot.lane.b32.xlu0 %v872, 96
        %v898 = vpop.permute.xlu0 %897
        %899 = vrot.lane.b32.xlu0 %v873, 96
        %v900 = vpop.permute.xlu0 %899
        %vm901 = vcmask 785408
        %v902 = vsel %vm901, %v884, %v886
        %v903 = vsel %vm901, %v886, %v888
        %v904 = vsel %vm901, %v888, %v890
        %v905 = vsel %vm901, %v890, %v892
        %v906 = vsel %vm901, %v892, %v894
        %v907 = vsel %vm901, %v894, %v896
        %v908 = vsel %vm901, %v896, %v898
        %v909 = vsel %vm901, %v898, %v900
        %v918 = vsel %vm695, %v902, 0.0
        %v919 = vsel %vm696, %v903, 0.0
        %v920 = vsel %vm697, %v904, 0.0
        %v921 = vsel %vm698, %v905, 0.0
        %v922 = vsel %vm699, %v906, 0.0
        %v923 = vsel %vm700, %v907, 0.0
        %v924 = vsel %vm701, %v908, 0.0
        %v925 = vsel %vm702, %v909, 0.0
        %926 = vst [vmem:[#allocation7 + $0xc0] sm:$0xff] %v918
        %927 = vst [vmem:[#allocation7 + $0xc8] sm:$0xff] %v919
        %928 = vst [vmem:[#allocation7 + $0xd0] sm:$0xff] %v920
        %929 = vst [vmem:[#allocation7 + $0xd8] sm:$0xff] %v921
        %930 = vst [vmem:[#allocation7 + $0xe0] sm:$0xff] %v922
        %931 = vst [vmem:[#allocation7 + $0xe8] sm:$0xff] %v923
        %932 = vst [vmem:[#allocation7 + $0xf0] sm:$0xff] %v924
        %933 = vst [vmem:[#allocation7 + $0xf8] sm:$0xff] %v925
        %v934 = vld [vmem:[#allocation2] sm:$0xff]
        %v935 = vld [vmem:[#allocation2 + $0x8] sm:$0xff]
        %v936 = vld [vmem:[#allocation2 + $0x10] sm:$0xff]
        %v937 = vld [vmem:[#allocation2 + $0x18] sm:$0xff]
        %v938 = vld [vmem:[#allocation2 + $0x20] sm:$0xff]
        %v939 = vld [vmem:[#allocation2 + $0x28] sm:$0xff]
        %v940 = vld [vmem:[#allocation2 + $0x30] sm:$0xff]
        %v941 = vld [vmem:[#allocation2 + $0x38] sm:$0xff]
        %v942 = vld [vmem:[#allocation2 + $0x40] sm:$0xff]
        %952 = vrot.lane.b32.xlu0 %v934, 95
        %v953 = vpop.permute.xlu0 %952
        %954 = vrot.lane.b32.xlu0 %v935, 95
        %v955 = vpop.permute.xlu0 %954
        %956 = vrot.lane.b32.xlu0 %v936, 95
        %v957 = vpop.permute.xlu0 %956
        %958 = vrot.lane.b32.xlu0 %v937, 95
        %v959 = vpop.permute.xlu0 %958
        %960 = vrot.lane.b32.xlu0 %v938, 95
        %v961 = vpop.permute.xlu0 %960
        %962 = vrot.lane.b32.xlu0 %v939, 95
        %v963 = vpop.permute.xlu0 %962
        %964 = vrot.lane.b32.xlu0 %v940, 95
        %v965 = vpop.permute.xlu0 %964
        %966 = vrot.lane.b32.xlu0 %v941, 95
        %v967 = vpop.permute.xlu0 %966
        %968 = vrot.lane.b32.xlu0 %v942, 95
        %v969 = vpop.permute.xlu0 %968
        %vm970 = vcmask 777216
        %v971 = vsel %vm970, %v953, %v955
        %v972 = vsel %vm970, %v955, %v957
        %v973 = vsel %vm970, %v957, %v959
        %v974 = vsel %vm970, %v959, %v961
        %v975 = vsel %vm970, %v961, %v963
        %v976 = vsel %vm970, %v963, %v965
        %v977 = vsel %vm970, %v965, %v967
        %v978 = vsel %vm970, %v967, %v969
        %987 = vst [vmem:[#allocation7 + $0x100] sm:$0xff] %v971
        %988 = vst [vmem:[#allocation7 + $0x108] sm:$0xff] %v972
        %989 = vst [vmem:[#allocation7 + $0x110] sm:$0xff] %v973
        %990 = vst [vmem:[#allocation7 + $0x118] sm:$0xff] %v974
        %991 = vst [vmem:[#allocation7 + $0x120] sm:$0xff] %v975
        %992 = vst [vmem:[#allocation7 + $0x128] sm:$0xff] %v976
        %993 = vst [vmem:[#allocation7 + $0x130] sm:$0xff] %v977
        %994 = vst [vmem:[#allocation7 + $0x138] sm:$0xff] %v978
        %v995 = vld [vmem:[#allocation2] sm:$0xff]
        %v996 = vld [vmem:[#allocation2 + $0x8] sm:$0xff]
        %v997 = vld [vmem:[#allocation2 + $0x10] sm:$0xff]
        %v998 = vld [vmem:[#allocation2 + $0x18] sm:$0xff]
        %v999 = vld [vmem:[#allocation2 + $0x20] sm:$0xff]
        %v1000 = vld [vmem:[#allocation2 + $0x28] sm:$0xff]
        %v1001 = vld [vmem:[#allocation2 + $0x30] sm:$0xff]
        %v1002 = vld [vmem:[#allocation2 + $0x38] sm:$0xff]
        %v1003 = vld [vmem:[#allocation2 + $0x40] sm:$0xff]
        %1013 = vrot.lane.b32.xlu0 %v995, 94
        %v1014 = vpop.permute.xlu0 %1013
        %1015 = vrot.lane.b32.xlu0 %v996, 94
        %v1016 = vpop.permute.xlu0 %1015
        %1017 = vrot.lane.b32.xlu0 %v997, 94
        %v1018 = vpop.permute.xlu0 %1017
        %1019 = vrot.lane.b32.xlu0 %v998, 94
        %v1020 = vpop.permute.xlu0 %1019
        %1021 = vrot.lane.b32.xlu0 %v999, 94
        %v1022 = vpop.permute.xlu0 %1021
        %1023 = vrot.lane.b32.xlu0 %v1000, 94
        %v1024 = vpop.permute.xlu0 %1023
        %1025 = vrot.lane.b32.xlu0 %v1001, 94
        %v1026 = vpop.permute.xlu0 %1025
        %1027 = vrot.lane.b32.xlu0 %v1002, 94
        %v1028 = vpop.permute.xlu0 %1027
        %1029 = vrot.lane.b32.xlu0 %v1003, 94
        %v1030 = vpop.permute.xlu0 %1029
        %vm1031 = vcmask 769024
        %v1032 = vsel %vm1031, %v1014, %v1016
        %v1033 = vsel %vm1031, %v1016, %v1018
        %v1034 = vsel %vm1031, %v1018, %v1020
        %v1035 = vsel %vm1031, %v1020, %v1022
        %v1036 = vsel %vm1031, %v1022, %v1024
        %v1037 = vsel %vm1031, %v1024, %v1026
        %v1038 = vsel %vm1031, %v1026, %v1028
        %v1039 = vsel %vm1031, %v1028, %v1030
        %v1048 = vsel %vm703, %v1032, 0.0
        %v1049 = vsel %vm704, %v1033, 0.0
        %v1050 = vsel %vm705, %v1034, 0.0
        %v1051 = vsel %vm706, %v1035, 0.0
        %v1052 = vsel %vm707, %v1036, 0.0
        %v1053 = vsel %vm708, %v1037, 0.0
        %v1054 = vsel %vm709, %v1038, 0.0
        %v1055 = vsel %vm710, %v1039, 0.0
        %1056 = vst [vmem:[#allocation7 + $0x140] sm:$0xff] %v1048
        %1057 = vst [vmem:[#allocation7 + $0x148] sm:$0xff] %v1049
        %1058 = vst [vmem:[#allocation7 + $0x150] sm:$0xff] %v1050
        %1059 = vst [vmem:[#allocation7 + $0x158] sm:$0xff] %v1051
        %1060 = vst [vmem:[#allocation7 + $0x160] sm:$0xff] %v1052
        %1061 = vst [vmem:[#allocation7 + $0x168] sm:$0xff] %v1053
        %1062 = vst [vmem:[#allocation7 + $0x170] sm:$0xff] %v1054
        %1063 = vst [vmem:[#allocation7 + $0x178] sm:$0xff] %v1055
        %v1064 = vld [vmem:[#allocation2] sm:$0xff]
        %v1065 = vld [vmem:[#allocation2 + $0x8] sm:$0xff]
        %v1066 = vld [vmem:[#allocation2 + $0x10] sm:$0xff]
        %v1067 = vld [vmem:[#allocation2 + $0x18] sm:$0xff]
        %v1068 = vld [vmem:[#allocation2 + $0x20] sm:$0xff]
        %v1069 = vld [vmem:[#allocation2 + $0x28] sm:$0xff]
        %v1070 = vld [vmem:[#allocation2 + $0x30] sm:$0xff]
        %v1071 = vld [vmem:[#allocation2 + $0x38] sm:$0xff]
        %v1072 = vld [vmem:[#allocation2 + $0x40] sm:$0xff]
        %1082 = vrot.lane.b32.xlu0 %v1064, 64
        %v1083 = vpop.permute.xlu0 %1082
        %1084 = vrot.lane.b32.xlu0 %v1065, 64
        %v1085 = vpop.permute.xlu0 %1084
        %1086 = vrot.lane.b32.xlu0 %v1066, 64
        %v1087 = vpop.permute.xlu0 %1086
        %1088 = vrot.lane.b32.xlu0 %v1067, 64
        %v1089 = vpop.permute.xlu0 %1088
        %1090 = vrot.lane.b32.xlu0 %v1068, 64
        %v1091 = vpop.permute.xlu0 %1090
        %1092 = vrot.lane.b32.xlu0 %v1069, 64
        %v1093 = vpop.permute.xlu0 %1092
        %1094 = vrot.lane.b32.xlu0 %v1070, 64
        %v1095 = vpop.permute.xlu0 %1094
        %1096 = vrot.lane.b32.xlu0 %v1071, 64
        %v1097 = vpop.permute.xlu0 %1096
        %1098 = vrot.lane.b32.xlu0 %v1072, 64
        %v1099 = vpop.permute.xlu0 %1098
        %vm1100 = vcmask 523264
        %v1101 = vsel %vm1100, %v1083, %v1085
        %v1102 = vsel %vm1100, %v1085, %v1087
        %v1103 = vsel %vm1100, %v1087, %v1089
        %v1104 = vsel %vm1100, %v1089, %v1091
        %v1105 = vsel %vm1100, %v1091, %v1093
        %v1106 = vsel %vm1100, %v1093, %v1095
        %v1107 = vsel %vm1100, %v1095, %v1097
        %v1108 = vsel %vm1100, %v1097, %v1099
        %v1117 = vsel %vm695, %v1101, 0.0
        %v1118 = vsel %vm696, %v1102, 0.0
        %v1119 = vsel %vm697, %v1103, 0.0
        %v1120 = vsel %vm698, %v1104, 0.0
        %v1121 = vsel %vm699, %v1105, 0.0
        %v1122 = vsel %vm700, %v1106, 0.0
        %v1123 = vsel %vm701, %v1107, 0.0
        %v1124 = vsel %vm702, %v1108, 0.0
        %1125 = vst [vmem:[#allocation7 + $0x180] sm:$0xff] %v1117
        %1126 = vst [vmem:[#allocation7 + $0x188] sm:$0xff] %v1118
        %1127 = vst [vmem:[#allocation7 + $0x190] sm:$0xff] %v1119
        %1128 = vst [vmem:[#allocation7 + $0x198] sm:$0xff] %v1120
        %1129 = vst [vmem:[#allocation7 + $0x1a0] sm:$0xff] %v1121
        %1130 = vst [vmem:[#allocation7 + $0x1a8] sm:$0xff] %v1122
        %1131 = vst [vmem:[#allocation7 + $0x1b0] sm:$0xff] %v1123
        %1132 = vst [vmem:[#allocation7 + $0x1b8] sm:$0xff] %v1124
        %v1133 = vld [vmem:[#allocation2] sm:$0xff]
        %v1134 = vld [vmem:[#allocation2 + $0x8] sm:$0xff]
        %v1135 = vld [vmem:[#allocation2 + $0x10] sm:$0xff]
        %v1136 = vld [vmem:[#allocation2 + $0x18] sm:$0xff]
        %v1137 = vld [vmem:[#allocation2 + $0x20] sm:$0xff]
        %v1138 = vld [vmem:[#allocation2 + $0x28] sm:$0xff]
        %v1139 = vld [vmem:[#allocation2 + $0x30] sm:$0xff]
        %v1140 = vld [vmem:[#allocation2 + $0x38] sm:$0xff]
        %v1141 = vld [vmem:[#allocation2 + $0x40] sm:$0xff]
        %1151 = vrot.lane.b32.xlu0 %v1133, 63
        %v1152 = vpop.permute.xlu0 %1151
        %1153 = vrot.lane.b32.xlu0 %v1134, 63
        %v1154 = vpop.permute.xlu0 %1153
        %1155 = vrot.lane.b32.xlu0 %v1135, 63
        %v1156 = vpop.permute.xlu0 %1155
        %1157 = vrot.lane.b32.xlu0 %v1136, 63
        %v1158 = vpop.permute.xlu0 %1157
        %1159 = vrot.lane.b32.xlu0 %v1137, 63
        %v1160 = vpop.permute.xlu0 %1159
        %1161 = vrot.lane.b32.xlu0 %v1138, 63
        %v1162 = vpop.permute.xlu0 %1161
        %1163 = vrot.lane.b32.xlu0 %v1139, 63
        %v1164 = vpop.permute.xlu0 %1163
        %1165 = vrot.lane.b32.xlu0 %v1140, 63
        %v1166 = vpop.permute.xlu0 %1165
        %1167 = vrot.lane.b32.xlu0 %v1141, 63
        %v1168 = vpop.permute.xlu0 %1167
        %vm1169 = vcmask 515072
        %v1170 = vsel %vm1169, %v1152, %v1154
        %v1171 = vsel %vm1169, %v1154, %v1156
        %v1172 = vsel %vm1169, %v1156, %v1158
        %v1173 = vsel %vm1169, %v1158, %v1160
        %v1174 = vsel %vm1169, %v1160, %v1162
        %v1175 = vsel %vm1169, %v1162, %v1164
        %v1176 = vsel %vm1169, %v1164, %v1166
        %v1177 = vsel %vm1169, %v1166, %v1168
        %1186 = vst [vmem:[#allocation7 + $0x1c0] sm:$0xff] %v1170
        %1187 = vst [vmem:[#allocation7 + $0x1c8] sm:$0xff] %v1171
        %1188 = vst [vmem:[#allocation7 + $0x1d0] sm:$0xff] %v1172
        %1189 = vst [vmem:[#allocation7 + $0x1d8] sm:$0xff] %v1173
        %1190 = vst [vmem:[#allocation7 + $0x1e0] sm:$0xff] %v1174
        %1191 = vst [vmem:[#allocation7 + $0x1e8] sm:$0xff] %v1175
        %1192 = vst [vmem:[#allocation7 + $0x1f0] sm:$0xff] %v1176
        %1193 = vst [vmem:[#allocation7 + $0x1f8] sm:$0xff] %v1177
        %v1194 = vld [vmem:[#allocation2] sm:$0xff]
        %v1195 = vld [vmem:[#allocation2 + $0x8] sm:$0xff]
        %v1196 = vld [vmem:[#allocation2 + $0x10] sm:$0xff]
        %v1197 = vld [vmem:[#allocation2 + $0x18] sm:$0xff]
        %v1198 = vld [vmem:[#allocation2 + $0x20] sm:$0xff]
        %v1199 = vld [vmem:[#allocation2 + $0x28] sm:$0xff]
        %v1200 = vld [vmem:[#allocation2 + $0x30] sm:$0xff]
        %v1201 = vld [vmem:[#allocation2 + $0x38] sm:$0xff]
        %v1202 = vld [vmem:[#allocation2 + $0x40] sm:$0xff]
        %1212 = vrot.lane.b32.xlu0 %v1194, 62
        %v1213 = vpop.permute.xlu0 %1212
        %1214 = vrot.lane.b32.xlu0 %v1195, 62
        %v1215 = vpop.permute.xlu0 %1214
        %1216 = vrot.lane.b32.xlu0 %v1196, 62
        %v1217 = vpop.permute.xlu0 %1216
        %1218 = vrot.lane.b32.xlu0 %v1197, 62
        %v1219 = vpop.permute.xlu0 %1218
        %1220 = vrot.lane.b32.xlu0 %v1198, 62
        %v1221 = vpop.permute.xlu0 %1220
        %1222 = vrot.lane.b32.xlu0 %v1199, 62
        %v1223 = vpop.permute.xlu0 %1222
        %1224 = vrot.lane.b32.xlu0 %v1200, 62
        %v1225 = vpop.permute.xlu0 %1224
        %1226 = vrot.lane.b32.xlu0 %v1201, 62
        %v1227 = vpop.permute.xlu0 %1226
        %1228 = vrot.lane.b32.xlu0 %v1202, 62
        %v1229 = vpop.permute.xlu0 %1228
        %vm1230 = vcmask 506880
        %v1231 = vsel %vm1230, %v1213, %v1215
        %v1232 = vsel %vm1230, %v1215, %v1217
        %v1233 = vsel %vm1230, %v1217, %v1219
        %v1234 = vsel %vm1230, %v1219, %v1221
        %v1235 = vsel %vm1230, %v1221, %v1223
        %v1236 = vsel %vm1230, %v1223, %v1225
        %v1237 = vsel %vm1230, %v1225, %v1227
        %v1238 = vsel %vm1230, %v1227, %v1229
        %v1247 = vsel %vm703, %v1231, 0.0
        %v1248 = vsel %vm704, %v1232, 0.0
        %v1249 = vsel %vm705, %v1233, 0.0
        %v1250 = vsel %vm706, %v1234, 0.0
        %v1251 = vsel %vm707, %v1235, 0.0
        %v1252 = vsel %vm708, %v1236, 0.0
        %v1253 = vsel %vm709, %v1237, 0.0
        %v1254 = vsel %vm710, %v1238, 0.0
        %1255 = vst [vmem:[#allocation7 + $0x200] sm:$0xff] %v1247
        %1256 = vst [vmem:[#allocation7 + $0x208] sm:$0xff] %v1248
        %1257 = vst [vmem:[#allocation7 + $0x210] sm:$0xff] %v1249
        %1258 = vst [vmem:[#allocation7 + $0x218] sm:$0xff] %v1250
        %1259 = vst [vmem:[#allocation7 + $0x220] sm:$0xff] %v1251
        %1260 = vst [vmem:[#allocation7 + $0x228] sm:$0xff] %v1252
        %1261 = vst [vmem:[#allocation7 + $0x230] sm:$0xff] %v1253
        %1262 = vst [vmem:[#allocation7 + $0x238] sm:$0xff] %v1254
        %v1263 = vld [vmem:[#allocation7] sm:$0xff]
        %v1264 = vld [vmem:[#allocation7 + $0x8] sm:$0xff]
        %v1265 = vld [vmem:[#allocation7 + $0x10] sm:$0xff]
        %v1266 = vld [vmem:[#allocation7 + $0x18] sm:$0xff]
        %v1267 = vld [vmem:[#allocation7 + $0x20] sm:$0xff]
        %v1268 = vld [vmem:[#allocation7 + $0x28] sm:$0xff]
        %v1269 = vld [vmem:[#allocation7 + $0x30] sm:$0xff]
        %v1270 = vld [vmem:[#allocation7 + $0x38] sm:$0xff]
        %v1271 = vld [vmem:[#allocation7 + $0x40] sm:$0xff]
        %v1272 = vld [vmem:[#allocation7 + $0x48] sm:$0xff]
        %v1273 = vld [vmem:[#allocation7 + $0x50] sm:$0xff]
        %v1274 = vld [vmem:[#allocation7 + $0x58] sm:$0xff]
        %v1275 = vld [vmem:[#allocation7 + $0x60] sm:$0xff]
        %v1276 = vld [vmem:[#allocation7 + $0x68] sm:$0xff]
        %v1277 = vld [vmem:[#allocation7 + $0x70] sm:$0xff]
        %v1278 = vld [vmem:[#allocation7 + $0x78] sm:$0xff]
        %v1279 = vld [vmem:[#allocation7 + $0x80] sm:$0xff]
        %v1280 = vld [vmem:[#allocation7 + $0x88] sm:$0xff]
        %v1281 = vld [vmem:[#allocation7 + $0x90] sm:$0xff]
        %v1282 = vld [vmem:[#allocation7 + $0x98] sm:$0xff]
        %v1283 = vld [vmem:[#allocation7 + $0xa0] sm:$0xff]
        %v1284 = vld [vmem:[#allocation7 + $0xa8] sm:$0xff]
        %v1285 = vld [vmem:[#allocation7 + $0xb0] sm:$0xff]
        %v1286 = vld [vmem:[#allocation7 + $0xb8] sm:$0xff]
        %v1287 = vld [vmem:[#allocation7 + $0xc0] sm:$0xff]
        %v1288 = vld [vmem:[#allocation7 + $0xc8] sm:$0xff]
        %v1289 = vld [vmem:[#allocation7 + $0xd0] sm:$0xff]
        %v1290 = vld [vmem:[#allocation7 + $0xd8] sm:$0xff]
        %v1291 = vld [vmem:[#allocation7 + $0xe0] sm:$0xff]
        %v1292 = vld [vmem:[#allocation7 + $0xe8] sm:$0xff]
        %v1293 = vld [vmem:[#allocation7 + $0xf0] sm:$0xff]
        %v1294 = vld [vmem:[#allocation7 + $0xf8] sm:$0xff]
        %v1295 = vld [vmem:[#allocation7 + $0x100] sm:$0xff]
        %v1296 = vld [vmem:[#allocation7 + $0x108] sm:$0xff]
        %v1297 = vld [vmem:[#allocation7 + $0x110] sm:$0xff]
        %v1298 = vld [vmem:[#allocation7 + $0x118] sm:$0xff]
        %v1299 = vld [vmem:[#allocation7 + $0x120] sm:$0xff]
        %v1300 = vld [vmem:[#allocation7 + $0x128] sm:$0xff]
        %v1301 = vld [vmem:[#allocation7 + $0x130] sm:$0xff]
        %v1302 = vld [vmem:[#allocation7 + $0x138] sm:$0xff]
        %v1303 = vld [vmem:[#allocation7 + $0x140] sm:$0xff]
        %v1304 = vld [vmem:[#allocation7 + $0x148] sm:$0xff]
        %v1305 = vld [vmem:[#allocation7 + $0x150] sm:$0xff]
        %v1306 = vld [vmem:[#allocation7 + $0x158] sm:$0xff]
        %v1307 = vld [vmem:[#allocation7 + $0x160] sm:$0xff]
        %v1308 = vld [vmem:[#allocation7 + $0x168] sm:$0xff]
        %v1309 = vld [vmem:[#allocation7 + $0x170] sm:$0xff]
        %v1310 = vld [vmem:[#allocation7 + $0x178] sm:$0xff]
        %v1311 = vld [vmem:[#allocation7 + $0x180] sm:$0xff]
        %v1312 = vld [vmem:[#allocation7 + $0x188] sm:$0xff]
        %v1313 = vld [vmem:[#allocation7 + $0x190] sm:$0xff]
        %v1314 = vld [vmem:[#allocation7 + $0x198] sm:$0xff]
        %v1315 = vld [vmem:[#allocation7 + $0x1a0] sm:$0xff]
        %v1316 = vld [vmem:[#allocation7 + $0x1a8] sm:$0xff]
        %v1317 = vld [vmem:[#allocation7 + $0x1b0] sm:$0xff]
        %v1318 = vld [vmem:[#allocation7 + $0x1b8] sm:$0xff]
        %v1319 = vld [vmem:[#allocation7 + $0x1c0] sm:$0xff]
        %v1320 = vld [vmem:[#allocation7 + $0x1c8] sm:$0xff]
        %v1321 = vld [vmem:[#allocation7 + $0x1d0] sm:$0xff]
        %v1322 = vld [vmem:[#allocation7 + $0x1d8] sm:$0xff]
        %v1323 = vld [vmem:[#allocation7 + $0x1e0] sm:$0xff]
        %v1324 = vld [vmem:[#allocation7 + $0x1e8] sm:$0xff]
        %v1325 = vld [vmem:[#allocation7 + $0x1f0] sm:$0xff]
        %v1326 = vld [vmem:[#allocation7 + $0x1f8] sm:$0xff]
        %v1327 = vld [vmem:[#allocation7 + $0x200] sm:$0xff]
        %v1328 = vld [vmem:[#allocation7 + $0x208] sm:$0xff]
        %v1329 = vld [vmem:[#allocation7 + $0x210] sm:$0xff]
        %v1330 = vld [vmem:[#allocation7 + $0x218] sm:$0xff]
        %v1331 = vld [vmem:[#allocation7 + $0x220] sm:$0xff]
        %v1332 = vld [vmem:[#allocation7 + $0x228] sm:$0xff]
        %v1333 = vld [vmem:[#allocation7 + $0x230] sm:$0xff]
        %v1334 = vld [vmem:[#allocation7 + $0x238] sm:$0xff]
        %v1335 = vpack.c.bf16 %v1271, %v1263
        %v1336 = vpack.c.bf16 %v1272, %v1264
        %v1337 = vpack.c.bf16 %v1273, %v1265
        %v1338 = vpack.c.bf16 %v1274, %v1266
        %v1339 = vpack.c.bf16 %v1275, %v1267
        %v1340 = vpack.c.bf16 %v1276, %v1268
        %v1341 = vpack.c.bf16 %v1277, %v1269
        %v1342 = vpack.c.bf16 %v1278, %v1270
        %v1343 = vpack.c.bf16 %v1287, %v1279
        %v1344 = vpack.c.bf16 %v1288, %v1280
        %v1345 = vpack.c.bf16 %v1289, %v1281
        %v1346 = vpack.c.bf16 %v1290, %v1282
        %v1347 = vpack.c.bf16 %v1291, %v1283
        %v1348 = vpack.c.bf16 %v1292, %v1284
        %v1349 = vpack.c.bf16 %v1293, %v1285
        %v1350 = vpack.c.bf16 %v1294, %v1286
        %v1351 = vpack.c.bf16 %v1303, %v1295
        %v1352 = vpack.c.bf16 %v1304, %v1296
        %v1353 = vpack.c.bf16 %v1305, %v1297
        %v1354 = vpack.c.bf16 %v1306, %v1298
        %v1355 = vpack.c.bf16 %v1307, %v1299
        %v1356 = vpack.c.bf16 %v1308, %v1300
        %v1357 = vpack.c.bf16 %v1309, %v1301
        %v1358 = vpack.c.bf16 %v1310, %v1302
        %v1359 = vpack.c.bf16 %v1319, %v1311
        %v1360 = vpack.c.bf16 %v1320, %v1312
        %v1361 = vpack.c.bf16 %v1321, %v1313
        %v1362 = vpack.c.bf16 %v1322, %v1314
        %v1363 = vpack.c.bf16 %v1323, %v1315
        %v1364 = vpack.c.bf16 %v1324, %v1316
        %v1365 = vpack.c.bf16 %v1325, %v1317
        %v1366 = vpack.c.bf16 %v1326, %v1318
        %v1367 = vpack.c.bf16 %v1327, %v1327
        %v1368 = vpack.c.bf16 %v1328, %v1328
        %v1369 = vpack.c.bf16 %v1329, %v1329
        %v1370 = vpack.c.bf16 %v1330, %v1330
        %v1371 = vpack.c.bf16 %v1331, %v1331
        %v1372 = vpack.c.bf16 %v1332, %v1332
        %v1373 = vpack.c.bf16 %v1333, %v1333
        %v1374 = vpack.c.bf16 %v1334, %v1334
        %v1375 = vld [vmem:[%s1] sm:$0xf]
        %vm1376 = vcmask 588800
        %v1378 = vsel %vm1376, %v1375, 0
        %vm1380 = vcmask 1043456
        %v1382 = vsel %vm1380, %v1367, 0
        %v1385 = vsel %vm1380, %v1368, 0
        %v1388 = vsel %vm1380, %v1369, 0
        %v1391 = vsel %vm1380, %v1370, 0
        %v1394 = vsel %vm1380, %v1371, 0
        %v1397 = vsel %vm1380, %v1372, 0
        %v1400 = vsel %vm1380, %v1373, 0
        %v1403 = vsel %vm1380, %v1374, 0
        %1405 = vmatpush.bf16.msra.mxu0 0
        %1406 = vmatpush.bf16.msra.mxu0 0
        %1407 = vmatpush.bf16.msra.mxu0 0
        %1408 = vmatpush.bf16.msra.mxu0 %v1382
        %1409 = vmatpush.bf16.msra.mxu0 %v1359
        %1410 = vmatpush.bf16.msra.mxu0 %v1351
        %1411 = vmatpush.bf16.msra.mxu0 %v1343
        %1412 = vmatpush.bf16.msra.mxu0 %v1335
        %1413 = vmatmul.bf16.gmra.mxu0 %v1378
        %v1414 = vpop.f32.mrf.mxu0
        %v1415 = vadd.f32 0.0, %v1414
        %v1416 = vpop.f32.mrf.mxu0
        %1417 = vdwg.mxu0
        %1418 = vmatpush.bf16.msra.mxu0 0
        %1419 = vmatpush.bf16.msra.mxu0 0
        %1420 = vmatpush.bf16.msra.mxu0 0
        %1421 = vmatpush.bf16.msra.mxu0 %v1385
        %1422 = vmatpush.bf16.msra.mxu0 %v1360
        %1423 = vmatpush.bf16.msra.mxu0 %v1352
        %1424 = vmatpush.bf16.msra.mxu0 %v1344
        %1425 = vmatpush.bf16.msra.mxu0 %v1336
        %1426 = vmatmul.bf16.gmra.mxu0 %v1378
        %v1427 = vpop.f32.mrf.mxu0
        %v1428 = vadd.f32 0.0, %v1427
        %v1429 = vpop.f32.mrf.mxu0
        %1430 = vdwg.mxu0
        %1431 = vmatpush.bf16.msra.mxu0 0
        %1432 = vmatpush.bf16.msra.mxu0 0
        %1433 = vmatpush.bf16.msra.mxu0 0
        %1434 = vmatpush.bf16.msra.mxu0 %v1388
        %1435 = vmatpush.bf16.msra.mxu0 %v1361
        %1436 = vmatpush.bf16.msra.mxu0 %v1353
        %1437 = vmatpush.bf16.msra.mxu0 %v1345
        %1438 = vmatpush.bf16.msra.mxu0 %v1337
        %1439 = vmatmul.bf16.gmra.mxu0 %v1378
        %v1440 = vpop.f32.mrf.mxu0
        %v1441 = vadd.f32 0.0, %v1440
        %v1442 = vpop.f32.mrf.mxu0
        %1443 = vdwg.mxu0
        %1444 = vmatpush.bf16.msra.mxu0 0
        %1445 = vmatpush.bf16.msra.mxu0 0
        %1446 = vmatpush.bf16.msra.mxu0 0
        %1447 = vmatpush.bf16.msra.mxu0 %v1391
        %1448 = vmatpush.bf16.msra.mxu0 %v1362
        %1449 = vmatpush.bf16.msra.mxu0 %v1354
        %1450 = vmatpush.bf16.msra.mxu0 %v1346
        %1451 = vmatpush.bf16.msra.mxu0 %v1338
        %1452 = vmatmul.bf16.gmra.mxu0 %v1378
        %v1453 = vpop.f32.mrf.mxu0
        %v1454 = vadd.f32 0.0, %v1453
        %v1455 = vpop.f32.mrf.mxu0
        %1456 = vdwg.mxu0
        %1457 = vmatpush.bf16.msra.mxu0 0
        %1458 = vmatpush.bf16.msra.mxu0 0
        %1459 = vmatpush.bf16.msra.mxu0 0
        %1460 = vmatpush.bf16.msra.mxu0 %v1394
        %1461 = vmatpush.bf16.msra.mxu0 %v1363
        %1462 = vmatpush.bf16.msra.mxu0 %v1355
        %1463 = vmatpush.bf16.msra.mxu0 %v1347
        %1464 = vmatpush.bf16.msra.mxu0 %v1339
        %1465 = vmatmul.bf16.gmra.mxu0 %v1378
        %v1466 = vpop.f32.mrf.mxu0
        %v1467 = vadd.f32 0.0, %v1466
        %v1468 = vpop.f32.mrf.mxu0
        %1469 = vdwg.mxu0
        %1470 = vmatpush.bf16.msra.mxu0 0
        %1471 = vmatpush.bf16.msra.mxu0 0
        %1472 = vmatpush.bf16.msra.mxu0 0
        %1473 = vmatpush.bf16.msra.mxu0 %v1397
        %1474 = vmatpush.bf16.msra.mxu0 %v1364
        %1475 = vmatpush.bf16.msra.mxu0 %v1356
        %1476 = vmatpush.bf16.msra.mxu0 %v1348
        %1477 = vmatpush.bf16.msra.mxu0 %v1340
        %1478 = vmatmul.bf16.gmra.mxu0 %v1378
        %v1479 = vpop.f32.mrf.mxu0
        %v1480 = vadd.f32 0.0, %v1479
        %v1481 = vpop.f32.mrf.mxu0
        %1482 = vdwg.mxu0
        %1483 = vmatpush.bf16.msra.mxu0 0
        %1484 = vmatpush.bf16.msra.mxu0 0
        %1485 = vmatpush.bf16.msra.mxu0 0
        %1486 = vmatpush.bf16.msra.mxu0 %v1400
        %1487 = vmatpush.bf16.msra.mxu0 %v1365
        %1488 = vmatpush.bf16.msra.mxu0 %v1357
        %1489 = vmatpush.bf16.msra.mxu0 %v1349
        %1490 = vmatpush.bf16.msra.mxu0 %v1341
        %1491 = vmatmul.bf16.gmra.mxu0 %v1378
        %v1492 = vpop.f32.mrf.mxu0
        %v1493 = vadd.f32 0.0, %v1492
        %v1494 = vpop.f32.mrf.mxu0
        %1495 = vdwg.mxu0
        %1496 = vmatpush.bf16.msra.mxu0 0
        %1497 = vmatpush.bf16.msra.mxu0 0
        %1498 = vmatpush.bf16.msra.mxu0 0
        %1499 = vmatpush.bf16.msra.mxu0 %v1403
        %1500 = vmatpush.bf16.msra.mxu0 %v1366
        %1501 = vmatpush.bf16.msra.mxu0 %v1358
        %1502 = vmatpush.bf16.msra.mxu0 %v1350
        %1503 = vmatpush.bf16.msra.mxu0 %v1342
        %1504 = vmatmul.bf16.gmra.mxu0 %v1378
        %v1505 = vpop.f32.mrf.mxu0
        %v1506 = vadd.f32 0.0, %v1505
        %v1507 = vpop.f32.mrf.mxu0
        %1508 = vdwg.mxu0
        %v1509 = vadd.f32 %v1415, %v1428
        %v1510 = vadd.f32 %v1509, %v1441
        %v1511 = vadd.f32 %v1510, %v1454
        %v1512 = vadd.f32 %v1511, %v1467
        %v1513 = vadd.f32 %v1512, %v1480
        %v1514 = vadd.f32 %v1513, %v1493
        %v1515 = vadd.f32 %v1514, %v1506
        %1516 = vadd.xlane.f32.xlu0 %v1515
        %v1517 = vpop.xlane.xlu0 %1516
        %v1518 = vmul.f32 %v1517, 0.0009765625
        %v1519 = vmul.f32 %v1415, %v1415
        %v1520 = vmul.f32 %v1428, %v1428
        %v1521 = vmul.f32 %v1441, %v1441
        %v1522 = vmul.f32 %v1454, %v1454
        %v1523 = vmul.f32 %v1467, %v1467
        %v1524 = vmul.f32 %v1480, %v1480
        %v1525 = vmul.f32 %v1493, %v1493
        %v1526 = vmul.f32 %v1506, %v1506
        %v1527 = vadd.f32 %v1519, %v1520
        %v1528 = vadd.f32 %v1527, %v1521
        %v1529 = vadd.f32 %v1528, %v1522
        %v1530 = vadd.f32 %v1529, %v1523
        %v1531 = vadd.f32 %v1530, %v1524
        %v1532 = vadd.f32 %v1531, %v1525
        %v1533 = vadd.f32 %v1532, %v1526
        %1534 = vadd.xlane.f32.xlu0 %v1533
        %v1535 = vpop.xlane.xlu0 %1534
        %v1536 = vmul.f32 %v1535, 0.0009765625
        %v1537 = vmul.f32 %v1518, %v1518
        %v1538 = vsub.f32 %v1536, %v1537
        %v1539 = vmax.f32 %v1538, 0.0
        %v1540 = vsub.f32 %v1415, %v1518
        %v1541 = vsub.f32 %v1428, %v1518
        %v1542 = vsub.f32 %v1441, %v1518
        %v1543 = vsub.f32 %v1454, %v1518
        %v1544 = vsub.f32 %v1467, %v1518
        %v1545 = vsub.f32 %v1480, %v1518
        %v1546 = vsub.f32 %v1493, %v1518
        %v1547 = vsub.f32 %v1506, %v1518
        %v1548 = vadd.f32 %v1539, 1e-05
        %v1549 = vrsqrt.pop %v1548
        %v1550 = vmul.f32 %v1549, %v1548
        %v1551 = vmul.f32 %v1550, %v1549
        %v1552 = vmul.f32 0.5, %v1551
        %v1553 = vsub.f32 1.5, %v1552
        %v1554 = vmul.f32 %v1549, %v1553
        %vm1555 = vweird.f32 %v1548
        %vm1556 = vweird.f32 %v1549
        %vm1557 = vmor %vm1555, %vm1556
        %v1558 = vsel %vm1557, %v1549, %v1554
        %v1559 = vmul.f32 %v1540, %v1558
        %v1560 = vmul.f32 %v1541, %v1558
        %v1561 = vmul.f32 %v1542, %v1558
        %v1562 = vmul.f32 %v1543, %v1558
        %v1563 = vmul.f32 %v1544, %v1558
        %v1564 = vmul.f32 %v1545, %v1558
        %v1565 = vmul.f32 %v1546, %v1558
        %v1566 = vmul.f32 %v1547, %v1558
        %v1567 = vmul.f32 %v1559, 0.5
        %v1568 = vmul.f32 %v1560, 0.5
        %v1569 = vmul.f32 %v1561, 0.5
        %v1570 = vmul.f32 %v1562, 0.5
        %v1571 = vmul.f32 %v1563, 0.5
        %v1572 = vmul.f32 %v1564, 0.5
        %v1573 = vmul.f32 %v1565, 0.5
        %v1574 = vmul.f32 %v1566, 0.5
        %v1575 = vmul.f32 %v1559, 0.70710677
        %v1576 = vmul.f32 %v1560, 0.70710677
        %v1577 = vmul.f32 %v1561, 0.70710677
        %v1578 = vmul.f32 %v1562, 0.70710677
        %v1579 = vmul.f32 %v1563, 0.70710677
        %v1580 = vmul.f32 %v1564, 0.70710677
        %v1581 = vmul.f32 %v1565, 0.70710677
        %v1582 = vmul.f32 %v1566, 0.70710677
        %v1583 = vmul.f32 %v1575, %v1575
        %v1584 = vmin.f32 16.0, %v1583
        %v1585 = vmul.f32 %v1584, 2.1237322e-06
        %v1586 = vadd.f32 %v1585, 0.00028619796
        %v1587 = vmul.f32 %v1584, %v1586
        %v1588 = vadd.f32 %v1587, 0.0036580483
        %v1589 = vmul.f32 %v1584, %v1588
        %v1590 = vadd.f32 %v1589, 0.05243302
        %v1591 = vmul.f32 %v1584, %v1590
        %v1592 = vadd.f32 %v1591, 0.18741608
        %v1593 = vmul.f32 %v1584, %v1592
        %v1594 = vadd.f32 %v1593, 1.1283791
        %v1595 = vmul.f32 %v1575, %v1594
        %v1596 = vmul.f32 %v1584, 3.8918573e-05
        %v1597 = vadd.f32 %v1596, 0.001143296
        %v1598 = vmul.f32 %v1584, %v1597
        %v1599 = vadd.f32 %v1598, 0.014752088
        %v1600 = vmul.f32 %v1584, %v1599
        %v1601 = vadd.f32 %v1600, 0.112945676
        %v1602 = vmul.f32 %v1584, %v1601
        %v1603 = vadd.f32 %v1602, 0.4994258
        %v1604 = vmul.f32 %v1584, %v1603
        %v1605 = vadd.f32 %v1604, 1.0
        %v1606 = vrcp.pop %v1605
        %v1607 = vmul.f32 %v1605, %v1606
        %v1608 = vsub.f32 1.0, %v1607
        %v1609 = vmul.f32 %v1606, %v1608
        %v1610 = vadd.f32 %v1606, %v1609
        %vm1611 = vweird.f32 %v1605
        %vm1612 = vweird.f32 %v1606
        %vm1613 = vmor %vm1611, %vm1612
        %v1614 = vsel %vm1613, %v1606, %v1610
        %v1615 = vand.u32 2147483647, %v1605
        %vm1616 = vcmp.eq.f32.partialorder %v1615, 8.507059e+37
        %v1617 = vand.u32 %v1605, 2147483648
        %v1618 = vor.u32 1.1754944e-38, %v1617
        %v1619 = vsel %vm1616, %v1618, %v1614
        %v1620 = vmul.f32 %v1595, %v1619
        %v1621 = vmin.f32 %v1620, 1.0
        %v1622 = vmax.f32 %v1621, -1.0
        %v1623 = vmul.f32 %v1576, %v1576
        %v1624 = vmin.f32 16.0, %v1623
        %v1625 = vmul.f32 %v1624, 2.1237322e-06
        %v1626 = vadd.f32 %v1625, 0.00028619796
        %v1627 = vmul.f32 %v1624, %v1626
        %v1628 = vadd.f32 %v1627, 0.0036580483
        %v1629 = vmul.f32 %v1624, %v1628
        %v1630 = vadd.f32 %v1629, 0.05243302
        %v1631 = vmul.f32 %v1624, %v1630
        %v1632 = vadd.f32 %v1631, 0.18741608
        %v1633 = vmul.f32 %v1624, %v1632
        %v1634 = vadd.f32 %v1633, 1.1283791
        %v1635 = vmul.f32 %v1576, %v1634
        %v1636 = vmul.f32 %v1624, 3.8918573e-05
        %v1637 = vadd.f32 %v1636, 0.001143296
        %v1638 = vmul.f32 %v1624, %v1637
        %v1639 = vadd.f32 %v1638, 0.014752088
        %v1640 = vmul.f32 %v1624, %v1639
        %v1641 = vadd.f32 %v1640, 0.112945676
        %v1642 = vmul.f32 %v1624, %v1641
        %v1643 = vadd.f32 %v1642, 0.4994258
        %v1644 = vmul.f32 %v1624, %v1643
        %v1645 = vadd.f32 %v1644, 1.0
        %v1646 = vrcp.pop %v1645
        %v1647 = vmul.f32 %v1645, %v1646
        %v1648 = vsub.f32 1.0, %v1647
        %v1649 = vmul.f32 %v1646, %v1648
        %v1650 = vadd.f32 %v1646, %v1649
        %vm1651 = vweird.f32 %v1645
        %vm1652 = vweird.f32 %v1646
        %vm1653 = vmor %vm1651, %vm1652
        %v1654 = vsel %vm1653, %v1646, %v1650
        %v1655 = vand.u32 2147483647, %v1645
        %vm1656 = vcmp.eq.f32.partialorder %v1655, 8.507059e+37
        %v1657 = vand.u32 %v1645, 2147483648
        %v1658 = vor.u32 1.1754944e-38, %v1657
        %v1659 = vsel %vm1656, %v1658, %v1654
        %v1660 = vmul.f32 %v1635, %v1659
        %v1661 = vmin.f32 %v1660, 1.0
        %v1662 = vmax.f32 %v1661, -1.0
        %v1663 = vmul.f32 %v1577, %v1577
        %v1664 = vmin.f32 16.0, %v1663
        %v1665 = vmul.f32 %v1664, 2.1237322e-06
        %v1666 = vadd.f32 %v1665, 0.00028619796
        %v1667 = vmul.f32 %v1664, %v1666
        %v1668 = vadd.f32 %v1667, 0.0036580483
        %v1669 = vmul.f32 %v1664, %v1668
        %v1670 = vadd.f32 %v1669, 0.05243302
        %v1671 = vmul.f32 %v1664, %v1670
        %v1672 = vadd.f32 %v1671, 0.18741608
        %v1673 = vmul.f32 %v1664, %v1672
        %v1674 = vadd.f32 %v1673, 1.1283791
        %v1675 = vmul.f32 %v1577, %v1674
        %v1676 = vmul.f32 %v1664, 3.8918573e-05
        %v1677 = vadd.f32 %v1676, 0.001143296
        %v1678 = vmul.f32 %v1664, %v1677
        %v1679 = vadd.f32 %v1678, 0.014752088
        %v1680 = vmul.f32 %v1664, %v1679
        %v1681 = vadd.f32 %v1680, 0.112945676
        %v1682 = vmul.f32 %v1664, %v1681
        %v1683 = vadd.f32 %v1682, 0.4994258
        %v1684 = vmul.f32 %v1664, %v1683
        %v1685 = vadd.f32 %v1684, 1.0
        %v1686 = vrcp.pop %v1685
        %v1687 = vmul.f32 %v1685, %v1686
        %v1688 = vsub.f32 1.0, %v1687
        %v1689 = vmul.f32 %v1686, %v1688
        %v1690 = vadd.f32 %v1686, %v1689
        %vm1691 = vweird.f32 %v1685
        %vm1692 = vweird.f32 %v1686
        %vm1693 = vmor %vm1691, %vm1692
        %v1694 = vsel %vm1693, %v1686, %v1690
        %v1695 = vand.u32 2147483647, %v1685
        %vm1696 = vcmp.eq.f32.partialorder %v1695, 8.507059e+37
        %v1697 = vand.u32 %v1685, 2147483648
        %v1698 = vor.u32 1.1754944e-38, %v1697
        %v1699 = vsel %vm1696, %v1698, %v1694
        %v1700 = vmul.f32 %v1675, %v1699
        %v1701 = vmin.f32 %v1700, 1.0
        %v1702 = vmax.f32 %v1701, -1.0
        %v1703 = vmul.f32 %v1578, %v1578
        %v1704 = vmin.f32 16.0, %v1703
        %v1705 = vmul.f32 %v1704, 2.1237322e-06
        %v1706 = vadd.f32 %v1705, 0.00028619796
        %v1707 = vmul.f32 %v1704, %v1706
        %v1708 = vadd.f32 %v1707, 0.0036580483
        %v1709 = vmul.f32 %v1704, %v1708
        %v1710 = vadd.f32 %v1709, 0.05243302
        %v1711 = vmul.f32 %v1704, %v1710
        %v1712 = vadd.f32 %v1711, 0.18741608
        %v1713 = vmul.f32 %v1704, %v1712
        %v1714 = vadd.f32 %v1713, 1.1283791
        %v1715 = vmul.f32 %v1578, %v1714
        %v1716 = vmul.f32 %v1704, 3.8918573e-05
        %v1717 = vadd.f32 %v1716, 0.001143296
        %v1718 = vmul.f32 %v1704, %v1717
        %v1719 = vadd.f32 %v1718, 0.014752088
        %v1720 = vmul.f32 %v1704, %v1719
        %v1721 = vadd.f32 %v1720, 0.112945676
        %v1722 = vmul.f32 %v1704, %v1721
        %v1723 = vadd.f32 %v1722, 0.4994258
        %v1724 = vmul.f32 %v1704, %v1723
        %v1725 = vadd.f32 %v1724, 1.0
        %v1726 = vrcp.pop %v1725
        %v1727 = vmul.f32 %v1725, %v1726
        %v1728 = vsub.f32 1.0, %v1727
        %v1729 = vmul.f32 %v1726, %v1728
        %v1730 = vadd.f32 %v1726, %v1729
        %vm1731 = vweird.f32 %v1725
        %vm1732 = vweird.f32 %v1726
        %vm1733 = vmor %vm1731, %vm1732
        %v1734 = vsel %vm1733, %v1726, %v1730
        %v1735 = vand.u32 2147483647, %v1725
        %vm1736 = vcmp.eq.f32.partialorder %v1735, 8.507059e+37
        %v1737 = vand.u32 %v1725, 2147483648
        %v1738 = vor.u32 1.1754944e-38, %v1737
        %v1739 = vsel %vm1736, %v1738, %v1734
        %v1740 = vmul.f32 %v1715, %v1739
        %v1741 = vmin.f32 %v1740, 1.0
        %v1742 = vmax.f32 %v1741, -1.0
        %v1743 = vmul.f32 %v1579, %v1579
        %v1744 = vmin.f32 16.0, %v1743
        %v1745 = vmul.f32 %v1744, 2.1237322e-06
        %v1746 = vadd.f32 %v1745, 0.00028619796
        %v1747 = vmul.f32 %v1744, %v1746
        %v1748 = vadd.f32 %v1747, 0.0036580483
        %v1749 = vmul.f32 %v1744, %v1748
        %v1750 = vadd.f32 %v1749, 0.05243302
        %v1751 = vmul.f32 %v1744, %v1750
        %v1752 = vadd.f32 %v1751, 0.18741608
        %v1753 = vmul.f32 %v1744, %v1752
        %v1754 = vadd.f32 %v1753, 1.1283791
        %v1755 = vmul.f32 %v1579, %v1754
        %v1756 = vmul.f32 %v1744, 3.8918573e-05
        %v1757 = vadd.f32 %v1756, 0.001143296
        %v1758 = vmul.f32 %v1744, %v1757
        %v1759 = vadd.f32 %v1758, 0.014752088
        %v1760 = vmul.f32 %v1744, %v1759
        %v1761 = vadd.f32 %v1760, 0.112945676
        %v1762 = vmul.f32 %v1744, %v1761
        %v1763 = vadd.f32 %v1762, 0.4994258
        %v1764 = vmul.f32 %v1744, %v1763
        %v1765 = vadd.f32 %v1764, 1.0
        %v1766 = vrcp.pop %v1765
        %v1767 = vmul.f32 %v1765, %v1766
        %v1768 = vsub.f32 1.0, %v1767
        %v1769 = vmul.f32 %v1766, %v1768
        %v1770 = vadd.f32 %v1766, %v1769
        %vm1771 = vweird.f32 %v1765
        %vm1772 = vweird.f32 %v1766
        %vm1773 = vmor %vm1771, %vm1772
        %v1774 = vsel %vm1773, %v1766, %v1770
        %v1775 = vand.u32 2147483647, %v1765
        %vm1776 = vcmp.eq.f32.partialorder %v1775, 8.507059e+37
        %v1777 = vand.u32 %v1765, 2147483648
        %v1778 = vor.u32 1.1754944e-38, %v1777
        %v1779 = vsel %vm1776, %v1778, %v1774
        %v1780 = vmul.f32 %v1755, %v1779
        %v1781 = vmin.f32 %v1780, 1.0
        %v1782 = vmax.f32 %v1781, -1.0
        %v1783 = vmul.f32 %v1580, %v1580
        %v1784 = vmin.f32 16.0, %v1783
        %v1785 = vmul.f32 %v1784, 2.1237322e-06
        %v1786 = vadd.f32 %v1785, 0.00028619796
        %v1787 = vmul.f32 %v1784, %v1786
        %v1788 = vadd.f32 %v1787, 0.0036580483
        %v1789 = vmul.f32 %v1784, %v1788
        %v1790 = vadd.f32 %v1789, 0.05243302
        %v1791 = vmul.f32 %v1784, %v1790
        %v1792 = vadd.f32 %v1791, 0.18741608
        %v1793 = vmul.f32 %v1784, %v1792
        %v1794 = vadd.f32 %v1793, 1.1283791
        %v1795 = vmul.f32 %v1580, %v1794
        %v1796 = vmul.f32 %v1784, 3.8918573e-05
        %v1797 = vadd.f32 %v1796, 0.001143296
        %v1798 = vmul.f32 %v1784, %v1797
        %v1799 = vadd.f32 %v1798, 0.014752088
        %v1800 = vmul.f32 %v1784, %v1799
        %v1801 = vadd.f32 %v1800, 0.112945676
        %v1802 = vmul.f32 %v1784, %v1801
        %v1803 = vadd.f32 %v1802, 0.4994258
        %v1804 = vmul.f32 %v1784, %v1803
        %v1805 = vadd.f32 %v1804, 1.0
        %v1806 = vrcp.pop %v1805
        %v1807 = vmul.f32 %v1805, %v1806
        %v1808 = vsub.f32 1.0, %v1807
        %v1809 = vmul.f32 %v1806, %v1808
        %v1810 = vadd.f32 %v1806, %v1809
        %vm1811 = vweird.f32 %v1805
        %vm1812 = vweird.f32 %v1806
        %vm1813 = vmor %vm1811, %vm1812
        %v1814 = vsel %vm1813, %v1806, %v1810
        %v1815 = vand.u32 2147483647, %v1805
        %vm1816 = vcmp.eq.f32.partialorder %v1815, 8.507059e+37
        %v1817 = vand.u32 %v1805, 2147483648
        %v1818 = vor.u32 1.1754944e-38, %v1817
        %v1819 = vsel %vm1816, %v1818, %v1814
        %v1820 = vmul.f32 %v1795, %v1819
        %v1821 = vmin.f32 %v1820, 1.0
        %v1822 = vmax.f32 %v1821, -1.0
        %v1823 = vmul.f32 %v1581, %v1581
        %v1824 = vmin.f32 16.0, %v1823
        %v1825 = vmul.f32 %v1824, 2.1237322e-06
        %v1826 = vadd.f32 %v1825, 0.00028619796
        %v1827 = vmul.f32 %v1824, %v1826
        %v1828 = vadd.f32 %v1827, 0.0036580483
        %v1829 = vmul.f32 %v1824, %v1828
        %v1830 = vadd.f32 %v1829, 0.05243302
        %v1831 = vmul.f32 %v1824, %v1830
        %v1832 = vadd.f32 %v1831, 0.18741608
        %v1833 = vmul.f32 %v1824, %v1832
        %v1834 = vadd.f32 %v1833, 1.1283791
        %v1835 = vmul.f32 %v1581, %v1834
        %v1836 = vmul.f32 %v1824, 3.8918573e-05
        %v1837 = vadd.f32 %v1836, 0.001143296
        %v1838 = vmul.f32 %v1824, %v1837
        %v1839 = vadd.f32 %v1838, 0.014752088
        %v1840 = vmul.f32 %v1824, %v1839
        %v1841 = vadd.f32 %v1840, 0.112945676
        %v1842 = vmul.f32 %v1824, %v1841
        %v1843 = vadd.f32 %v1842, 0.4994258
        %v1844 = vmul.f32 %v1824, %v1843
        %v1845 = vadd.f32 %v1844, 1.0
        %v1846 = vrcp.pop %v1845
        %v1847 = vmul.f32 %v1845, %v1846
        %v1848 = vsub.f32 1.0, %v1847
        %v1849 = vmul.f32 %v1846, %v1848
        %v1850 = vadd.f32 %v1846, %v1849
        %vm1851 = vweird.f32 %v1845
        %vm1852 = vweird.f32 %v1846
        %vm1853 = vmor %vm1851, %vm1852
        %v1854 = vsel %vm1853, %v1846, %v1850
        %v1855 = vand.u32 2147483647, %v1845
        %vm1856 = vcmp.eq.f32.partialorder %v1855, 8.507059e+37
        %v1857 = vand.u32 %v1845, 2147483648
        %v1858 = vor.u32 1.1754944e-38, %v1857
        %v1859 = vsel %vm1856, %v1858, %v1854
        %v1860 = vmul.f32 %v1835, %v1859
        %v1861 = vmin.f32 %v1860, 1.0
        %v1862 = vmax.f32 %v1861, -1.0
        %v1863 = vmul.f32 %v1582, %v1582
        %v1864 = vmin.f32 16.0, %v1863
        %v1865 = vmul.f32 %v1864, 2.1237322e-06
        %v1866 = vadd.f32 %v1865, 0.00028619796
        %v1867 = vmul.f32 %v1864, %v1866
        %v1868 = vadd.f32 %v1867, 0.0036580483
        %v1869 = vmul.f32 %v1864, %v1868
        %v1870 = vadd.f32 %v1869, 0.05243302
        %v1871 = vmul.f32 %v1864, %v1870
        %v1872 = vadd.f32 %v1871, 0.18741608
        %v1873 = vmul.f32 %v1864, %v1872
        %v1874 = vadd.f32 %v1873, 1.1283791
        %v1875 = vmul.f32 %v1582, %v1874
        %v1876 = vmul.f32 %v1864, 3.8918573e-05
        %v1877 = vadd.f32 %v1876, 0.001143296
        %v1878 = vmul.f32 %v1864, %v1877
        %v1879 = vadd.f32 %v1878, 0.014752088
        %v1880 = vmul.f32 %v1864, %v1879
        %v1881 = vadd.f32 %v1880, 0.112945676
        %v1882 = vmul.f32 %v1864, %v1881
        %v1883 = vadd.f32 %v1882, 0.4994258
        %v1884 = vmul.f32 %v1864, %v1883
        %v1885 = vadd.f32 %v1884, 1.0
        %v1886 = vrcp.pop %v1885
        %v1887 = vmul.f32 %v1885, %v1886
        %v1888 = vsub.f32 1.0, %v1887
        %v1889 = vmul.f32 %v1886, %v1888
        %v1890 = vadd.f32 %v1886, %v1889
        %vm1891 = vweird.f32 %v1885
        %vm1892 = vweird.f32 %v1886
        %vm1893 = vmor %vm1891, %vm1892
        %v1894 = vsel %vm1893, %v1886, %v1890
        %v1895 = vand.u32 2147483647, %v1885
        %vm1896 = vcmp.eq.f32.partialorder %v1895, 8.507059e+37
        %v1897 = vand.u32 %v1885, 2147483648
        %v1898 = vor.u32 1.1754944e-38, %v1897
        %v1899 = vsel %vm1896, %v1898, %v1894
        %v1900 = vmul.f32 %v1875, %v1899
        %v1901 = vmin.f32 %v1900, 1.0
        %v1902 = vmax.f32 %v1901, -1.0
        %v1903 = vadd.f32 %v1622, 1.0
        %v1904 = vadd.f32 %v1662, 1.0
        %v1905 = vadd.f32 %v1702, 1.0
        %v1906 = vadd.f32 %v1742, 1.0
        %v1907 = vadd.f32 %v1782, 1.0
        %v1908 = vadd.f32 %v1822, 1.0
        %v1909 = vadd.f32 %v1862, 1.0
        %v1910 = vadd.f32 %v1902, 1.0
        %v1911 = vmul.f32 %v1567, %v1903
        %v1912 = vmul.f32 %v1568, %v1904
        %v1913 = vmul.f32 %v1569, %v1905
        %v1914 = vmul.f32 %v1570, %v1906
        %v1915 = vmul.f32 %v1571, %v1907
        %v1916 = vmul.f32 %v1572, %v1908
        %v1917 = vmul.f32 %v1573, %v1909
        %v1918 = vmul.f32 %v1574, %v1910
        %1919 = vst [vmem:[%s481] sm:$0xff] %v1911
        %1920 = vst [vmem:[%s481 + $0x8] sm:$0xff] %v1912
        %1921 = vst [vmem:[%s481 + $0x10] sm:$0xff] %v1913
        %1922 = vst [vmem:[%s481 + $0x18] sm:$0xff] %v1914
        %1923 = vst [vmem:[%s481 + $0x20] sm:$0xff] %v1915
        %1924 = vst [vmem:[%s481 + $0x28] sm:$0xff] %v1916
        %1925 = vst [vmem:[%s481 + $0x30] sm:$0xff] %v1917
        %1926 = vst [vmem:[%s481 + $0x38] sm:$0xff] %v1918
        %v1927 = vpack.c.bf16 %v1911, %v1911
        %v1928 = vpack.c.bf16 %v1912, %v1912
        %v1929 = vpack.c.bf16 %v1913, %v1913
        %v1930 = vpack.c.bf16 %v1914, %v1914
        %v1931 = vpack.c.bf16 %v1915, %v1915
        %v1932 = vpack.c.bf16 %v1916, %v1916
        %v1933 = vpack.c.bf16 %v1917, %v1917
        %v1934 = vpack.c.bf16 %v1918, %v1918
        %v1935 = vld [vmem:[#allocation12] sm:$0xff]
        %v1936 = vld [vmem:[#allocation12 + $0x8] sm:$0xff]
        %v1937 = vld [vmem:[#allocation12 + $0x10] sm:$0xff]
        %v1938 = vld [vmem:[#allocation12 + $0x18] sm:$0xff]
        %v1939 = vld [vmem:[#allocation12 + $0x20] sm:$0xff]
        %v1940 = vld [vmem:[#allocation12 + $0x28] sm:$0xff]
        %v1941 = vld [vmem:[#allocation12 + $0x30] sm:$0xff]
        %v1942 = vld [vmem:[#allocation12 + $0x38] sm:$0xff]
        %v1943 = vld [vmem:[#allocation12 + $0x40] sm:$0xff]
        %v1944 = vld [vmem:[#allocation12 + $0x48] sm:$0xff]
        %v1945 = vld [vmem:[#allocation12 + $0x50] sm:$0xff]
        %v1946 = vld [vmem:[#allocation12 + $0x58] sm:$0xff]
        %v1947 = vld [vmem:[#allocation12 + $0x60] sm:$0xff]
        %v1948 = vld [vmem:[#allocation12 + $0x68] sm:$0xff]
        %v1949 = vld [vmem:[#allocation12 + $0x70] sm:$0xff]
        %v1950 = vld [vmem:[#allocation12 + $0x78] sm:$0xff]
        %v1951 = vld [vmem:[#allocation12 + $0x80] sm:$0xff]
        %v1952 = vld [vmem:[#allocation12 + $0x88] sm:$0xff]
        %v1953 = vld [vmem:[#allocation12 + $0x90] sm:$0xff]
        %v1954 = vld [vmem:[#allocation12 + $0x98] sm:$0xff]
        %v1955 = vld [vmem:[#allocation12 + $0xa0] sm:$0xff]
        %v1956 = vld [vmem:[#allocation12 + $0xa8] sm:$0xff]
        %v1957 = vld [vmem:[#allocation12 + $0xb0] sm:$0xff]
        %v1958 = vld [vmem:[#allocation12 + $0xb8] sm:$0xff]
        %v1959 = vld [vmem:[#allocation12 + $0xc0] sm:$0xff]
        %v1960 = vld [vmem:[#allocation12 + $0xc8] sm:$0xff]
        %v1961 = vld [vmem:[#allocation12 + $0xd0] sm:$0xff]
        %v1962 = vld [vmem:[#allocation12 + $0xd8] sm:$0xff]
        %v1963 = vld [vmem:[#allocation12 + $0xe0] sm:$0xff]
        %v1964 = vld [vmem:[#allocation12 + $0xe8] sm:$0xff]
        %v1965 = vld [vmem:[#allocation12 + $0xf0] sm:$0xff]
        %v1966 = vld [vmem:[#allocation12 + $0xf8] sm:$0xff]
        %v1967 = vld [vmem:[#allocation12 + $0x100] sm:$0xff]
        %v1968 = vld [vmem:[#allocation12 + $0x108] sm:$0xff]
        %v1969 = vld [vmem:[#allocation12 + $0x110] sm:$0xff]
        %v1970 = vld [vmem:[#allocation12 + $0x118] sm:$0xff]
        %v1971 = vld [vmem:[#allocation12 + $0x120] sm:$0xff]
        %v1972 = vld [vmem:[#allocation12 + $0x128] sm:$0xff]
        %v1973 = vld [vmem:[#allocation12 + $0x130] sm:$0xff]
        %v1974 = vld [vmem:[#allocation12 + $0x138] sm:$0xff]
        %v1975 = vld [vmem:[#allocation12 + $0x140] sm:$0xff]
        %v1976 = vld [vmem:[#allocation12 + $0x148] sm:$0xff]
        %v1977 = vld [vmem:[#allocation12 + $0x150] sm:$0xff]
        %v1978 = vld [vmem:[#allocation12 + $0x158] sm:$0xff]
        %v1979 = vld [vmem:[#allocation12 + $0x160] sm:$0xff]
        %v1980 = vld [vmem:[#allocation12 + $0x168] sm:$0xff]
        %v1981 = vld [vmem:[#allocation12 + $0x170] sm:$0xff]
        %v1982 = vld [vmem:[#allocation12 + $0x178] sm:$0xff]
        %v1983 = vld [vmem:[#allocation12 + $0x180] sm:$0xff]
        %v1984 = vld [vmem:[#allocation12 + $0x188] sm:$0xff]
        %v1985 = vld [vmem:[#allocation12 + $0x190] sm:$0xff]
        %v1986 = vld [vmem:[#allocation12 + $0x198] sm:$0xff]
        %v1987 = vld [vmem:[#allocation12 + $0x1a0] sm:$0xff]
        %v1988 = vld [vmem:[#allocation12 + $0x1a8] sm:$0xff]
        %v1989 = vld [vmem:[#allocation12 + $0x1b0] sm:$0xff]
        %v1990 = vld [vmem:[#allocation12 + $0x1b8] sm:$0xff]
        %v1991 = vld [vmem:[#allocation12 + $0x1c0] sm:$0xff]
        %v1992 = vld [vmem:[#allocation12 + $0x1c8] sm:$0xff]
        %v1993 = vld [vmem:[#allocation12 + $0x1d0] sm:$0xff]
        %v1994 = vld [vmem:[#allocation12 + $0x1d8] sm:$0xff]
        %v1995 = vld [vmem:[#allocation12 + $0x1e0] sm:$0xff]
        %v1996 = vld [vmem:[#allocation12 + $0x1e8] sm:$0xff]
        %v1997 = vld [vmem:[#allocation12 + $0x1f0] sm:$0xff]
        %v1998 = vld [vmem:[#allocation12 + $0x1f8] sm:$0xff]
        %v1999 = vld [vmem:[#allocation12 + $0x200] sm:$0xff]
        %v2000 = vld [vmem:[#allocation12 + $0x208] sm:$0xff]
        %v2001 = vld [vmem:[#allocation12 + $0x210] sm:$0xff]
        %v2002 = vld [vmem:[#allocation12 + $0x218] sm:$0xff]
        %v2003 = vld [vmem:[#allocation12 + $0x220] sm:$0xff]
        %v2004 = vld [vmem:[#allocation12 + $0x228] sm:$0xff]
        %v2005 = vld [vmem:[#allocation12 + $0x230] sm:$0xff]
        %v2006 = vld [vmem:[#allocation12 + $0x238] sm:$0xff]
        %v2007 = vld [vmem:[#allocation12 + $0x240] sm:$0xff]
        %v2008 = vld [vmem:[#allocation12 + $0x248] sm:$0xff]
        %v2009 = vld [vmem:[#allocation12 + $0x250] sm:$0xff]
        %v2010 = vld [vmem:[#allocation12 + $0x258] sm:$0xff]
        %v2011 = vld [vmem:[#allocation12 + $0x260] sm:$0xff]
        %v2012 = vld [vmem:[#allocation12 + $0x268] sm:$0xff]
        %v2013 = vld [vmem:[#allocation12 + $0x270] sm:$0xff]
        %v2014 = vld [vmem:[#allocation12 + $0x278] sm:$0xff]
        %v2015 = vld [vmem:[#allocation12 + $0x280] sm:$0xff]
        %v2016 = vld [vmem:[#allocation12 + $0x288] sm:$0xff]
        %v2017 = vld [vmem:[#allocation12 + $0x290] sm:$0xff]
        %v2018 = vld [vmem:[#allocation12 + $0x298] sm:$0xff]
        %v2019 = vld [vmem:[#allocation12 + $0x2a0] sm:$0xff]
        %v2020 = vld [vmem:[#allocation12 + $0x2a8] sm:$0xff]
        %v2021 = vld [vmem:[#allocation12 + $0x2b0] sm:$0xff]
        %v2022 = vld [vmem:[#allocation12 + $0x2b8] sm:$0xff]
        %v2023 = vld [vmem:[#allocation12 + $0x2c0] sm:$0xff]
        %v2024 = vld [vmem:[#allocation12 + $0x2c8] sm:$0xff]
        %v2025 = vld [vmem:[#allocation12 + $0x2d0] sm:$0xff]
        %v2026 = vld [vmem:[#allocation12 + $0x2d8] sm:$0xff]
        %v2027 = vld [vmem:[#allocation12 + $0x2e0] sm:$0xff]
        %v2028 = vld [vmem:[#allocation12 + $0x2e8] sm:$0xff]
        %v2029 = vld [vmem:[#allocation12 + $0x2f0] sm:$0xff]
        %v2030 = vld [vmem:[#allocation12 + $0x2f8] sm:$0xff]
        %v2031 = vld [vmem:[#allocation12 + $0x300] sm:$0xff]
        %v2032 = vld [vmem:[#allocation12 + $0x308] sm:$0xff]
        %v2033 = vld [vmem:[#allocation12 + $0x310] sm:$0xff]
        %v2034 = vld [vmem:[#allocation12 + $0x318] sm:$0xff]
        %v2035 = vld [vmem:[#allocation12 + $0x320] sm:$0xff]
        %v2036 = vld [vmem:[#allocation12 + $0x328] sm:$0xff]
        %v2037 = vld [vmem:[#allocation12 + $0x330] sm:$0xff]
        %v2038 = vld [vmem:[#allocation12 + $0x338] sm:$0xff]
        %v2039 = vld [vmem:[#allocation12 + $0x340] sm:$0xff]
        %v2040 = vld [vmem:[#allocation12 + $0x348] sm:$0xff]
        %v2041 = vld [vmem:[#allocation12 + $0x350] sm:$0xff]
        %v2042 = vld [vmem:[#allocation12 + $0x358] sm:$0xff]
        %v2043 = vld [vmem:[#allocation12 + $0x360] sm:$0xff]
        %v2044 = vld [vmem:[#allocation12 + $0x368] sm:$0xff]
        %v2045 = vld [vmem:[#allocation12 + $0x370] sm:$0xff]
        %v2046 = vld [vmem:[#allocation12 + $0x378] sm:$0xff]
        %v2047 = vld [vmem:[#allocation12 + $0x380] sm:$0xff]
        %v2048 = vld [vmem:[#allocation12 + $0x388] sm:$0xff]
        %v2049 = vld [vmem:[#allocation12 + $0x390] sm:$0xff]
        %v2050 = vld [vmem:[#allocation12 + $0x398] sm:$0xff]
        %v2051 = vld [vmem:[#allocation12 + $0x3a0] sm:$0xff]
        %v2052 = vld [vmem:[#allocation12 + $0x3a8] sm:$0xff]
        %v2053 = vld [vmem:[#allocation12 + $0x3b0] sm:$0xff]
        %v2054 = vld [vmem:[#allocation12 + $0x3b8] sm:$0xff]
        %v2055 = vld [vmem:[#allocation12 + $0x3c0] sm:$0xff]
        %v2056 = vld [vmem:[#allocation12 + $0x3c8] sm:$0xff]
        %v2057 = vld [vmem:[#allocation12 + $0x3d0] sm:$0xff]
        %v2058 = vld [vmem:[#allocation12 + $0x3d8] sm:$0xff]
        %v2059 = vld [vmem:[#allocation12 + $0x3e0] sm:$0xff]
        %v2060 = vld [vmem:[#allocation12 + $0x3e8] sm:$0xff]
        %v2061 = vld [vmem:[#allocation12 + $0x3f0] sm:$0xff]
        %v2062 = vld [vmem:[#allocation12 + $0x3f8] sm:$0xff]
        %v2191 = vunpack.c.l.b16 %v1935
        %v2192 = vunpack.c.h.b16 %v1935
        %v2193 = vunpack.c.l.b16 %v1936
        %v2194 = vunpack.c.h.b16 %v1936
        %v2195 = vunpack.c.l.b16 %v1937
        %v2196 = vunpack.c.h.b16 %v1937
        %v2197 = vunpack.c.l.b16 %v1938
        %v2198 = vunpack.c.h.b16 %v1938
        %v2199 = vunpack.c.l.b16 %v1939
        %v2200 = vunpack.c.h.b16 %v1939
        %v2201 = vunpack.c.l.b16 %v1940
        %v2202 = vunpack.c.h.b16 %v1940
        %v2203 = vunpack.c.l.b16 %v1941
        %v2204 = vunpack.c.h.b16 %v1941
        %v2205 = vunpack.c.l.b16 %v1942
        %v2206 = vunpack.c.h.b16 %v1942
        %v2207 = vunpack.c.l.b16 %v1943
        %v2208 = vunpack.c.h.b16 %v1943
        %v2209 = vunpack.c.l.b16 %v1944
        %v2210 = vunpack.c.h.b16 %v1944
        %v2211 = vunpack.c.l.b16 %v1945
        %v2212 = vunpack.c.h.b16 %v1945
        %v2213 = vunpack.c.l.b16 %v1946
        %v2214 = vunpack.c.h.b16 %v1946
        %v2215 = vunpack.c.l.b16 %v1947
        %v2216 = vunpack.c.h.b16 %v1947
        %v2217 = vunpack.c.l.b16 %v1948
        %v2218 = vunpack.c.h.b16 %v1948
        %v2219 = vunpack.c.l.b16 %v1949
        %v2220 = vunpack.c.h.b16 %v1949
        %v2221 = vunpack.c.l.b16 %v1950
        %v2222 = vunpack.c.h.b16 %v1950
        %v2223 = vunpack.c.l.b16 %v1951
        %v2224 = vunpack.c.h.b16 %v1951
        %v2225 = vunpack.c.l.b16 %v1952
        %v2226 = vunpack.c.h.b16 %v1952
        %v2227 = vunpack.c.l.b16 %v1953
        %v2228 = vunpack.c.h.b16 %v1953
        %v2229 = vunpack.c.l.b16 %v1954
        %v2230 = vunpack.c.h.b16 %v1954
        %v2231 = vunpack.c.l.b16 %v1955
        %v2232 = vunpack.c.h.b16 %v1955
        %v2233 = vunpack.c.l.b16 %v1956
        %v2234 = vunpack.c.h.b16 %v1956
        %v2235 = vunpack.c.l.b16 %v1957
        %v2236 = vunpack.c.h.b16 %v1957
        %v2237 = vunpack.c.l.b16 %v1958
        %v2238 = vunpack.c.h.b16 %v1958
        %v2239 = vunpack.c.l.b16 %v1959
        %v2240 = vunpack.c.h.b16 %v1959
        %v2241 = vunpack.c.l.b16 %v1960
        %v2242 = vunpack.c.h.b16 %v1960
        %v2243 = vunpack.c.l.b16 %v1961
        %v2244 = vunpack.c.h.b16 %v1961
        %v2245 = vunpack.c.l.b16 %v1962
        %v2246 = vunpack.c.h.b16 %v1962
        %v2247 = vunpack.c.l.b16 %v1963
        %v2248 = vunpack.c.h.b16 %v1963
        %v2249 = vunpack.c.l.b16 %v1964
        %v2250 = vunpack.c.h.b16 %v1964
        %v2251 = vunpack.c.l.b16 %v1965
        %v2252 = vunpack.c.h.b16 %v1965
        %v2253 = vunpack.c.l.b16 %v1966
        %v2254 = vunpack.c.h.b16 %v1966
        %v2255 = vunpack.c.l.b16 %v1967
        %v2256 = vunpack.c.h.b16 %v1967
        %v2257 = vunpack.c.l.b16 %v1968
        %v2258 = vunpack.c.h.b16 %v1968
        %v2259 = vunpack.c.l.b16 %v1969
        %v2260 = vunpack.c.h.b16 %v1969
        %v2261 = vunpack.c.l.b16 %v1970
        %v2262 = vunpack.c.h.b16 %v1970
        %v2263 = vunpack.c.l.b16 %v1971
        %v2264 = vunpack.c.h.b16 %v1971
        %v2265 = vunpack.c.l.b16 %v1972
        %v2266 = vunpack.c.h.b16 %v1972
        %v2267 = vunpack.c.l.b16 %v1973
        %v2268 = vunpack.c.h.b16 %v1973
        %v2269 = vunpack.c.l.b16 %v1974
        %v2270 = vunpack.c.h.b16 %v1974
        %v2271 = vunpack.c.l.b16 %v1975
        %v2272 = vunpack.c.h.b16 %v1975
        %v2273 = vunpack.c.l.b16 %v1976
        %v2274 = vunpack.c.h.b16 %v1976
        %v2275 = vunpack.c.l.b16 %v1977
        %v2276 = vunpack.c.h.b16 %v1977
        %v2277 = vunpack.c.l.b16 %v1978
        %v2278 = vunpack.c.h.b16 %v1978
        %v2279 = vunpack.c.l.b16 %v1979
        %v2280 = vunpack.c.h.b16 %v1979
        %v2281 = vunpack.c.l.b16 %v1980
        %v2282 = vunpack.c.h.b16 %v1980
        %v2283 = vunpack.c.l.b16 %v1981
        %v2284 = vunpack.c.h.b16 %v1981
        %v2285 = vunpack.c.l.b16 %v1982
        %v2286 = vunpack.c.h.b16 %v1982
        %v2287 = vunpack.c.l.b16 %v1983
        %v2288 = vunpack.c.h.b16 %v1983
        %v2289 = vunpack.c.l.b16 %v1984
        %v2290 = vunpack.c.h.b16 %v1984
        %v2291 = vunpack.c.l.b16 %v1985
        %v2292 = vunpack.c.h.b16 %v1985
        %v2293 = vunpack.c.l.b16 %v1986
        %v2294 = vunpack.c.h.b16 %v1986
        %v2295 = vunpack.c.l.b16 %v1987
        %v2296 = vunpack.c.h.b16 %v1987
        %v2297 = vunpack.c.l.b16 %v1988
        %v2298 = vunpack.c.h.b16 %v1988
        %v2299 = vunpack.c.l.b16 %v1989
        %v2300 = vunpack.c.h.b16 %v1989
        %v2301 = vunpack.c.l.b16 %v1990
        %v2302 = vunpack.c.h.b16 %v1990
        %v2303 = vunpack.c.l.b16 %v1991
        %v2304 = vunpack.c.h.b16 %v1991
        %v2305 = vunpack.c.l.b16 %v1992
        %v2306 = vunpack.c.h.b16 %v1992
        %v2307 = vunpack.c.l.b16 %v1993
        %v2308 = vunpack.c.h.b16 %v1993
        %v2309 = vunpack.c.l.b16 %v1994
        %v2310 = vunpack.c.h.b16 %v1994
        %v2311 = vunpack.c.l.b16 %v1995
        %v2312 = vunpack.c.h.b16 %v1995
        %v2313 = vunpack.c.l.b16 %v1996
        %v2314 = vunpack.c.h.b16 %v1996
        %v2315 = vunpack.c.l.b16 %v1997
        %v2316 = vunpack.c.h.b16 %v1997
        %v2317 = vunpack.c.l.b16 %v1998
        %v2318 = vunpack.c.h.b16 %v1998
        %v2319 = vunpack.c.l.b16 %v1999
        %v2320 = vunpack.c.h.b16 %v1999
        %v2321 = vunpack.c.l.b16 %v2000
        %v2322 = vunpack.c.h.b16 %v2000
        %v2323 = vunpack.c.l.b16 %v2001
        %v2324 = vunpack.c.h.b16 %v2001
        %v2325 = vunpack.c.l.b16 %v2002
        %v2326 = vunpack.c.h.b16 %v2002
        %v2327 = vunpack.c.l.b16 %v2003
        %v2328 = vunpack.c.h.b16 %v2003
        %v2329 = vunpack.c.l.b16 %v2004
        %v2330 = vunpack.c.h.b16 %v2004
        %v2331 = vunpack.c.l.b16 %v2005
        %v2332 = vunpack.c.h.b16 %v2005
        %v2333 = vunpack.c.l.b16 %v2006
        %v2334 = vunpack.c.h.b16 %v2006
        %v2335 = vunpack.c.l.b16 %v2007
        %v2336 = vunpack.c.h.b16 %v2007
        %v2337 = vunpack.c.l.b16 %v2008
        %v2338 = vunpack.c.h.b16 %v2008
        %v2339 = vunpack.c.l.b16 %v2009
        %v2340 = vunpack.c.h.b16 %v2009
        %v2341 = vunpack.c.l.b16 %v2010
        %v2342 = vunpack.c.h.b16 %v2010
        %v2343 = vunpack.c.l.b16 %v2011
        %v2344 = vunpack.c.h.b16 %v2011
        %v2345 = vunpack.c.l.b16 %v2012
        %v2346 = vunpack.c.h.b16 %v2012
        %v2347 = vunpack.c.l.b16 %v2013
        %v2348 = vunpack.c.h.b16 %v2013
        %v2349 = vunpack.c.l.b16 %v2014
        %v2350 = vunpack.c.h.b16 %v2014
        %v2351 = vunpack.c.l.b16 %v2015
        %v2352 = vunpack.c.h.b16 %v2015
        %v2353 = vunpack.c.l.b16 %v2016
        %v2354 = vunpack.c.h.b16 %v2016
        %v2355 = vunpack.c.l.b16 %v2017
        %v2356 = vunpack.c.h.b16 %v2017
        %v2357 = vunpack.c.l.b16 %v2018
        %v2358 = vunpack.c.h.b16 %v2018
        %v2359 = vunpack.c.l.b16 %v2019
        %v2360 = vunpack.c.h.b16 %v2019
        %v2361 = vunpack.c.l.b16 %v2020
        %v2362 = vunpack.c.h.b16 %v2020
        %v2363 = vunpack.c.l.b16 %v2021
        %v2364 = vunpack.c.h.b16 %v2021
        %v2365 = vunpack.c.l.b16 %v2022
        %v2366 = vunpack.c.h.b16 %v2022
        %v2367 = vunpack.c.l.b16 %v2023
        %v2368 = vunpack.c.h.b16 %v2023
        %v2369 = vunpack.c.l.b16 %v2024
        %v2370 = vunpack.c.h.b16 %v2024
        %v2371 = vunpack.c.l.b16 %v2025
        %v2372 = vunpack.c.h.b16 %v2025
        %v2373 = vunpack.c.l.b16 %v2026
        %v2374 = vunpack.c.h.b16 %v2026
        %v2375 = vunpack.c.l.b16 %v2027
        %v2376 = vunpack.c.h.b16 %v2027
        %v2377 = vunpack.c.l.b16 %v2028
        %v2378 = vunpack.c.h.b16 %v2028
        %v2379 = vunpack.c.l.b16 %v2029
        %v2380 = vunpack.c.h.b16 %v2029
        %v2381 = vunpack.c.l.b16 %v2030
        %v2382 = vunpack.c.h.b16 %v2030
        %v2383 = vunpack.c.l.b16 %v2031
        %v2384 = vunpack.c.h.b16 %v2031
        %v2385 = vunpack.c.l.b16 %v2032
        %v2386 = vunpack.c.h.b16 %v2032
        %v2387 = vunpack.c.l.b16 %v2033
        %v2388 = vunpack.c.h.b16 %v2033
        %v2389 = vunpack.c.l.b16 %v2034
        %v2390 = vunpack.c.h.b16 %v2034
        %v2391 = vunpack.c.l.b16 %v2035
        %v2392 = vunpack.c.h.b16 %v2035
        %v2393 = vunpack.c.l.b16 %v2036
        %v2394 = vunpack.c.h.b16 %v2036
        %v2395 = vunpack.c.l.b16 %v2037
        %v2396 = vunpack.c.h.b16 %v2037
        %v2397 = vunpack.c.l.b16 %v2038
        %v2398 = vunpack.c.h.b16 %v2038
        %v2399 = vunpack.c.l.b16 %v2039
        %v2400 = vunpack.c.h.b16 %v2039
        %v2401 = vunpack.c.l.b16 %v2040
        %v2402 = vunpack.c.h.b16 %v2040
        %v2403 = vunpack.c.l.b16 %v2041
        %v2404 = vunpack.c.h.b16 %v2041
        %v2405 = vunpack.c.l.b16 %v2042
        %v2406 = vunpack.c.h.b16 %v2042
        %v2407 = vunpack.c.l.b16 %v2043
        %v2408 = vunpack.c.h.b16 %v2043
        %v2409 = vunpack.c.l.b16 %v2044
        %v2410 = vunpack.c.h.b16 %v2044
        %v2411 = vunpack.c.l.b16 %v2045
        %v2412 = vunpack.c.h.b16 %v2045
        %v2413 = vunpack.c.l.b16 %v2046
        %v2414 = vunpack.c.h.b16 %v2046
        %v2415 = vunpack.c.l.b16 %v2047
        %v2416 = vunpack.c.h.b16 %v2047
        %v2417 = vunpack.c.l.b16 %v2048
        %v2418 = vunpack.c.h.b16 %v2048
        %v2419 = vunpack.c.l.b16 %v2049
        %v2420 = vunpack.c.h.b16 %v2049
        %v2421 = vunpack.c.l.b16 %v2050
        %v2422 = vunpack.c.h.b16 %v2050
        %v2423 = vunpack.c.l.b16 %v2051
        %v2424 = vunpack.c.h.b16 %v2051
        %v2425 = vunpack.c.l.b16 %v2052
        %v2426 = vunpack.c.h.b16 %v2052
        %v2427 = vunpack.c.l.b16 %v2053
        %v2428 = vunpack.c.h.b16 %v2053
        %v2429 = vunpack.c.l.b16 %v2054
        %v2430 = vunpack.c.h.b16 %v2054
        %v2431 = vunpack.c.l.b16 %v2055
        %v2432 = vunpack.c.h.b16 %v2055
        %v2433 = vunpack.c.l.b16 %v2056
        %v2434 = vunpack.c.h.b16 %v2056
        %v2435 = vunpack.c.l.b16 %v2057
        %v2436 = vunpack.c.h.b16 %v2057
        %v2437 = vunpack.c.l.b16 %v2058
        %v2438 = vunpack.c.h.b16 %v2058
        %v2439 = vunpack.c.l.b16 %v2059
        %v2440 = vunpack.c.h.b16 %v2059
        %v2441 = vunpack.c.l.b16 %v2060
        %v2442 = vunpack.c.h.b16 %v2060
        %v2443 = vunpack.c.l.b16 %v2061
        %v2444 = vunpack.c.h.b16 %v2061
        %v2445 = vunpack.c.l.b16 %v2062
        %v2446 = vunpack.c.h.b16 %v2062
        %v2447 = vpack.c.b16 %v2193, %v2191
        %v2448 = vpack.c.b16 %v2194, %v2192
        %v2449 = vpack.c.b16 %v2197, %v2195
        %v2450 = vpack.c.b16 %v2198, %v2196
        %v2451 = vpack.c.b16 %v2201, %v2199
        %v2452 = vpack.c.b16 %v2202, %v2200
        %v2453 = vpack.c.b16 %v2205, %v2203
        %v2454 = vpack.c.b16 %v2206, %v2204
        %v2455 = vpack.c.b16 %v2209, %v2207
        %v2456 = vpack.c.b16 %v2210, %v2208
        %v2457 = vpack.c.b16 %v2213, %v2211
        %v2458 = vpack.c.b16 %v2214, %v2212
        %v2459 = vpack.c.b16 %v2217, %v2215
        %v2460 = vpack.c.b16 %v2218, %v2216
        %v2461 = vpack.c.b16 %v2221, %v2219
        %v2462 = vpack.c.b16 %v2222, %v2220
        %v2463 = vpack.c.b16 %v2225, %v2223
        %v2464 = vpack.c.b16 %v2226, %v2224
        %v2465 = vpack.c.b16 %v2229, %v2227
        %v2466 = vpack.c.b16 %v2230, %v2228
        %v2467 = vpack.c.b16 %v2233, %v2231
        %v2468 = vpack.c.b16 %v2234, %v2232
        %v2469 = vpack.c.b16 %v2237, %v2235
        %v2470 = vpack.c.b16 %v2238, %v2236
        %v2471 = vpack.c.b16 %v2241, %v2239
        %v2472 = vpack.c.b16 %v2242, %v2240
        %v2473 = vpack.c.b16 %v2245, %v2243
        %v2474 = vpack.c.b16 %v2246, %v2244
        %v2475 = vpack.c.b16 %v2249, %v2247
        %v2476 = vpack.c.b16 %v2250, %v2248
        %v2477 = vpack.c.b16 %v2253, %v2251
        %v2478 = vpack.c.b16 %v2254, %v2252
        %v2479 = vpack.c.b16 %v2257, %v2255
        %v2480 = vpack.c.b16 %v2258, %v2256
        %v2481 = vpack.c.b16 %v2261, %v2259
        %v2482 = vpack.c.b16 %v2262, %v2260
        %v2483 = vpack.c.b16 %v2265, %v2263
        %v2484 = vpack.c.b16 %v2266, %v2264
        %v2485 = vpack.c.b16 %v2269, %v2267
        %v2486 = vpack.c.b16 %v2270, %v2268
        %v2487 = vpack.c.b16 %v2273, %v2271
        %v2488 = vpack.c.b16 %v2274, %v2272
        %v2489 = vpack.c.b16 %v2277, %v2275
        %v2490 = vpack.c.b16 %v2278, %v2276
        %v2491 = vpack.c.b16 %v2281, %v2279
        %v2492 = vpack.c.b16 %v2282, %v2280
        %v2493 = vpack.c.b16 %v2285, %v2283
        %v2494 = vpack.c.b16 %v2286, %v2284
        %v2495 = vpack.c.b16 %v2289, %v2287
        %v2496 = vpack.c.b16 %v2290, %v2288
        %v2497 = vpack.c.b16 %v2293, %v2291
        %v2498 = vpack.c.b16 %v2294, %v2292
        %v2499 = vpack.c.b16 %v2297, %v2295
        %v2500 = vpack.c.b16 %v2298, %v2296
        %v2501 = vpack.c.b16 %v2301, %v2299
        %v2502 = vpack.c.b16 %v2302, %v2300
        %v2503 = vpack.c.b16 %v2305, %v2303
        %v2504 = vpack.c.b16 %v2306, %v2304
        %v2505 = vpack.c.b16 %v2309, %v2307
        %v2506 = vpack.c.b16 %v2310, %v2308
        %v2507 = vpack.c.b16 %v2313, %v2311
        %v2508 = vpack.c.b16 %v2314, %v2312
        %v2509 = vpack.c.b16 %v2317, %v2315
        %v2510 = vpack.c.b16 %v2318, %v2316
        %v2511 = vpack.c.b16 %v2321, %v2319
        %v2512 = vpack.c.b16 %v2322, %v2320
        %v2513 = vpack.c.b16 %v2325, %v2323
        %v2514 = vpack.c.b16 %v2326, %v2324
        %v2515 = vpack.c.b16 %v2329, %v2327
        %v2516 = vpack.c.b16 %v2330, %v2328
        %v2517 = vpack.c.b16 %v2333, %v2331
        %v2518 = vpack.c.b16 %v2334, %v2332
        %v2519 = vpack.c.b16 %v2337, %v2335
        %v2520 = vpack.c.b16 %v2338, %v2336
        %v2521 = vpack.c.b16 %v2341, %v2339
        %v2522 = vpack.c.b16 %v2342, %v2340
        %v2523 = vpack.c.b16 %v2345, %v2343
        %v2524 = vpack.c.b16 %v2346, %v2344
        %v2525 = vpack.c.b16 %v2349, %v2347
        %v2526 = vpack.c.b16 %v2350, %v2348
        %v2527 = vpack.c.b16 %v2353, %v2351
        %v2528 = vpack.c.b16 %v2354, %v2352
        %v2529 = vpack.c.b16 %v2357, %v2355
        %v2530 = vpack.c.b16 %v2358, %v2356
        %v2531 = vpack.c.b16 %v2361, %v2359
        %v2532 = vpack.c.b16 %v2362, %v2360
        %v2533 = vpack.c.b16 %v2365, %v2363
        %v2534 = vpack.c.b16 %v2366, %v2364
        %v2535 = vpack.c.b16 %v2369, %v2367
        %v2536 = vpack.c.b16 %v2370, %v2368
        %v2537 = vpack.c.b16 %v2373, %v2371
        %v2538 = vpack.c.b16 %v2374, %v2372
        %v2539 = vpack.c.b16 %v2377, %v2375
        %v2540 = vpack.c.b16 %v2378, %v2376
        %v2541 = vpack.c.b16 %v2381, %v2379
        %v2542 = vpack.c.b16 %v2382, %v2380
        %v2543 = vpack.c.b16 %v2385, %v2383
        %v2544 = vpack.c.b16 %v2386, %v2384
        %v2545 = vpack.c.b16 %v2389, %v2387
        %v2546 = vpack.c.b16 %v2390, %v2388
        %v2547 = vpack.c.b16 %v2393, %v2391
        %v2548 = vpack.c.b16 %v2394, %v2392
        %v2549 = vpack.c.b16 %v2397, %v2395
        %v2550 = vpack.c.b16 %v2398, %v2396
        %v2551 = vpack.c.b16 %v2401, %v2399
        %v2552 = vpack.c.b16 %v2402, %v2400
        %v2553 = vpack.c.b16 %v2405, %v2403
        %v2554 = vpack.c.b16 %v2406, %v2404
        %v2555 = vpack.c.b16 %v2409, %v2407
        %v2556 = vpack.c.b16 %v2410, %v2408
        %v2557 = vpack.c.b16 %v2413, %v2411
        %v2558 = vpack.c.b16 %v2414, %v2412
        %v2559 = vpack.c.b16 %v2417, %v2415
        %v2560 = vpack.c.b16 %v2418, %v2416
        %v2561 = vpack.c.b16 %v2421, %v2419
        %v2562 = vpack.c.b16 %v2422, %v2420
        %v2563 = vpack.c.b16 %v2425, %v2423
        %v2564 = vpack.c.b16 %v2426, %v2424
        %v2565 = vpack.c.b16 %v2429, %v2427
        %v2566 = vpack.c.b16 %v2430, %v2428
        %v2567 = vpack.c.b16 %v2433, %v2431
        %v2568 = vpack.c.b16 %v2434, %v2432
        %v2569 = vpack.c.b16 %v2437, %v2435
        %v2570 = vpack.c.b16 %v2438, %v2436
        %v2571 = vpack.c.b16 %v2441, %v2439
        %v2572 = vpack.c.b16 %v2442, %v2440
        %v2573 = vpack.c.b16 %v2445, %v2443
        %v2574 = vpack.c.b16 %v2446, %v2444
        %2703 = vmatpush.bf16.msra.mxu0 %v2461
        %2704 = vmatpush.bf16.msra.mxu0 %v2459
        %2705 = vmatpush.bf16.msra.mxu0 %v2457
        %2706 = vmatpush.bf16.msra.mxu0 %v2455
        %2707 = vmatpush.bf16.msra.mxu0 %v2453
        %2708 = vmatpush.bf16.msra.mxu0 %v2451
        %2709 = vmatpush.bf16.msra.mxu0 %v2449
        %2710 = vmatpush.bf16.msra.mxu0 %v2447
        %2711 = vmatmul.bf16.gmra.mxu0 %v1927
        %v2712 = vpop.f32.mrf.mxu0
        %v2713 = vadd.f32 0.0, %v2712
        %v2714 = vpop.f32.mrf.mxu0
        %2715 = vdwg.mxu0
        %2716 = vmatpush.bf16.msra.mxu0 %v2477
        %2717 = vmatpush.bf16.msra.mxu0 %v2475
        %2718 = vmatpush.bf16.msra.mxu0 %v2473
        %2719 = vmatpush.bf16.msra.mxu0 %v2471
        %2720 = vmatpush.bf16.msra.mxu0 %v2469
        %2721 = vmatpush.bf16.msra.mxu0 %v2467
        %2722 = vmatpush.bf16.msra.mxu0 %v2465
        %2723 = vmatpush.bf16.msra.mxu0 %v2463
        %2724 = vmatmul.bf16.gmra.mxu0 %v1928
        %v2725 = vpop.f32.mrf.mxu0
        %v2726 = vadd.f32 %v2713, %v2725
        %v2727 = vpop.f32.mrf.mxu0
        %2728 = vdwg.mxu0
        %2729 = vmatpush.bf16.msra.mxu0 %v2493
        %2730 = vmatpush.bf16.msra.mxu0 %v2491
        %2731 = vmatpush.bf16.msra.mxu0 %v2489
        %2732 = vmatpush.bf16.msra.mxu0 %v2487
        %2733 = vmatpush.bf16.msra.mxu0 %v2485
        %2734 = vmatpush.bf16.msra.mxu0 %v2483
        %2735 = vmatpush.bf16.msra.mxu0 %v2481
        %2736 = vmatpush.bf16.msra.mxu0 %v2479
        %2737 = vmatmul.bf16.gmra.mxu0 %v1929
        %v2738 = vpop.f32.mrf.mxu0
        %v2739 = vadd.f32 %v2726, %v2738
        %v2740 = vpop.f32.mrf.mxu0
        %2741 = vdwg.mxu0
        %2742 = vmatpush.bf16.msra.mxu0 %v2509
        %2743 = vmatpush.bf16.msra.mxu0 %v2507
        %2744 = vmatpush.bf16.msra.mxu0 %v2505
        %2745 = vmatpush.bf16.msra.mxu0 %v2503
        %2746 = vmatpush.bf16.msra.mxu0 %v2501
        %2747 = vmatpush.bf16.msra.mxu0 %v2499
        %2748 = vmatpush.bf16.msra.mxu0 %v2497
        %2749 = vmatpush.bf16.msra.mxu0 %v2495
        %2750 = vmatmul.bf16.gmra.mxu0 %v1930
        %v2751 = vpop.f32.mrf.mxu0
        %v2752 = vadd.f32 %v2739, %v2751
        %v2753 = vpop.f32.mrf.mxu0
        %2754 = vdwg.mxu0
        %2755 = vmatpush.bf16.msra.mxu0 %v2525
        %2756 = vmatpush.bf16.msra.mxu0 %v2523
        %2757 = vmatpush.bf16.msra.mxu0 %v2521
        %2758 = vmatpush.bf16.msra.mxu0 %v2519
        %2759 = vmatpush.bf16.msra.mxu0 %v2517
        %2760 = vmatpush.bf16.msra.mxu0 %v2515
        %2761 = vmatpush.bf16.msra.mxu0 %v2513
        %2762 = vmatpush.bf16.msra.mxu0 %v2511
        %2763 = vmatmul.bf16.gmra.mxu0 %v1931
        %v2764 = vpop.f32.mrf.mxu0
        %v2765 = vadd.f32 %v2752, %v2764
        %v2766 = vpop.f32.mrf.mxu0
        %2767 = vdwg.mxu0
        %2768 = vmatpush.bf16.msra.mxu0 %v2541
        %2769 = vmatpush.bf16.msra.mxu0 %v2539
        %2770 = vmatpush.bf16.msra.mxu0 %v2537
        %2771 = vmatpush.bf16.msra.mxu0 %v2535
        %2772 = vmatpush.bf16.msra.mxu0 %v2533
        %2773 = vmatpush.bf16.msra.mxu0 %v2531
        %2774 = vmatpush.bf16.msra.mxu0 %v2529
        %2775 = vmatpush.bf16.msra.mxu0 %v2527
        %2776 = vmatmul.bf16.gmra.mxu0 %v1932
        %v2777 = vpop.f32.mrf.mxu0
        %v2778 = vadd.f32 %v2765, %v2777
        %v2779 = vpop.f32.mrf.mxu0
        %2780 = vdwg.mxu0
        %2781 = vmatpush.bf16.msra.mxu0 %v2557
        %2782 = vmatpush.bf16.msra.mxu0 %v2555
        %2783 = vmatpush.bf16.msra.mxu0 %v2553
        %2784 = vmatpush.bf16.msra.mxu0 %v2551
        %2785 = vmatpush.bf16.msra.mxu0 %v2549
        %2786 = vmatpush.bf16.msra.mxu0 %v2547
        %2787 = vmatpush.bf16.msra.mxu0 %v2545
        %2788 = vmatpush.bf16.msra.mxu0 %v2543
        %2789 = vmatmul.bf16.gmra.mxu0 %v1933
        %v2790 = vpop.f32.mrf.mxu0
        %v2791 = vadd.f32 %v2778, %v2790
        %v2792 = vpop.f32.mrf.mxu0
        %2793 = vdwg.mxu0
        %2794 = vmatpush.bf16.msra.mxu0 %v2573
        %2795 = vmatpush.bf16.msra.mxu0 %v2571
        %2796 = vmatpush.bf16.msra.mxu0 %v2569
        %2797 = vmatpush.bf16.msra.mxu0 %v2567
        %2798 = vmatpush.bf16.msra.mxu0 %v2565
        %2799 = vmatpush.bf16.msra.mxu0 %v2563
        %2800 = vmatpush.bf16.msra.mxu0 %v2561
        %2801 = vmatpush.bf16.msra.mxu0 %v2559
        %2802 = vmatmul.bf16.gmra.mxu0 %v1934
        %v2803 = vpop.f32.mrf.mxu0
        %v2804 = vadd.f32 %v2791, %v2803
        %v2805 = vpop.f32.mrf.mxu0
        %2806 = vdwg.mxu0
        %2807 = vmatpush.bf16.msra.mxu0 %v2462
        %2808 = vmatpush.bf16.msra.mxu0 %v2460
        %2809 = vmatpush.bf16.msra.mxu0 %v2458
        %2810 = vmatpush.bf16.msra.mxu0 %v2456
        %2811 = vmatpush.bf16.msra.mxu0 %v2454
        %2812 = vmatpush.bf16.msra.mxu0 %v2452
        %2813 = vmatpush.bf16.msra.mxu0 %v2450
        %2814 = vmatpush.bf16.msra.mxu0 %v2448
        %2815 = vmatmul.bf16.gmra.mxu0 %v1927
        %v2816 = vpop.f32.mrf.mxu0
        %v2817 = vadd.f32 0.0, %v2816
        %v2818 = vpop.f32.mrf.mxu0
        %2819 = vdwg.mxu0
        %2820 = vmatpush.bf16.msra.mxu0 %v2478
        %2821 = vmatpush.bf16.msra.mxu0 %v2476
        %2822 = vmatpush.bf16.msra.mxu0 %v2474
        %2823 = vmatpush.bf16.msra.mxu0 %v2472
        %2824 = vmatpush.bf16.msra.mxu0 %v2470
        %2825 = vmatpush.bf16.msra.mxu0 %v2468
        %2826 = vmatpush.bf16.msra.mxu0 %v2466
        %2827 = vmatpush.bf16.msra.mxu0 %v2464
        %2828 = vmatmul.bf16.gmra.mxu0 %v1928
        %v2829 = vpop.f32.mrf.mxu0
        %v2830 = vadd.f32 %v2817, %v2829
        %v2831 = vpop.f32.mrf.mxu0
        %2832 = vdwg.mxu0
        %2833 = vmatpush.bf16.msra.mxu0 %v2494
        %2834 = vmatpush.bf16.msra.mxu0 %v2492
        %2835 = vmatpush.bf16.msra.mxu0 %v2490
        %2836 = vmatpush.bf16.msra.mxu0 %v2488
        %2837 = vmatpush.bf16.msra.mxu0 %v2486
        %2838 = vmatpush.bf16.msra.mxu0 %v2484
        %2839 = vmatpush.bf16.msra.mxu0 %v2482
        %2840 = vmatpush.bf16.msra.mxu0 %v2480
        %2841 = vmatmul.bf16.gmra.mxu0 %v1929
        %v2842 = vpop.f32.mrf.mxu0
        %v2843 = vadd.f32 %v2830, %v2842
        %v2844 = vpop.f32.mrf.mxu0
        %2845 = vdwg.mxu0
        %2846 = vmatpush.bf16.msra.mxu0 %v2510
        %2847 = vmatpush.bf16.msra.mxu0 %v2508
        %2848 = vmatpush.bf16.msra.mxu0 %v2506
        %2849 = vmatpush.bf16.msra.mxu0 %v2504
        %2850 = vmatpush.bf16.msra.mxu0 %v2502
        %2851 = vmatpush.bf16.msra.mxu0 %v2500
        %2852 = vmatpush.bf16.msra.mxu0 %v2498
        %2853 = vmatpush.bf16.msra.mxu0 %v2496
        %2854 = vmatmul.bf16.gmra.mxu0 %v1930
        %v2855 = vpop.f32.mrf.mxu0
        %v2856 = vadd.f32 %v2843, %v2855
        %v2857 = vpop.f32.mrf.mxu0
        %2858 = vdwg.mxu0
        %2859 = vmatpush.bf16.msra.mxu0 %v2526
        %2860 = vmatpush.bf16.msra.mxu0 %v2524
        %2861 = vmatpush.bf16.msra.mxu0 %v2522
        %2862 = vmatpush.bf16.msra.mxu0 %v2520
        %2863 = vmatpush.bf16.msra.mxu0 %v2518
        %2864 = vmatpush.bf16.msra.mxu0 %v2516
        %2865 = vmatpush.bf16.msra.mxu0 %v2514
        %2866 = vmatpush.bf16.msra.mxu0 %v2512
        %2867 = vmatmul.bf16.gmra.mxu0 %v1931
        %v2868 = vpop.f32.mrf.mxu0
        %v2869 = vadd.f32 %v2856, %v2868
        %v2870 = vpop.f32.mrf.mxu0
        %2871 = vdwg.mxu0
        %2872 = vmatpush.bf16.msra.mxu0 %v2542
        %2873 = vmatpush.bf16.msra.mxu0 %v2540
        %2874 = vmatpush.bf16.msra.mxu0 %v2538
        %2875 = vmatpush.bf16.msra.mxu0 %v2536
        %2876 = vmatpush.bf16.msra.mxu0 %v2534
        %2877 = vmatpush.bf16.msra.mxu0 %v2532
        %2878 = vmatpush.bf16.msra.mxu0 %v2530
        %2879 = vmatpush.bf16.msra.mxu0 %v2528
        %2880 = vmatmul.bf16.gmra.mxu0 %v1932
        %v2881 = vpop.f32.mrf.mxu0
        %v2882 = vadd.f32 %v2869, %v2881
        %v2883 = vpop.f32.mrf.mxu0
        %2884 = vdwg.mxu0
        %2885 = vmatpush.bf16.msra.mxu0 %v2558
        %2886 = vmatpush.bf16.msra.mxu0 %v2556
        %2887 = vmatpush.bf16.msra.mxu0 %v2554
        %2888 = vmatpush.bf16.msra.mxu0 %v2552
        %2889 = vmatpush.bf16.msra.mxu0 %v2550
        %2890 = vmatpush.bf16.msra.mxu0 %v2548
        %2891 = vmatpush.bf16.msra.mxu0 %v2546
        %2892 = vmatpush.bf16.msra.mxu0 %v2544
        %2893 = vmatmul.bf16.gmra.mxu0 %v1933
        %v2894 = vpop.f32.mrf.mxu0
        %v2895 = vadd.f32 %v2882, %v2894
        %v2896 = vpop.f32.mrf.mxu0
        %2897 = vdwg.mxu0
        %2898 = vmatpush.bf16.msra.mxu0 %v2574
        %2899 = vmatpush.bf16.msra.mxu0 %v2572
        %2900 = vmatpush.bf16.msra.mxu0 %v2570
        %2901 = vmatpush.bf16.msra.mxu0 %v2568
        %2902 = vmatpush.bf16.msra.mxu0 %v2566
        %2903 = vmatpush.bf16.msra.mxu0 %v2564
        %2904 = vmatpush.bf16.msra.mxu0 %v2562
        %2905 = vmatpush.bf16.msra.mxu0 %v2560
        %2906 = vmatmul.bf16.gmra.mxu0 %v1934
        %v2907 = vpop.f32.mrf.mxu0
        %v2908 = vadd.f32 %v2895, %v2907
        %v2909 = vpop.f32.mrf.mxu0
        %2910 = vdwg.mxu0
        %vm2911 = vcmask 138240
        %2912 = vst.msk [vmem:[#allocation3] sm:$0xff] %vm2911, 0.0
        %vm2913 = vcmask 277640
        %2914 = vst.msk [vmem:[#allocation3 + $0x10] sm:$0xff] %vm2913, 0.0
        %2917 = vrot.lane.b32.xlu0 %v2804, 17
        %v2918 = vpop.permute.xlu0 %2917
        %2919 = vrot.lane.b32.xlu0 %v2908, 17
        %v2920 = vpop.permute.xlu0 %2919
        %v2921 = vsel %vm2911, %v2918, %v2920
        %vm2925 = vcmask 1047688
        %2926 = vst.msk [vmem:[#allocation3] sm:$0xff] %vm2925, %v2918
        %2927 = vst [vmem:[#allocation3 + $0x8] sm:$0xff] %v2921
        %2928 = vst.msk [vmem:[#allocation3 + $0x10] sm:$0xff] %vm2911, %v2920
        %vm2929 = vcmp.lt.s32.totalorder %v591, 0
        %v2930 = vsub.s32 0, %v591
        %v2931 = vsel %vm2929, %v2930, %v591
        %v2932 = vshrl.u32 %v2931, 4
        %v2933 = vand.u32 %v2931, 15
        %v2934 = vsub.s32 0, %v2933
        %v2935 = vsel %vm2929, %v2934, %v2933
        %vm2936 = vcmp.lt.s32.totalorder %v592, 0
        %v2937 = vsub.s32 0, %v592
        %v2938 = vsel %vm2936, %v2937, %v592
        %v2939 = vshrl.u32 %v2938, 4
        %v2940 = vand.u32 %v2938, 15
        %v2941 = vsub.s32 0, %v2940
        %v2942 = vsel %vm2936, %v2941, %v2940
        %vm2943 = vcmp.ne.s32.totalorder %v2935, 0
        %vm2944 = vcmp.ne.s32.totalorder %v2942, 0
        %vm2945 = vcmp.lt.s32.totalorder %v2935, 0
        %vm2946 = vcmp.lt.s32.totalorder %v2942, 0
        %vm2947 = vmand %vm2945, %vm2943
        %vm2948 = vmand %vm2946, %vm2944
        %v2949 = vadd.s32 %v2935, 16
        %v2950 = vadd.s32 %v2942, 16
        %v2951 = vsel %vm2947, %v2949, %v2935
        %v2952 = vsel %vm2948, %v2950, %v2942
        %vm2953 = vcmp.ge.s32.totalorder %v2951, 1
        %vm2954 = vcmp.ge.s32.totalorder %v2952, 1
        %vm2955 = vcmp.le.s32.totalorder %v2951, 14
        %vm2956 = vcmp.le.s32.totalorder %v2952, 14
        %v2957 = vld [vmem:[#allocation3] sm:$0xff]
        %v2958 = vld [vmem:[#allocation3 + $0x8] sm:$0xff]
        %v2959 = vsel %vm2953, %v2957, 0.0
        %v2960 = vsel %vm2954, %v2958, 0.0
        %2961 = vst [vmem:[#allocation8] sm:$0xff] %v2959
        %2962 = vst [vmem:[#allocation8 + $0x8] sm:$0xff] %v2960
        %v2963 = vld [vmem:[#allocation3] sm:$0xff]
        %v2964 = vld [vmem:[#allocation3 + $0x8] sm:$0xff]
        %v2965 = vld [vmem:[#allocation3 + $0x10] sm:$0xff]
        %2969 = vrot.lane.b32.xlu0 %v2963, 127
        %v2970 = vpop.permute.xlu0 %2969
        %2971 = vrot.lane.b32.xlu0 %v2964, 127
        %v2972 = vpop.permute.xlu0 %2971
        %2973 = vrot.lane.b32.xlu0 %v2965, 127
        %v2974 = vpop.permute.xlu0 %2973
        %v2975 = vsel %vm771, %v2970, %v2972
        %v2976 = vsel %vm771, %v2972, %v2974
        %2979 = vst [vmem:[#allocation8 + $0x10] sm:$0xff] %v2975
        %2980 = vst [vmem:[#allocation8 + $0x18] sm:$0xff] %v2976
        %v2981 = vld [vmem:[#allocation3] sm:$0xff]
        %v2982 = vld [vmem:[#allocation3 + $0x8] sm:$0xff]
        %v2983 = vld [vmem:[#allocation3 + $0x10] sm:$0xff]
        %2987 = vrot.lane.b32.xlu0 %v2981, 126
        %v2988 = vpop.permute.xlu0 %2987
        %2989 = vrot.lane.b32.xlu0 %v2982, 126
        %v2990 = vpop.permute.xlu0 %2989
        %2991 = vrot.lane.b32.xlu0 %v2983, 126
        %v2992 = vpop.permute.xlu0 %2991
        %v2993 = vsel %vm832, %v2988, %v2990
        %v2994 = vsel %vm832, %v2990, %v2992
        %v2997 = vsel %vm2955, %v2993, 0.0
        %v2998 = vsel %vm2956, %v2994, 0.0
        %2999 = vst [vmem:[#allocation8 + $0x20] sm:$0xff] %v2997
        %3000 = vst [vmem:[#allocation8 + $0x28] sm:$0xff] %v2998
        %v3001 = vld [vmem:[#allocation3] sm:$0xff]
        %v3002 = vld [vmem:[#allocation3 + $0x8] sm:$0xff]
        %v3003 = vld [vmem:[#allocation3 + $0x10] sm:$0xff]
        %3007 = vrot.lane.b32.xlu0 %v3001, 112
        %v3008 = vpop.permute.xlu0 %3007
        %3009 = vrot.lane.b32.xlu0 %v3002, 112
        %v3010 = vpop.permute.xlu0 %3009
        %3011 = vrot.lane.b32.xlu0 %v3003, 112
        %v3012 = vpop.permute.xlu0 %3011
        %vm3013 = vcmask 916480
        %v3014 = vsel %vm3013, %v3008, %v3010
        %v3015 = vsel %vm3013, %v3010, %v3012
        %v3018 = vsel %vm2953, %v3014, 0.0
        %v3019 = vsel %vm2954, %v3015, 0.0
        %3020 = vst [vmem:[#allocation8 + $0x30] sm:$0xff] %v3018
        %3021 = vst [vmem:[#allocation8 + $0x38] sm:$0xff] %v3019
        %v3022 = vld [vmem:[#allocation3] sm:$0xff]
        %v3023 = vld [vmem:[#allocation3 + $0x8] sm:$0xff]
        %v3024 = vld [vmem:[#allocation3 + $0x10] sm:$0xff]
        %3028 = vrot.lane.b32.xlu0 %v3022, 111
        %v3029 = vpop.permute.xlu0 %3028
        %3030 = vrot.lane.b32.xlu0 %v3023, 111
        %v3031 = vpop.permute.xlu0 %3030
        %3032 = vrot.lane.b32.xlu0 %v3024, 111
        %v3033 = vpop.permute.xlu0 %3032
        %vm3034 = vcmask 908288
        %v3035 = vsel %vm3034, %v3029, %v3031
        %v3036 = vsel %vm3034, %v3031, %v3033
        %3039 = vst [vmem:[#allocation8 + $0x40] sm:$0xff] %v3035
        %3040 = vst [vmem:[#allocation8 + $0x48] sm:$0xff] %v3036
        %v3041 = vld [vmem:[#allocation3] sm:$0xff]
        %v3042 = vld [vmem:[#allocation3 + $0x8] sm:$0xff]
        %v3043 = vld [vmem:[#allocation3 + $0x10] sm:$0xff]
        %3047 = vrot.lane.b32.xlu0 %v3041, 110
        %v3048 = vpop.permute.xlu0 %3047
        %3049 = vrot.lane.b32.xlu0 %v3042, 110
        %v3050 = vpop.permute.xlu0 %3049
        %3051 = vrot.lane.b32.xlu0 %v3043, 110
        %v3052 = vpop.permute.xlu0 %3051
        %vm3053 = vcmask 900096
        %v3054 = vsel %vm3053, %v3048, %v3050
        %v3055 = vsel %vm3053, %v3050, %v3052
        %v3058 = vsel %vm2955, %v3054, 0.0
        %v3059 = vsel %vm2956, %v3055, 0.0
        %3060 = vst [vmem:[#allocation8 + $0x50] sm:$0xff] %v3058
        %3061 = vst [vmem:[#allocation8 + $0x58] sm:$0xff] %v3059
        %v3062 = vld [vmem:[#allocation3] sm:$0xff]
        %v3063 = vld [vmem:[#allocation3 + $0x8] sm:$0xff]
        %v3064 = vld [vmem:[#allocation3 + $0x10] sm:$0xff]
        %3068 = vrot.lane.b32.xlu0 %v3062, 96
        %v3069 = vpop.permute.xlu0 %3068
        %3070 = vrot.lane.b32.xlu0 %v3063, 96
        %v3071 = vpop.permute.xlu0 %3070
        %3072 = vrot.lane.b32.xlu0 %v3064, 96
        %v3073 = vpop.permute.xlu0 %3072
        %v3074 = vsel %vm901, %v3069, %v3071
        %v3075 = vsel %vm901, %v3071, %v3073
        %v3078 = vsel %vm2953, %v3074, 0.0
        %v3079 = vsel %vm2954, %v3075, 0.0
        %3080 = vst [vmem:[#allocation8 + $0x60] sm:$0xff] %v3078
        %3081 = vst [vmem:[#allocation8 + $0x68] sm:$0xff] %v3079
        %v3082 = vld [vmem:[#allocation3] sm:$0xff]
        %v3083 = vld [vmem:[#allocation3 + $0x8] sm:$0xff]
        %v3084 = vld [vmem:[#allocation3 + $0x10] sm:$0xff]
        %3088 = vrot.lane.b32.xlu0 %v3082, 95
        %v3089 = vpop.permute.xlu0 %3088
        %3090 = vrot.lane.b32.xlu0 %v3083, 95
        %v3091 = vpop.permute.xlu0 %3090
        %3092 = vrot.lane.b32.xlu0 %v3084, 95
        %v3093 = vpop.permute.xlu0 %3092
        %v3094 = vsel %vm970, %v3089, %v3091
        %v3095 = vsel %vm970, %v3091, %v3093
        %3098 = vst [vmem:[#allocation8 + $0x70] sm:$0xff] %v3094
        %3099 = vst [vmem:[#allocation8 + $0x78] sm:$0xff] %v3095
        %v3100 = vld [vmem:[#allocation3] sm:$0xff]
        %v3101 = vld [vmem:[#allocation3 + $0x8] sm:$0xff]
        %v3102 = vld [vmem:[#allocation3 + $0x10] sm:$0xff]
        %3106 = vrot.lane.b32.xlu0 %v3100, 94
        %v3107 = vpop.permute.xlu0 %3106
        %3108 = vrot.lane.b32.xlu0 %v3101, 94
        %v3109 = vpop.permute.xlu0 %3108
        %3110 = vrot.lane.b32.xlu0 %v3102, 94
        %v3111 = vpop.permute.xlu0 %3110
        %v3112 = vsel %vm1031, %v3107, %v3109
        %v3113 = vsel %vm1031, %v3109, %v3111
        %v3116 = vsel %vm2955, %v3112, 0.0
        %v3117 = vsel %vm2956, %v3113, 0.0
        %3118 = vst [vmem:[#allocation8 + $0x80] sm:$0xff] %v3116
        %3119 = vst [vmem:[#allocation8 + $0x88] sm:$0xff] %v3117
        %v3120 = vld [vmem:[#allocation8] sm:$0xff]
        %v3121 = vld [vmem:[#allocation8 + $0x8] sm:$0xff]
        %v3122 = vld [vmem:[#allocation8 + $0x10] sm:$0xff]
        %v3123 = vld [vmem:[#allocation8 + $0x18] sm:$0xff]
        %v3124 = vld [vmem:[#allocation8 + $0x20] sm:$0xff]
        %v3125 = vld [vmem:[#allocation8 + $0x28] sm:$0xff]
        %v3126 = vld [vmem:[#allocation8 + $0x30] sm:$0xff]
        %v3127 = vld [vmem:[#allocation8 + $0x38] sm:$0xff]
        %v3128 = vld [vmem:[#allocation8 + $0x40] sm:$0xff]
        %v3129 = vld [vmem:[#allocation8 + $0x48] sm:$0xff]
        %v3130 = vld [vmem:[#allocation8 + $0x50] sm:$0xff]
        %v3131 = vld [vmem:[#allocation8 + $0x58] sm:$0xff]
        %v3132 = vld [vmem:[#allocation8 + $0x60] sm:$0xff]
        %v3133 = vld [vmem:[#allocation8 + $0x68] sm:$0xff]
        %v3134 = vld [vmem:[#allocation8 + $0x70] sm:$0xff]
        %v3135 = vld [vmem:[#allocation8 + $0x78] sm:$0xff]
        %v3136 = vld [vmem:[#allocation8 + $0x80] sm:$0xff]
        %v3137 = vld [vmem:[#allocation8 + $0x88] sm:$0xff]
        %v3138 = vpack.c.bf16 %v3122, %v3120
        %v3139 = vpack.c.bf16 %v3123, %v3121
        %v3140 = vpack.c.bf16 %v3126, %v3124
        %v3141 = vpack.c.bf16 %v3127, %v3125
        %v3142 = vpack.c.bf16 %v3130, %v3128
        %v3143 = vpack.c.bf16 %v3131, %v3129
        %v3144 = vpack.c.bf16 %v3134, %v3132
        %v3145 = vpack.c.bf16 %v3135, %v3133
        %v3146 = vpack.c.bf16 %v3136, %v3136
        %v3147 = vpack.c.bf16 %v3137, %v3137
        %v3148 = vld [vmem:[%s2] sm:$0xf]
        %v3149 = vld [vmem:[%s2 + $0x4] sm:$0xf]
        %v3152 = vunpack.c.l.b16 %v3148
        %v3153 = vunpack.c.l.b16 %v3149
        %v3154 = vpack.c.b16 %v3153, %v3152
        %v3156 = vsel %vm1376, %v3154, 0
        %v3159 = vsel %vm1380, %v3146, 0
        %v3162 = vsel %vm1380, %v3147, 0
        %3164 = vmatpush.bf16.msra.mxu0 0
        %3165 = vmatpush.bf16.msra.mxu0 0
        %3166 = vmatpush.bf16.msra.mxu0 0
        %3167 = vmatpush.bf16.msra.mxu0 %v3159
        %3168 = vmatpush.bf16.msra.mxu0 %v3144
        %3169 = vmatpush.bf16.msra.mxu0 %v3142
        %3170 = vmatpush.bf16.msra.mxu0 %v3140
        %3171 = vmatpush.bf16.msra.mxu0 %v3138
        %3172 = vmatmul.bf16.gmra.mxu0 %v3156
        %v3173 = vpop.f32.mrf.mxu0
        %v3174 = vadd.f32 0.0, %v3173
        %v3175 = vpop.f32.mrf.mxu0
        %v3176 = vadd.f32 0.0, %v3175
        %3177 = vdwg.mxu0
        %3178 = vmatpush.bf16.msra.mxu0 0
        %3179 = vmatpush.bf16.msra.mxu0 0
        %3180 = vmatpush.bf16.msra.mxu0 0
        %3181 = vmatpush.bf16.msra.mxu0 %v3162
        %3182 = vmatpush.bf16.msra.mxu0 %v3145
        %3183 = vmatpush.bf16.msra.mxu0 %v3143
        %3184 = vmatpush.bf16.msra.mxu0 %v3141
        %3185 = vmatpush.bf16.msra.mxu0 %v3139
        %3186 = vmatmul.bf16.gmra.mxu0 %v3156
        %v3187 = vpop.f32.mrf.mxu0
        %v3188 = vadd.f32 0.0, %v3187
        %v3189 = vpop.f32.mrf.mxu0
        %v3190 = vadd.f32 0.0, %v3189
        %3191 = vdwg.mxu0
        %v3192 = vadd.f32 %v3174, %v3188
        %3193 = vadd.xlane.f32.xlu0 %v3192
        %v3194 = vpop.xlane.xlu0 %3193
        %v3195 = vadd.f32 %v3176, %v3190
        %3196 = vadd.xlane.f32.xlu0 %v3195
        %v3197 = vpop.xlane.xlu0 %3196
        %v3198 = vmul.f32 %v3194, 0.00390625
        %v3199 = vmul.f32 %v3197, 0.00390625
        %v3200 = vmul.f32 %v3174, %v3174
        %v3201 = vmul.f32 %v3188, %v3188
        %v3202 = vmul.f32 %v3176, %v3176
        %v3203 = vmul.f32 %v3190, %v3190
        %v3204 = vadd.f32 %v3200, %v3201
        %3205 = vadd.xlane.f32.xlu0 %v3204
        %v3206 = vpop.xlane.xlu0 %3205
        %v3207 = vadd.f32 %v3202, %v3203
        %3208 = vadd.xlane.f32.xlu0 %v3207
        %v3209 = vpop.xlane.xlu0 %3208
        %v3210 = vmul.f32 %v3206, 0.00390625
        %v3211 = vmul.f32 %v3209, 0.00390625
        %v3212 = vmul.f32 %v3198, %v3198
        %v3213 = vmul.f32 %v3199, %v3199
        %v3214 = vsub.f32 %v3210, %v3212
        %v3215 = vsub.f32 %v3211, %v3213
        %v3216 = vmax.f32 %v3214, 0.0
        %v3217 = vmax.f32 %v3215, 0.0
        %v3218 = vsub.f32 %v3174, %v3198
        %v3219 = vsub.f32 %v3188, %v3198
        %v3220 = vsub.f32 %v3176, %v3199
        %v3221 = vsub.f32 %v3190, %v3199
        %v3222 = vadd.f32 %v3216, 1e-05
        %v3223 = vadd.f32 %v3217, 1e-05
        %v3224 = vrsqrt.pop %v3222
        %v3225 = vmul.f32 %v3224, %v3222
        %v3226 = vmul.f32 %v3225, %v3224
        %v3227 = vmul.f32 0.5, %v3226
        %v3228 = vsub.f32 1.5, %v3227
        %v3229 = vmul.f32 %v3224, %v3228
        %vm3230 = vweird.f32 %v3222
        %vm3231 = vweird.f32 %v3224
        %vm3232 = vmor %vm3230, %vm3231
        %v3233 = vsel %vm3232, %v3224, %v3229
        %v3234 = vrsqrt.pop %v3223
        %v3235 = vmul.f32 %v3234, %v3223
        %v3236 = vmul.f32 %v3235, %v3234
        %v3237 = vmul.f32 0.5, %v3236
        %v3238 = vsub.f32 1.5, %v3237
        %v3239 = vmul.f32 %v3234, %v3238
        %vm3240 = vweird.f32 %v3223
        %vm3241 = vweird.f32 %v3234
        %vm3242 = vmor %vm3240, %vm3241
        %v3243 = vsel %vm3242, %v3234, %v3239
        %v3244 = vmul.f32 %v3218, %v3233
        %v3245 = vmul.f32 %v3219, %v3233
        %v3246 = vmul.f32 %v3220, %v3243
        %v3247 = vmul.f32 %v3221, %v3243
        %v3248 = vmul.f32 %v3244, 0.5
        %v3249 = vmul.f32 %v3245, 0.5
        %v3250 = vmul.f32 %v3246, 0.5
        %v3251 = vmul.f32 %v3247, 0.5
        %v3252 = vmul.f32 %v3244, 0.70710677
        %v3253 = vmul.f32 %v3245, 0.70710677
        %v3254 = vmul.f32 %v3246, 0.70710677
        %v3255 = vmul.f32 %v3247, 0.70710677
        %v3256 = vmul.f32 %v3252, %v3252
        %v3257 = vmin.f32 16.0, %v3256
        %v3258 = vmul.f32 %v3257, 2.1237322e-06
        %v3259 = vadd.f32 %v3258, 0.00028619796
        %v3260 = vmul.f32 %v3257, %v3259
        %v3261 = vadd.f32 %v3260, 0.0036580483
        %v3262 = vmul.f32 %v3257, %v3261
        %v3263 = vadd.f32 %v3262, 0.05243302
        %v3264 = vmul.f32 %v3257, %v3263
        %v3265 = vadd.f32 %v3264, 0.18741608
        %v3266 = vmul.f32 %v3257, %v3265
        %v3267 = vadd.f32 %v3266, 1.1283791
        %v3268 = vmul.f32 %v3252, %v3267
        %v3269 = vmul.f32 %v3257, 3.8918573e-05
        %v3270 = vadd.f32 %v3269, 0.001143296
        %v3271 = vmul.f32 %v3257, %v3270
        %v3272 = vadd.f32 %v3271, 0.014752088
        %v3273 = vmul.f32 %v3257, %v3272
        %v3274 = vadd.f32 %v3273, 0.112945676
        %v3275 = vmul.f32 %v3257, %v3274
        %v3276 = vadd.f32 %v3275, 0.4994258
        %v3277 = vmul.f32 %v3257, %v3276
        %v3278 = vadd.f32 %v3277, 1.0
        %v3279 = vrcp.pop %v3278
        %v3280 = vmul.f32 %v3278, %v3279
        %v3281 = vsub.f32 1.0, %v3280
        %v3282 = vmul.f32 %v3279, %v3281
        %v3283 = vadd.f32 %v3279, %v3282
        %vm3284 = vweird.f32 %v3278
        %vm3285 = vweird.f32 %v3279
        %vm3286 = vmor %vm3284, %vm3285
        %v3287 = vsel %vm3286, %v3279, %v3283
        %v3288 = vand.u32 2147483647, %v3278
        %vm3289 = vcmp.eq.f32.partialorder %v3288, 8.507059e+37
        %v3290 = vand.u32 %v3278, 2147483648
        %v3291 = vor.u32 1.1754944e-38, %v3290
        %v3292 = vsel %vm3289, %v3291, %v3287
        %v3293 = vmul.f32 %v3268, %v3292
        %v3294 = vmin.f32 %v3293, 1.0
        %v3295 = vmax.f32 %v3294, -1.0
        %v3296 = vmul.f32 %v3253, %v3253
        %v3297 = vmin.f32 16.0, %v3296
        %v3298 = vmul.f32 %v3297, 2.1237322e-06
        %v3299 = vadd.f32 %v3298, 0.00028619796
        %v3300 = vmul.f32 %v3297, %v3299
        %v3301 = vadd.f32 %v3300, 0.0036580483
        %v3302 = vmul.f32 %v3297, %v3301
        %v3303 = vadd.f32 %v3302, 0.05243302
        %v3304 = vmul.f32 %v3297, %v3303
        %v3305 = vadd.f32 %v3304, 0.18741608
        %v3306 = vmul.f32 %v3297, %v3305
        %v3307 = vadd.f32 %v3306, 1.1283791
        %v3308 = vmul.f32 %v3253, %v3307
        %v3309 = vmul.f32 %v3297, 3.8918573e-05
        %v3310 = vadd.f32 %v3309, 0.001143296
        %v3311 = vmul.f32 %v3297, %v3310
        %v3312 = vadd.f32 %v3311, 0.014752088
        %v3313 = vmul.f32 %v3297, %v3312
        %v3314 = vadd.f32 %v3313, 0.112945676
        %v3315 = vmul.f32 %v3297, %v3314
        %v3316 = vadd.f32 %v3315, 0.4994258
        %v3317 = vmul.f32 %v3297, %v3316
        %v3318 = vadd.f32 %v3317, 1.0
        %v3319 = vrcp.pop %v3318
        %v3320 = vmul.f32 %v3318, %v3319
        %v3321 = vsub.f32 1.0, %v3320
        %v3322 = vmul.f32 %v3319, %v3321
        %v3323 = vadd.f32 %v3319, %v3322
        %vm3324 = vweird.f32 %v3318
        %vm3325 = vweird.f32 %v3319
        %vm3326 = vmor %vm3324, %vm3325
        %v3327 = vsel %vm3326, %v3319, %v3323
        %v3328 = vand.u32 2147483647, %v3318
        %vm3329 = vcmp.eq.f32.partialorder %v3328, 8.507059e+37
        %v3330 = vand.u32 %v3318, 2147483648
        %v3331 = vor.u32 1.1754944e-38, %v3330
        %v3332 = vsel %vm3329, %v3331, %v3327
        %v3333 = vmul.f32 %v3308, %v3332
        %v3334 = vmin.f32 %v3333, 1.0
        %v3335 = vmax.f32 %v3334, -1.0
        %v3336 = vmul.f32 %v3254, %v3254
        %v3337 = vmin.f32 16.0, %v3336
        %v3338 = vmul.f32 %v3337, 2.1237322e-06
        %v3339 = vadd.f32 %v3338, 0.00028619796
        %v3340 = vmul.f32 %v3337, %v3339
        %v3341 = vadd.f32 %v3340, 0.0036580483
        %v3342 = vmul.f32 %v3337, %v3341
        %v3343 = vadd.f32 %v3342, 0.05243302
        %v3344 = vmul.f32 %v3337, %v3343
        %v3345 = vadd.f32 %v3344, 0.18741608
        %v3346 = vmul.f32 %v3337, %v3345
        %v3347 = vadd.f32 %v3346, 1.1283791
        %v3348 = vmul.f32 %v3254, %v3347
        %v3349 = vmul.f32 %v3337, 3.8918573e-05
        %v3350 = vadd.f32 %v3349, 0.001143296
        %v3351 = vmul.f32 %v3337, %v3350
        %v3352 = vadd.f32 %v3351, 0.014752088
        %v3353 = vmul.f32 %v3337, %v3352
        %v3354 = vadd.f32 %v3353, 0.112945676
        %v3355 = vmul.f32 %v3337, %v3354
        %v3356 = vadd.f32 %v3355, 0.4994258
        %v3357 = vmul.f32 %v3337, %v3356
        %v3358 = vadd.f32 %v3357, 1.0
        %v3359 = vrcp.pop %v3358
        %v3360 = vmul.f32 %v3358, %v3359
        %v3361 = vsub.f32 1.0, %v3360
        %v3362 = vmul.f32 %v3359, %v3361
        %v3363 = vadd.f32 %v3359, %v3362
        %vm3364 = vweird.f32 %v3358
        %vm3365 = vweird.f32 %v3359
        %vm3366 = vmor %vm3364, %vm3365
        %v3367 = vsel %vm3366, %v3359, %v3363
        %v3368 = vand.u32 2147483647, %v3358
        %vm3369 = vcmp.eq.f32.partialorder %v3368, 8.507059e+37
        %v3370 = vand.u32 %v3358, 2147483648
        %v3371 = vor.u32 1.1754944e-38, %v3370
        %v3372 = vsel %vm3369, %v3371, %v3367
        %v3373 = vmul.f32 %v3348, %v3372
        %v3374 = vmin.f32 %v3373, 1.0
        %v3375 = vmax.f32 %v3374, -1.0
        %v3376 = vmul.f32 %v3255, %v3255
        %v3377 = vmin.f32 16.0, %v3376
        %v3378 = vmul.f32 %v3377, 2.1237322e-06
        %v3379 = vadd.f32 %v3378, 0.00028619796
        %v3380 = vmul.f32 %v3377, %v3379
        %v3381 = vadd.f32 %v3380, 0.0036580483
        %v3382 = vmul.f32 %v3377, %v3381
        %v3383 = vadd.f32 %v3382, 0.05243302
        %v3384 = vmul.f32 %v3377, %v3383
        %v3385 = vadd.f32 %v3384, 0.18741608
        %v3386 = vmul.f32 %v3377, %v3385
        %v3387 = vadd.f32 %v3386, 1.1283791
        %v3388 = vmul.f32 %v3255, %v3387
        %v3389 = vmul.f32 %v3377, 3.8918573e-05
        %v3390 = vadd.f32 %v3389, 0.001143296
        %v3391 = vmul.f32 %v3377, %v3390
        %v3392 = vadd.f32 %v3391, 0.014752088
        %v3393 = vmul.f32 %v3377, %v3392
        %v3394 = vadd.f32 %v3393, 0.112945676
        %v3395 = vmul.f32 %v3377, %v3394
        %v3396 = vadd.f32 %v3395, 0.4994258
        %v3397 = vmul.f32 %v3377, %v3396
        %v3398 = vadd.f32 %v3397, 1.0
        %v3399 = vrcp.pop %v3398
        %v3400 = vmul.f32 %v3398, %v3399
        %v3401 = vsub.f32 1.0, %v3400
        %v3402 = vmul.f32 %v3399, %v3401
        %v3403 = vadd.f32 %v3399, %v3402
        %vm3404 = vweird.f32 %v3398
        %vm3405 = vweird.f32 %v3399
        %vm3406 = vmor %vm3404, %vm3405
        %v3407 = vsel %vm3406, %v3399, %v3403
        %v3408 = vand.u32 2147483647, %v3398
        %vm3409 = vcmp.eq.f32.partialorder %v3408, 8.507059e+37
        %v3410 = vand.u32 %v3398, 2147483648
        %v3411 = vor.u32 1.1754944e-38, %v3410
        %v3412 = vsel %vm3409, %v3411, %v3407
        %v3413 = vmul.f32 %v3388, %v3412
        %v3414 = vmin.f32 %v3413, 1.0
        %v3415 = vmax.f32 %v3414, -1.0
        %v3416 = vadd.f32 %v3295, 1.0
        %v3417 = vadd.f32 %v3335, 1.0
        %v3418 = vadd.f32 %v3375, 1.0
        %v3419 = vadd.f32 %v3415, 1.0
        %v3420 = vmul.f32 %v3248, %v3416
        %v3421 = vmul.f32 %v3249, %v3417
        %v3422 = vmul.f32 %v3250, %v3418
        %v3423 = vmul.f32 %v3251, %v3419
        %3424 = vst [vmem:[%s488] sm:$0xff] %v3420
        %3425 = vst [vmem:[%s488 + $0x8] sm:$0xff] %v3421
        %3426 = vst [vmem:[%s488 + $0x10] sm:$0xff] %v3422
        %3427 = vst [vmem:[%s488 + $0x18] sm:$0xff] %v3423
        %v3428 = vpack.c.bf16 %v3422, %v3420
        %v3429 = vpack.c.bf16 %v3423, %v3421
        %v3430 = vld [vmem:[%s7] sm:$0xf]
        %v3431 = vld [vmem:[%s7 + $0x4] sm:$0xf]
        %v3432 = vld [vmem:[%s7 + $0x8] sm:$0xf]
        %v3433 = vld [vmem:[%s7 + $0xc] sm:$0xf]
        %v3434 = vld [vmem:[%s7 + $0x10] sm:$0xf]
        %v3435 = vld [vmem:[%s7 + $0x14] sm:$0xf]
        %v3436 = vld [vmem:[%s7 + $0x18] sm:$0xf]
        %v3437 = vld [vmem:[%s7 + $0x1c] sm:$0xf]
        %v3438 = vld [vmem:[%s7 + $0x20] sm:$0xf]
        %v3439 = vld [vmem:[%s7 + $0x24] sm:$0xf]
        %v3440 = vld [vmem:[%s7 + $0x28] sm:$0xf]
        %v3441 = vld [vmem:[%s7 + $0x2c] sm:$0xf]
        %v3442 = vld [vmem:[%s7 + $0x30] sm:$0xf]
        %v3443 = vld [vmem:[%s7 + $0x34] sm:$0xf]
        %v3444 = vld [vmem:[%s7 + $0x38] sm:$0xf]
        %v3445 = vld [vmem:[%s7 + $0x3c] sm:$0xf]
        %v3446 = vld [vmem:[%s7 + $0x40] sm:$0xf]
        %v3447 = vld [vmem:[%s7 + $0x44] sm:$0xf]
        %v3448 = vld [vmem:[%s7 + $0x48] sm:$0xf]
        %v3449 = vld [vmem:[%s7 + $0x4c] sm:$0xf]
        %v3450 = vld [vmem:[%s7 + $0x50] sm:$0xf]
        %v3451 = vld [vmem:[%s7 + $0x54] sm:$0xf]
        %v3452 = vld [vmem:[%s7 + $0x58] sm:$0xf]
        %v3453 = vld [vmem:[%s7 + $0x5c] sm:$0xf]
        %v3454 = vld [vmem:[%s7 + $0x60] sm:$0xf]
        %v3455 = vld [vmem:[%s7 + $0x64] sm:$0xf]
        %v3456 = vld [vmem:[%s7 + $0x68] sm:$0xf]
        %v3457 = vld [vmem:[%s7 + $0x6c] sm:$0xf]
        %v3458 = vld [vmem:[%s7 + $0x70] sm:$0xf]
        %v3459 = vld [vmem:[%s7 + $0x74] sm:$0xf]
        %v3460 = vld [vmem:[%s7 + $0x78] sm:$0xf]
        %v3461 = vld [vmem:[%s7 + $0x7c] sm:$0xf]
        %v3494 = vunpack.c.l.b16 %v3430
        %v3495 = vunpack.c.l.b16 %v3431
        %v3496 = vunpack.c.l.b16 %v3432
        %v3497 = vunpack.c.l.b16 %v3433
        %v3498 = vunpack.c.l.b16 %v3434
        %v3499 = vunpack.c.l.b16 %v3435
        %v3500 = vunpack.c.l.b16 %v3436
        %v3501 = vunpack.c.l.b16 %v3437
        %v3502 = vunpack.c.l.b16 %v3438
        %v3503 = vunpack.c.l.b16 %v3439
        %v3504 = vunpack.c.l.b16 %v3440
        %v3505 = vunpack.c.l.b16 %v3441
        %v3506 = vunpack.c.l.b16 %v3442
        %v3507 = vunpack.c.l.b16 %v3443
        %v3508 = vunpack.c.l.b16 %v3444
        %v3509 = vunpack.c.l.b16 %v3445
        %v3510 = vunpack.c.l.b16 %v3446
        %v3511 = vunpack.c.l.b16 %v3447
        %v3512 = vunpack.c.l.b16 %v3448
        %v3513 = vunpack.c.l.b16 %v3449
        %v3514 = vunpack.c.l.b16 %v3450
        %v3515 = vunpack.c.l.b16 %v3451
        %v3516 = vunpack.c.l.b16 %v3452
        %v3517 = vunpack.c.l.b16 %v3453
        %v3518 = vunpack.c.l.b16 %v3454
        %v3519 = vunpack.c.l.b16 %v3455
        %v3520 = vunpack.c.l.b16 %v3456
        %v3521 = vunpack.c.l.b16 %v3457
        %v3522 = vunpack.c.l.b16 %v3458
        %v3523 = vunpack.c.l.b16 %v3459
        %v3524 = vunpack.c.l.b16 %v3460
        %v3525 = vunpack.c.l.b16 %v3461
        %v3526 = vpack.c.b16 %v3495, %v3494
        %v3527 = vpack.c.b16 %v3497, %v3496
        %v3528 = vpack.c.b16 %v3499, %v3498
        %v3529 = vpack.c.b16 %v3501, %v3500
        %v3530 = vpack.c.b16 %v3503, %v3502
        %v3531 = vpack.c.b16 %v3505, %v3504
        %v3532 = vpack.c.b16 %v3507, %v3506
        %v3533 = vpack.c.b16 %v3509, %v3508
        %v3534 = vpack.c.b16 %v3511, %v3510
        %v3535 = vpack.c.b16 %v3513, %v3512
        %v3536 = vpack.c.b16 %v3515, %v3514
        %v3537 = vpack.c.b16 %v3517, %v3516
        %v3538 = vpack.c.b16 %v3519, %v3518
        %v3539 = vpack.c.b16 %v3521, %v3520
        %v3540 = vpack.c.b16 %v3523, %v3522
        %v3541 = vpack.c.b16 %v3525, %v3524
        %3558 = vmatpush.bf16.msra.mxu0 %v3533
        %3559 = vmatpush.bf16.msra.mxu0 %v3532
        %3560 = vmatpush.bf16.msra.mxu0 %v3531
        %3561 = vmatpush.bf16.msra.mxu0 %v3530
        %3562 = vmatpush.bf16.msra.mxu0 %v3529
        %3563 = vmatpush.bf16.msra.mxu0 %v3528
        %3564 = vmatpush.bf16.msra.mxu0 %v3527
        %3565 = vmatpush.bf16.msra.mxu0 %v3526
        %3566 = vmatmul.bf16.gmra.mxu0 %v3428
        %v3567 = vpop.f32.mrf.mxu0
        %v3568 = vadd.f32 0.0, %v3567
        %v3569 = vpop.f32.mrf.mxu0
        %v3570 = vadd.f32 0.0, %v3569
        %3571 = vdwg.mxu0
        %3572 = vmatpush.bf16.msra.mxu0 %v3541
        %3573 = vmatpush.bf16.msra.mxu0 %v3540
        %3574 = vmatpush.bf16.msra.mxu0 %v3539
        %3575 = vmatpush.bf16.msra.mxu0 %v3538
        %3576 = vmatpush.bf16.msra.mxu0 %v3537
        %3577 = vmatpush.bf16.msra.mxu0 %v3536
        %3578 = vmatpush.bf16.msra.mxu0 %v3535
        %3579 = vmatpush.bf16.msra.mxu0 %v3534
        %3580 = vmatmul.bf16.gmra.mxu0 %v3429
        %v3581 = vpop.f32.mrf.mxu0
        %v3582 = vadd.f32 %v3568, %v3581
        %v3583 = vpop.f32.mrf.mxu0
        %v3584 = vadd.f32 %v3570, %v3583
        %3585 = vdwg.mxu0
        %vm3586 = vcmask 68608
        %3587 = vst.msk [vmem:[#allocation4] sm:$0xf] %vm3586, 0
        %3588 = vst.msk [vmem:[#allocation4 + $0x4] sm:$0xf] %vm3586, 0
        %vm3589 = vcmask 667208
        %3590 = vst.msk [vmem:[#allocation4] sm:$0xf] %vm3589, 0
        %3591 = vst.msk [vmem:[#allocation4 + $0x4] sm:$0xf] %vm3589, 0
        %v3592 = vpack.c.bf16 %v3582, %v3582
        %v3593 = vpack.c.bf16 %v3584, %v3584
        %3596 = vrot.lane.b32.xlu0 %v3592, 9
        %v3597 = vpop.permute.xlu0 %3596
        %3598 = vrot.lane.b32.xlu0 %v3593, 9
        %v3599 = vpop.permute.xlu0 %3598
        %vm3602 = vcmask 592968
        %3603 = vst.msk [vmem:[#allocation4] sm:$0xf] %vm3602, %v3597
        %3604 = vst.msk [vmem:[#allocation4 + $0x4] sm:$0xf] %vm3602, %v3599
        %vm3605 = vcmp.lt.s32.totalorder %v591, 0
        %v3606 = vsub.s32 0, %v591
        %v3607 = vsel %vm3605, %v3606, %v591
        %v3608 = vshrl.u32 %v3607, 3
        %v3609 = vand.u32 %v3607, 7
        %v3610 = vsub.s32 0, %v3609
        %v3611 = vsel %vm3605, %v3610, %v3609
        %vm3612 = vcmp.ne.s32.totalorder %v3611, 0
        %vm3613 = vcmp.lt.s32.totalorder %v3611, 0
        %vm3614 = vmand %vm3613, %vm3612
        %v3615 = vadd.s32 %v3611, 8
        %v3616 = vsel %vm3614, %v3615, %v3611
        %vm3617 = vcmp.ge.s32.totalorder %v3616, 1
        %vm3618 = vcmp.le.s32.totalorder %v3616, 6
        %v3619 = vld [vmem:[#allocation4] sm:$0xf]
        %v3620 = vld [vmem:[#allocation4 + $0x4] sm:$0xf]
        %vm3621 = vmpackc.low %vm3617, %vm3617
        %v3622 = vsel %vm3621, %v3619, 0
        %v3623 = vsel %vm3621, %v3620, 0
        %vm3624 = vcmask 519168
        %3625 = vst.msk [vmem:[#allocation9] sm:$0xf] %vm3624, %v3622
        %3626 = vst.msk [vmem:[#allocation9 + $0x4] sm:$0xf] %vm3624, %v3623
        %v3627 = vld [vmem:[#allocation4] sm:$0xf]
        %v3628 = vld [vmem:[#allocation4 + $0x4] sm:$0xf]
        %3631 = vrot.lane.b32.xlu0 %v3627, 127
        %v3632 = vpop.permute.xlu0 %3631
        %3633 = vrot.lane.b32.xlu0 %v3628, 127
        %v3634 = vpop.permute.xlu0 %3633
        %3637 = vst.msk [vmem:[#allocation9 + $0x8] sm:$0xf] %vm3624, %v3632
        %3638 = vst.msk [vmem:[#allocation9 + $0xc] sm:$0xf] %vm3624, %v3634
        %v3639 = vld [vmem:[#allocation4] sm:$0xf]
        %v3640 = vld [vmem:[#allocation4 + $0x4] sm:$0xf]
        %vm3641 = vmpackc.low %vm3618, %vm3618
        %v3642 = vsel %vm3641, 65537, 0
        %3643 = vrot.lane.b32.xlu0 %v3642, 2
        %v3644 = vpop.permute.xlu0 %3643
        %v3645 = vunpack.c.l.b16 %v3644
        %v3646 = vunpack.c.h.b16 %v3644
        %v3647 = vunpack.c.l.b16 0
        %v3648 = vunpack.c.h.b16 0
        %vm3649 = vcmp.ne.s32.totalorder %v3645, %v3647
        %vm3650 = vcmp.ne.s32.totalorder %v3646, %v3648
        %vm3651 = vmpackc.low %vm3650, %vm3649
        %v3652 = vsel %vm3651, %v3639, 0
        %v3653 = vsel %vm3651, %v3640, 0
        %3656 = vrot.lane.b32.xlu0 %v3652, 126
        %v3657 = vpop.permute.xlu0 %3656
        %3658 = vrot.lane.b32.xlu0 %v3653, 126
        %v3659 = vpop.permute.xlu0 %3658
        %3662 = vst.msk [vmem:[#allocation9 + $0x10] sm:$0xf] %vm3624, %v3657
        %3663 = vst.msk [vmem:[#allocation9 + $0x14] sm:$0xf] %vm3624, %v3659
        %v3664 = vld [vmem:[#allocation4] sm:$0xf]
        %v3665 = vld [vmem:[#allocation4 + $0x4] sm:$0xf]
        %v3666 = vsel %vm3621, 65537, 0
        %3667 = vrot.lane.b32.xlu0 %v3666, 8
        %v3668 = vpop.permute.xlu0 %3667
        %v3669 = vunpack.c.l.b16 %v3668
        %v3670 = vunpack.c.h.b16 %v3668
        %v3671 = vunpack.c.l.b16 0
        %v3672 = vunpack.c.h.b16 0
        %vm3673 = vcmp.ne.s32.totalorder %v3669, %v3671
        %vm3674 = vcmp.ne.s32.totalorder %v3670, %v3672
        %vm3675 = vmpackc.low %vm3674, %vm3673
        %v3676 = vsel %vm3675, %v3664, 0
        %v3677 = vsel %vm3675, %v3665, 0
        %3680 = vrot.lane.b32.xlu0 %v3676, 120
        %v3681 = vpop.permute.xlu0 %3680
        %3682 = vrot.lane.b32.xlu0 %v3677, 120
        %v3683 = vpop.permute.xlu0 %3682
        %3686 = vst.msk [vmem:[#allocation9 + $0x18] sm:$0xf] %vm3624, %v3681
        %3687 = vst.msk [vmem:[#allocation9 + $0x1c] sm:$0xf] %vm3624, %v3683
        %v3688 = vld [vmem:[#allocation4] sm:$0xf]
        %v3689 = vld [vmem:[#allocation4 + $0x4] sm:$0xf]
        %3692 = vrot.lane.b32.xlu0 %v3688, 119
        %v3693 = vpop.permute.xlu0 %3692
        %3694 = vrot.lane.b32.xlu0 %v3689, 119
        %v3695 = vpop.permute.xlu0 %3694
        %3698 = vst.msk [vmem:[#allocation9 + $0x20] sm:$0xf] %vm3624, %v3693
        %3699 = vst.msk [vmem:[#allocation9 + $0x24] sm:$0xf] %vm3624, %v3695
        %v3700 = vld [vmem:[#allocation4] sm:$0xf]
        %v3701 = vld [vmem:[#allocation4 + $0x4] sm:$0xf]
        %3702 = vrot.lane.b32.xlu0 %v3642, 10
        %v3703 = vpop.permute.xlu0 %3702
        %v3704 = vunpack.c.l.b16 %v3703
        %v3705 = vunpack.c.h.b16 %v3703
        %v3706 = vunpack.c.l.b16 0
        %v3707 = vunpack.c.h.b16 0
        %vm3708 = vcmp.ne.s32.totalorder %v3704, %v3706
        %vm3709 = vcmp.ne.s32.totalorder %v3705, %v3707
        %vm3710 = vmpackc.low %vm3709, %vm3708
        %v3711 = vsel %vm3710, %v3700, 0
        %v3712 = vsel %vm3710, %v3701, 0
        %3715 = vrot.lane.b32.xlu0 %v3711, 118
        %v3716 = vpop.permute.xlu0 %3715
        %3717 = vrot.lane.b32.xlu0 %v3712, 118
        %v3718 = vpop.permute.xlu0 %3717
        %3721 = vst.msk [vmem:[#allocation9 + $0x28] sm:$0xf] %vm3624, %v3716
        %3722 = vst.msk [vmem:[#allocation9 + $0x2c] sm:$0xf] %vm3624, %v3718
        %v3723 = vld [vmem:[#allocation4] sm:$0xf]
        %v3724 = vld [vmem:[#allocation4 + $0x4] sm:$0xf]
        %3725 = vrot.lane.b32.xlu0 %v3666, 16
        %v3726 = vpop.permute.xlu0 %3725
        %v3727 = vunpack.c.l.b16 %v3726
        %v3728 = vunpack.c.h.b16 %v3726
        %v3729 = vunpack.c.l.b16 0
        %v3730 = vunpack.c.h.b16 0
        %vm3731 = vcmp.ne.s32.totalorder %v3727, %v3729
        %vm3732 = vcmp.ne.s32.totalorder %v3728, %v3730
        %vm3733 = vmpackc.low %vm3732, %vm3731
        %v3734 = vsel %vm3733, %v3723, 0
        %v3735 = vsel %vm3733, %v3724, 0
        %3738 = vrot.lane.b32.xlu0 %v3734, 112
        %v3739 = vpop.permute.xlu0 %3738
        %3740 = vrot.lane.b32.xlu0 %v3735, 112
        %v3741 = vpop.permute.xlu0 %3740
        %3744 = vst.msk [vmem:[#allocation9 + $0x30] sm:$0xf] %vm3624, %v3739
        %3745 = vst.msk [vmem:[#allocation9 + $0x34] sm:$0xf] %vm3624, %v3741
        %v3746 = vld [vmem:[#allocation4] sm:$0xf]
        %v3747 = vld [vmem:[#allocation4 + $0x4] sm:$0xf]
        %3750 = vrot.lane.b32.xlu0 %v3746, 111
        %v3751 = vpop.permute.xlu0 %3750
        %3752 = vrot.lane.b32.xlu0 %v3747, 111
        %v3753 = vpop.permute.xlu0 %3752
        %3756 = vst.msk [vmem:[#allocation9 + $0x38] sm:$0xf] %vm3624, %v3751
        %3757 = vst.msk [vmem:[#allocation9 + $0x3c] sm:$0xf] %vm3624, %v3753
        %v3758 = vld [vmem:[#allocation4] sm:$0xf]
        %v3759 = vld [vmem:[#allocation4 + $0x4] sm:$0xf]
        %3760 = vrot.lane.b32.xlu0 %v3642, 18
        %v3761 = vpop.permute.xlu0 %3760
        %v3762 = vunpack.c.l.b16 %v3761
        %v3763 = vunpack.c.h.b16 %v3761
        %v3764 = vunpack.c.l.b16 0
        %v3765 = vunpack.c.h.b16 0
        %vm3766 = vcmp.ne.s32.totalorder %v3762, %v3764
        %vm3767 = vcmp.ne.s32.totalorder %v3763, %v3765
        %vm3768 = vmpackc.low %vm3767, %vm3766
        %v3769 = vsel %vm3768, %v3758, 0
        %v3770 = vsel %vm3768, %v3759, 0
        %3773 = vrot.lane.b32.xlu0 %v3769, 110
        %v3774 = vpop.permute.xlu0 %3773
        %3775 = vrot.lane.b32.xlu0 %v3770, 110
        %v3776 = vpop.permute.xlu0 %3775
        %3779 = vst.msk [vmem:[#allocation9 + $0x40] sm:$0xf] %vm3624, %v3774
        %3780 = vst.msk [vmem:[#allocation9 + $0x44] sm:$0xf] %vm3624, %v3776
        %v3781 = vld [vmem:[#allocation9] sm:$0xf]
        %v3782 = vld [vmem:[#allocation9 + $0x4] sm:$0xf]
        %v3783 = vld [vmem:[#allocation9 + $0x8] sm:$0xf]
        %v3784 = vld [vmem:[#allocation9 + $0xc] sm:$0xf]
        %v3785 = vld [vmem:[#allocation9 + $0x10] sm:$0xf]
        %v3786 = vld [vmem:[#allocation9 + $0x14] sm:$0xf]
        %v3787 = vld [vmem:[#allocation9 + $0x18] sm:$0xf]
        %v3788 = vld [vmem:[#allocation9 + $0x1c] sm:$0xf]
        %v3789 = vld [vmem:[#allocation9 + $0x20] sm:$0xf]
        %v3790 = vld [vmem:[#allocation9 + $0x24] sm:$0xf]
        %v3791 = vld [vmem:[#allocation9 + $0x28] sm:$0xf]
        %v3792 = vld [vmem:[#allocation9 + $0x2c] sm:$0xf]
        %v3793 = vld [vmem:[#allocation9 + $0x30] sm:$0xf]
        %v3794 = vld [vmem:[#allocation9 + $0x34] sm:$0xf]
        %v3795 = vld [vmem:[#allocation9 + $0x38] sm:$0xf]
        %v3796 = vld [vmem:[#allocation9 + $0x3c] sm:$0xf]
        %v3797 = vld [vmem:[#allocation9 + $0x40] sm:$0xf]
        %v3798 = vld [vmem:[#allocation9 + $0x44] sm:$0xf]
        %v3799 = vld [vmem:[%s3] sm:$0xff]
        %v3800 = vld [vmem:[%s3 + $0x8] sm:$0xff]
        %v3801 = vld [vmem:[%s3 + $0x10] sm:$0xff]
        %v3802 = vld [vmem:[%s3 + $0x18] sm:$0xff]
        %v3807 = vunpack.c.l.b16 %v3799
        %v3808 = vunpack.c.h.b16 %v3799
        %v3809 = vunpack.c.l.b16 %v3800
        %v3810 = vunpack.c.h.b16 %v3800
        %v3811 = vunpack.c.l.b16 %v3801
        %v3812 = vunpack.c.h.b16 %v3801
        %v3813 = vunpack.c.l.b16 %v3802
        %v3814 = vunpack.c.h.b16 %v3802
        %v3815 = vpack.c.b16 %v3809, %v3807
        %v3816 = vpack.c.b16 %v3810, %v3808
        %v3817 = vpack.c.b16 %v3813, %v3811
        %v3818 = vpack.c.b16 %v3814, %v3812
        %v3839 = vunpack.c.l.b16 %v3781
        %v3840 = vunpack.c.l.b16 %v3782
        %v3841 = vunpack.c.l.b16 %v3783
        %v3842 = vunpack.c.l.b16 %v3784
        %v3843 = vunpack.c.l.b16 %v3785
        %v3844 = vunpack.c.l.b16 %v3786
        %v3845 = vunpack.c.l.b16 %v3787
        %v3846 = vunpack.c.l.b16 %v3788
        %v3847 = vunpack.c.l.b16 %v3789
        %v3848 = vunpack.c.l.b16 %v3790
        %v3849 = vunpack.c.l.b16 %v3791
        %v3850 = vunpack.c.l.b16 %v3792
        %v3851 = vunpack.c.l.b16 %v3793
        %v3852 = vunpack.c.l.b16 %v3794
        %v3853 = vunpack.c.l.b16 %v3795
        %v3854 = vunpack.c.l.b16 %v3796
        %v3855 = vunpack.c.l.b16 %v3797
        %v3856 = vunpack.c.l.b16 %v3798
        %v3857 = vpack.c.b16 %v3840, %v3839
        %v3858 = vpack.c.b16 %v3842, %v3841
        %v3859 = vpack.c.b16 %v3844, %v3843
        %v3860 = vpack.c.b16 %v3846, %v3845
        %v3861 = vpack.c.b16 %v3848, %v3847
        %v3862 = vpack.c.b16 %v3850, %v3849
        %v3863 = vpack.c.b16 %v3852, %v3851
        %v3864 = vpack.c.b16 %v3854, %v3853
        %v3865 = vpack.c.b16 %v3856, %v3855
        %vm3875 = vcmask 130048
        %v3877 = vsel %vm3875, %v3816, 0
        %v3880 = vsel %vm3875, %v3818, 0
        %3882 = vmatpush.bf16.msra.mxu0 %v3864
        %3883 = vmatpush.bf16.msra.mxu0 %v3863
        %3884 = vmatpush.bf16.msra.mxu0 %v3862
        %3885 = vmatpush.bf16.msra.mxu0 %v3861
        %3886 = vmatpush.bf16.msra.mxu0 %v3860
        %3887 = vmatpush.bf16.msra.mxu0 %v3859
        %3888 = vmatpush.bf16.msra.mxu0 %v3858
        %3889 = vmatpush.bf16.msra.mxu0 %v3857
        %3890 = vmatmul.bf16.gmra.mxu0 %v3815
        %v3891 = vpop.f32.mrf.mxu0
        %v3892 = vadd.f32 0.0, %v3891
        %v3893 = vpop.f32.mrf.mxu0
        %v3894 = vadd.f32 0.0, %v3893
        %3895 = vmatmul.bf16.gmra.mxu0 %v3817
        %v3896 = vpop.f32.mrf.mxu0
        %v3897 = vadd.f32 0.0, %v3896
        %v3898 = vpop.f32.mrf.mxu0
        %v3899 = vadd.f32 0.0, %v3898
        %3900 = vdwg.mxu0
        %3901 = vmatpush.bf16.msra.mxu0 0
        %3902 = vmatpush.bf16.msra.mxu0 0
        %3903 = vmatpush.bf16.msra.mxu0 0
        %3904 = vmatpush.bf16.msra.mxu0 0
        %3905 = vmatpush.bf16.msra.mxu0 0
        %3906 = vmatpush.bf16.msra.mxu0 0
        %3907 = vmatpush.bf16.msra.mxu0 0
        %3908 = vmatpush.bf16.msra.mxu0 %v3865
        %3909 = vmatmul.bf16.gmra.mxu0 %v3877
        %v3910 = vpop.f32.mrf.mxu0
        %v3911 = vadd.f32 %v3892, %v3910
        %v3912 = vpop.f32.mrf.mxu0
        %v3913 = vadd.f32 %v3894, %v3912
        %3914 = vmatmul.bf16.gmra.mxu0 %v3880
        %v3915 = vpop.f32.mrf.mxu0
        %v3916 = vadd.f32 %v3897, %v3915
        %v3917 = vpop.f32.mrf.mxu0
        %v3918 = vadd.f32 %v3899, %v3917
        %3919 = vdwg.mxu0
        %v3920 = vsel %vm1100, %v3911, 0.0
        %3921 = vadd.xlane.f32.xlu0 %v3920
        %v3922 = vpop.xlane.xlu0 %3921
        %v3923 = vsel %vm1100, %v3913, 0.0
        %3924 = vadd.xlane.f32.xlu0 %v3923
        %v3925 = vpop.xlane.xlu0 %3924
        %v3926 = vsel %vm1100, %v3916, 0.0
        %3927 = vadd.xlane.f32.xlu0 %v3926
        %v3928 = vpop.xlane.xlu0 %3927
        %v3929 = vsel %vm1100, %v3918, 0.0
        %3930 = vadd.xlane.f32.xlu0 %v3929
        %v3931 = vpop.xlane.xlu0 %3930
        %v3932 = vmul.f32 %v3922, 0.015625
        %v3933 = vmul.f32 %v3925, 0.015625
        %v3934 = vmul.f32 %v3928, 0.015625
        %v3935 = vmul.f32 %v3931, 0.015625
        %v3936 = vmul.f32 %v3911, %v3911
        %v3937 = vmul.f32 %v3913, %v3913
        %v3938 = vmul.f32 %v3916, %v3916
        %v3939 = vmul.f32 %v3918, %v3918
        %v3940 = vsel %vm1100, %v3936, 0.0
        %3941 = vadd.xlane.f32.xlu0 %v3940
        %v3942 = vpop.xlane.xlu0 %3941
        %v3943 = vsel %vm1100, %v3937, 0.0
        %3944 = vadd.xlane.f32.xlu0 %v3943
        %v3945 = vpop.xlane.xlu0 %3944
        %v3946 = vsel %vm1100, %v3938, 0.0
        %3947 = vadd.xlane.f32.xlu0 %v3946
        %v3948 = vpop.xlane.xlu0 %3947
        %v3949 = vsel %vm1100, %v3939, 0.0
        %3950 = vadd.xlane.f32.xlu0 %v3949
        %v3951 = vpop.xlane.xlu0 %3950
        %v3952 = vmul.f32 %v3942, 0.015625
        %v3953 = vmul.f32 %v3945, 0.015625
        %v3954 = vmul.f32 %v3948, 0.015625
        %v3955 = vmul.f32 %v3951, 0.015625
        %v3956 = vmul.f32 %v3932, %v3932
        %v3957 = vmul.f32 %v3933, %v3933
        %v3958 = vmul.f32 %v3934, %v3934
        %v3959 = vmul.f32 %v3935, %v3935
        %v3960 = vsub.f32 %v3952, %v3956
        %v3961 = vsub.f32 %v3953, %v3957
        %v3962 = vsub.f32 %v3954, %v3958
        %v3963 = vsub.f32 %v3955, %v3959
        %v3964 = vmax.f32 %v3960, 0.0
        %v3965 = vmax.f32 %v3961, 0.0
        %v3966 = vmax.f32 %v3962, 0.0
        %v3967 = vmax.f32 %v3963, 0.0
        %v3968 = vsub.f32 %v3911, %v3932
        %v3969 = vsub.f32 %v3913, %v3933
        %v3970 = vsub.f32 %v3916, %v3934
        %v3971 = vsub.f32 %v3918, %v3935
        %v3972 = vadd.f32 %v3964, 1e-05
        %v3973 = vadd.f32 %v3965, 1e-05
        %v3974 = vadd.f32 %v3966, 1e-05
        %v3975 = vadd.f32 %v3967, 1e-05
        %v3976 = vrsqrt.pop %v3972
        %v3977 = vmul.f32 %v3976, %v3972
        %v3978 = vmul.f32 %v3977, %v3976
        %v3979 = vmul.f32 0.5, %v3978
        %v3980 = vsub.f32 1.5, %v3979
        %v3981 = vmul.f32 %v3976, %v3980
        %vm3982 = vweird.f32 %v3972
        %vm3983 = vweird.f32 %v3976
        %vm3984 = vmor %vm3982, %vm3983
        %v3985 = vsel %vm3984, %v3976, %v3981
        %v3986 = vrsqrt.pop %v3973
        %v3987 = vmul.f32 %v3986, %v3973
        %v3988 = vmul.f32 %v3987, %v3986
        %v3989 = vmul.f32 0.5, %v3988
        %v3990 = vsub.f32 1.5, %v3989
        %v3991 = vmul.f32 %v3986, %v3990
        %vm3992 = vweird.f32 %v3973
        %vm3993 = vweird.f32 %v3986
        %vm3994 = vmor %vm3992, %vm3993
        %v3995 = vsel %vm3994, %v3986, %v3991
        %v3996 = vrsqrt.pop %v3974
        %v3997 = vmul.f32 %v3996, %v3974
        %v3998 = vmul.f32 %v3997, %v3996
        %v3999 = vmul.f32 0.5, %v3998
        %v4000 = vsub.f32 1.5, %v3999
        %v4001 = vmul.f32 %v3996, %v4000
        %vm4002 = vweird.f32 %v3974
        %vm4003 = vweird.f32 %v3996
        %vm4004 = vmor %vm4002, %vm4003
        %v4005 = vsel %vm4004, %v3996, %v4001
        %v4006 = vrsqrt.pop %v3975
        %v4007 = vmul.f32 %v4006, %v3975
        %v4008 = vmul.f32 %v4007, %v4006
        %v4009 = vmul.f32 0.5, %v4008
        %v4010 = vsub.f32 1.5, %v4009
        %v4011 = vmul.f32 %v4006, %v4010
        %vm4012 = vweird.f32 %v3975
        %vm4013 = vweird.f32 %v4006
        %vm4014 = vmor %vm4012, %vm4013
        %v4015 = vsel %vm4014, %v4006, %v4011
        %v4016 = vmul.f32 %v3968, %v3985
        %v4017 = vmul.f32 %v3969, %v3995
        %v4018 = vmul.f32 %v3970, %v4005
        %v4019 = vmul.f32 %v3971, %v4015
        %v4020 = vmul.f32 %v4016, 0.5
        %v4021 = vmul.f32 %v4017, 0.5
        %v4022 = vmul.f32 %v4018, 0.5
        %v4023 = vmul.f32 %v4019, 0.5
        %v4024 = vmul.f32 %v4016, 0.70710677
        %v4025 = vmul.f32 %v4017, 0.70710677
        %v4026 = vmul.f32 %v4018, 0.70710677
        %v4027 = vmul.f32 %v4019, 0.70710677
        %v4028 = vmul.f32 %v4024, %v4024
        %v4029 = vmin.f32 16.0, %v4028
        %v4030 = vmul.f32 %v4029, 2.1237322e-06
        %v4031 = vadd.f32 %v4030, 0.00028619796
        %v4032 = vmul.f32 %v4029, %v4031
        %v4033 = vadd.f32 %v4032, 0.0036580483
        %v4034 = vmul.f32 %v4029, %v4033
        %v4035 = vadd.f32 %v4034, 0.05243302
        %v4036 = vmul.f32 %v4029, %v4035
        %v4037 = vadd.f32 %v4036, 0.18741608
        %v4038 = vmul.f32 %v4029, %v4037
        %v4039 = vadd.f32 %v4038, 1.1283791
        %v4040 = vmul.f32 %v4024, %v4039
        %v4041 = vmul.f32 %v4029, 3.8918573e-05
        %v4042 = vadd.f32 %v4041, 0.001143296
        %v4043 = vmul.f32 %v4029, %v4042
        %v4044 = vadd.f32 %v4043, 0.014752088
        %v4045 = vmul.f32 %v4029, %v4044
        %v4046 = vadd.f32 %v4045, 0.112945676
        %v4047 = vmul.f32 %v4029, %v4046
        %v4048 = vadd.f32 %v4047, 0.4994258
        %v4049 = vmul.f32 %v4029, %v4048
        %v4050 = vadd.f32 %v4049, 1.0
        %v4051 = vrcp.pop %v4050
        %v4052 = vmul.f32 %v4050, %v4051
        %v4053 = vsub.f32 1.0, %v4052
        %v4054 = vmul.f32 %v4051, %v4053
        %v4055 = vadd.f32 %v4051, %v4054
        %vm4056 = vweird.f32 %v4050
        %vm4057 = vweird.f32 %v4051
        %vm4058 = vmor %vm4056, %vm4057
        %v4059 = vsel %vm4058, %v4051, %v4055
        %v4060 = vand.u32 2147483647, %v4050
        %vm4061 = vcmp.eq.f32.partialorder %v4060, 8.507059e+37
        %v4062 = vand.u32 %v4050, 2147483648
        %v4063 = vor.u32 1.1754944e-38, %v4062
        %v4064 = vsel %vm4061, %v4063, %v4059
        %v4065 = vmul.f32 %v4040, %v4064
        %v4066 = vmin.f32 %v4065, 1.0
        %v4067 = vmax.f32 %v4066, -1.0
        %v4068 = vmul.f32 %v4025, %v4025
        %v4069 = vmin.f32 16.0, %v4068
        %v4070 = vmul.f32 %v4069, 2.1237322e-06
        %v4071 = vadd.f32 %v4070, 0.00028619796
        %v4072 = vmul.f32 %v4069, %v4071
        %v4073 = vadd.f32 %v4072, 0.0036580483
        %v4074 = vmul.f32 %v4069, %v4073
        %v4075 = vadd.f32 %v4074, 0.05243302
        %v4076 = vmul.f32 %v4069, %v4075
        %v4077 = vadd.f32 %v4076, 0.18741608
        %v4078 = vmul.f32 %v4069, %v4077
        %v4079 = vadd.f32 %v4078, 1.1283791
        %v4080 = vmul.f32 %v4025, %v4079
        %v4081 = vmul.f32 %v4069, 3.8918573e-05
        %v4082 = vadd.f32 %v4081, 0.001143296
        %v4083 = vmul.f32 %v4069, %v4082
        %v4084 = vadd.f32 %v4083, 0.014752088
        %v4085 = vmul.f32 %v4069, %v4084
        %v4086 = vadd.f32 %v4085, 0.112945676
        %v4087 = vmul.f32 %v4069, %v4086
        %v4088 = vadd.f32 %v4087, 0.4994258
        %v4089 = vmul.f32 %v4069, %v4088
        %v4090 = vadd.f32 %v4089, 1.0
        %v4091 = vrcp.pop %v4090
        %v4092 = vmul.f32 %v4090, %v4091
        %v4093 = vsub.f32 1.0, %v4092
        %v4094 = vmul.f32 %v4091, %v4093
        %v4095 = vadd.f32 %v4091, %v4094
        %vm4096 = vweird.f32 %v4090
        %vm4097 = vweird.f32 %v4091
        %vm4098 = vmor %vm4096, %vm4097
        %v4099 = vsel %vm4098, %v4091, %v4095
        %v4100 = vand.u32 2147483647, %v4090
        %vm4101 = vcmp.eq.f32.partialorder %v4100, 8.507059e+37
        %v4102 = vand.u32 %v4090, 2147483648
        %v4103 = vor.u32 1.1754944e-38, %v4102
        %v4104 = vsel %vm4101, %v4103, %v4099
        %v4105 = vmul.f32 %v4080, %v4104
        %v4106 = vmin.f32 %v4105, 1.0
        %v4107 = vmax.f32 %v4106, -1.0
        %v4108 = vmul.f32 %v4026, %v4026
        %v4109 = vmin.f32 16.0, %v4108
        %v4110 = vmul.f32 %v4109, 2.1237322e-06
        %v4111 = vadd.f32 %v4110, 0.00028619796
        %v4112 = vmul.f32 %v4109, %v4111
        %v4113 = vadd.f32 %v4112, 0.0036580483
        %v4114 = vmul.f32 %v4109, %v4113
        %v4115 = vadd.f32 %v4114, 0.05243302
        %v4116 = vmul.f32 %v4109, %v4115
        %v4117 = vadd.f32 %v4116, 0.18741608
        %v4118 = vmul.f32 %v4109, %v4117
        %v4119 = vadd.f32 %v4118, 1.1283791
        %v4120 = vmul.f32 %v4026, %v4119
        %v4121 = vmul.f32 %v4109, 3.8918573e-05
        %v4122 = vadd.f32 %v4121, 0.001143296
        %v4123 = vmul.f32 %v4109, %v4122
        %v4124 = vadd.f32 %v4123, 0.014752088
        %v4125 = vmul.f32 %v4109, %v4124
        %v4126 = vadd.f32 %v4125, 0.112945676
        %v4127 = vmul.f32 %v4109, %v4126
        %v4128 = vadd.f32 %v4127, 0.4994258
        %v4129 = vmul.f32 %v4109, %v4128
        %v4130 = vadd.f32 %v4129, 1.0
        %v4131 = vrcp.pop %v4130
        %v4132 = vmul.f32 %v4130, %v4131
        %v4133 = vsub.f32 1.0, %v4132
        %v4134 = vmul.f32 %v4131, %v4133
        %v4135 = vadd.f32 %v4131, %v4134
        %vm4136 = vweird.f32 %v4130
        %vm4137 = vweird.f32 %v4131
        %vm4138 = vmor %vm4136, %vm4137
        %v4139 = vsel %vm4138, %v4131, %v4135
        %v4140 = vand.u32 2147483647, %v4130
        %vm4141 = vcmp.eq.f32.partialorder %v4140, 8.507059e+37
        %v4142 = vand.u32 %v4130, 2147483648
        %v4143 = vor.u32 1.1754944e-38, %v4142
        %v4144 = vsel %vm4141, %v4143, %v4139
        %v4145 = vmul.f32 %v4120, %v4144
        %v4146 = vmin.f32 %v4145, 1.0
        %v4147 = vmax.f32 %v4146, -1.0
        %v4148 = vmul.f32 %v4027, %v4027
        %v4149 = vmin.f32 16.0, %v4148
        %v4150 = vmul.f32 %v4149, 2.1237322e-06
        %v4151 = vadd.f32 %v4150, 0.00028619796
        %v4152 = vmul.f32 %v4149, %v4151
        %v4153 = vadd.f32 %v4152, 0.0036580483
        %v4154 = vmul.f32 %v4149, %v4153
        %v4155 = vadd.f32 %v4154, 0.05243302
        %v4156 = vmul.f32 %v4149, %v4155
        %v4157 = vadd.f32 %v4156, 0.18741608
        %v4158 = vmul.f32 %v4149, %v4157
        %v4159 = vadd.f32 %v4158, 1.1283791
        %v4160 = vmul.f32 %v4027, %v4159
        %v4161 = vmul.f32 %v4149, 3.8918573e-05
        %v4162 = vadd.f32 %v4161, 0.001143296
        %v4163 = vmul.f32 %v4149, %v4162
        %v4164 = vadd.f32 %v4163, 0.014752088
        %v4165 = vmul.f32 %v4149, %v4164
        %v4166 = vadd.f32 %v4165, 0.112945676
        %v4167 = vmul.f32 %v4149, %v4166
        %v4168 = vadd.f32 %v4167, 0.4994258
        %v4169 = vmul.f32 %v4149, %v4168
        %v4170 = vadd.f32 %v4169, 1.0
        %v4171 = vrcp.pop %v4170
        %v4172 = vmul.f32 %v4170, %v4171
        %v4173 = vsub.f32 1.0, %v4172
        %v4174 = vmul.f32 %v4171, %v4173
        %v4175 = vadd.f32 %v4171, %v4174
        %vm4176 = vweird.f32 %v4170
        %vm4177 = vweird.f32 %v4171
        %vm4178 = vmor %vm4176, %vm4177
        %v4179 = vsel %vm4178, %v4171, %v4175
        %v4180 = vand.u32 2147483647, %v4170
        %vm4181 = vcmp.eq.f32.partialorder %v4180, 8.507059e+37
        %v4182 = vand.u32 %v4170, 2147483648
        %v4183 = vor.u32 1.1754944e-38, %v4182
        %v4184 = vsel %vm4181, %v4183, %v4179
        %v4185 = vmul.f32 %v4160, %v4184
        %v4186 = vmin.f32 %v4185, 1.0
        %v4187 = vmax.f32 %v4186, -1.0
        %v4188 = vadd.f32 %v4067, 1.0
        %v4189 = vadd.f32 %v4107, 1.0
        %v4190 = vadd.f32 %v4147, 1.0
        %v4191 = vadd.f32 %v4187, 1.0
        %v4192 = vmul.f32 %v4020, %v4188
        %v4193 = vmul.f32 %v4021, %v4189
        %v4194 = vmul.f32 %v4022, %v4190
        %v4195 = vmul.f32 %v4023, %v4191
        %4196 = vst.msk [vmem:[%s495] sm:$0xff] %vm1100, %v4192
        %4197 = vst.msk [vmem:[%s495 + $0x8] sm:$0xff] %vm1100, %v4193
        %4198 = vst.msk [vmem:[%s495 + $0x10] sm:$0xff] %vm1100, %v4194
        %4199 = vst.msk [vmem:[%s495 + $0x18] sm:$0xff] %vm1100, %v4195
        %v4200 = vpack.c.bf16 %v4193, %v4192
        %v4201 = vpack.c.bf16 %v4195, %v4194
        %v4202 = vld [vmem:[%s8] sm:$0xf]
        %v4203 = vld [vmem:[%s8 + $0x4] sm:$0xf]
        %v4204 = vld [vmem:[%s8 + $0x8] sm:$0xf]
        %v4205 = vld [vmem:[%s8 + $0xc] sm:$0xf]
        %v4206 = vld [vmem:[%s8 + $0x10] sm:$0xf]
        %v4207 = vld [vmem:[%s8 + $0x14] sm:$0xf]
        %v4208 = vld [vmem:[%s8 + $0x18] sm:$0xf]
        %v4209 = vld [vmem:[%s8 + $0x1c] sm:$0xf]
        %v4218 = vunpack.c.l.b16 %v4202
        %v4219 = vunpack.c.l.b16 %v4203
        %v4220 = vunpack.c.l.b16 %v4204
        %v4221 = vunpack.c.l.b16 %v4205
        %v4222 = vunpack.c.l.b16 %v4206
        %v4223 = vunpack.c.l.b16 %v4207
        %v4224 = vunpack.c.l.b16 %v4208
        %v4225 = vunpack.c.l.b16 %v4209
        %v4226 = vpack.c.b16 %v4219, %v4218
        %v4227 = vpack.c.b16 %v4221, %v4220
        %v4228 = vpack.c.b16 %v4223, %v4222
        %v4229 = vpack.c.b16 %v4225, %v4224
        %v4235 = vsel %vm1100, %v4200, 0
        %v4238 = vsel %vm1100, %v4201, 0
        %4240 = vmatpush.bf16.msra.mxu0 0
        %4241 = vmatpush.bf16.msra.mxu0 0
        %4242 = vmatpush.bf16.msra.mxu0 0
        %4243 = vmatpush.bf16.msra.mxu0 0
        %4244 = vmatpush.bf16.msra.mxu0 %v4229
        %4245 = vmatpush.bf16.msra.mxu0 %v4228
        %4246 = vmatpush.bf16.msra.mxu0 %v4227
        %4247 = vmatpush.bf16.msra.mxu0 %v4226
        %4248 = vmatmul.bf16.gmra.mxu0 %v4235
        %v4249 = vpop.f32.mrf.mxu0
        %v4250 = vadd.f32 0.0, %v4249
        %v4251 = vpop.f32.mrf.mxu0
        %v4252 = vadd.f32 0.0, %v4251
        %4253 = vmatmul.bf16.gmra.mxu0 %v4238
        %v4254 = vpop.f32.mrf.mxu0
        %v4255 = vadd.f32 0.0, %v4254
        %v4256 = vpop.f32.mrf.mxu0
        %v4257 = vadd.f32 0.0, %v4256
        %4258 = vdwg.mxu0
        %vm4259 = vcmask 35840
        %4260 = vst.msk [vmem:[#allocation5] sm:$0xf] %vm4259, 0
        %4261 = vst.msk [vmem:[#allocation5 + $0x4] sm:$0xf] %vm4259, 0
        %4262 = vst.msk [vmem:[#allocation5 + $0x8] sm:$0xf] %vm4259, 0
        %4263 = vst.msk [vmem:[#allocation5 + $0xc] sm:$0xf] %vm4259, 0
        %vm4264 = vcmask 208040
        %4265 = vst.msk [vmem:[#allocation5] sm:$0xf] %vm4264, 0
        %4266 = vst.msk [vmem:[#allocation5 + $0x4] sm:$0xf] %vm4264, 0
        %4267 = vst.msk [vmem:[#allocation5 + $0x8] sm:$0xf] %vm4264, 0
        %4268 = vst.msk [vmem:[#allocation5 + $0xc] sm:$0xf] %vm4264, 0
        %v4269 = vpack.c.bf16 %v4250, %v4250
        %v4270 = vpack.c.bf16 %v4252, %v4252
        %v4271 = vpack.c.bf16 %v4255, %v4255
        %v4272 = vpack.c.bf16 %v4257, %v4257
        %4277 = vrot.lane.b32.xlu0 %v4269, 5
        %v4278 = vpop.permute.xlu0 %4277
        %4279 = vrot.lane.b32.xlu0 %v4270, 5
        %v4280 = vpop.permute.xlu0 %4279
        %4281 = vrot.lane.b32.xlu0 %v4271, 5
        %v4282 = vpop.permute.xlu0 %4281
        %4283 = vrot.lane.b32.xlu0 %v4272, 5
        %v4284 = vpop.permute.xlu0 %4283
        %vm4289 = vcmask 166952
        %4290 = vst.msk [vmem:[#allocation5] sm:$0xf] %vm4289, %v4278
        %4291 = vst.msk [vmem:[#allocation5 + $0x4] sm:$0xf] %vm4289, %v4280
        %4292 = vst.msk [vmem:[#allocation5 + $0x8] sm:$0xf] %vm4289, %v4282
        %4293 = vst.msk [vmem:[#allocation5 + $0xc] sm:$0xf] %vm4289, %v4284
        %vm4294 = vcmp.lt.s32.totalorder %v591, 0
        %v4295 = vsub.s32 0, %v591
        %v4296 = vsel %vm4294, %v4295, %v591
        %v4297 = vshrl.u32 %v4296, 2
        %v4298 = vand.u32 %v4296, 3
        %v4299 = vsub.s32 0, %v4298
        %v4300 = vsel %vm4294, %v4299, %v4298
        %vm4301 = vcmp.ne.s32.totalorder %v4300, 0
        %vm4302 = vcmp.lt.s32.totalorder %v4300, 0
        %vm4303 = vmand %vm4302, %vm4301
        %v4304 = vadd.s32 %v4300, 4
        %v4305 = vsel %vm4303, %v4304, %v4300
        %vm4306 = vcmp.ge.s32.totalorder %v4305, 1
        %vm4307 = vcmp.le.s32.totalorder %v4305, 2
        %v4308 = vld [vmem:[#allocation5] sm:$0xf]
        %v4309 = vld [vmem:[#allocation5 + $0x4] sm:$0xf]
        %v4310 = vld [vmem:[#allocation5 + $0x8] sm:$0xf]
        %v4311 = vld [vmem:[#allocation5 + $0xc] sm:$0xf]
        %vm4312 = vmpackc.low %vm4306, %vm4306
        %v4313 = vsel %vm4312, %v4308, 0
        %v4314 = vsel %vm4312, %v4309, 0
        %v4315 = vsel %vm4312, %v4310, 0
        %v4316 = vsel %vm4312, %v4311, 0
        %vm4317 = vcmask 125952
        %4318 = vst.msk [vmem:[#allocation10] sm:$0xf] %vm4317, %v4313
        %4319 = vst.msk [vmem:[#allocation10 + $0x4] sm:$0xf] %vm4317, %v4314
        %4320 = vst.msk [vmem:[#allocation10 + $0x8] sm:$0xf] %vm4317, %v4315
        %4321 = vst.msk [vmem:[#allocation10 + $0xc] sm:$0xf] %vm4317, %v4316
        %v4322 = vld [vmem:[#allocation5] sm:$0xf]
        %v4323 = vld [vmem:[#allocation5 + $0x4] sm:$0xf]
        %v4324 = vld [vmem:[#allocation5 + $0x8] sm:$0xf]
        %v4325 = vld [vmem:[#allocation5 + $0xc] sm:$0xf]
        %4330 = vrot.lane.b32.xlu0 %v4322, 127
        %v4331 = vpop.permute.xlu0 %4330
        %4332 = vrot.lane.b32.xlu0 %v4323, 127
        %v4333 = vpop.permute.xlu0 %4332
        %4334 = vrot.lane.b32.xlu0 %v4324, 127
        %v4335 = vpop.permute.xlu0 %4334
        %4336 = vrot.lane.b32.xlu0 %v4325, 127
        %v4337 = vpop.permute.xlu0 %4336
        %4342 = vst.msk [vmem:[#allocation10 + $0x10] sm:$0xf] %vm4317, %v4331
        %4343 = vst.msk [vmem:[#allocation10 + $0x14] sm:$0xf] %vm4317, %v4333
        %4344 = vst.msk [vmem:[#allocation10 + $0x18] sm:$0xf] %vm4317, %v4335
        %4345 = vst.msk [vmem:[#allocation10 + $0x1c] sm:$0xf] %vm4317, %v4337
        %v4346 = vld [vmem:[#allocation5] sm:$0xf]
        %v4347 = vld [vmem:[#allocation5 + $0x4] sm:$0xf]
        %v4348 = vld [vmem:[#allocation5 + $0x8] sm:$0xf]
        %v4349 = vld [vmem:[#allocation5 + $0xc] sm:$0xf]
        %vm4350 = vmpackc.low %vm4307, %vm4307
        %v4351 = vsel %vm4350, 65537, 0
        %4352 = vrot.lane.b32.xlu0 %v4351, 2
        %v4353 = vpop.permute.xlu0 %4352
        %v4354 = vunpack.c.l.b16 %v4353
        %v4355 = vunpack.c.h.b16 %v4353
        %v4356 = vunpack.c.l.b16 0
        %v4357 = vunpack.c.h.b16 0
        %vm4358 = vcmp.ne.s32.totalorder %v4354, %v4356
        %vm4359 = vcmp.ne.s32.totalorder %v4355, %v4357
        %vm4360 = vmpackc.low %vm4359, %vm4358
        %v4361 = vsel %vm4360, %v4346, 0
        %v4362 = vsel %vm4360, %v4347, 0
        %v4363 = vsel %vm4360, %v4348, 0
        %v4364 = vsel %vm4360, %v4349, 0
        %4369 = vrot.lane.b32.xlu0 %v4361, 126
        %v4370 = vpop.permute.xlu0 %4369
        %4371 = vrot.lane.b32.xlu0 %v4362, 126
        %v4372 = vpop.permute.xlu0 %4371
        %4373 = vrot.lane.b32.xlu0 %v4363, 126
        %v4374 = vpop.permute.xlu0 %4373
        %4375 = vrot.lane.b32.xlu0 %v4364, 126
        %v4376 = vpop.permute.xlu0 %4375
        %4381 = vst.msk [vmem:[#allocation10 + $0x20] sm:$0xf] %vm4317, %v4370
        %4382 = vst.msk [vmem:[#allocation10 + $0x24] sm:$0xf] %vm4317, %v4372
        %4383 = vst.msk [vmem:[#allocation10 + $0x28] sm:$0xf] %vm4317, %v4374
        %4384 = vst.msk [vmem:[#allocation10 + $0x2c] sm:$0xf] %vm4317, %v4376
        %v4385 = vld [vmem:[#allocation5] sm:$0xf]
        %v4386 = vld [vmem:[#allocation5 + $0x4] sm:$0xf]
        %v4387 = vld [vmem:[#allocation5 + $0x8] sm:$0xf]
        %v4388 = vld [vmem:[#allocation5 + $0xc] sm:$0xf]
        %v4389 = vsel %vm4312, 65537, 0
        %4390 = vrot.lane.b32.xlu0 %v4389, 4
        %v4391 = vpop.permute.xlu0 %4390
        %v4392 = vunpack.c.l.b16 %v4391
        %v4393 = vunpack.c.h.b16 %v4391
        %v4394 = vunpack.c.l.b16 0
        %v4395 = vunpack.c.h.b16 0
        %vm4396 = vcmp.ne.s32.totalorder %v4392, %v4394
        %vm4397 = vcmp.ne.s32.totalorder %v4393, %v4395
        %vm4398 = vmpackc.low %vm4397, %vm4396
        %v4399 = vsel %vm4398, %v4385, 0
        %v4400 = vsel %vm4398, %v4386, 0
        %v4401 = vsel %vm4398, %v4387, 0
        %v4402 = vsel %vm4398, %v4388, 0
        %4407 = vrot.lane.b32.xlu0 %v4399, 124
        %v4408 = vpop.permute.xlu0 %4407
        %4409 = vrot.lane.b32.xlu0 %v4400, 124
        %v4410 = vpop.permute.xlu0 %4409
        %4411 = vrot.lane.b32.xlu0 %v4401, 124
        %v4412 = vpop.permute.xlu0 %4411
        %4413 = vrot.lane.b32.xlu0 %v4402, 124
        %v4414 = vpop.permute.xlu0 %4413
        %4419 = vst.msk [vmem:[#allocation10 + $0x30] sm:$0xf] %vm4317, %v4408
        %4420 = vst.msk [vmem:[#allocation10 + $0x34] sm:$0xf] %vm4317, %v4410
        %4421 = vst.msk [vmem:[#allocation10 + $0x38] sm:$0xf] %vm4317, %v4412
        %4422 = vst.msk [vmem:[#allocation10 + $0x3c] sm:$0xf] %vm4317, %v4414
        %v4423 = vld [vmem:[#allocation5] sm:$0xf]
        %v4424 = vld [vmem:[#allocation5 + $0x4] sm:$0xf]
        %v4425 = vld [vmem:[#allocation5 + $0x8] sm:$0xf]
        %v4426 = vld [vmem:[#allocation5 + $0xc] sm:$0xf]
        %4431 = vrot.lane.b32.xlu0 %v4423, 123
        %v4432 = vpop.permute.xlu0 %4431
        %4433 = vrot.lane.b32.xlu0 %v4424, 123
        %v4434 = vpop.permute.xlu0 %4433
        %4435 = vrot.lane.b32.xlu0 %v4425, 123
        %v4436 = vpop.permute.xlu0 %4435
        %4437 = vrot.lane.b32.xlu0 %v4426, 123
        %v4438 = vpop.permute.xlu0 %4437
        %4443 = vst.msk [vmem:[#allocation10 + $0x40] sm:$0xf] %vm4317, %v4432
        %4444 = vst.msk [vmem:[#allocation10 + $0x44] sm:$0xf] %vm4317, %v4434
        %4445 = vst.msk [vmem:[#allocation10 + $0x48] sm:$0xf] %vm4317, %v4436
        %4446 = vst.msk [vmem:[#allocation10 + $0x4c] sm:$0xf] %vm4317, %v4438
        %v4447 = vld [vmem:[#allocation5] sm:$0xf]
        %v4448 = vld [vmem:[#allocation5 + $0x4] sm:$0xf]
        %v4449 = vld [vmem:[#allocation5 + $0x8] sm:$0xf]
        %v4450 = vld [vmem:[#allocation5 + $0xc] sm:$0xf]
        %4451 = vrot.lane.b32.xlu0 %v4351, 6
        %v4452 = vpop.permute.xlu0 %4451
        %v4453 = vunpack.c.l.b16 %v4452
        %v4454 = vunpack.c.h.b16 %v4452
        %v4455 = vunpack.c.l.b16 0
        %v4456 = vunpack.c.h.b16 0
        %vm4457 = vcmp.ne.s32.totalorder %v4453, %v4455
        %vm4458 = vcmp.ne.s32.totalorder %v4454, %v4456
        %vm4459 = vmpackc.low %vm4458, %vm4457
        %v4460 = vsel %vm4459, %v4447, 0
        %v4461 = vsel %vm4459, %v4448, 0
        %v4462 = vsel %vm4459, %v4449, 0
        %v4463 = vsel %vm4459, %v4450, 0
        %4468 = vrot.lane.b32.xlu0 %v4460, 122
        %v4469 = vpop.permute.xlu0 %4468
        %4470 = vrot.lane.b32.xlu0 %v4461, 122
        %v4471 = vpop.permute.xlu0 %4470
        %4472 = vrot.lane.b32.xlu0 %v4462, 122
        %v4473 = vpop.permute.xlu0 %4472
        %4474 = vrot.lane.b32.xlu0 %v4463, 122
        %v4475 = vpop.permute.xlu0 %4474
        %4480 = vst.msk [vmem:[#allocation10 + $0x50] sm:$0xf] %vm4317, %v4469
        %4481 = vst.msk [vmem:[#allocation10 + $0x54] sm:$0xf] %vm4317, %v4471
        %4482 = vst.msk [vmem:[#allocation10 + $0x58] sm:$0xf] %vm4317, %v4473
        %4483 = vst.msk [vmem:[#allocation10 + $0x5c] sm:$0xf] %vm4317, %v4475
        %v4484 = vld [vmem:[#allocation5] sm:$0xf]
        %v4485 = vld [vmem:[#allocation5 + $0x4] sm:$0xf]
        %v4486 = vld [vmem:[#allocation5 + $0x8] sm:$0xf]
        %v4487 = vld [vmem:[#allocation5 + $0xc] sm:$0xf]
        %4488 = vrot.lane.b32.xlu0 %v4389, 8
        %v4489 = vpop.permute.xlu0 %4488
        %v4490 = vunpack.c.l.b16 %v4489
        %v4491 = vunpack.c.h.b16 %v4489
        %v4492 = vunpack.c.l.b16 0
        %v4493 = vunpack.c.h.b16 0
        %vm4494 = vcmp.ne.s32.totalorder %v4490, %v4492
        %vm4495 = vcmp.ne.s32.totalorder %v4491, %v4493
        %vm4496 = vmpackc.low %vm4495, %vm4494
        %v4497 = vsel %vm4496, %v4484, 0
        %v4498 = vsel %vm4496, %v4485, 0
        %v4499 = vsel %vm4496, %v4486, 0
        %v4500 = vsel %vm4496, %v4487, 0
        %4505 = vrot.lane.b32.xlu0 %v4497, 120
        %v4506 = vpop.permute.xlu0 %4505
        %4507 = vrot.lane.b32.xlu0 %v4498, 120
        %v4508 = vpop.permute.xlu0 %4507
        %4509 = vrot.lane.b32.xlu0 %v4499, 120
        %v4510 = vpop.permute.xlu0 %4509
        %4511 = vrot.lane.b32.xlu0 %v4500, 120
        %v4512 = vpop.permute.xlu0 %4511
        %4517 = vst.msk [vmem:[#allocation10 + $0x60] sm:$0xf] %vm4317, %v4506
        %4518 = vst.msk [vmem:[#allocation10 + $0x64] sm:$0xf] %vm4317, %v4508
        %4519 = vst.msk [vmem:[#allocation10 + $0x68] sm:$0xf] %vm4317, %v4510
        %4520 = vst.msk [vmem:[#allocation10 + $0x6c] sm:$0xf] %vm4317, %v4512
        %v4521 = vld [vmem:[#allocation5] sm:$0xf]
        %v4522 = vld [vmem:[#allocation5 + $0x4] sm:$0xf]
        %v4523 = vld [vmem:[#allocation5 + $0x8] sm:$0xf]
        %v4524 = vld [vmem:[#allocation5 + $0xc] sm:$0xf]
        %4529 = vrot.lane.b32.xlu0 %v4521, 119
        %v4530 = vpop.permute.xlu0 %4529
        %4531 = vrot.lane.b32.xlu0 %v4522, 119
        %v4532 = vpop.permute.xlu0 %4531
        %4533 = vrot.lane.b32.xlu0 %v4523, 119
        %v4534 = vpop.permute.xlu0 %4533
        %4535 = vrot.lane.b32.xlu0 %v4524, 119
        %v4536 = vpop.permute.xlu0 %4535
        %4541 = vst.msk [vmem:[#allocation10 + $0x70] sm:$0xf] %vm4317, %v4530
        %4542 = vst.msk [vmem:[#allocation10 + $0x74] sm:$0xf] %vm4317, %v4532
        %4543 = vst.msk [vmem:[#allocation10 + $0x78] sm:$0xf] %vm4317, %v4534
        %4544 = vst.msk [vmem:[#allocation10 + $0x7c] sm:$0xf] %vm4317, %v4536
        %v4545 = vld [vmem:[#allocation5] sm:$0xf]
        %v4546 = vld [vmem:[#allocation5 + $0x4] sm:$0xf]
        %v4547 = vld [vmem:[#allocation5 + $0x8] sm:$0xf]
        %v4548 = vld [vmem:[#allocation5 + $0xc] sm:$0xf]
        %4549 = vrot.lane.b32.xlu0 %v4351, 10
        %v4550 = vpop.permute.xlu0 %4549
        %v4551 = vunpack.c.l.b16 %v4550
        %v4552 = vunpack.c.h.b16 %v4550
        %v4553 = vunpack.c.l.b16 0
        %v4554 = vunpack.c.h.b16 0
        %vm4555 = vcmp.ne.s32.totalorder %v4551, %v4553
        %vm4556 = vcmp.ne.s32.totalorder %v4552, %v4554
        %vm4557 = vmpackc.low %vm4556, %vm4555
        %v4558 = vsel %vm4557, %v4545, 0
        %v4559 = vsel %vm4557, %v4546, 0
        %v4560 = vsel %vm4557, %v4547, 0
        %v4561 = vsel %vm4557, %v4548, 0
        %4566 = vrot.lane.b32.xlu0 %v4558, 118
        %v4567 = vpop.permute.xlu0 %4566
        %4568 = vrot.lane.b32.xlu0 %v4559, 118
        %v4569 = vpop.permute.xlu0 %4568
        %4570 = vrot.lane.b32.xlu0 %v4560, 118
        %v4571 = vpop.permute.xlu0 %4570
        %4572 = vrot.lane.b32.xlu0 %v4561, 118
        %v4573 = vpop.permute.xlu0 %4572
        %4578 = vst.msk [vmem:[#allocation10 + $0x80] sm:$0xf] %vm4317, %v4567
        %4579 = vst.msk [vmem:[#allocation10 + $0x84] sm:$0xf] %vm4317, %v4569
        %4580 = vst.msk [vmem:[#allocation10 + $0x88] sm:$0xf] %vm4317, %v4571
        %4581 = vst.msk [vmem:[#allocation10 + $0x8c] sm:$0xf] %vm4317, %v4573
        %v4582 = vld [vmem:[#allocation10] sm:$0xf]
        %v4583 = vld [vmem:[#allocation10 + $0x4] sm:$0xf]
        %v4584 = vld [vmem:[#allocation10 + $0x8] sm:$0xf]
        %v4585 = vld [vmem:[#allocation10 + $0xc] sm:$0xf]
        %v4586 = vld [vmem:[#allocation10 + $0x10] sm:$0xf]
        %v4587 = vld [vmem:[#allocation10 + $0x14] sm:$0xf]
        %v4588 = vld [vmem:[#allocation10 + $0x18] sm:$0xf]
        %v4589 = vld [vmem:[#allocation10 + $0x1c] sm:$0xf]
        %v4590 = vld [vmem:[#allocation10 + $0x20] sm:$0xf]
        %v4591 = vld [vmem:[#allocation10 + $0x24] sm:$0xf]
        %v4592 = vld [vmem:[#allocation10 + $0x28] sm:$0xf]
        %v4593 = vld [vmem:[#allocation10 + $0x2c] sm:$0xf]
        %v4594 = vld [vmem:[#allocation10 + $0x30] sm:$0xf]
        %v4595 = vld [vmem:[#allocation10 + $0x34] sm:$0xf]
        %v4596 = vld [vmem:[#allocation10 + $0x38] sm:$0xf]
        %v4597 = vld [vmem:[#allocation10 + $0x3c] sm:$0xf]
        %v4598 = vld [vmem:[#allocation10 + $0x40] sm:$0xf]
        %v4599 = vld [vmem:[#allocation10 + $0x44] sm:$0xf]
        %v4600 = vld [vmem:[#allocation10 + $0x48] sm:$0xf]
        %v4601 = vld [vmem:[#allocation10 + $0x4c] sm:$0xf]
        %v4602 = vld [vmem:[#allocation10 + $0x50] sm:$0xf]
        %v4603 = vld [vmem:[#allocation10 + $0x54] sm:$0xf]
        %v4604 = vld [vmem:[#allocation10 + $0x58] sm:$0xf]
        %v4605 = vld [vmem:[#allocation10 + $0x5c] sm:$0xf]
        %v4606 = vld [vmem:[#allocation10 + $0x60] sm:$0xf]
        %v4607 = vld [vmem:[#allocation10 + $0x64] sm:$0xf]
        %v4608 = vld [vmem:[#allocation10 + $0x68] sm:$0xf]
        %v4609 = vld [vmem:[#allocation10 + $0x6c] sm:$0xf]
        %v4610 = vld [vmem:[#allocation10 + $0x70] sm:$0xf]
        %v4611 = vld [vmem:[#allocation10 + $0x74] sm:$0xf]
        %v4612 = vld [vmem:[#allocation10 + $0x78] sm:$0xf]
        %v4613 = vld [vmem:[#allocation10 + $0x7c] sm:$0xf]
        %v4614 = vld [vmem:[#allocation10 + $0x80] sm:$0xf]
        %v4615 = vld [vmem:[#allocation10 + $0x84] sm:$0xf]
        %v4616 = vld [vmem:[#allocation10 + $0x88] sm:$0xf]
        %v4617 = vld [vmem:[#allocation10 + $0x8c] sm:$0xf]
        %v4618 = vld [vmem:[%s4] sm:$0xff]
        %v4619 = vld [vmem:[%s4 + $0x8] sm:$0xf]
        %v4620 = vld [vmem:[%s4 + $0xc] sm:$0xff]
        %v4621 = vld [vmem:[%s4 + $0x14] sm:$0xf]
        %v4622 = vld [vmem:[%s4 + $0x18] sm:$0xff]
        %v4623 = vld [vmem:[%s4 + $0x20] sm:$0xf]
        %v4624 = vld [vmem:[%s4 + $0x24] sm:$0xff]
        %v4625 = vld [vmem:[%s4 + $0x2c] sm:$0xf]
        %v4626 = vld [vmem:[%s4 + $0x30] sm:$0xff]
        %v4627 = vld [vmem:[%s4 + $0x38] sm:$0xf]
        %v4628 = vld [vmem:[%s4 + $0x3c] sm:$0xff]
        %v4629 = vld [vmem:[%s4 + $0x44] sm:$0xf]
        %v4630 = vld [vmem:[%s4 + $0x48] sm:$0xff]
        %v4631 = vld [vmem:[%s4 + $0x50] sm:$0xf]
        %v4632 = vld [vmem:[%s4 + $0x54] sm:$0xff]
        %v4633 = vld [vmem:[%s4 + $0x5c] sm:$0xf]
        %v4650 = vunpack.c.l.b16 %v4618
        %v4651 = vunpack.c.h.b16 %v4618
        %v4652 = vunpack.c.l.b16 %v4619
        %v4653 = vunpack.c.l.b16 %v4620
        %v4654 = vunpack.c.h.b16 %v4620
        %v4655 = vunpack.c.l.b16 %v4621
        %v4656 = vunpack.c.l.b16 %v4622
        %v4657 = vunpack.c.h.b16 %v4622
        %v4658 = vunpack.c.l.b16 %v4623
        %v4659 = vunpack.c.l.b16 %v4624
        %v4660 = vunpack.c.h.b16 %v4624
        %v4661 = vunpack.c.l.b16 %v4625
        %v4662 = vunpack.c.l.b16 %v4626
        %v4663 = vunpack.c.h.b16 %v4626
        %v4664 = vunpack.c.l.b16 %v4627
        %v4665 = vunpack.c.l.b16 %v4628
        %v4666 = vunpack.c.h.b16 %v4628
        %v4667 = vunpack.c.l.b16 %v4629
        %v4668 = vunpack.c.l.b16 %v4630
        %v4669 = vunpack.c.h.b16 %v4630
        %v4670 = vunpack.c.l.b16 %v4631
        %v4671 = vunpack.c.l.b16 %v4632
        %v4672 = vunpack.c.h.b16 %v4632
        %v4673 = vunpack.c.l.b16 %v4633
        %v4674 = vpack.c.b16 %v4653, %v4650
        %v4675 = vpack.c.b16 %v4654, %v4651
        %v4676 = vpack.c.b16 %v4655, %v4652
        %v4677 = vpack.c.b16 %v4659, %v4656
        %v4678 = vpack.c.b16 %v4660, %v4657
        %v4679 = vpack.c.b16 %v4661, %v4658
        %v4680 = vpack.c.b16 %v4665, %v4662
        %v4681 = vpack.c.b16 %v4666, %v4663
        %v4682 = vpack.c.b16 %v4667, %v4664
        %v4683 = vpack.c.b16 %v4671, %v4668
        %v4684 = vpack.c.b16 %v4672, %v4669
        %v4685 = vpack.c.b16 %v4673, %v4670
        %v4730 = vunpack.c.l.b16 %v4582
        %v4731 = vunpack.c.l.b16 %v4583
        %v4732 = vunpack.c.l.b16 %v4584
        %v4733 = vunpack.c.l.b16 %v4585
        %v4734 = vunpack.c.l.b16 %v4586
        %v4735 = vunpack.c.l.b16 %v4587
        %v4736 = vunpack.c.l.b16 %v4588
        %v4737 = vunpack.c.l.b16 %v4589
        %v4738 = vunpack.c.l.b16 %v4590
        %v4739 = vunpack.c.l.b16 %v4591
        %v4740 = vunpack.c.l.b16 %v4592
        %v4741 = vunpack.c.l.b16 %v4593
        %v4742 = vunpack.c.l.b16 %v4594
        %v4743 = vunpack.c.l.b16 %v4595
        %v4744 = vunpack.c.l.b16 %v4596
        %v4745 = vunpack.c.l.b16 %v4597
        %v4746 = vunpack.c.l.b16 %v4598
        %v4747 = vunpack.c.l.b16 %v4599
        %v4748 = vunpack.c.l.b16 %v4600
        %v4749 = vunpack.c.l.b16 %v4601
        %v4750 = vunpack.c.l.b16 %v4602
        %v4751 = vunpack.c.l.b16 %v4603
        %v4752 = vunpack.c.l.b16 %v4604
        %v4753 = vunpack.c.l.b16 %v4605
        %v4754 = vunpack.c.l.b16 %v4606
        %v4755 = vunpack.c.l.b16 %v4607
        %v4756 = vunpack.c.l.b16 %v4608
        %v4757 = vunpack.c.l.b16 %v4609
        %v4758 = vunpack.c.l.b16 %v4610
        %v4759 = vunpack.c.l.b16 %v4611
        %v4760 = vunpack.c.l.b16 %v4612
        %v4761 = vunpack.c.l.b16 %v4613
        %v4762 = vunpack.c.l.b16 %v4614
        %v4763 = vunpack.c.l.b16 %v4615
        %v4764 = vunpack.c.l.b16 %v4616
        %v4765 = vunpack.c.l.b16 %v4617
        %v4766 = vpack.c.b16 %v4731, %v4730
        %v4767 = vpack.c.b16 %v4733, %v4732
        %v4768 = vpack.c.b16 %v4735, %v4734
        %v4769 = vpack.c.b16 %v4737, %v4736
        %v4770 = vpack.c.b16 %v4739, %v4738
        %v4771 = vpack.c.b16 %v4741, %v4740
        %v4772 = vpack.c.b16 %v4743, %v4742
        %v4773 = vpack.c.b16 %v4745, %v4744
        %v4774 = vpack.c.b16 %v4747, %v4746
        %v4775 = vpack.c.b16 %v4749, %v4748
        %v4776 = vpack.c.b16 %v4751, %v4750
        %v4777 = vpack.c.b16 %v4753, %v4752
        %v4778 = vpack.c.b16 %v4755, %v4754
        %v4779 = vpack.c.b16 %v4757, %v4756
        %v4780 = vpack.c.b16 %v4759, %v4758
        %v4781 = vpack.c.b16 %v4761, %v4760
        %v4782 = vpack.c.b16 %v4763, %v4762
        %v4783 = vpack.c.b16 %v4765, %v4764
        %vm4802 = vcmask 261120
        %v4804 = vsel %vm4802, %v4676, 0
        %v4807 = vsel %vm4802, %v4679, 0
        %v4810 = vsel %vm4802, %v4682, 0
        %v4813 = vsel %vm4802, %v4685, 0
        %4815 = vmatpush.bf16.msra.mxu0 %v4773
        %4816 = vmatpush.bf16.msra.mxu0 %v4772
        %4817 = vmatpush.bf16.msra.mxu0 %v4771
        %4818 = vmatpush.bf16.msra.mxu0 %v4770
        %4819 = vmatpush.bf16.msra.mxu0 %v4769
        %4820 = vmatpush.bf16.msra.mxu0 %v4768
        %4821 = vmatpush.bf16.msra.mxu0 %v4767
        %4822 = vmatpush.bf16.msra.mxu0 %v4766
        %4823 = vmatmul.bf16.gmra.mxu0 %v4674
        %v4824 = vpop.f32.mrf.mxu0
        %v4825 = vadd.f32 0.0, %v4824
        %v4826 = vpop.f32.mrf.mxu0
        %v4827 = vadd.f32 0.0, %v4826
        %4828 = vmatmul.bf16.gmra.mxu0 %v4677
        %v4829 = vpop.f32.mrf.mxu0
        %v4830 = vadd.f32 0.0, %v4829
        %v4831 = vpop.f32.mrf.mxu0
        %v4832 = vadd.f32 0.0, %v4831
        %4833 = vmatmul.bf16.gmra.mxu0 %v4680
        %v4834 = vpop.f32.mrf.mxu0
        %v4835 = vadd.f32 0.0, %v4834
        %v4836 = vpop.f32.mrf.mxu0
        %v4837 = vadd.f32 0.0, %v4836
        %4838 = vmatmul.bf16.gmra.mxu0 %v4683
        %v4839 = vpop.f32.mrf.mxu0
        %v4840 = vadd.f32 0.0, %v4839
        %v4841 = vpop.f32.mrf.mxu0
        %v4842 = vadd.f32 0.0, %v4841
        %4843 = vdwg.mxu0
        %4844 = vmatpush.bf16.msra.mxu0 %v4781
        %4845 = vmatpush.bf16.msra.mxu0 %v4780
        %4846 = vmatpush.bf16.msra.mxu0 %v4779
        %4847 = vmatpush.bf16.msra.mxu0 %v4778
        %4848 = vmatpush.bf16.msra.mxu0 %v4777
        %4849 = vmatpush.bf16.msra.mxu0 %v4776
        %4850 = vmatpush.bf16.msra.mxu0 %v4775
        %4851 = vmatpush.bf16.msra.mxu0 %v4774
        %4852 = vmatmul.bf16.gmra.mxu0 %v4675
        %v4853 = vpop.f32.mrf.mxu0
        %v4854 = vadd.f32 %v4825, %v4853
        %v4855 = vpop.f32.mrf.mxu0
        %v4856 = vadd.f32 %v4827, %v4855
        %4857 = vmatmul.bf16.gmra.mxu0 %v4678
        %v4858 = vpop.f32.mrf.mxu0
        %v4859 = vadd.f32 %v4830, %v4858
        %v4860 = vpop.f32.mrf.mxu0
        %v4861 = vadd.f32 %v4832, %v4860
        %4862 = vmatmul.bf16.gmra.mxu0 %v4681
        %v4863 = vpop.f32.mrf.mxu0
        %v4864 = vadd.f32 %v4835, %v4863
        %v4865 = vpop.f32.mrf.mxu0
        %v4866 = vadd.f32 %v4837, %v4865
        %4867 = vmatmul.bf16.gmra.mxu0 %v4684
        %v4868 = vpop.f32.mrf.mxu0
        %v4869 = vadd.f32 %v4840, %v4868
        %v4870 = vpop.f32.mrf.mxu0
        %v4871 = vadd.f32 %v4842, %v4870
        %4872 = vdwg.mxu0
        %4873 = vmatpush.bf16.msra.mxu0 0
        %4874 = vmatpush.bf16.msra.mxu0 0
        %4875 = vmatpush.bf16.msra.mxu0 0
        %4876 = vmatpush.bf16.msra.mxu0 0
        %4877 = vmatpush.bf16.msra.mxu0 0
        %4878 = vmatpush.bf16.msra.mxu0 0
        %4879 = vmatpush.bf16.msra.mxu0 %v4783
        %4880 = vmatpush.bf16.msra.mxu0 %v4782
        %4881 = vmatmul.bf16.gmra.mxu0 %v4804
        %v4882 = vpop.f32.mrf.mxu0
        %v4883 = vadd.f32 %v4854, %v4882
        %v4884 = vpop.f32.mrf.mxu0
        %v4885 = vadd.f32 %v4856, %v4884
        %4886 = vmatmul.bf16.gmra.mxu0 %v4807
        %v4887 = vpop.f32.mrf.mxu0
        %v4888 = vadd.f32 %v4859, %v4887
        %v4889 = vpop.f32.mrf.mxu0
        %v4890 = vadd.f32 %v4861, %v4889
        %4891 = vmatmul.bf16.gmra.mxu0 %v4810
        %v4892 = vpop.f32.mrf.mxu0
        %v4893 = vadd.f32 %v4864, %v4892
        %v4894 = vpop.f32.mrf.mxu0
        %v4895 = vadd.f32 %v4866, %v4894
        %4896 = vmatmul.bf16.gmra.mxu0 %v4813
        %v4897 = vpop.f32.mrf.mxu0
        %v4898 = vadd.f32 %v4869, %v4897
        %v4899 = vpop.f32.mrf.mxu0
        %v4900 = vadd.f32 %v4871, %v4899
        %4901 = vdwg.mxu0
        %v4902 = vsel %vm3875, %v4883, 0.0
        %4903 = vadd.xlane.f32.xlu0 %v4902
        %v4904 = vpop.xlane.xlu0 %4903
        %v4905 = vsel %vm3875, %v4885, 0.0
        %4906 = vadd.xlane.f32.xlu0 %v4905
        %v4907 = vpop.xlane.xlu0 %4906
        %v4908 = vsel %vm3875, %v4888, 0.0
        %4909 = vadd.xlane.f32.xlu0 %v4908
        %v4910 = vpop.xlane.xlu0 %4909
        %v4911 = vsel %vm3875, %v4890, 0.0
        %4912 = vadd.xlane.f32.xlu0 %v4911
        %v4913 = vpop.xlane.xlu0 %4912
        %v4914 = vsel %vm3875, %v4893, 0.0
        %4915 = vadd.xlane.f32.xlu0 %v4914
        %v4916 = vpop.xlane.xlu0 %4915
        %v4917 = vsel %vm3875, %v4895, 0.0
        %4918 = vadd.xlane.f32.xlu0 %v4917
        %v4919 = vpop.xlane.xlu0 %4918
        %v4920 = vsel %vm3875, %v4898, 0.0
        %4921 = vadd.xlane.f32.xlu0 %v4920
        %v4922 = vpop.xlane.xlu0 %4921
        %v4923 = vsel %vm3875, %v4900, 0.0
        %4924 = vadd.xlane.f32.xlu0 %v4923
        %v4925 = vpop.xlane.xlu0 %4924
        %v4926 = vmul.f32 %v4904, 0.0625
        %v4927 = vmul.f32 %v4907, 0.0625
        %v4928 = vmul.f32 %v4910, 0.0625
        %v4929 = vmul.f32 %v4913, 0.0625
        %v4930 = vmul.f32 %v4916, 0.0625
        %v4931 = vmul.f32 %v4919, 0.0625
        %v4932 = vmul.f32 %v4922, 0.0625
        %v4933 = vmul.f32 %v4925, 0.0625
        %v4934 = vmul.f32 %v4883, %v4883
        %v4935 = vmul.f32 %v4885, %v4885
        %v4936 = vmul.f32 %v4888, %v4888
        %v4937 = vmul.f32 %v4890, %v4890
        %v4938 = vmul.f32 %v4893, %v4893
        %v4939 = vmul.f32 %v4895, %v4895
        %v4940 = vmul.f32 %v4898, %v4898
        %v4941 = vmul.f32 %v4900, %v4900
        %v4942 = vsel %vm3875, %v4934, 0.0
        %4943 = vadd.xlane.f32.xlu0 %v4942
        %v4944 = vpop.xlane.xlu0 %4943
        %v4945 = vsel %vm3875, %v4935, 0.0
        %4946 = vadd.xlane.f32.xlu0 %v4945
        %v4947 = vpop.xlane.xlu0 %4946
        %v4948 = vsel %vm3875, %v4936, 0.0
        %4949 = vadd.xlane.f32.xlu0 %v4948
        %v4950 = vpop.xlane.xlu0 %4949
        %v4951 = vsel %vm3875, %v4937, 0.0
        %4952 = vadd.xlane.f32.xlu0 %v4951
        %v4953 = vpop.xlane.xlu0 %4952
        %v4954 = vsel %vm3875, %v4938, 0.0
        %4955 = vadd.xlane.f32.xlu0 %v4954
        %v4956 = vpop.xlane.xlu0 %4955
        %v4957 = vsel %vm3875, %v4939, 0.0
        %4958 = vadd.xlane.f32.xlu0 %v4957
        %v4959 = vpop.xlane.xlu0 %4958
        %v4960 = vsel %vm3875, %v4940, 0.0
        %4961 = vadd.xlane.f32.xlu0 %v4960
        %v4962 = vpop.xlane.xlu0 %4961
        %v4963 = vsel %vm3875, %v4941, 0.0
        %4964 = vadd.xlane.f32.xlu0 %v4963
        %v4965 = vpop.xlane.xlu0 %4964
        %v4966 = vmul.f32 %v4944, 0.0625
        %v4967 = vmul.f32 %v4947, 0.0625
        %v4968 = vmul.f32 %v4950, 0.0625
        %v4969 = vmul.f32 %v4953, 0.0625
        %v4970 = vmul.f32 %v4956, 0.0625
        %v4971 = vmul.f32 %v4959, 0.0625
        %v4972 = vmul.f32 %v4962, 0.0625
        %v4973 = vmul.f32 %v4965, 0.0625
        %v4974 = vmul.f32 %v4926, %v4926
        %v4975 = vmul.f32 %v4927, %v4927
        %v4976 = vmul.f32 %v4928, %v4928
        %v4977 = vmul.f32 %v4929, %v4929
        %v4978 = vmul.f32 %v4930, %v4930
        %v4979 = vmul.f32 %v4931, %v4931
        %v4980 = vmul.f32 %v4932, %v4932
        %v4981 = vmul.f32 %v4933, %v4933
        %v4982 = vsub.f32 %v4966, %v4974
        %v4983 = vsub.f32 %v4967, %v4975
        %v4984 = vsub.f32 %v4968, %v4976
        %v4985 = vsub.f32 %v4969, %v4977
        %v4986 = vsub.f32 %v4970, %v4978
        %v4987 = vsub.f32 %v4971, %v4979
        %v4988 = vsub.f32 %v4972, %v4980
        %v4989 = vsub.f32 %v4973, %v4981
        %v4990 = vmax.f32 %v4982, 0.0
        %v4991 = vmax.f32 %v4983, 0.0
        %v4992 = vmax.f32 %v4984, 0.0
        %v4993 = vmax.f32 %v4985, 0.0
        %v4994 = vmax.f32 %v4986, 0.0
        %v4995 = vmax.f32 %v4987, 0.0
        %v4996 = vmax.f32 %v4988, 0.0
        %v4997 = vmax.f32 %v4989, 0.0
        %v4998 = vsub.f32 %v4883, %v4926
        %v4999 = vsub.f32 %v4885, %v4927
        %v5000 = vsub.f32 %v4888, %v4928
        %v5001 = vsub.f32 %v4890, %v4929
        %v5002 = vsub.f32 %v4893, %v4930
        %v5003 = vsub.f32 %v4895, %v4931
        %v5004 = vsub.f32 %v4898, %v4932
        %v5005 = vsub.f32 %v4900, %v4933
        %v5006 = vadd.f32 %v4990, 1e-05
        %v5007 = vadd.f32 %v4991, 1e-05
        %v5008 = vadd.f32 %v4992, 1e-05
        %v5009 = vadd.f32 %v4993, 1e-05
        %v5010 = vadd.f32 %v4994, 1e-05
        %v5011 = vadd.f32 %v4995, 1e-05
        %v5012 = vadd.f32 %v4996, 1e-05
        %v5013 = vadd.f32 %v4997, 1e-05
        %v5014 = vrsqrt.pop %v5006
        %v5015 = vmul.f32 %v5014, %v5006
        %v5016 = vmul.f32 %v5015, %v5014
        %v5017 = vmul.f32 0.5, %v5016
        %v5018 = vsub.f32 1.5, %v5017
        %v5019 = vmul.f32 %v5014, %v5018
        %vm5020 = vweird.f32 %v5006
        %vm5021 = vweird.f32 %v5014
        %vm5022 = vmor %vm5020, %vm5021
        %v5023 = vsel %vm5022, %v5014, %v5019
        %v5024 = vrsqrt.pop %v5007
        %v5025 = vmul.f32 %v5024, %v5007
        %v5026 = vmul.f32 %v5025, %v5024
        %v5027 = vmul.f32 0.5, %v5026
        %v5028 = vsub.f32 1.5, %v5027
        %v5029 = vmul.f32 %v5024, %v5028
        %vm5030 = vweird.f32 %v5007
        %vm5031 = vweird.f32 %v5024
        %vm5032 = vmor %vm5030, %vm5031
        %v5033 = vsel %vm5032, %v5024, %v5029
        %v5034 = vrsqrt.pop %v5008
        %v5035 = vmul.f32 %v5034, %v5008
        %v5036 = vmul.f32 %v5035, %v5034
        %v5037 = vmul.f32 0.5, %v5036
        %v5038 = vsub.f32 1.5, %v5037
        %v5039 = vmul.f32 %v5034, %v5038
        %vm5040 = vweird.f32 %v5008
        %vm5041 = vweird.f32 %v5034
        %vm5042 = vmor %vm5040, %vm5041
        %v5043 = vsel %vm5042, %v5034, %v5039
        %v5044 = vrsqrt.pop %v5009
        %v5045 = vmul.f32 %v5044, %v5009
        %v5046 = vmul.f32 %v5045, %v5044
        %v5047 = vmul.f32 0.5, %v5046
        %v5048 = vsub.f32 1.5, %v5047
        %v5049 = vmul.f32 %v5044, %v5048
        %vm5050 = vweird.f32 %v5009
        %vm5051 = vweird.f32 %v5044
        %vm5052 = vmor %vm5050, %vm5051
        %v5053 = vsel %vm5052, %v5044, %v5049
        %v5054 = vrsqrt.pop %v5010
        %v5055 = vmul.f32 %v5054, %v5010
        %v5056 = vmul.f32 %v5055, %v5054
        %v5057 = vmul.f32 0.5, %v5056
        %v5058 = vsub.f32 1.5, %v5057
        %v5059 = vmul.f32 %v5054, %v5058
        %vm5060 = vweird.f32 %v5010
        %vm5061 = vweird.f32 %v5054
        %vm5062 = vmor %vm5060, %vm5061
        %v5063 = vsel %vm5062, %v5054, %v5059
        %v5064 = vrsqrt.pop %v5011
        %v5065 = vmul.f32 %v5064, %v5011
        %v5066 = vmul.f32 %v5065, %v5064
        %v5067 = vmul.f32 0.5, %v5066
        %v5068 = vsub.f32 1.5, %v5067
        %v5069 = vmul.f32 %v5064, %v5068
        %vm5070 = vweird.f32 %v5011
        %vm5071 = vweird.f32 %v5064
        %vm5072 = vmor %vm5070, %vm5071
        %v5073 = vsel %vm5072, %v5064, %v5069
        %v5074 = vrsqrt.pop %v5012
        %v5075 = vmul.f32 %v5074, %v5012
        %v5076 = vmul.f32 %v5075, %v5074
        %v5077 = vmul.f32 0.5, %v5076
        %v5078 = vsub.f32 1.5, %v5077
        %v5079 = vmul.f32 %v5074, %v5078
        %vm5080 = vweird.f32 %v5012
        %vm5081 = vweird.f32 %v5074
        %vm5082 = vmor %vm5080, %vm5081
        %v5083 = vsel %vm5082, %v5074, %v5079
        %v5084 = vrsqrt.pop %v5013
        %v5085 = vmul.f32 %v5084, %v5013
        %v5086 = vmul.f32 %v5085, %v5084
        %v5087 = vmul.f32 0.5, %v5086
        %v5088 = vsub.f32 1.5, %v5087
        %v5089 = vmul.f32 %v5084, %v5088
        %vm5090 = vweird.f32 %v5013
        %vm5091 = vweird.f32 %v5084
        %vm5092 = vmor %vm5090, %vm5091
        %v5093 = vsel %vm5092, %v5084, %v5089
        %v5094 = vmul.f32 %v4998, %v5023
        %v5095 = vmul.f32 %v4999, %v5033
        %v5096 = vmul.f32 %v5000, %v5043
        %v5097 = vmul.f32 %v5001, %v5053
        %v5098 = vmul.f32 %v5002, %v5063
        %v5099 = vmul.f32 %v5003, %v5073
        %v5100 = vmul.f32 %v5004, %v5083
        %v5101 = vmul.f32 %v5005, %v5093
        %v5102 = vmul.f32 %v5094, 0.5
        %v5103 = vmul.f32 %v5095, 0.5
        %v5104 = vmul.f32 %v5096, 0.5
        %v5105 = vmul.f32 %v5097, 0.5
        %v5106 = vmul.f32 %v5098, 0.5
        %v5107 = vmul.f32 %v5099, 0.5
        %v5108 = vmul.f32 %v5100, 0.5
        %v5109 = vmul.f32 %v5101, 0.5
        %v5110 = vmul.f32 %v5094, 0.70710677
        %v5111 = vmul.f32 %v5095, 0.70710677
        %v5112 = vmul.f32 %v5096, 0.70710677
        %v5113 = vmul.f32 %v5097, 0.70710677
        %v5114 = vmul.f32 %v5098, 0.70710677
        %v5115 = vmul.f32 %v5099, 0.70710677
        %v5116 = vmul.f32 %v5100, 0.70710677
        %v5117 = vmul.f32 %v5101, 0.70710677
        %v5118 = vmul.f32 %v5110, %v5110
        %v5119 = vmin.f32 16.0, %v5118
        %v5120 = vmul.f32 %v5119, 2.1237322e-06
        %v5121 = vadd.f32 %v5120, 0.00028619796
        %v5122 = vmul.f32 %v5119, %v5121
        %v5123 = vadd.f32 %v5122, 0.0036580483
        %v5124 = vmul.f32 %v5119, %v5123
        %v5125 = vadd.f32 %v5124, 0.05243302
        %v5126 = vmul.f32 %v5119, %v5125
        %v5127 = vadd.f32 %v5126, 0.18741608
        %v5128 = vmul.f32 %v5119, %v5127
        %v5129 = vadd.f32 %v5128, 1.1283791
        %v5130 = vmul.f32 %v5110, %v5129
        %v5131 = vmul.f32 %v5119, 3.8918573e-05
        %v5132 = vadd.f32 %v5131, 0.001143296
        %v5133 = vmul.f32 %v5119, %v5132
        %v5134 = vadd.f32 %v5133, 0.014752088
        %v5135 = vmul.f32 %v5119, %v5134
        %v5136 = vadd.f32 %v5135, 0.112945676
        %v5137 = vmul.f32 %v5119, %v5136
        %v5138 = vadd.f32 %v5137, 0.4994258
        %v5139 = vmul.f32 %v5119, %v5138
        %v5140 = vadd.f32 %v5139, 1.0
        %v5141 = vrcp.pop %v5140
        %v5142 = vmul.f32 %v5140, %v5141
        %v5143 = vsub.f32 1.0, %v5142
        %v5144 = vmul.f32 %v5141, %v5143
        %v5145 = vadd.f32 %v5141, %v5144
        %vm5146 = vweird.f32 %v5140
        %vm5147 = vweird.f32 %v5141
        %vm5148 = vmor %vm5146, %vm5147
        %v5149 = vsel %vm5148, %v5141, %v5145
        %v5150 = vand.u32 2147483647, %v5140
        %vm5151 = vcmp.eq.f32.partialorder %v5150, 8.507059e+37
        %v5152 = vand.u32 %v5140, 2147483648
        %v5153 = vor.u32 1.1754944e-38, %v5152
        %v5154 = vsel %vm5151, %v5153, %v5149
        %v5155 = vmul.f32 %v5130, %v5154
        %v5156 = vmin.f32 %v5155, 1.0
        %v5157 = vmax.f32 %v5156, -1.0
        %v5158 = vmul.f32 %v5111, %v5111
        %v5159 = vmin.f32 16.0, %v5158
        %v5160 = vmul.f32 %v5159, 2.1237322e-06
        %v5161 = vadd.f32 %v5160, 0.00028619796
        %v5162 = vmul.f32 %v5159, %v5161
        %v5163 = vadd.f32 %v5162, 0.0036580483
        %v5164 = vmul.f32 %v5159, %v5163
        %v5165 = vadd.f32 %v5164, 0.05243302
        %v5166 = vmul.f32 %v5159, %v5165
        %v5167 = vadd.f32 %v5166, 0.18741608
        %v5168 = vmul.f32 %v5159, %v5167
        %v5169 = vadd.f32 %v5168, 1.1283791
        %v5170 = vmul.f32 %v5111, %v5169
        %v5171 = vmul.f32 %v5159, 3.8918573e-05
        %v5172 = vadd.f32 %v5171, 0.001143296
        %v5173 = vmul.f32 %v5159, %v5172
        %v5174 = vadd.f32 %v5173, 0.014752088
        %v5175 = vmul.f32 %v5159, %v5174
        %v5176 = vadd.f32 %v5175, 0.112945676
        %v5177 = vmul.f32 %v5159, %v5176
        %v5178 = vadd.f32 %v5177, 0.4994258
        %v5179 = vmul.f32 %v5159, %v5178
        %v5180 = vadd.f32 %v5179, 1.0
        %v5181 = vrcp.pop %v5180
        %v5182 = vmul.f32 %v5180, %v5181
        %v5183 = vsub.f32 1.0, %v5182
        %v5184 = vmul.f32 %v5181, %v5183
        %v5185 = vadd.f32 %v5181, %v5184
        %vm5186 = vweird.f32 %v5180
        %vm5187 = vweird.f32 %v5181
        %vm5188 = vmor %vm5186, %vm5187
        %v5189 = vsel %vm5188, %v5181, %v5185
        %v5190 = vand.u32 2147483647, %v5180
        %vm5191 = vcmp.eq.f32.partialorder %v5190, 8.507059e+37
        %v5192 = vand.u32 %v5180, 2147483648
        %v5193 = vor.u32 1.1754944e-38, %v5192
        %v5194 = vsel %vm5191, %v5193, %v5189
        %v5195 = vmul.f32 %v5170, %v5194
        %v5196 = vmin.f32 %v5195, 1.0
        %v5197 = vmax.f32 %v5196, -1.0
        %v5198 = vmul.f32 %v5112, %v5112
        %v5199 = vmin.f32 16.0, %v5198
        %v5200 = vmul.f32 %v5199, 2.1237322e-06
        %v5201 = vadd.f32 %v5200, 0.00028619796
        %v5202 = vmul.f32 %v5199, %v5201
        %v5203 = vadd.f32 %v5202, 0.0036580483
        %v5204 = vmul.f32 %v5199, %v5203
        %v5205 = vadd.f32 %v5204, 0.05243302
        %v5206 = vmul.f32 %v5199, %v5205
        %v5207 = vadd.f32 %v5206, 0.18741608
        %v5208 = vmul.f32 %v5199, %v5207
        %v5209 = vadd.f32 %v5208, 1.1283791
        %v5210 = vmul.f32 %v5112, %v5209
        %v5211 = vmul.f32 %v5199, 3.8918573e-05
        %v5212 = vadd.f32 %v5211, 0.001143296
        %v5213 = vmul.f32 %v5199, %v5212
        %v5214 = vadd.f32 %v5213, 0.014752088
        %v5215 = vmul.f32 %v5199, %v5214
        %v5216 = vadd.f32 %v5215, 0.112945676
        %v5217 = vmul.f32 %v5199, %v5216
        %v5218 = vadd.f32 %v5217, 0.4994258
        %v5219 = vmul.f32 %v5199, %v5218
        %v5220 = vadd.f32 %v5219, 1.0
        %v5221 = vrcp.pop %v5220
        %v5222 = vmul.f32 %v5220, %v5221
        %v5223 = vsub.f32 1.0, %v5222
        %v5224 = vmul.f32 %v5221, %v5223
        %v5225 = vadd.f32 %v5221, %v5224
        %vm5226 = vweird.f32 %v5220
        %vm5227 = vweird.f32 %v5221
        %vm5228 = vmor %vm5226, %vm5227
        %v5229 = vsel %vm5228, %v5221, %v5225
        %v5230 = vand.u32 2147483647, %v5220
        %vm5231 = vcmp.eq.f32.partialorder %v5230, 8.507059e+37
        %v5232 = vand.u32 %v5220, 2147483648
        %v5233 = vor.u32 1.1754944e-38, %v5232
        %v5234 = vsel %vm5231, %v5233, %v5229
        %v5235 = vmul.f32 %v5210, %v5234
        %v5236 = vmin.f32 %v5235, 1.0
        %v5237 = vmax.f32 %v5236, -1.0
        %v5238 = vmul.f32 %v5113, %v5113
        %v5239 = vmin.f32 16.0, %v5238
        %v5240 = vmul.f32 %v5239, 2.1237322e-06
        %v5241 = vadd.f32 %v5240, 0.00028619796
        %v5242 = vmul.f32 %v5239, %v5241
        %v5243 = vadd.f32 %v5242, 0.0036580483
        %v5244 = vmul.f32 %v5239, %v5243
        %v5245 = vadd.f32 %v5244, 0.05243302
        %v5246 = vmul.f32 %v5239, %v5245
        %v5247 = vadd.f32 %v5246, 0.18741608
        %v5248 = vmul.f32 %v5239, %v5247
        %v5249 = vadd.f32 %v5248, 1.1283791
        %v5250 = vmul.f32 %v5113, %v5249
        %v5251 = vmul.f32 %v5239, 3.8918573e-05
        %v5252 = vadd.f32 %v5251, 0.001143296
        %v5253 = vmul.f32 %v5239, %v5252
        %v5254 = vadd.f32 %v5253, 0.014752088
        %v5255 = vmul.f32 %v5239, %v5254
        %v5256 = vadd.f32 %v5255, 0.112945676
        %v5257 = vmul.f32 %v5239, %v5256
        %v5258 = vadd.f32 %v5257, 0.4994258
        %v5259 = vmul.f32 %v5239, %v5258
        %v5260 = vadd.f32 %v5259, 1.0
        %v5261 = vrcp.pop %v5260
        %v5262 = vmul.f32 %v5260, %v5261
        %v5263 = vsub.f32 1.0, %v5262
        %v5264 = vmul.f32 %v5261, %v5263
        %v5265 = vadd.f32 %v5261, %v5264
        %vm5266 = vweird.f32 %v5260
        %vm5267 = vweird.f32 %v5261
        %vm5268 = vmor %vm5266, %vm5267
        %v5269 = vsel %vm5268, %v5261, %v5265
        %v5270 = vand.u32 2147483647, %v5260
        %vm5271 = vcmp.eq.f32.partialorder %v5270, 8.507059e+37
        %v5272 = vand.u32 %v5260, 2147483648
        %v5273 = vor.u32 1.1754944e-38, %v5272
        %v5274 = vsel %vm5271, %v5273, %v5269
        %v5275 = vmul.f32 %v5250, %v5274
        %v5276 = vmin.f32 %v5275, 1.0
        %v5277 = vmax.f32 %v5276, -1.0
        %v5278 = vmul.f32 %v5114, %v5114
        %v5279 = vmin.f32 16.0, %v5278
        %v5280 = vmul.f32 %v5279, 2.1237322e-06
        %v5281 = vadd.f32 %v5280, 0.00028619796
        %v5282 = vmul.f32 %v5279, %v5281
        %v5283 = vadd.f32 %v5282, 0.0036580483
        %v5284 = vmul.f32 %v5279, %v5283
        %v5285 = vadd.f32 %v5284, 0.05243302
        %v5286 = vmul.f32 %v5279, %v5285
        %v5287 = vadd.f32 %v5286, 0.18741608
        %v5288 = vmul.f32 %v5279, %v5287
        %v5289 = vadd.f32 %v5288, 1.1283791
        %v5290 = vmul.f32 %v5114, %v5289
        %v5291 = vmul.f32 %v5279, 3.8918573e-05
        %v5292 = vadd.f32 %v5291, 0.001143296
        %v5293 = vmul.f32 %v5279, %v5292
        %v5294 = vadd.f32 %v5293, 0.014752088
        %v5295 = vmul.f32 %v5279, %v5294
        %v5296 = vadd.f32 %v5295, 0.112945676
        %v5297 = vmul.f32 %v5279, %v5296
        %v5298 = vadd.f32 %v5297, 0.4994258
        %v5299 = vmul.f32 %v5279, %v5298
        %v5300 = vadd.f32 %v5299, 1.0
        %v5301 = vrcp.pop %v5300
        %v5302 = vmul.f32 %v5300, %v5301
        %v5303 = vsub.f32 1.0, %v5302
        %v5304 = vmul.f32 %v5301, %v5303
        %v5305 = vadd.f32 %v5301, %v5304
        %vm5306 = vweird.f32 %v5300
        %vm5307 = vweird.f32 %v5301
        %vm5308 = vmor %vm5306, %vm5307
        %v5309 = vsel %vm5308, %v5301, %v5305
        %v5310 = vand.u32 2147483647, %v5300
        %vm5311 = vcmp.eq.f32.partialorder %v5310, 8.507059e+37
        %v5312 = vand.u32 %v5300, 2147483648
        %v5313 = vor.u32 1.1754944e-38, %v5312
        %v5314 = vsel %vm5311, %v5313, %v5309
        %v5315 = vmul.f32 %v5290, %v5314
        %v5316 = vmin.f32 %v5315, 1.0
        %v5317 = vmax.f32 %v5316, -1.0
        %v5318 = vmul.f32 %v5115, %v5115
        %v5319 = vmin.f32 16.0, %v5318
        %v5320 = vmul.f32 %v5319, 2.1237322e-06
        %v5321 = vadd.f32 %v5320, 0.00028619796
        %v5322 = vmul.f32 %v5319, %v5321
        %v5323 = vadd.f32 %v5322, 0.0036580483
        %v5324 = vmul.f32 %v5319, %v5323
        %v5325 = vadd.f32 %v5324, 0.05243302
        %v5326 = vmul.f32 %v5319, %v5325
        %v5327 = vadd.f32 %v5326, 0.18741608
        %v5328 = vmul.f32 %v5319, %v5327
        %v5329 = vadd.f32 %v5328, 1.1283791
        %v5330 = vmul.f32 %v5115, %v5329
        %v5331 = vmul.f32 %v5319, 3.8918573e-05
        %v5332 = vadd.f32 %v5331, 0.001143296
        %v5333 = vmul.f32 %v5319, %v5332
        %v5334 = vadd.f32 %v5333, 0.014752088
        %v5335 = vmul.f32 %v5319, %v5334
        %v5336 = vadd.f32 %v5335, 0.112945676
        %v5337 = vmul.f32 %v5319, %v5336
        %v5338 = vadd.f32 %v5337, 0.4994258
        %v5339 = vmul.f32 %v5319, %v5338
        %v5340 = vadd.f32 %v5339, 1.0
        %v5341 = vrcp.pop %v5340
        %v5342 = vmul.f32 %v5340, %v5341
        %v5343 = vsub.f32 1.0, %v5342
        %v5344 = vmul.f32 %v5341, %v5343
        %v5345 = vadd.f32 %v5341, %v5344
        %vm5346 = vweird.f32 %v5340
        %vm5347 = vweird.f32 %v5341
        %vm5348 = vmor %vm5346, %vm5347
        %v5349 = vsel %vm5348, %v5341, %v5345
        %v5350 = vand.u32 2147483647, %v5340
        %vm5351 = vcmp.eq.f32.partialorder %v5350, 8.507059e+37
        %v5352 = vand.u32 %v5340, 2147483648
        %v5353 = vor.u32 1.1754944e-38, %v5352
        %v5354 = vsel %vm5351, %v5353, %v5349
        %v5355 = vmul.f32 %v5330, %v5354
        %v5356 = vmin.f32 %v5355, 1.0
        %v5357 = vmax.f32 %v5356, -1.0
        %v5358 = vmul.f32 %v5116, %v5116
        %v5359 = vmin.f32 16.0, %v5358
        %v5360 = vmul.f32 %v5359, 2.1237322e-06
        %v5361 = vadd.f32 %v5360, 0.00028619796
        %v5362 = vmul.f32 %v5359, %v5361
        %v5363 = vadd.f32 %v5362, 0.0036580483
        %v5364 = vmul.f32 %v5359, %v5363
        %v5365 = vadd.f32 %v5364, 0.05243302
        %v5366 = vmul.f32 %v5359, %v5365
        %v5367 = vadd.f32 %v5366, 0.18741608
        %v5368 = vmul.f32 %v5359, %v5367
        %v5369 = vadd.f32 %v5368, 1.1283791
        %v5370 = vmul.f32 %v5116, %v5369
        %v5371 = vmul.f32 %v5359, 3.8918573e-05
        %v5372 = vadd.f32 %v5371, 0.001143296
        %v5373 = vmul.f32 %v5359, %v5372
        %v5374 = vadd.f32 %v5373, 0.014752088
        %v5375 = vmul.f32 %v5359, %v5374
        %v5376 = vadd.f32 %v5375, 0.112945676
        %v5377 = vmul.f32 %v5359, %v5376
        %v5378 = vadd.f32 %v5377, 0.4994258
        %v5379 = vmul.f32 %v5359, %v5378
        %v5380 = vadd.f32 %v5379, 1.0
        %v5381 = vrcp.pop %v5380
        %v5382 = vmul.f32 %v5380, %v5381
        %v5383 = vsub.f32 1.0, %v5382
        %v5384 = vmul.f32 %v5381, %v5383
        %v5385 = vadd.f32 %v5381, %v5384
        %vm5386 = vweird.f32 %v5380
        %vm5387 = vweird.f32 %v5381
        %vm5388 = vmor %vm5386, %vm5387
        %v5389 = vsel %vm5388, %v5381, %v5385
        %v5390 = vand.u32 2147483647, %v5380
        %vm5391 = vcmp.eq.f32.partialorder %v5390, 8.507059e+37
        %v5392 = vand.u32 %v5380, 2147483648
        %v5393 = vor.u32 1.1754944e-38, %v5392
        %v5394 = vsel %vm5391, %v5393, %v5389
        %v5395 = vmul.f32 %v5370, %v5394
        %v5396 = vmin.f32 %v5395, 1.0
        %v5397 = vmax.f32 %v5396, -1.0
        %v5398 = vmul.f32 %v5117, %v5117
        %v5399 = vmin.f32 16.0, %v5398
        %v5400 = vmul.f32 %v5399, 2.1237322e-06
        %v5401 = vadd.f32 %v5400, 0.00028619796
        %v5402 = vmul.f32 %v5399, %v5401
        %v5403 = vadd.f32 %v5402, 0.0036580483
        %v5404 = vmul.f32 %v5399, %v5403
        %v5405 = vadd.f32 %v5404, 0.05243302
        %v5406 = vmul.f32 %v5399, %v5405
        %v5407 = vadd.f32 %v5406, 0.18741608
        %v5408 = vmul.f32 %v5399, %v5407
        %v5409 = vadd.f32 %v5408, 1.1283791
        %v5410 = vmul.f32 %v5117, %v5409
        %v5411 = vmul.f32 %v5399, 3.8918573e-05
        %v5412 = vadd.f32 %v5411, 0.001143296
        %v5413 = vmul.f32 %v5399, %v5412
        %v5414 = vadd.f32 %v5413, 0.014752088
        %v5415 = vmul.f32 %v5399, %v5414
        %v5416 = vadd.f32 %v5415, 0.112945676
        %v5417 = vmul.f32 %v5399, %v5416
        %v5418 = vadd.f32 %v5417, 0.4994258
        %v5419 = vmul.f32 %v5399, %v5418
        %v5420 = vadd.f32 %v5419, 1.0
        %v5421 = vrcp.pop %v5420
        %v5422 = vmul.f32 %v5420, %v5421
        %v5423 = vsub.f32 1.0, %v5422
        %v5424 = vmul.f32 %v5421, %v5423
        %v5425 = vadd.f32 %v5421, %v5424
        %vm5426 = vweird.f32 %v5420
        %vm5427 = vweird.f32 %v5421
        %vm5428 = vmor %vm5426, %vm5427
        %v5429 = vsel %vm5428, %v5421, %v5425
        %v5430 = vand.u32 2147483647, %v5420
        %vm5431 = vcmp.eq.f32.partialorder %v5430, 8.507059e+37
        %v5432 = vand.u32 %v5420, 2147483648
        %v5433 = vor.u32 1.1754944e-38, %v5432
        %v5434 = vsel %vm5431, %v5433, %v5429
        %v5435 = vmul.f32 %v5410, %v5434
        %v5436 = vmin.f32 %v5435, 1.0
        %v5437 = vmax.f32 %v5436, -1.0
        %v5438 = vadd.f32 %v5157, 1.0
        %v5439 = vadd.f32 %v5197, 1.0
        %v5440 = vadd.f32 %v5237, 1.0
        %v5441 = vadd.f32 %v5277, 1.0
        %v5442 = vadd.f32 %v5317, 1.0
        %v5443 = vadd.f32 %v5357, 1.0
        %v5444 = vadd.f32 %v5397, 1.0
        %v5445 = vadd.f32 %v5437, 1.0
        %v5446 = vmul.f32 %v5102, %v5438
        %v5447 = vmul.f32 %v5103, %v5439
        %v5448 = vmul.f32 %v5104, %v5440
        %v5449 = vmul.f32 %v5105, %v5441
        %v5450 = vmul.f32 %v5106, %v5442
        %v5451 = vmul.f32 %v5107, %v5443
        %v5452 = vmul.f32 %v5108, %v5444
        %v5453 = vmul.f32 %v5109, %v5445
        %5454 = vst.msk [vmem:[%s519] sm:$0xff] %vm3875, %v5446
        %5455 = vst.msk [vmem:[%s519 + $0x8] sm:$0xff] %vm3875, %v5447
        %5456 = vst.msk [vmem:[%s519 + $0x10] sm:$0xff] %vm3875, %v5448
        %5457 = vst.msk [vmem:[%s519 + $0x18] sm:$0xff] %vm3875, %v5449
        %5458 = vst.msk [vmem:[%s519 + $0x20] sm:$0xff] %vm3875, %v5450
        %5459 = vst.msk [vmem:[%s519 + $0x28] sm:$0xff] %vm3875, %v5451
        %5460 = vst.msk [vmem:[%s519 + $0x30] sm:$0xff] %vm3875, %v5452
        %5461 = vst.msk [vmem:[%s519 + $0x38] sm:$0xff] %vm3875, %v5453
        %v5462 = vpack.c.bf16 %v5447, %v5446
        %v5463 = vpack.c.bf16 %v5449, %v5448
        %v5464 = vpack.c.bf16 %v5451, %v5450
        %v5465 = vpack.c.bf16 %v5453, %v5452
        %v5466 = vld [vmem:[%s9] sm:$0xf]
        %v5467 = vld [vmem:[%s9 + $0x4] sm:$0xf]
        %v5470 = vunpack.c.l.b16 %v5466
        %v5471 = vunpack.c.l.b16 %v5467
        %v5472 = vpack.c.b16 %v5471, %v5470
        %v5475 = vsel %vm3875, %v5462, 0
        %v5478 = vsel %vm3875, %v5463, 0
        %v5481 = vsel %vm3875, %v5464, 0
        %v5484 = vsel %vm3875, %v5465, 0
        %5486 = vmatpush.bf16.msra.mxu0 0
        %5487 = vmatpush.bf16.msra.mxu0 0
        %5488 = vmatpush.bf16.msra.mxu0 0
        %5489 = vmatpush.bf16.msra.mxu0 0
        %5490 = vmatpush.bf16.msra.mxu0 0
        %5491 = vmatpush.bf16.msra.mxu0 0
        %5492 = vmatpush.bf16.msra.mxu0 0
        %5493 = vmatpush.bf16.msra.mxu0 %v5472
        %5494 = vmatmul.bf16.gmra.mxu0 %v5475
        %v5495 = vpop.f32.mrf.mxu0
        %v5496 = vadd.f32 0.0, %v5495
        %v5497 = vpop.f32.mrf.mxu0
        %v5498 = vadd.f32 0.0, %v5497
        %5499 = vmatmul.bf16.gmra.mxu0 %v5478
        %v5500 = vpop.f32.mrf.mxu0
        %v5501 = vadd.f32 0.0, %v5500
        %v5502 = vpop.f32.mrf.mxu0
        %v5503 = vadd.f32 0.0, %v5502
        %5504 = vmatmul.bf16.gmra.mxu0 %v5481
        %v5505 = vpop.f32.mrf.mxu0
        %v5506 = vadd.f32 0.0, %v5505
        %v5507 = vpop.f32.mrf.mxu0
        %v5508 = vadd.f32 0.0, %v5507
        %5509 = vmatmul.bf16.gmra.mxu0 %v5484
        %v5510 = vpop.f32.mrf.mxu0
        %v5511 = vadd.f32 0.0, %v5510
        %v5512 = vpop.f32.mrf.mxu0
        %v5513 = vadd.f32 0.0, %v5512
        %5514 = vdwg.mxu0
        %vm5515 = vcmask 19456
        %5516 = vst.msk [vmem:[#allocation6] sm:$0xf] %vm5515, 0
        %5517 = vst.msk [vmem:[#allocation6 + $0x4] sm:$0xf] %vm5515, 0
        %5518 = vst.msk [vmem:[#allocation6 + $0x8] sm:$0xf] %vm5515, 0
        %5519 = vst.msk [vmem:[#allocation6 + $0xc] sm:$0xf] %vm5515, 0
        %5520 = vst.msk [vmem:[#allocation6 + $0x10] sm:$0xf] %vm5515, 0
        %5521 = vst.msk [vmem:[#allocation6 + $0x14] sm:$0xf] %vm5515, 0
        %5522 = vst.msk [vmem:[#allocation6 + $0x18] sm:$0xf] %vm5515, 0
        %5523 = vst.msk [vmem:[#allocation6 + $0x1c] sm:$0xf] %vm5515, 0
        %vm5524 = vcmask 76856
        %5525 = vst.msk [vmem:[#allocation6] sm:$0xf] %vm5524, 0
        %5526 = vst.msk [vmem:[#allocation6 + $0x4] sm:$0xf] %vm5524, 0
        %5527 = vst.msk [vmem:[#allocation6 + $0x8] sm:$0xf] %vm5524, 0
        %5528 = vst.msk [vmem:[#allocation6 + $0xc] sm:$0xf] %vm5524, 0
        %5529 = vst.msk [vmem:[#allocation6 + $0x10] sm:$0xf] %vm5524, 0
        %5530 = vst.msk [vmem:[#allocation6 + $0x14] sm:$0xf] %vm5524, 0
        %5531 = vst.msk [vmem:[#allocation6 + $0x18] sm:$0xf] %vm5524, 0
        %5532 = vst.msk [vmem:[#allocation6 + $0x1c] sm:$0xf] %vm5524, 0
        %v5533 = vpack.c.bf16 %v5496, %v5496
        %v5534 = vpack.c.bf16 %v5498, %v5498
        %v5535 = vpack.c.bf16 %v5501, %v5501
        %v5536 = vpack.c.bf16 %v5503, %v5503
        %v5537 = vpack.c.bf16 %v5506, %v5506
        %v5538 = vpack.c.bf16 %v5508, %v5508
        %v5539 = vpack.c.bf16 %v5511, %v5511
        %v5540 = vpack.c.bf16 %v5513, %v5513
        %5549 = vrot.lane.b32.xlu0 %v5533, 3
        %v5550 = vpop.permute.xlu0 %5549
        %5551 = vrot.lane.b32.xlu0 %v5534, 3
        %v5552 = vpop.permute.xlu0 %5551
        %5553 = vrot.lane.b32.xlu0 %v5535, 3
        %v5554 = vpop.permute.xlu0 %5553
        %5555 = vrot.lane.b32.xlu0 %v5536, 3
        %v5556 = vpop.permute.xlu0 %5555
        %5557 = vrot.lane.b32.xlu0 %v5537, 3
        %v5558 = vpop.permute.xlu0 %5557
        %5559 = vrot.lane.b32.xlu0 %v5538, 3
        %v5560 = vpop.permute.xlu0 %5559
        %5561 = vrot.lane.b32.xlu0 %v5539, 3
        %v5562 = vpop.permute.xlu0 %5561
        %5563 = vrot.lane.b32.xlu0 %v5540, 3
        %v5564 = vpop.permute.xlu0 %5563
        %vm5573 = vcmask 52248
        %5574 = vst.msk [vmem:[#allocation6] sm:$0xf] %vm5573, %v5550
        %5575 = vst.msk [vmem:[#allocation6 + $0x4] sm:$0xf] %vm5573, %v5552
        %5576 = vst.msk [vmem:[#allocation6 + $0x8] sm:$0xf] %vm5573, %v5554
        %5577 = vst.msk [vmem:[#allocation6 + $0xc] sm:$0xf] %vm5573, %v5556
        %5578 = vst.msk [vmem:[#allocation6 + $0x10] sm:$0xf] %vm5573, %v5558
        %5579 = vst.msk [vmem:[#allocation6 + $0x14] sm:$0xf] %vm5573, %v5560
        %5580 = vst.msk [vmem:[#allocation6 + $0x18] sm:$0xf] %vm5573, %v5562
        %5581 = vst.msk [vmem:[#allocation6 + $0x1c] sm:$0xf] %vm5573, %v5564
        %vm5582 = vcmp.lt.s32.totalorder %v591, 0
        %v5583 = vsub.s32 0, %v591
        %v5584 = vsel %vm5582, %v5583, %v591
        %v5585 = vshrl.u32 %v5584, 1
        %v5586 = vand.u32 %v5584, 1
        %v5587 = vsub.s32 0, %v5586
        %v5588 = vsel %vm5582, %v5587, %v5586
        %vm5589 = vcmp.ne.s32.totalorder %v5588, 0
        %vm5590 = vcmp.lt.s32.totalorder %v5588, 0
        %vm5591 = vmand %vm5590, %vm5589
        %v5592 = vadd.s32 %v5588, 2
        %v5593 = vsel %vm5591, %v5592, %v5588
        %vm5594 = vcmp.ge.s32.totalorder %v5593, 1
        %vm5595 = vcmp.le.s32.totalorder %v5593, 0
        %v5596 = vld [vmem:[#allocation6] sm:$0xf]
        %v5597 = vld [vmem:[#allocation6 + $0x4] sm:$0xf]
        %v5598 = vld [vmem:[#allocation6 + $0x8] sm:$0xf]
        %v5599 = vld [vmem:[#allocation6 + $0xc] sm:$0xf]
        %v5600 = vld [vmem:[#allocation6 + $0x10] sm:$0xf]
        %v5601 = vld [vmem:[#allocation6 + $0x14] sm:$0xf]
        %v5602 = vld [vmem:[#allocation6 + $0x18] sm:$0xf]
        %v5603 = vld [vmem:[#allocation6 + $0x1c] sm:$0xf]
        %vm5604 = vmpackc.low %vm5594, %vm5594
        %v5605 = vsel %vm5604, %v5596, 0
        %v5606 = vsel %vm5604, %v5597, 0
        %v5607 = vsel %vm5604, %v5598, 0
        %v5608 = vsel %vm5604, %v5599, 0
        %v5609 = vsel %vm5604, %v5600, 0
        %v5610 = vsel %vm5604, %v5601, 0
        %v5611 = vsel %vm5604, %v5602, 0
        %v5612 = vsel %vm5604, %v5603, 0
        %vm5613 = vcmask 27648
        %5614 = vst.msk [vmem:[#allocation11] sm:$0xf] %vm5613, %v5605
        %5615 = vst.msk [vmem:[#allocation11 + $0x4] sm:$0xf] %vm5613, %v5606
        %5616 = vst.msk [vmem:[#allocation11 + $0x8] sm:$0xf] %vm5613, %v5607
        %5617 = vst.msk [vmem:[#allocation11 + $0xc] sm:$0xf] %vm5613, %v5608
        %5618 = vst.msk [vmem:[#allocation11 + $0x10] sm:$0xf] %vm5613, %v5609
        %5619 = vst.msk [vmem:[#allocation11 + $0x14] sm:$0xf] %vm5613, %v5610
        %5620 = vst.msk [vmem:[#allocation11 + $0x18] sm:$0xf] %vm5613, %v5611
        %5621 = vst.msk [vmem:[#allocation11 + $0x1c] sm:$0xf] %vm5613, %v5612
        %v5622 = vld [vmem:[#allocation6] sm:$0xf]
        %v5623 = vld [vmem:[#allocation6 + $0x4] sm:$0xf]
        %v5624 = vld [vmem:[#allocation6 + $0x8] sm:$0xf]
        %v5625 = vld [vmem:[#allocation6 + $0xc] sm:$0xf]
        %v5626 = vld [vmem:[#allocation6 + $0x10] sm:$0xf]
        %v5627 = vld [vmem:[#allocation6 + $0x14] sm:$0xf]
        %v5628 = vld [vmem:[#allocation6 + $0x18] sm:$0xf]
        %v5629 = vld [vmem:[#allocation6 + $0x1c] sm:$0xf]
        %5638 = vrot.lane.b32.xlu0 %v5622, 127
        %v5639 = vpop.permute.xlu0 %5638
        %5640 = vrot.lane.b32.xlu0 %v5623, 127
        %v5641 = vpop.permute.xlu0 %5640
        %5642 = vrot.lane.b32.xlu0 %v5624, 127
        %v5643 = vpop.permute.xlu0 %5642
        %5644 = vrot.lane.b32.xlu0 %v5625, 127
        %v5645 = vpop.permute.xlu0 %5644
        %5646 = vrot.lane.b32.xlu0 %v5626, 127
        %v5647 = vpop.permute.xlu0 %5646
        %5648 = vrot.lane.b32.xlu0 %v5627, 127
        %v5649 = vpop.permute.xlu0 %5648
        %5650 = vrot.lane.b32.xlu0 %v5628, 127
        %v5651 = vpop.permute.xlu0 %5650
        %5652 = vrot.lane.b32.xlu0 %v5629, 127
        %v5653 = vpop.permute.xlu0 %5652
        %5662 = vst.msk [vmem:[#allocation11 + $0x20] sm:$0xf] %vm5613, %v5639
        %5663 = vst.msk [vmem:[#allocation11 + $0x24] sm:$0xf] %vm5613, %v5641
        %5664 = vst.msk [vmem:[#allocation11 + $0x28] sm:$0xf] %vm5613, %v5643
        %5665 = vst.msk [vmem:[#allocation11 + $0x2c] sm:$0xf] %vm5613, %v5645
        %5666 = vst.msk [vmem:[#allocation11 + $0x30] sm:$0xf] %vm5613, %v5647
        %5667 = vst.msk [vmem:[#allocation11 + $0x34] sm:$0xf] %vm5613, %v5649
        %5668 = vst.msk [vmem:[#allocation11 + $0x38] sm:$0xf] %vm5613, %v5651
        %5669 = vst.msk [vmem:[#allocation11 + $0x3c] sm:$0xf] %vm5613, %v5653
        %v5670 = vld [vmem:[#allocation6] sm:$0xf]
        %v5671 = vld [vmem:[#allocation6 + $0x4] sm:$0xf]
        %v5672 = vld [vmem:[#allocation6 + $0x8] sm:$0xf]
        %v5673 = vld [vmem:[#allocation6 + $0xc] sm:$0xf]
        %v5674 = vld [vmem:[#allocation6 + $0x10] sm:$0xf]
        %v5675 = vld [vmem:[#allocation6 + $0x14] sm:$0xf]
        %v5676 = vld [vmem:[#allocation6 + $0x18] sm:$0xf]
        %v5677 = vld [vmem:[#allocation6 + $0x1c] sm:$0xf]
        %vm5678 = vmpackc.low %vm5595, %vm5595
        %v5679 = vsel %vm5678, 65537, 0
        %5680 = vrot.lane.b32.xlu0 %v5679, 2
        %v5681 = vpop.permute.xlu0 %5680
        %v5682 = vunpack.c.l.b16 %v5681
        %v5683 = vunpack.c.h.b16 %v5681
        %v5684 = vunpack.c.l.b16 0
        %v5685 = vunpack.c.h.b16 0
        %vm5686 = vcmp.ne.s32.totalorder %v5682, %v5684
        %vm5687 = vcmp.ne.s32.totalorder %v5683, %v5685
        %vm5688 = vmpackc.low %vm5687, %vm5686
        %v5689 = vsel %vm5688, %v5670, 0
        %v5690 = vsel %vm5688, %v5671, 0
        %v5691 = vsel %vm5688, %v5672, 0
        %v5692 = vsel %vm5688, %v5673, 0
        %v5693 = vsel %vm5688, %v5674, 0
        %v5694 = vsel %vm5688, %v5675, 0
        %v5695 = vsel %vm5688, %v5676, 0
        %v5696 = vsel %vm5688, %v5677, 0
        %5705 = vrot.lane.b32.xlu0 %v5689, 126
        %v5706 = vpop.permute.xlu0 %5705
        %5707 = vrot.lane.b32.xlu0 %v5690, 126
        %v5708 = vpop.permute.xlu0 %5707
        %5709 = vrot.lane.b32.xlu0 %v5691, 126
        %v5710 = vpop.permute.xlu0 %5709
        %5711 = vrot.lane.b32.xlu0 %v5692, 126
        %v5712 = vpop.permute.xlu0 %5711
        %5713 = vrot.lane.b32.xlu0 %v5693, 126
        %v5714 = vpop.permute.xlu0 %5713
        %5715 = vrot.lane.b32.xlu0 %v5694, 126
        %v5716 = vpop.permute.xlu0 %5715
        %5717 = vrot.lane.b32.xlu0 %v5695, 126
        %v5718 = vpop.permute.xlu0 %5717
        %5719 = vrot.lane.b32.xlu0 %v5696, 126
        %v5720 = vpop.permute.xlu0 %5719
        %5729 = vst.msk [vmem:[#allocation11 + $0x40] sm:$0xf] %vm5613, %v5706
        %5730 = vst.msk [vmem:[#allocation11 + $0x44] sm:$0xf] %vm5613, %v5708
        %5731 = vst.msk [vmem:[#allocation11 + $0x48] sm:$0xf] %vm5613, %v5710
        %5732 = vst.msk [vmem:[#allocation11 + $0x4c] sm:$0xf] %vm5613, %v5712
        %5733 = vst.msk [vmem:[#allocation11 + $0x50] sm:$0xf] %vm5613, %v5714
        %5734 = vst.msk [vmem:[#allocation11 + $0x54] sm:$0xf] %vm5613, %v5716
        %5735 = vst.msk [vmem:[#allocation11 + $0x58] sm:$0xf] %vm5613, %v5718
        %5736 = vst.msk [vmem:[#allocation11 + $0x5c] sm:$0xf] %vm5613, %v5720
        %v5737 = vld [vmem:[#allocation6] sm:$0xf]
        %v5738 = vld [vmem:[#allocation6 + $0x4] sm:$0xf]
        %v5739 = vld [vmem:[#allocation6 + $0x8] sm:$0xf]
        %v5740 = vld [vmem:[#allocation6 + $0xc] sm:$0xf]
        %v5741 = vld [vmem:[#allocation6 + $0x10] sm:$0xf]
        %v5742 = vld [vmem:[#allocation6 + $0x14] sm:$0xf]
        %v5743 = vld [vmem:[#allocation6 + $0x18] sm:$0xf]
        %v5744 = vld [vmem:[#allocation6 + $0x1c] sm:$0xf]
        %v5745 = vsel %vm5604, 65537, 0
        %5746 = vrot.lane.b32.xlu0 %v5745, 2
        %v5747 = vpop.permute.xlu0 %5746
        %v5748 = vunpack.c.l.b16 %v5747
        %v5749 = vunpack.c.h.b16 %v5747
        %v5750 = vunpack.c.l.b16 0
        %v5751 = vunpack.c.h.b16 0
        %vm5752 = vcmp.ne.s32.totalorder %v5748, %v5750
        %vm5753 = vcmp.ne.s32.totalorder %v5749, %v5751
        %vm5754 = vmpackc.low %vm5753, %vm5752
        %v5755 = vsel %vm5754, %v5737, 0
        %v5756 = vsel %vm5754, %v5738, 0
        %v5757 = vsel %vm5754, %v5739, 0
        %v5758 = vsel %vm5754, %v5740, 0
        %v5759 = vsel %vm5754, %v5741, 0
        %v5760 = vsel %vm5754, %v5742, 0
        %v5761 = vsel %vm5754, %v5743, 0
        %v5762 = vsel %vm5754, %v5744, 0
        %5771 = vrot.lane.b32.xlu0 %v5755, 126
        %v5772 = vpop.permute.xlu0 %5771
        %5773 = vrot.lane.b32.xlu0 %v5756, 126
        %v5774 = vpop.permute.xlu0 %5773
        %5775 = vrot.lane.b32.xlu0 %v5757, 126
        %v5776 = vpop.permute.xlu0 %5775
        %5777 = vrot.lane.b32.xlu0 %v5758, 126
        %v5778 = vpop.permute.xlu0 %5777
        %5779 = vrot.lane.b32.xlu0 %v5759, 126
        %v5780 = vpop.permute.xlu0 %5779
        %5781 = vrot.lane.b32.xlu0 %v5760, 126
        %v5782 = vpop.permute.xlu0 %5781
        %5783 = vrot.lane.b32.xlu0 %v5761, 126
        %v5784 = vpop.permute.xlu0 %5783
        %5785 = vrot.lane.b32.xlu0 %v5762, 126
        %v5786 = vpop.permute.xlu0 %5785
        %5795 = vst.msk [vmem:[#allocation11 + $0x60] sm:$0xf] %vm5613, %v5772
        %5796 = vst.msk [vmem:[#allocation11 + $0x64] sm:$0xf] %vm5613, %v5774
        %5797 = vst.msk [vmem:[#allocation11 + $0x68] sm:$0xf] %vm5613, %v5776
        %5798 = vst.msk [vmem:[#allocation11 + $0x6c] sm:$0xf] %vm5613, %v5778
        %5799 = vst.msk [vmem:[#allocation11 + $0x70] sm:$0xf] %vm5613, %v5780
        %5800 = vst.msk [vmem:[#allocation11 + $0x74] sm:$0xf] %vm5613, %v5782
        %5801 = vst.msk [vmem:[#allocation11 + $0x78] sm:$0xf] %vm5613, %v5784
        %5802 = vst.msk [vmem:[#allocation11 + $0x7c] sm:$0xf] %vm5613, %v5786
        %v5803 = vld [vmem:[#allocation6] sm:$0xf]
        %v5804 = vld [vmem:[#allocation6 + $0x4] sm:$0xf]
        %v5805 = vld [vmem:[#allocation6 + $0x8] sm:$0xf]
        %v5806 = vld [vmem:[#allocation6 + $0xc] sm:$0xf]
        %v5807 = vld [vmem:[#allocation6 + $0x10] sm:$0xf]
        %v5808 = vld [vmem:[#allocation6 + $0x14] sm:$0xf]
        %v5809 = vld [vmem:[#allocation6 + $0x18] sm:$0xf]
        %v5810 = vld [vmem:[#allocation6 + $0x1c] sm:$0xf]
        %5819 = vrot.lane.b32.xlu0 %v5803, 125
        %v5820 = vpop.permute.xlu0 %5819
        %5821 = vrot.lane.b32.xlu0 %v5804, 125
        %v5822 = vpop.permute.xlu0 %5821
        %5823 = vrot.lane.b32.xlu0 %v5805, 125
        %v5824 = vpop.permute.xlu0 %5823
        %5825 = vrot.lane.b32.xlu0 %v5806, 125
        %v5826 = vpop.permute.xlu0 %5825
        %5827 = vrot.lane.b32.xlu0 %v5807, 125
        %v5828 = vpop.permute.xlu0 %5827
        %5829 = vrot.lane.b32.xlu0 %v5808, 125
        %v5830 = vpop.permute.xlu0 %5829
        %5831 = vrot.lane.b32.xlu0 %v5809, 125
        %v5832 = vpop.permute.xlu0 %5831
        %5833 = vrot.lane.b32.xlu0 %v5810, 125
        %v5834 = vpop.permute.xlu0 %5833
        %5843 = vst.msk [vmem:[#allocation11 + $0x80] sm:$0xf] %vm5613, %v5820
        %5844 = vst.msk [vmem:[#allocation11 + $0x84] sm:$0xf] %vm5613, %v5822
        %5845 = vst.msk [vmem:[#allocation11 + $0x88] sm:$0xf] %vm5613, %v5824
        %5846 = vst.msk [vmem:[#allocation11 + $0x8c] sm:$0xf] %vm5613, %v5826
        %5847 = vst.msk [vmem:[#allocation11 + $0x90] sm:$0xf] %vm5613, %v5828
        %5848 = vst.msk [vmem:[#allocation11 + $0x94] sm:$0xf] %vm5613, %v5830
        %5849 = vst.msk [vmem:[#allocation11 + $0x98] sm:$0xf] %vm5613, %v5832
        %5850 = vst.msk [vmem:[#allocation11 + $0x9c] sm:$0xf] %vm5613, %v5834
        %v5851 = vld [vmem:[#allocation6] sm:$0xf]
        %v5852 = vld [vmem:[#allocation6 + $0x4] sm:$0xf]
        %v5853 = vld [vmem:[#allocation6 + $0x8] sm:$0xf]
        %v5854 = vld [vmem:[#allocation6 + $0xc] sm:$0xf]
        %v5855 = vld [vmem:[#allocation6 + $0x10] sm:$0xf]
        %v5856 = vld [vmem:[#allocation6 + $0x14] sm:$0xf]
        %v5857 = vld [vmem:[#allocation6 + $0x18] sm:$0xf]
        %v5858 = vld [vmem:[#allocation6 + $0x1c] sm:$0xf]
        %5859 = vrot.lane.b32.xlu0 %v5679, 4
        %v5860 = vpop.permute.xlu0 %5859
        %v5861 = vunpack.c.l.b16 %v5860
        %v5862 = vunpack.c.h.b16 %v5860
        %v5863 = vunpack.c.l.b16 0
        %v5864 = vunpack.c.h.b16 0
        %vm5865 = vcmp.ne.s32.totalorder %v5861, %v5863
        %vm5866 = vcmp.ne.s32.totalorder %v5862, %v5864
        %vm5867 = vmpackc.low %vm5866, %vm5865
        %v5868 = vsel %vm5867, %v5851, 0
        %v5869 = vsel %vm5867, %v5852, 0
        %v5870 = vsel %vm5867, %v5853, 0
        %v5871 = vsel %vm5867, %v5854, 0
        %v5872 = vsel %vm5867, %v5855, 0
        %v5873 = vsel %vm5867, %v5856, 0
        %v5874 = vsel %vm5867, %v5857, 0
        %v5875 = vsel %vm5867, %v5858, 0
        %5884 = vrot.lane.b32.xlu0 %v5868, 124
        %v5885 = vpop.permute.xlu0 %5884
        %5886 = vrot.lane.b32.xlu0 %v5869, 124
        %v5887 = vpop.permute.xlu0 %5886
        %5888 = vrot.lane.b32.xlu0 %v5870, 124
        %v5889 = vpop.permute.xlu0 %5888
        %5890 = vrot.lane.b32.xlu0 %v5871, 124
        %v5891 = vpop.permute.xlu0 %5890
        %5892 = vrot.lane.b32.xlu0 %v5872, 124
        %v5893 = vpop.permute.xlu0 %5892
        %5894 = vrot.lane.b32.xlu0 %v5873, 124
        %v5895 = vpop.permute.xlu0 %5894
        %5896 = vrot.lane.b32.xlu0 %v5874, 124
        %v5897 = vpop.permute.xlu0 %5896
        %5898 = vrot.lane.b32.xlu0 %v5875, 124
        %v5899 = vpop.permute.xlu0 %5898
        %5908 = vst.msk [vmem:[#allocation11 + $0xa0] sm:$0xf] %vm5613, %v5885
        %5909 = vst.msk [vmem:[#allocation11 + $0xa4] sm:$0xf] %vm5613, %v5887
        %5910 = vst.msk [vmem:[#allocation11 + $0xa8] sm:$0xf] %vm5613, %v5889
        %5911 = vst.msk [vmem:[#allocation11 + $0xac] sm:$0xf] %vm5613, %v5891
        %5912 = vst.msk [vmem:[#allocation11 + $0xb0] sm:$0xf] %vm5613, %v5893
        %5913 = vst.msk [vmem:[#allocation11 + $0xb4] sm:$0xf] %vm5613, %v5895
        %5914 = vst.msk [vmem:[#allocation11 + $0xb8] sm:$0xf] %vm5613, %v5897
        %5915 = vst.msk [vmem:[#allocation11 + $0xbc] sm:$0xf] %vm5613, %v5899
        %v5916 = vld [vmem:[#allocation6] sm:$0xf]
        %v5917 = vld [vmem:[#allocation6 + $0x4] sm:$0xf]
        %v5918 = vld [vmem:[#allocation6 + $0x8] sm:$0xf]
        %v5919 = vld [vmem:[#allocation6 + $0xc] sm:$0xf]
        %v5920 = vld [vmem:[#allocation6 + $0x10] sm:$0xf]
        %v5921 = vld [vmem:[#allocation6 + $0x14] sm:$0xf]
        %v5922 = vld [vmem:[#allocation6 + $0x18] sm:$0xf]
        %v5923 = vld [vmem:[#allocation6 + $0x1c] sm:$0xf]
        %5924 = vrot.lane.b32.xlu0 %v5745, 4
        %v5925 = vpop.permute.xlu0 %5924
        %v5926 = vunpack.c.l.b16 %v5925
        %v5927 = vunpack.c.h.b16 %v5925
        %v5928 = vunpack.c.l.b16 0
        %v5929 = vunpack.c.h.b16 0
        %vm5930 = vcmp.ne.s32.totalorder %v5926, %v5928
        %vm5931 = vcmp.ne.s32.totalorder %v5927, %v5929
        %vm5932 = vmpackc.low %vm5931, %vm5930
        %v5933 = vsel %vm5932, %v5916, 0
        %v5934 = vsel %vm5932, %v5917, 0
        %v5935 = vsel %vm5932, %v5918, 0
        %v5936 = vsel %vm5932, %v5919, 0
        %v5937 = vsel %vm5932, %v5920, 0
        %v5938 = vsel %vm5932, %v5921, 0
        %v5939 = vsel %vm5932, %v5922, 0
        %v5940 = vsel %vm5932, %v5923, 0
        %5949 = vrot.lane.b32.xlu0 %v5933, 124
        %v5950 = vpop.permute.xlu0 %5949
        %5951 = vrot.lane.b32.xlu0 %v5934, 124
        %v5952 = vpop.permute.xlu0 %5951
        %5953 = vrot.lane.b32.xlu0 %v5935, 124
        %v5954 = vpop.permute.xlu0 %5953
        %5955 = vrot.lane.b32.xlu0 %v5936, 124
        %v5956 = vpop.permute.xlu0 %5955
        %5957 = vrot.lane.b32.xlu0 %v5937, 124
        %v5958 = vpop.permute.xlu0 %5957
        %5959 = vrot.lane.b32.xlu0 %v5938, 124
        %v5960 = vpop.permute.xlu0 %5959
        %5961 = vrot.lane.b32.xlu0 %v5939, 124
        %v5962 = vpop.permute.xlu0 %5961
        %5963 = vrot.lane.b32.xlu0 %v5940, 124
        %v5964 = vpop.permute.xlu0 %5963
        %5973 = vst.msk [vmem:[#allocation11 + $0xc0] sm:$0xf] %vm5613, %v5950
        %5974 = vst.msk [vmem:[#allocation11 + $0xc4] sm:$0xf] %vm5613, %v5952
        %5975 = vst.msk [vmem:[#allocation11 + $0xc8] sm:$0xf] %vm5613, %v5954
        %5976 = vst.msk [vmem:[#allocation11 + $0xcc] sm:$0xf] %vm5613, %v5956
        %5977 = vst.msk [vmem:[#allocation11 + $0xd0] sm:$0xf] %vm5613, %v5958
        %5978 = vst.msk [vmem:[#allocation11 + $0xd4] sm:$0xf] %vm5613, %v5960
        %5979 = vst.msk [vmem:[#allocation11 + $0xd8] sm:$0xf] %vm5613, %v5962
        %5980 = vst.msk [vmem:[#allocation11 + $0xdc] sm:$0xf] %vm5613, %v5964
        %v5981 = vld [vmem:[#allocation6] sm:$0xf]
        %v5982 = vld [vmem:[#allocation6 + $0x4] sm:$0xf]
        %v5983 = vld [vmem:[#allocation6 + $0x8] sm:$0xf]
        %v5984 = vld [vmem:[#allocation6 + $0xc] sm:$0xf]
        %v5985 = vld [vmem:[#allocation6 + $0x10] sm:$0xf]
        %v5986 = vld [vmem:[#allocation6 + $0x14] sm:$0xf]
        %v5987 = vld [vmem:[#allocation6 + $0x18] sm:$0xf]
        %v5988 = vld [vmem:[#allocation6 + $0x1c] sm:$0xf]
        %5997 = vrot.lane.b32.xlu0 %v5981, 123
        %v5998 = vpop.permute.xlu0 %5997
        %5999 = vrot.lane.b32.xlu0 %v5982, 123
        %v6000 = vpop.permute.xlu0 %5999
        %6001 = vrot.lane.b32.xlu0 %v5983, 123
        %v6002 = vpop.permute.xlu0 %6001
        %6003 = vrot.lane.b32.xlu0 %v5984, 123
        %v6004 = vpop.permute.xlu0 %6003
        %6005 = vrot.lane.b32.xlu0 %v5985, 123
        %v6006 = vpop.permute.xlu0 %6005
        %6007 = vrot.lane.b32.xlu0 %v5986, 123
        %v6008 = vpop.permute.xlu0 %6007
        %6009 = vrot.lane.b32.xlu0 %v5987, 123
        %v6010 = vpop.permute.xlu0 %6009
        %6011 = vrot.lane.b32.xlu0 %v5988, 123
        %v6012 = vpop.permute.xlu0 %6011
        %6021 = vst.msk [vmem:[#allocation11 + $0xe0] sm:$0xf] %vm5613, %v5998
        %6022 = vst.msk [vmem:[#allocation11 + $0xe4] sm:$0xf] %vm5613, %v6000
        %6023 = vst.msk [vmem:[#allocation11 + $0xe8] sm:$0xf] %vm5613, %v6002
        %6024 = vst.msk [vmem:[#allocation11 + $0xec] sm:$0xf] %vm5613, %v6004
        %6025 = vst.msk [vmem:[#allocation11 + $0xf0] sm:$0xf] %vm5613, %v6006
        %6026 = vst.msk [vmem:[#allocation11 + $0xf4] sm:$0xf] %vm5613, %v6008
        %6027 = vst.msk [vmem:[#allocation11 + $0xf8] sm:$0xf] %vm5613, %v6010
        %6028 = vst.msk [vmem:[#allocation11 + $0xfc] sm:$0xf] %vm5613, %v6012
        %v6029 = vld [vmem:[#allocation6] sm:$0xf]
        %v6030 = vld [vmem:[#allocation6 + $0x4] sm:$0xf]
        %v6031 = vld [vmem:[#allocation6 + $0x8] sm:$0xf]
        %v6032 = vld [vmem:[#allocation6 + $0xc] sm:$0xf]
        %v6033 = vld [vmem:[#allocation6 + $0x10] sm:$0xf]
        %v6034 = vld [vmem:[#allocation6 + $0x14] sm:$0xf]
        %v6035 = vld [vmem:[#allocation6 + $0x18] sm:$0xf]
        %v6036 = vld [vmem:[#allocation6 + $0x1c] sm:$0xf]
        %6037 = vrot.lane.b32.xlu0 %v5679, 6
        %v6038 = vpop.permute.xlu0 %6037
        %v6039 = vunpack.c.l.b16 %v6038
        %v6040 = vunpack.c.h.b16 %v6038
        %v6041 = vunpack.c.l.b16 0
        %v6042 = vunpack.c.h.b16 0
        %vm6043 = vcmp.ne.s32.totalorder %v6039, %v6041
        %vm6044 = vcmp.ne.s32.totalorder %v6040, %v6042
        %vm6045 = vmpackc.low %vm6044, %vm6043
        %v6046 = vsel %vm6045, %v6029, 0
        %v6047 = vsel %vm6045, %v6030, 0
        %v6048 = vsel %vm6045, %v6031, 0
        %v6049 = vsel %vm6045, %v6032, 0
        %v6050 = vsel %vm6045, %v6033, 0
        %v6051 = vsel %vm6045, %v6034, 0
        %v6052 = vsel %vm6045, %v6035, 0
        %v6053 = vsel %vm6045, %v6036, 0
        %6062 = vrot.lane.b32.xlu0 %v6046, 122
        %v6063 = vpop.permute.xlu0 %6062
        %6064 = vrot.lane.b32.xlu0 %v6047, 122
        %v6065 = vpop.permute.xlu0 %6064
        %6066 = vrot.lane.b32.xlu0 %v6048, 122
        %v6067 = vpop.permute.xlu0 %6066
        %6068 = vrot.lane.b32.xlu0 %v6049, 122
        %v6069 = vpop.permute.xlu0 %6068
        %6070 = vrot.lane.b32.xlu0 %v6050, 122
        %v6071 = vpop.permute.xlu0 %6070
        %6072 = vrot.lane.b32.xlu0 %v6051, 122
        %v6073 = vpop.permute.xlu0 %6072
        %6074 = vrot.lane.b32.xlu0 %v6052, 122
        %v6075 = vpop.permute.xlu0 %6074
        %6076 = vrot.lane.b32.xlu0 %v6053, 122
        %v6077 = vpop.permute.xlu0 %6076
        %6086 = vst.msk [vmem:[#allocation11 + $0x100] sm:$0xf] %vm5613, %v6063
        %6087 = vst.msk [vmem:[#allocation11 + $0x104] sm:$0xf] %vm5613, %v6065
        %6088 = vst.msk [vmem:[#allocation11 + $0x108] sm:$0xf] %vm5613, %v6067
        %6089 = vst.msk [vmem:[#allocation11 + $0x10c] sm:$0xf] %vm5613, %v6069
        %6090 = vst.msk [vmem:[#allocation11 + $0x110] sm:$0xf] %vm5613, %v6071
        %6091 = vst.msk [vmem:[#allocation11 + $0x114] sm:$0xf] %vm5613, %v6073
        %6092 = vst.msk [vmem:[#allocation11 + $0x118] sm:$0xf] %vm5613, %v6075
        %6093 = vst.msk [vmem:[#allocation11 + $0x11c] sm:$0xf] %vm5613, %v6077
        %v6094 = vld [vmem:[#allocation11] sm:$0xf]
        %v6095 = vld [vmem:[#allocation11 + $0x4] sm:$0xf]
        %v6096 = vld [vmem:[#allocation11 + $0x8] sm:$0xf]
        %v6097 = vld [vmem:[#allocation11 + $0xc] sm:$0xf]
        %v6098 = vld [vmem:[#allocation11 + $0x10] sm:$0xf]
        %v6099 = vld [vmem:[#allocation11 + $0x14] sm:$0xf]
        %v6100 = vld [vmem:[#allocation11 + $0x18] sm:$0xf]
        %v6101 = vld [vmem:[#allocation11 + $0x1c] sm:$0xf]
        %v6102 = vld [vmem:[#allocation11 + $0x20] sm:$0xf]
        %v6103 = vld [vmem:[#allocation11 + $0x24] sm:$0xf]
        %v6104 = vld [vmem:[#allocation11 + $0x28] sm:$0xf]
        %v6105 = vld [vmem:[#allocation11 + $0x2c] sm:$0xf]
        %v6106 = vld [vmem:[#allocation11 + $0x30] sm:$0xf]
        %v6107 = vld [vmem:[#allocation11 + $0x34] sm:$0xf]
        %v6108 = vld [vmem:[#allocation11 + $0x38] sm:$0xf]
        %v6109 = vld [vmem:[#allocation11 + $0x3c] sm:$0xf]
        %v6110 = vld [vmem:[#allocation11 + $0x40] sm:$0xf]
        %v6111 = vld [vmem:[#allocation11 + $0x44] sm:$0xf]
        %v6112 = vld [vmem:[#allocation11 + $0x48] sm:$0xf]
        %v6113 = vld [vmem:[#allocation11 + $0x4c] sm:$0xf]
        %v6114 = vld [vmem:[#allocation11 + $0x50] sm:$0xf]
        %v6115 = vld [vmem:[#allocation11 + $0x54] sm:$0xf]
        %v6116 = vld [vmem:[#allocation11 + $0x58] sm:$0xf]
        %v6117 = vld [vmem:[#allocation11 + $0x5c] sm:$0xf]
        %v6118 = vld [vmem:[#allocation11 + $0x60] sm:$0xf]
        %v6119 = vld [vmem:[#allocation11 + $0x64] sm:$0xf]
        %v6120 = vld [vmem:[#allocation11 + $0x68] sm:$0xf]
        %v6121 = vld [vmem:[#allocation11 + $0x6c] sm:$0xf]
        %v6122 = vld [vmem:[#allocation11 + $0x70] sm:$0xf]
        %v6123 = vld [vmem:[#allocation11 + $0x74] sm:$0xf]
        %v6124 = vld [vmem:[#allocation11 + $0x78] sm:$0xf]
        %v6125 = vld [vmem:[#allocation11 + $0x7c] sm:$0xf]
        %v6126 = vld [vmem:[#allocation11 + $0x80] sm:$0xf]
        %v6127 = vld [vmem:[#allocation11 + $0x84] sm:$0xf]
        %v6128 = vld [vmem:[#allocation11 + $0x88] sm:$0xf]
        %v6129 = vld [vmem:[#allocation11 + $0x8c] sm:$0xf]
        %v6130 = vld [vmem:[#allocation11 + $0x90] sm:$0xf]
        %v6131 = vld [vmem:[#allocation11 + $0x94] sm:$0xf]
        %v6132 = vld [vmem:[#allocation11 + $0x98] sm:$0xf]
        %v6133 = vld [vmem:[#allocation11 + $0x9c] sm:$0xf]
        %v6134 = vld [vmem:[#allocation11 + $0xa0] sm:$0xf]
        %v6135 = vld [vmem:[#allocation11 + $0xa4] sm:$0xf]
        %v6136 = vld [vmem:[#allocation11 + $0xa8] sm:$0xf]
        %v6137 = vld [vmem:[#allocation11 + $0xac] sm:$0xf]
        %v6138 = vld [vmem:[#allocation11 + $0xb0] sm:$0xf]
        %v6139 = vld [vmem:[#allocation11 + $0xb4] sm:$0xf]
        %v6140 = vld [vmem:[#allocation11 + $0xb8] sm:$0xf]
        %v6141 = vld [vmem:[#allocation11 + $0xbc] sm:$0xf]
        %v6142 = vld [vmem:[#allocation11 + $0xc0] sm:$0xf]
        %v6143 = vld [vmem:[#allocation11 + $0xc4] sm:$0xf]
        %v6144 = vld [vmem:[#allocation11 + $0xc8] sm:$0xf]
        %v6145 = vld [vmem:[#allocation11 + $0xcc] sm:$0xf]
        %v6146 = vld [vmem:[#allocation11 + $0xd0] sm:$0xf]
        %v6147 = vld [vmem:[#allocation11 + $0xd4] sm:$0xf]
        %v6148 = vld [vmem:[#allocation11 + $0xd8] sm:$0xf]
        %v6149 = vld [vmem:[#allocation11 + $0xdc] sm:$0xf]
        %v6150 = vld [vmem:[#allocation11 + $0xe0] sm:$0xf]
        %v6151 = vld [vmem:[#allocation11 + $0xe4] sm:$0xf]
        %v6152 = vld [vmem:[#allocation11 + $0xe8] sm:$0xf]
        %v6153 = vld [vmem:[#allocation11 + $0xec] sm:$0xf]
        %v6154 = vld [vmem:[#allocation11 + $0xf0] sm:$0xf]
        %v6155 = vld [vmem:[#allocation11 + $0xf4] sm:$0xf]
        %v6156 = vld [vmem:[#allocation11 + $0xf8] sm:$0xf]
        %v6157 = vld [vmem:[#allocation11 + $0xfc] sm:$0xf]
        %v6158 = vld [vmem:[#allocation11 + $0x100] sm:$0xf]
        %v6159 = vld [vmem:[#allocation11 + $0x104] sm:$0xf]
        %v6160 = vld [vmem:[#allocation11 + $0x108] sm:$0xf]
        %v6161 = vld [vmem:[#allocation11 + $0x10c] sm:$0xf]
        %v6162 = vld [vmem:[#allocation11 + $0x110] sm:$0xf]
        %v6163 = vld [vmem:[#allocation11 + $0x114] sm:$0xf]
        %v6164 = vld [vmem:[#allocation11 + $0x118] sm:$0xf]
        %v6165 = vld [vmem:[#allocation11 + $0x11c] sm:$0xf]
        %v6166 = vld [vmem:[%s5] sm:$0xff]
        %v6167 = vld [vmem:[%s5 + $0x8] sm:$0xff]
        %v6168 = vld [vmem:[%s5 + $0x10] sm:$0xf]
        %v6169 = vld [vmem:[%s5 + $0x14] sm:$0xff]
        %v6170 = vld [vmem:[%s5 + $0x1c] sm:$0xff]
        %v6171 = vld [vmem:[%s5 + $0x24] sm:$0xf]
        %v6172 = vld [vmem:[%s5 + $0x28] sm:$0xff]
        %v6173 = vld [vmem:[%s5 + $0x30] sm:$0xff]
        %v6174 = vld [vmem:[%s5 + $0x38] sm:$0xf]
        %v6175 = vld [vmem:[%s5 + $0x3c] sm:$0xff]
        %v6176 = vld [vmem:[%s5 + $0x44] sm:$0xff]
        %v6177 = vld [vmem:[%s5 + $0x4c] sm:$0xf]
        %v6178 = vld [vmem:[%s5 + $0x50] sm:$0xff]
        %v6179 = vld [vmem:[%s5 + $0x58] sm:$0xff]
        %v6180 = vld [vmem:[%s5 + $0x60] sm:$0xf]
        %v6181 = vld [vmem:[%s5 + $0x64] sm:$0xff]
        %v6182 = vld [vmem:[%s5 + $0x6c] sm:$0xff]
        %v6183 = vld [vmem:[%s5 + $0x74] sm:$0xf]
        %v6184 = vld [vmem:[%s5 + $0x78] sm:$0xff]
        %v6185 = vld [vmem:[%s5 + $0x80] sm:$0xff]
        %v6186 = vld [vmem:[%s5 + $0x88] sm:$0xf]
        %v6187 = vld [vmem:[%s5 + $0x8c] sm:$0xff]
        %v6188 = vld [vmem:[%s5 + $0x94] sm:$0xff]
        %v6189 = vld [vmem:[%s5 + $0x9c] sm:$0xf]
        %v6190 = vld [vmem:[%s5 + $0xa0] sm:$0xff]
        %v6191 = vld [vmem:[%s5 + $0xa8] sm:$0xff]
        %v6192 = vld [vmem:[%s5 + $0xb0] sm:$0xf]
        %v6193 = vld [vmem:[%s5 + $0xb4] sm:$0xff]
        %v6194 = vld [vmem:[%s5 + $0xbc] sm:$0xff]
        %v6195 = vld [vmem:[%s5 + $0xc4] sm:$0xf]
        %v6196 = vld [vmem:[%s5 + $0xc8] sm:$0xff]
        %v6197 = vld [vmem:[%s5 + $0xd0] sm:$0xff]
        %v6198 = vld [vmem:[%s5 + $0xd8] sm:$0xf]
        %v6199 = vld [vmem:[%s5 + $0xdc] sm:$0xff]
        %v6200 = vld [vmem:[%s5 + $0xe4] sm:$0xff]
        %v6201 = vld [vmem:[%s5 + $0xec] sm:$0xf]
        %v6202 = vld [vmem:[%s5 + $0xf0] sm:$0xff]
        %v6203 = vld [vmem:[%s5 + $0xf8] sm:$0xff]
        %v6204 = vld [vmem:[%s5 + $0x100] sm:$0xf]
        %v6205 = vld [vmem:[%s5 + $0x104] sm:$0xff]
        %v6206 = vld [vmem:[%s5 + $0x10c] sm:$0xff]
        %v6207 = vld [vmem:[%s5 + $0x114] sm:$0xf]
        %v6208 = vld [vmem:[%s5 + $0x118] sm:$0xff]
        %v6209 = vld [vmem:[%s5 + $0x120] sm:$0xff]
        %v6210 = vld [vmem:[%s5 + $0x128] sm:$0xf]
        %v6211 = vld [vmem:[%s5 + $0x12c] sm:$0xff]
        %v6212 = vld [vmem:[%s5 + $0x134] sm:$0xff]
        %v6213 = vld [vmem:[%s5 + $0x13c] sm:$0xf]
        %v6262 = vunpack.c.l.b16 %v6166
        %v6263 = vunpack.c.h.b16 %v6166
        %v6264 = vunpack.c.l.b16 %v6167
        %v6265 = vunpack.c.h.b16 %v6167
        %v6266 = vunpack.c.l.b16 %v6168
        %v6267 = vunpack.c.l.b16 %v6169
        %v6268 = vunpack.c.h.b16 %v6169
        %v6269 = vunpack.c.l.b16 %v6170
        %v6270 = vunpack.c.h.b16 %v6170
        %v6271 = vunpack.c.l.b16 %v6171
        %v6272 = vunpack.c.l.b16 %v6172
        %v6273 = vunpack.c.h.b16 %v6172
        %v6274 = vunpack.c.l.b16 %v6173
        %v6275 = vunpack.c.h.b16 %v6173
        %v6276 = vunpack.c.l.b16 %v6174
        %v6277 = vunpack.c.l.b16 %v6175
        %v6278 = vunpack.c.h.b16 %v6175
        %v6279 = vunpack.c.l.b16 %v6176
        %v6280 = vunpack.c.h.b16 %v6176
        %v6281 = vunpack.c.l.b16 %v6177
        %v6282 = vunpack.c.l.b16 %v6178
        %v6283 = vunpack.c.h.b16 %v6178
        %v6284 = vunpack.c.l.b16 %v6179
        %v6285 = vunpack.c.h.b16 %v6179
        %v6286 = vunpack.c.l.b16 %v6180
        %v6287 = vunpack.c.l.b16 %v6181
        %v6288 = vunpack.c.h.b16 %v6181
        %v6289 = vunpack.c.l.b16 %v6182
        %v6290 = vunpack.c.h.b16 %v6182
        %v6291 = vunpack.c.l.b16 %v6183
        %v6292 = vunpack.c.l.b16 %v6184
        %v6293 = vunpack.c.h.b16 %v6184
        %v6294 = vunpack.c.l.b16 %v6185
        %v6295 = vunpack.c.h.b16 %v6185
        %v6296 = vunpack.c.l.b16 %v6186
        %v6297 = vunpack.c.l.b16 %v6187
        %v6298 = vunpack.c.h.b16 %v6187
        %v6299 = vunpack.c.l.b16 %v6188
        %v6300 = vunpack.c.h.b16 %v6188
        %v6301 = vunpack.c.l.b16 %v6189
        %v6302 = vunpack.c.l.b16 %v6190
        %v6303 = vunpack.c.h.b16 %v6190
        %v6304 = vunpack.c.l.b16 %v6191
        %v6305 = vunpack.c.h.b16 %v6191
        %v6306 = vunpack.c.l.b16 %v6192
        %v6307 = vunpack.c.l.b16 %v6193
        %v6308 = vunpack.c.h.b16 %v6193
        %v6309 = vunpack.c.l.b16 %v6194
        %v6310 = vunpack.c.h.b16 %v6194
        %v6311 = vunpack.c.l.b16 %v6195
        %v6312 = vunpack.c.l.b16 %v6196
        %v6313 = vunpack.c.h.b16 %v6196
        %v6314 = vunpack.c.l.b16 %v6197
        %v6315 = vunpack.c.h.b16 %v6197
        %v6316 = vunpack.c.l.b16 %v6198
        %v6317 = vunpack.c.l.b16 %v6199
        %v6318 = vunpack.c.h.b16 %v6199
        %v6319 = vunpack.c.l.b16 %v6200
        %v6320 = vunpack.c.h.b16 %v6200
        %v6321 = vunpack.c.l.b16 %v6201
        %v6322 = vunpack.c.l.b16 %v6202
        %v6323 = vunpack.c.h.b16 %v6202
        %v6324 = vunpack.c.l.b16 %v6203
        %v6325 = vunpack.c.h.b16 %v6203
        %v6326 = vunpack.c.l.b16 %v6204
        %v6327 = vunpack.c.l.b16 %v6205
        %v6328 = vunpack.c.h.b16 %v6205
        %v6329 = vunpack.c.l.b16 %v6206
        %v6330 = vunpack.c.h.b16 %v6206
        %v6331 = vunpack.c.l.b16 %v6207
        %v6332 = vunpack.c.l.b16 %v6208
        %v6333 = vunpack.c.h.b16 %v6208
        %v6334 = vunpack.c.l.b16 %v6209
        %v6335 = vunpack.c.h.b16 %v6209
        %v6336 = vunpack.c.l.b16 %v6210
        %v6337 = vunpack.c.l.b16 %v6211
        %v6338 = vunpack.c.h.b16 %v6211
        %v6339 = vunpack.c.l.b16 %v6212
        %v6340 = vunpack.c.h.b16 %v6212
        %v6341 = vunpack.c.l.b16 %v6213
        %v6342 = vpack.c.b16 %v6267, %v6262
        %v6343 = vpack.c.b16 %v6268, %v6263
        %v6344 = vpack.c.b16 %v6269, %v6264
        %v6345 = vpack.c.b16 %v6270, %v6265
        %v6346 = vpack.c.b16 %v6271, %v6266
        %v6347 = vpack.c.b16 %v6277, %v6272
        %v6348 = vpack.c.b16 %v6278, %v6273
        %v6349 = vpack.c.b16 %v6279, %v6274
        %v6350 = vpack.c.b16 %v6280, %v6275
        %v6351 = vpack.c.b16 %v6281, %v6276
        %v6352 = vpack.c.b16 %v6287, %v6282
        %v6353 = vpack.c.b16 %v6288, %v6283
        %v6354 = vpack.c.b16 %v6289, %v6284
        %v6355 = vpack.c.b16 %v6290, %v6285
        %v6356 = vpack.c.b16 %v6291, %v6286
        %v6357 = vpack.c.b16 %v6297, %v6292
        %v6358 = vpack.c.b16 %v6298, %v6293
        %v6359 = vpack.c.b16 %v6299, %v6294
        %v6360 = vpack.c.b16 %v6300, %v6295
        %v6361 = vpack.c.b16 %v6301, %v6296
        %v6362 = vpack.c.b16 %v6307, %v6302
        %v6363 = vpack.c.b16 %v6308, %v6303
        %v6364 = vpack.c.b16 %v6309, %v6304
        %v6365 = vpack.c.b16 %v6310, %v6305
        %v6366 = vpack.c.b16 %v6311, %v6306
        %v6367 = vpack.c.b16 %v6317, %v6312
        %v6368 = vpack.c.b16 %v6318, %v6313
        %v6369 = vpack.c.b16 %v6319, %v6314
        %v6370 = vpack.c.b16 %v6320, %v6315
        %v6371 = vpack.c.b16 %v6321, %v6316
        %v6372 = vpack.c.b16 %v6327, %v6322
        %v6373 = vpack.c.b16 %v6328, %v6323
        %v6374 = vpack.c.b16 %v6329, %v6324
        %v6375 = vpack.c.b16 %v6330, %v6325
        %v6376 = vpack.c.b16 %v6331, %v6326
        %v6377 = vpack.c.b16 %v6337, %v6332
        %v6378 = vpack.c.b16 %v6338, %v6333
        %v6379 = vpack.c.b16 %v6339, %v6334
        %v6380 = vpack.c.b16 %v6340, %v6335
        %v6381 = vpack.c.b16 %v6341, %v6336
        %v6486 = vunpack.c.l.b16 %v6094
        %v6487 = vunpack.c.l.b16 %v6095
        %v6488 = vunpack.c.l.b16 %v6096
        %v6489 = vunpack.c.l.b16 %v6097
        %v6490 = vunpack.c.l.b16 %v6098
        %v6491 = vunpack.c.l.b16 %v6099
        %v6492 = vunpack.c.l.b16 %v6100
        %v6493 = vunpack.c.l.b16 %v6101
        %v6494 = vunpack.c.l.b16 %v6102
        %v6495 = vunpack.c.l.b16 %v6103
        %v6496 = vunpack.c.l.b16 %v6104
        %v6497 = vunpack.c.l.b16 %v6105
        %v6498 = vunpack.c.l.b16 %v6106
        %v6499 = vunpack.c.l.b16 %v6107
        %v6500 = vunpack.c.l.b16 %v6108
        %v6501 = vunpack.c.l.b16 %v6109
        %v6502 = vunpack.c.l.b16 %v6110
        %v6503 = vunpack.c.l.b16 %v6111
        %v6504 = vunpack.c.l.b16 %v6112
        %v6505 = vunpack.c.l.b16 %v6113
        %v6506 = vunpack.c.l.b16 %v6114
        %v6507 = vunpack.c.l.b16 %v6115
        %v6508 = vunpack.c.l.b16 %v6116
        %v6509 = vunpack.c.l.b16 %v6117
        %v6510 = vunpack.c.l.b16 %v6118
        %v6511 = vunpack.c.l.b16 %v6119
        %v6512 = vunpack.c.l.b16 %v6120
        %v6513 = vunpack.c.l.b16 %v6121
        %v6514 = vunpack.c.l.b16 %v6122
        %v6515 = vunpack.c.l.b16 %v6123
        %v6516 = vunpack.c.l.b16 %v6124
        %v6517 = vunpack.c.l.b16 %v6125
        %v6518 = vunpack.c.l.b16 %v6126
        %v6519 = vunpack.c.l.b16 %v6127
        %v6520 = vunpack.c.l.b16 %v6128
        %v6521 = vunpack.c.l.b16 %v6129
        %v6522 = vunpack.c.l.b16 %v6130
        %v6523 = vunpack.c.l.b16 %v6131
        %v6524 = vunpack.c.l.b16 %v6132
        %v6525 = vunpack.c.l.b16 %v6133
        %v6526 = vunpack.c.l.b16 %v6134
        %v6527 = vunpack.c.l.b16 %v6135
        %v6528 = vunpack.c.l.b16 %v6136
        %v6529 = vunpack.c.l.b16 %v6137
        %v6530 = vunpack.c.l.b16 %v6138
        %v6531 = vunpack.c.l.b16 %v6139
        %v6532 = vunpack.c.l.b16 %v6140
        %v6533 = vunpack.c.l.b16 %v6141
        %v6534 = vunpack.c.l.b16 %v6142
        %v6535 = vunpack.c.l.b16 %v6143
        %v6536 = vunpack.c.l.b16 %v6144
        %v6537 = vunpack.c.l.b16 %v6145
        %v6538 = vunpack.c.l.b16 %v6146
        %v6539 = vunpack.c.l.b16 %v6147
        %v6540 = vunpack.c.l.b16 %v6148
        %v6541 = vunpack.c.l.b16 %v6149
        %v6542 = vunpack.c.l.b16 %v6150
        %v6543 = vunpack.c.l.b16 %v6151
        %v6544 = vunpack.c.l.b16 %v6152
        %v6545 = vunpack.c.l.b16 %v6153
        %v6546 = vunpack.c.l.b16 %v6154
        %v6547 = vunpack.c.l.b16 %v6155
        %v6548 = vunpack.c.l.b16 %v6156
        %v6549 = vunpack.c.l.b16 %v6157
        %v6550 = vunpack.c.l.b16 %v6158
        %v6551 = vunpack.c.l.b16 %v6159
        %v6552 = vunpack.c.l.b16 %v6160
        %v6553 = vunpack.c.l.b16 %v6161
        %v6554 = vunpack.c.l.b16 %v6162
        %v6555 = vunpack.c.l.b16 %v6163
        %v6556 = vunpack.c.l.b16 %v6164
        %v6557 = vunpack.c.l.b16 %v6165
        %v6558 = vpack.c.b16 %v6487, %v6486
        %v6559 = vpack.c.b16 %v6489, %v6488
        %v6560 = vpack.c.b16 %v6491, %v6490
        %v6561 = vpack.c.b16 %v6493, %v6492
        %v6562 = vpack.c.b16 %v6495, %v6494
        %v6563 = vpack.c.b16 %v6497, %v6496
        %v6564 = vpack.c.b16 %v6499, %v6498
        %v6565 = vpack.c.b16 %v6501, %v6500
        %v6566 = vpack.c.b16 %v6503, %v6502
        %v6567 = vpack.c.b16 %v6505, %v6504
        %v6568 = vpack.c.b16 %v6507, %v6506
        %v6569 = vpack.c.b16 %v6509, %v6508
        %v6570 = vpack.c.b16 %v6511, %v6510
        %v6571 = vpack.c.b16 %v6513, %v6512
        %v6572 = vpack.c.b16 %v6515, %v6514
        %v6573 = vpack.c.b16 %v6517, %v6516
        %v6574 = vpack.c.b16 %v6519, %v6518
        %v6575 = vpack.c.b16 %v6521, %v6520
        %v6576 = vpack.c.b16 %v6523, %v6522
        %v6577 = vpack.c.b16 %v6525, %v6524
        %v6578 = vpack.c.b16 %v6527, %v6526
        %v6579 = vpack.c.b16 %v6529, %v6528
        %v6580 = vpack.c.b16 %v6531, %v6530
        %v6581 = vpack.c.b16 %v6533, %v6532
        %v6582 = vpack.c.b16 %v6535, %v6534
        %v6583 = vpack.c.b16 %v6537, %v6536
        %v6584 = vpack.c.b16 %v6539, %v6538
        %v6585 = vpack.c.b16 %v6541, %v6540
        %v6586 = vpack.c.b16 %v6543, %v6542
        %v6587 = vpack.c.b16 %v6545, %v6544
        %v6588 = vpack.c.b16 %v6547, %v6546
        %v6589 = vpack.c.b16 %v6549, %v6548
        %v6590 = vpack.c.b16 %v6551, %v6550
        %v6591 = vpack.c.b16 %v6553, %v6552
        %v6592 = vpack.c.b16 %v6555, %v6554
        %v6593 = vpack.c.b16 %v6557, %v6556
        %v6631 = vsel %vm1100, %v6346, 0
        %v6634 = vsel %vm1100, %v6351, 0
        %v6637 = vsel %vm1100, %v6356, 0
        %v6640 = vsel %vm1100, %v6361, 0
        %v6643 = vsel %vm1100, %v6366, 0
        %v6646 = vsel %vm1100, %v6371, 0
        %v6649 = vsel %vm1100, %v6376, 0
        %v6652 = vsel %vm1100, %v6381, 0
        %6654 = vmatpush.bf16.msra.mxu0 %v6565
        %6655 = vmatpush.bf16.msra.mxu0 %v6564
        %6656 = vmatpush.bf16.msra.mxu0 %v6563
        %6657 = vmatpush.bf16.msra.mxu0 %v6562
        %6658 = vmatpush.bf16.msra.mxu0 %v6561
        %6659 = vmatpush.bf16.msra.mxu0 %v6560
        %6660 = vmatpush.bf16.msra.mxu0 %v6559
        %6661 = vmatpush.bf16.msra.mxu0 %v6558
        %6662 = vmatmul.bf16.gmra.mxu0 %v6342
        %v6663 = vpop.f32.mrf.mxu0
        %v6664 = vadd.f32 0.0, %v6663
        %v6665 = vpop.f32.mrf.mxu0
        %v6666 = vadd.f32 0.0, %v6665
        %6667 = vmatmul.bf16.gmra.mxu0 %v6347
        %v6668 = vpop.f32.mrf.mxu0
        %v6669 = vadd.f32 0.0, %v6668
        %v6670 = vpop.f32.mrf.mxu0
        %v6671 = vadd.f32 0.0, %v6670
        %6672 = vmatmul.bf16.gmra.mxu0 %v6352
        %v6673 = vpop.f32.mrf.mxu0
        %v6674 = vadd.f32 0.0, %v6673
        %v6675 = vpop.f32.mrf.mxu0
        %v6676 = vadd.f32 0.0, %v6675
        %6677 = vmatmul.bf16.gmra.mxu0 %v6357
        %v6678 = vpop.f32.mrf.mxu0
        %v6679 = vadd.f32 0.0, %v6678
        %v6680 = vpop.f32.mrf.mxu0
        %v6681 = vadd.f32 0.0, %v6680
        %6682 = vmatmul.bf16.gmra.mxu0 %v6362
        %v6683 = vpop.f32.mrf.mxu0
        %v6684 = vadd.f32 0.0, %v6683
        %v6685 = vpop.f32.mrf.mxu0
        %v6686 = vadd.f32 0.0, %v6685
        %6687 = vmatmul.bf16.gmra.mxu0 %v6367
        %v6688 = vpop.f32.mrf.mxu0
        %v6689 = vadd.f32 0.0, %v6688
        %v6690 = vpop.f32.mrf.mxu0
        %v6691 = vadd.f32 0.0, %v6690
        %6692 = vmatmul.bf16.gmra.mxu0 %v6372
        %v6693 = vpop.f32.mrf.mxu0
        %v6694 = vadd.f32 0.0, %v6693
        %v6695 = vpop.f32.mrf.mxu0
        %v6696 = vadd.f32 0.0, %v6695
        %6697 = vmatmul.bf16.gmra.mxu0 %v6377
        %v6698 = vpop.f32.mrf.mxu0
        %v6699 = vadd.f32 0.0, %v6698
        %v6700 = vpop.f32.mrf.mxu0
        %v6701 = vadd.f32 0.0, %v6700
        %6702 = vdwg.mxu0
        %6703 = vmatpush.bf16.msra.mxu0 %v6573
        %6704 = vmatpush.bf16.msra.mxu0 %v6572
        %6705 = vmatpush.bf16.msra.mxu0 %v6571
        %6706 = vmatpush.bf16.msra.mxu0 %v6570
        %6707 = vmatpush.bf16.msra.mxu0 %v6569
        %6708 = vmatpush.bf16.msra.mxu0 %v6568
        %6709 = vmatpush.bf16.msra.mxu0 %v6567
        %6710 = vmatpush.bf16.msra.mxu0 %v6566
        %6711 = vmatmul.bf16.gmra.mxu0 %v6343
        %v6712 = vpop.f32.mrf.mxu0
        %v6713 = vadd.f32 %v6664, %v6712
        %v6714 = vpop.f32.mrf.mxu0
        %v6715 = vadd.f32 %v6666, %v6714
        %6716 = vmatmul.bf16.gmra.mxu0 %v6348
        %v6717 = vpop.f32.mrf.mxu0
        %v6718 = vadd.f32 %v6669, %v6717
        %v6719 = vpop.f32.mrf.mxu0
        %v6720 = vadd.f32 %v6671, %v6719
        %6721 = vmatmul.bf16.gmra.mxu0 %v6353
        %v6722 = vpop.f32.mrf.mxu0
        %v6723 = vadd.f32 %v6674, %v6722
        %v6724 = vpop.f32.mrf.mxu0
        %v6725 = vadd.f32 %v6676, %v6724
        %6726 = vmatmul.bf16.gmra.mxu0 %v6358
        %v6727 = vpop.f32.mrf.mxu0
        %v6728 = vadd.f32 %v6679, %v6727
        %v6729 = vpop.f32.mrf.mxu0
        %v6730 = vadd.f32 %v6681, %v6729
        %6731 = vmatmul.bf16.gmra.mxu0 %v6363
        %v6732 = vpop.f32.mrf.mxu0
        %v6733 = vadd.f32 %v6684, %v6732
        %v6734 = vpop.f32.mrf.mxu0
        %v6735 = vadd.f32 %v6686, %v6734
        %6736 = vmatmul.bf16.gmra.mxu0 %v6368
        %v6737 = vpop.f32.mrf.mxu0
        %v6738 = vadd.f32 %v6689, %v6737
        %v6739 = vpop.f32.mrf.mxu0
        %v6740 = vadd.f32 %v6691, %v6739
        %6741 = vmatmul.bf16.gmra.mxu0 %v6373
        %v6742 = vpop.f32.mrf.mxu0
        %v6743 = vadd.f32 %v6694, %v6742
        %v6744 = vpop.f32.mrf.mxu0
        %v6745 = vadd.f32 %v6696, %v6744
        %6746 = vmatmul.bf16.gmra.mxu0 %v6378
        %v6747 = vpop.f32.mrf.mxu0
        %v6748 = vadd.f32 %v6699, %v6747
        %v6749 = vpop.f32.mrf.mxu0
        %v6750 = vadd.f32 %v6701, %v6749
        %6751 = vdwg.mxu0
        %6752 = vmatpush.bf16.msra.mxu0 %v6581
        %6753 = vmatpush.bf16.msra.mxu0 %v6580
        %6754 = vmatpush.bf16.msra.mxu0 %v6579
        %6755 = vmatpush.bf16.msra.mxu0 %v6578
        %6756 = vmatpush.bf16.msra.mxu0 %v6577
        %6757 = vmatpush.bf16.msra.mxu0 %v6576
        %6758 = vmatpush.bf16.msra.mxu0 %v6575
        %6759 = vmatpush.bf16.msra.mxu0 %v6574
        %6760 = vmatmul.bf16.gmra.mxu0 %v6344
        %v6761 = vpop.f32.mrf.mxu0
        %v6762 = vadd.f32 %v6713, %v6761
        %v6763 = vpop.f32.mrf.mxu0
        %v6764 = vadd.f32 %v6715, %v6763
        %6765 = vmatmul.bf16.gmra.mxu0 %v6349
        %v6766 = vpop.f32.mrf.mxu0
        %v6767 = vadd.f32 %v6718, %v6766
        %v6768 = vpop.f32.mrf.mxu0
        %v6769 = vadd.f32 %v6720, %v6768
        %6770 = vmatmul.bf16.gmra.mxu0 %v6354
        %v6771 = vpop.f32.mrf.mxu0
        %v6772 = vadd.f32 %v6723, %v6771
        %v6773 = vpop.f32.mrf.mxu0
        %v6774 = vadd.f32 %v6725, %v6773
        %6775 = vmatmul.bf16.gmra.mxu0 %v6359
        %v6776 = vpop.f32.mrf.mxu0
        %v6777 = vadd.f32 %v6728, %v6776
        %v6778 = vpop.f32.mrf.mxu0
        %v6779 = vadd.f32 %v6730, %v6778
        %6780 = vmatmul.bf16.gmra.mxu0 %v6364
        %v6781 = vpop.f32.mrf.mxu0
        %v6782 = vadd.f32 %v6733, %v6781
        %v6783 = vpop.f32.mrf.mxu0
        %v6784 = vadd.f32 %v6735, %v6783
        %6785 = vmatmul.bf16.gmra.mxu0 %v6369
        %v6786 = vpop.f32.mrf.mxu0
        %v6787 = vadd.f32 %v6738, %v6786
        %v6788 = vpop.f32.mrf.mxu0
        %v6789 = vadd.f32 %v6740, %v6788
        %6790 = vmatmul.bf16.gmra.mxu0 %v6374
        %v6791 = vpop.f32.mrf.mxu0
        %v6792 = vadd.f32 %v6743, %v6791
        %v6793 = vpop.f32.mrf.mxu0
        %v6794 = vadd.f32 %v6745, %v6793
        %6795 = vmatmul.bf16.gmra.mxu0 %v6379
        %v6796 = vpop.f32.mrf.mxu0
        %v6797 = vadd.f32 %v6748, %v6796
        %v6798 = vpop.f32.mrf.mxu0
        %v6799 = vadd.f32 %v6750, %v6798
        %6800 = vdwg.mxu0
        %6801 = vmatpush.bf16.msra.mxu0 %v6589
        %6802 = vmatpush.bf16.msra.mxu0 %v6588
        %6803 = vmatpush.bf16.msra.mxu0 %v6587
        %6804 = vmatpush.bf16.msra.mxu0 %v6586
        %6805 = vmatpush.bf16.msra.mxu0 %v6585
        %6806 = vmatpush.bf16.msra.mxu0 %v6584
        %6807 = vmatpush.bf16.msra.mxu0 %v6583
        %6808 = vmatpush.bf16.msra.mxu0 %v6582
        %6809 = vmatmul.bf16.gmra.mxu0 %v6345
        %v6810 = vpop.f32.mrf.mxu0
        %v6811 = vadd.f32 %v6762, %v6810
        %v6812 = vpop.f32.mrf.mxu0
        %v6813 = vadd.f32 %v6764, %v6812
        %6814 = vmatmul.bf16.gmra.mxu0 %v6350
        %v6815 = vpop.f32.mrf.mxu0
        %v6816 = vadd.f32 %v6767, %v6815
        %v6817 = vpop.f32.mrf.mxu0
        %v6818 = vadd.f32 %v6769, %v6817
        %6819 = vmatmul.bf16.gmra.mxu0 %v6355
        %v6820 = vpop.f32.mrf.mxu0
        %v6821 = vadd.f32 %v6772, %v6820
        %v6822 = vpop.f32.mrf.mxu0
        %v6823 = vadd.f32 %v6774, %v6822
        %6824 = vmatmul.bf16.gmra.mxu0 %v6360
        %v6825 = vpop.f32.mrf.mxu0
        %v6826 = vadd.f32 %v6777, %v6825
        %v6827 = vpop.f32.mrf.mxu0
        %v6828 = vadd.f32 %v6779, %v6827
        %6829 = vmatmul.bf16.gmra.mxu0 %v6365
        %v6830 = vpop.f32.mrf.mxu0
        %v6831 = vadd.f32 %v6782, %v6830
        %v6832 = vpop.f32.mrf.mxu0
        %v6833 = vadd.f32 %v6784, %v6832
        %6834 = vmatmul.bf16.gmra.mxu0 %v6370
        %v6835 = vpop.f32.mrf.mxu0
        %v6836 = vadd.f32 %v6787, %v6835
        %v6837 = vpop.f32.mrf.mxu0
        %v6838 = vadd.f32 %v6789, %v6837
        %6839 = vmatmul.bf16.gmra.mxu0 %v6375
        %v6840 = vpop.f32.mrf.mxu0
        %v6841 = vadd.f32 %v6792, %v6840
        %v6842 = vpop.f32.mrf.mxu0
        %v6843 = vadd.f32 %v6794, %v6842
        %6844 = vmatmul.bf16.gmra.mxu0 %v6380
        %v6845 = vpop.f32.mrf.mxu0
        %v6846 = vadd.f32 %v6797, %v6845
        %v6847 = vpop.f32.mrf.mxu0
        %v6848 = vadd.f32 %v6799, %v6847
        %6849 = vdwg.mxu0
        %6850 = vmatpush.bf16.msra.mxu0 0
        %6851 = vmatpush.bf16.msra.mxu0 0
        %6852 = vmatpush.bf16.msra.mxu0 0
        %6853 = vmatpush.bf16.msra.mxu0 0
        %6854 = vmatpush.bf16.msra.mxu0 %v6593
        %6855 = vmatpush.bf16.msra.mxu0 %v6592
        %6856 = vmatpush.bf16.msra.mxu0 %v6591
        %6857 = vmatpush.bf16.msra.mxu0 %v6590
        %6858 = vmatmul.bf16.gmra.mxu0 %v6631
        %v6859 = vpop.f32.mrf.mxu0
        %v6860 = vadd.f32 %v6811, %v6859
        %v6861 = vpop.f32.mrf.mxu0
        %v6862 = vadd.f32 %v6813, %v6861
        %6863 = vmatmul.bf16.gmra.mxu0 %v6634
        %v6864 = vpop.f32.mrf.mxu0
        %v6865 = vadd.f32 %v6816, %v6864
        %v6866 = vpop.f32.mrf.mxu0
        %v6867 = vadd.f32 %v6818, %v6866
        %6868 = vmatmul.bf16.gmra.mxu0 %v6637
        %v6869 = vpop.f32.mrf.mxu0
        %v6870 = vadd.f32 %v6821, %v6869
        %v6871 = vpop.f32.mrf.mxu0
        %v6872 = vadd.f32 %v6823, %v6871
        %6873 = vmatmul.bf16.gmra.mxu0 %v6640
        %v6874 = vpop.f32.mrf.mxu0
        %v6875 = vadd.f32 %v6826, %v6874
        %v6876 = vpop.f32.mrf.mxu0
        %v6877 = vadd.f32 %v6828, %v6876
        %6878 = vmatmul.bf16.gmra.mxu0 %v6643
        %v6879 = vpop.f32.mrf.mxu0
        %v6880 = vadd.f32 %v6831, %v6879
        %v6881 = vpop.f32.mrf.mxu0
        %v6882 = vadd.f32 %v6833, %v6881
        %6883 = vmatmul.bf16.gmra.mxu0 %v6646
        %v6884 = vpop.f32.mrf.mxu0
        %v6885 = vadd.f32 %v6836, %v6884
        %v6886 = vpop.f32.mrf.mxu0
        %v6887 = vadd.f32 %v6838, %v6886
        %6888 = vmatmul.bf16.gmra.mxu0 %v6649
        %v6889 = vpop.f32.mrf.mxu0
        %v6890 = vadd.f32 %v6841, %v6889
        %v6891 = vpop.f32.mrf.mxu0
        %v6892 = vadd.f32 %v6843, %v6891
        %6893 = vmatmul.bf16.gmra.mxu0 %v6652
        %v6894 = vpop.f32.mrf.mxu0
        %v6895 = vadd.f32 %v6846, %v6894
        %v6896 = vpop.f32.mrf.mxu0
        %v6897 = vadd.f32 %v6848, %v6896
        %6898 = vdwg.mxu0
        %vm6899 = vcmask 31744
        %v6900 = vsel %vm6899, %v6860, 0.0
        %6901 = vadd.xlane.f32.xlu0 %v6900
        %v6902 = vpop.xlane.xlu0 %6901
        %v6903 = vsel %vm6899, %v6862, 0.0
        %6904 = vadd.xlane.f32.xlu0 %v6903
        %v6905 = vpop.xlane.xlu0 %6904
        %v6906 = vsel %vm6899, %v6865, 0.0
        %6907 = vadd.xlane.f32.xlu0 %v6906
        %v6908 = vpop.xlane.xlu0 %6907
        %v6909 = vsel %vm6899, %v6867, 0.0
        %6910 = vadd.xlane.f32.xlu0 %v6909
        %v6911 = vpop.xlane.xlu0 %6910
        %v6912 = vsel %vm6899, %v6870, 0.0
        %6913 = vadd.xlane.f32.xlu0 %v6912
        %v6914 = vpop.xlane.xlu0 %6913
        %v6915 = vsel %vm6899, %v6872, 0.0
        %6916 = vadd.xlane.f32.xlu0 %v6915
        %v6917 = vpop.xlane.xlu0 %6916
        %v6918 = vsel %vm6899, %v6875, 0.0
        %6919 = vadd.xlane.f32.xlu0 %v6918
        %v6920 = vpop.xlane.xlu0 %6919
        %v6921 = vsel %vm6899, %v6877, 0.0
        %6922 = vadd.xlane.f32.xlu0 %v6921
        %v6923 = vpop.xlane.xlu0 %6922
        %v6924 = vsel %vm6899, %v6880, 0.0
        %6925 = vadd.xlane.f32.xlu0 %v6924
        %v6926 = vpop.xlane.xlu0 %6925
        %v6927 = vsel %vm6899, %v6882, 0.0
        %6928 = vadd.xlane.f32.xlu0 %v6927
        %v6929 = vpop.xlane.xlu0 %6928
        %v6930 = vsel %vm6899, %v6885, 0.0
        %6931 = vadd.xlane.f32.xlu0 %v6930
        %v6932 = vpop.xlane.xlu0 %6931
        %v6933 = vsel %vm6899, %v6887, 0.0
        %6934 = vadd.xlane.f32.xlu0 %v6933
        %v6935 = vpop.xlane.xlu0 %6934
        %v6936 = vsel %vm6899, %v6890, 0.0
        %6937 = vadd.xlane.f32.xlu0 %v6936
        %v6938 = vpop.xlane.xlu0 %6937
        %v6939 = vsel %vm6899, %v6892, 0.0
        %6940 = vadd.xlane.f32.xlu0 %v6939
        %v6941 = vpop.xlane.xlu0 %6940
        %v6942 = vsel %vm6899, %v6895, 0.0
        %6943 = vadd.xlane.f32.xlu0 %v6942
        %v6944 = vpop.xlane.xlu0 %6943
        %v6945 = vsel %vm6899, %v6897, 0.0
        %6946 = vadd.xlane.f32.xlu0 %v6945
        %v6947 = vpop.xlane.xlu0 %6946
        %v6948 = vmul.f32 %v6902, 0.25
        %v6949 = vmul.f32 %v6905, 0.25
        %v6950 = vmul.f32 %v6908, 0.25
        %v6951 = vmul.f32 %v6911, 0.25
        %v6952 = vmul.f32 %v6914, 0.25
        %v6953 = vmul.f32 %v6917, 0.25
        %v6954 = vmul.f32 %v6920, 0.25
        %v6955 = vmul.f32 %v6923, 0.25
        %v6956 = vmul.f32 %v6926, 0.25
        %v6957 = vmul.f32 %v6929, 0.25
        %v6958 = vmul.f32 %v6932, 0.25
        %v6959 = vmul.f32 %v6935, 0.25
        %v6960 = vmul.f32 %v6938, 0.25
        %v6961 = vmul.f32 %v6941, 0.25
        %v6962 = vmul.f32 %v6944, 0.25
        %v6963 = vmul.f32 %v6947, 0.25
        %v6964 = vmul.f32 %v6860, %v6860
        %v6965 = vmul.f32 %v6862, %v6862
        %v6966 = vmul.f32 %v6865, %v6865
        %v6967 = vmul.f32 %v6867, %v6867
        %v6968 = vmul.f32 %v6870, %v6870
        %v6969 = vmul.f32 %v6872, %v6872
        %v6970 = vmul.f32 %v6875, %v6875
        %v6971 = vmul.f32 %v6877, %v6877
        %v6972 = vmul.f32 %v6880, %v6880
        %v6973 = vmul.f32 %v6882, %v6882
        %v6974 = vmul.f32 %v6885, %v6885
        %v6975 = vmul.f32 %v6887, %v6887
        %v6976 = vmul.f32 %v6890, %v6890
        %v6977 = vmul.f32 %v6892, %v6892
        %v6978 = vmul.f32 %v6895, %v6895
        %v6979 = vmul.f32 %v6897, %v6897
        %v6980 = vsel %vm6899, %v6964, 0.0
        %6981 = vadd.xlane.f32.xlu0 %v6980
        %v6982 = vpop.xlane.xlu0 %6981
        %v6983 = vsel %vm6899, %v6965, 0.0
        %6984 = vadd.xlane.f32.xlu0 %v6983
        %v6985 = vpop.xlane.xlu0 %6984
        %v6986 = vsel %vm6899, %v6966, 0.0
        %6987 = vadd.xlane.f32.xlu0 %v6986
        %v6988 = vpop.xlane.xlu0 %6987
        %v6989 = vsel %vm6899, %v6967, 0.0
        %6990 = vadd.xlane.f32.xlu0 %v6989
        %v6991 = vpop.xlane.xlu0 %6990
        %v6992 = vsel %vm6899, %v6968, 0.0
        %6993 = vadd.xlane.f32.xlu0 %v6992
        %v6994 = vpop.xlane.xlu0 %6993
        %v6995 = vsel %vm6899, %v6969, 0.0
        %6996 = vadd.xlane.f32.xlu0 %v6995
        %v6997 = vpop.xlane.xlu0 %6996
        %v6998 = vsel %vm6899, %v6970, 0.0
        %6999 = vadd.xlane.f32.xlu0 %v6998
        %v7000 = vpop.xlane.xlu0 %6999
        %v7001 = vsel %vm6899, %v6971, 0.0
        %7002 = vadd.xlane.f32.xlu0 %v7001
        %v7003 = vpop.xlane.xlu0 %7002
        %v7004 = vsel %vm6899, %v6972, 0.0
        %7005 = vadd.xlane.f32.xlu0 %v7004
        %v7006 = vpop.xlane.xlu0 %7005
        %v7007 = vsel %vm6899, %v6973, 0.0
        %7008 = vadd.xlane.f32.xlu0 %v7007
        %v7009 = vpop.xlane.xlu0 %7008
        %v7010 = vsel %vm6899, %v6974, 0.0
        %7011 = vadd.xlane.f32.xlu0 %v7010
        %v7012 = vpop.xlane.xlu0 %7011
        %v7013 = vsel %vm6899, %v6975, 0.0
        %7014 = vadd.xlane.f32.xlu0 %v7013
        %v7015 = vpop.xlane.xlu0 %7014
        %v7016 = vsel %vm6899, %v6976, 0.0
        %7017 = vadd.xlane.f32.xlu0 %v7016
        %v7018 = vpop.xlane.xlu0 %7017
        %v7019 = vsel %vm6899, %v6977, 0.0
        %7020 = vadd.xlane.f32.xlu0 %v7019
        %v7021 = vpop.xlane.xlu0 %7020
        %v7022 = vsel %vm6899, %v6978, 0.0
        %7023 = vadd.xlane.f32.xlu0 %v7022
        %v7024 = vpop.xlane.xlu0 %7023
        %v7025 = vsel %vm6899, %v6979, 0.0
        %7026 = vadd.xlane.f32.xlu0 %v7025
        %v7027 = vpop.xlane.xlu0 %7026
        %v7028 = vmul.f32 %v6982, 0.25
        %v7029 = vmul.f32 %v6985, 0.25
        %v7030 = vmul.f32 %v6988, 0.25
        %v7031 = vmul.f32 %v6991, 0.25
        %v7032 = vmul.f32 %v6994, 0.25
        %v7033 = vmul.f32 %v6997, 0.25
        %v7034 = vmul.f32 %v7000, 0.25
        %v7035 = vmul.f32 %v7003, 0.25
        %v7036 = vmul.f32 %v7006, 0.25
        %v7037 = vmul.f32 %v7009, 0.25
        %v7038 = vmul.f32 %v7012, 0.25
        %v7039 = vmul.f32 %v7015, 0.25
        %v7040 = vmul.f32 %v7018, 0.25
        %v7041 = vmul.f32 %v7021, 0.25
        %v7042 = vmul.f32 %v7024, 0.25
        %v7043 = vmul.f32 %v7027, 0.25
        %v7044 = vmul.f32 %v6948, %v6948
        %v7045 = vmul.f32 %v6949, %v6949
        %v7046 = vmul.f32 %v6950, %v6950
        %v7047 = vmul.f32 %v6951, %v6951
        %v7048 = vmul.f32 %v6952, %v6952
        %v7049 = vmul.f32 %v6953, %v6953
        %v7050 = vmul.f32 %v6954, %v6954
        %v7051 = vmul.f32 %v6955, %v6955
        %v7052 = vmul.f32 %v6956, %v6956
        %v7053 = vmul.f32 %v6957, %v6957
        %v7054 = vmul.f32 %v6958, %v6958
        %v7055 = vmul.f32 %v6959, %v6959
        %v7056 = vmul.f32 %v6960, %v6960
        %v7057 = vmul.f32 %v6961, %v6961
        %v7058 = vmul.f32 %v6962, %v6962
        %v7059 = vmul.f32 %v6963, %v6963
        %v7060 = vsub.f32 %v7028, %v7044
        %v7061 = vsub.f32 %v7029, %v7045
        %v7062 = vsub.f32 %v7030, %v7046
        %v7063 = vsub.f32 %v7031, %v7047
        %v7064 = vsub.f32 %v7032, %v7048
        %v7065 = vsub.f32 %v7033, %v7049
        %v7066 = vsub.f32 %v7034, %v7050
        %v7067 = vsub.f32 %v7035, %v7051
        %v7068 = vsub.f32 %v7036, %v7052
        %v7069 = vsub.f32 %v7037, %v7053
        %v7070 = vsub.f32 %v7038, %v7054
        %v7071 = vsub.f32 %v7039, %v7055
        %v7072 = vsub.f32 %v7040, %v7056
        %v7073 = vsub.f32 %v7041, %v7057
        %v7074 = vsub.f32 %v7042, %v7058
        %v7075 = vsub.f32 %v7043, %v7059
        %v7076 = vmax.f32 %v7060, 0.0
        %v7077 = vmax.f32 %v7061, 0.0
        %v7078 = vmax.f32 %v7062, 0.0
        %v7079 = vmax.f32 %v7063, 0.0
        %v7080 = vmax.f32 %v7064, 0.0
        %v7081 = vmax.f32 %v7065, 0.0
        %v7082 = vmax.f32 %v7066, 0.0
        %v7083 = vmax.f32 %v7067, 0.0
        %v7084 = vmax.f32 %v7068, 0.0
        %v7085 = vmax.f32 %v7069, 0.0
        %v7086 = vmax.f32 %v7070, 0.0
        %v7087 = vmax.f32 %v7071, 0.0
        %v7088 = vmax.f32 %v7072, 0.0
        %v7089 = vmax.f32 %v7073, 0.0
        %v7090 = vmax.f32 %v7074, 0.0
        %v7091 = vmax.f32 %v7075, 0.0
        %v7092 = vsub.f32 %v6860, %v6948
        %v7093 = vsub.f32 %v6862, %v6949
        %v7094 = vsub.f32 %v6865, %v6950
        %v7095 = vsub.f32 %v6867, %v6951
        %v7096 = vsub.f32 %v6870, %v6952
        %v7097 = vsub.f32 %v6872, %v6953
        %v7098 = vsub.f32 %v6875, %v6954
        %v7099 = vsub.f32 %v6877, %v6955
        %v7100 = vsub.f32 %v6880, %v6956
        %v7101 = vsub.f32 %v6882, %v6957
        %v7102 = vsub.f32 %v6885, %v6958
        %v7103 = vsub.f32 %v6887, %v6959
        %v7104 = vsub.f32 %v6890, %v6960
        %v7105 = vsub.f32 %v6892, %v6961
        %v7106 = vsub.f32 %v6895, %v6962
        %v7107 = vsub.f32 %v6897, %v6963
        %v7108 = vadd.f32 %v7076, 1e-05
        %v7109 = vadd.f32 %v7077, 1e-05
        %v7110 = vadd.f32 %v7078, 1e-05
        %v7111 = vadd.f32 %v7079, 1e-05
        %v7112 = vadd.f32 %v7080, 1e-05
        %v7113 = vadd.f32 %v7081, 1e-05
        %v7114 = vadd.f32 %v7082, 1e-05
        %v7115 = vadd.f32 %v7083, 1e-05
        %v7116 = vadd.f32 %v7084, 1e-05
        %v7117 = vadd.f32 %v7085, 1e-05
        %v7118 = vadd.f32 %v7086, 1e-05
        %v7119 = vadd.f32 %v7087, 1e-05
        %v7120 = vadd.f32 %v7088, 1e-05
        %v7121 = vadd.f32 %v7089, 1e-05
        %v7122 = vadd.f32 %v7090, 1e-05
        %v7123 = vadd.f32 %v7091, 1e-05
        %v7124 = vrsqrt.pop %v7108
        %v7125 = vmul.f32 %v7124, %v7108
        %v7126 = vmul.f32 %v7125, %v7124
        %v7127 = vmul.f32 0.5, %v7126
        %v7128 = vsub.f32 1.5, %v7127
        %v7129 = vmul.f32 %v7124, %v7128
        %vm7130 = vweird.f32 %v7108
        %vm7131 = vweird.f32 %v7124
        %vm7132 = vmor %vm7130, %vm7131
        %v7133 = vsel %vm7132, %v7124, %v7129
        %v7134 = vrsqrt.pop %v7109
        %v7135 = vmul.f32 %v7134, %v7109
        %v7136 = vmul.f32 %v7135, %v7134
        %v7137 = vmul.f32 0.5, %v7136
        %v7138 = vsub.f32 1.5, %v7137
        %v7139 = vmul.f32 %v7134, %v7138
        %vm7140 = vweird.f32 %v7109
        %vm7141 = vweird.f32 %v7134
        %vm7142 = vmor %vm7140, %vm7141
        %v7143 = vsel %vm7142, %v7134, %v7139
        %v7144 = vrsqrt.pop %v7110
        %v7145 = vmul.f32 %v7144, %v7110
        %v7146 = vmul.f32 %v7145, %v7144
        %v7147 = vmul.f32 0.5, %v7146
        %v7148 = vsub.f32 1.5, %v7147
        %v7149 = vmul.f32 %v7144, %v7148
        %vm7150 = vweird.f32 %v7110
        %vm7151 = vweird.f32 %v7144
        %vm7152 = vmor %vm7150, %vm7151
        %v7153 = vsel %vm7152, %v7144, %v7149
        %v7154 = vrsqrt.pop %v7111
        %v7155 = vmul.f32 %v7154, %v7111
        %v7156 = vmul.f32 %v7155, %v7154
        %v7157 = vmul.f32 0.5, %v7156
        %v7158 = vsub.f32 1.5, %v7157
        %v7159 = vmul.f32 %v7154, %v7158
        %vm7160 = vweird.f32 %v7111
        %vm7161 = vweird.f32 %v7154
        %vm7162 = vmor %vm7160, %vm7161
        %v7163 = vsel %vm7162, %v7154, %v7159
        %v7164 = vrsqrt.pop %v7112
        %v7165 = vmul.f32 %v7164, %v7112
        %v7166 = vmul.f32 %v7165, %v7164
        %v7167 = vmul.f32 0.5, %v7166
        %v7168 = vsub.f32 1.5, %v7167
        %v7169 = vmul.f32 %v7164, %v7168
        %vm7170 = vweird.f32 %v7112
        %vm7171 = vweird.f32 %v7164
        %vm7172 = vmor %vm7170, %vm7171
        %v7173 = vsel %vm7172, %v7164, %v7169
        %v7174 = vrsqrt.pop %v7113
        %v7175 = vmul.f32 %v7174, %v7113
        %v7176 = vmul.f32 %v7175, %v7174
        %v7177 = vmul.f32 0.5, %v7176
        %v7178 = vsub.f32 1.5, %v7177
        %v7179 = vmul.f32 %v7174, %v7178
        %vm7180 = vweird.f32 %v7113
        %vm7181 = vweird.f32 %v7174
        %vm7182 = vmor %vm7180, %vm7181
        %v7183 = vsel %vm7182, %v7174, %v7179
        %v7184 = vrsqrt.pop %v7114
        %v7185 = vmul.f32 %v7184, %v7114
        %v7186 = vmul.f32 %v7185, %v7184
        %v7187 = vmul.f32 0.5, %v7186
        %v7188 = vsub.f32 1.5, %v7187
        %v7189 = vmul.f32 %v7184, %v7188
        %vm7190 = vweird.f32 %v7114
        %vm7191 = vweird.f32 %v7184
        %vm7192 = vmor %vm7190, %vm7191
        %v7193 = vsel %vm7192, %v7184, %v7189
        %v7194 = vrsqrt.pop %v7115
        %v7195 = vmul.f32 %v7194, %v7115
        %v7196 = vmul.f32 %v7195, %v7194
        %v7197 = vmul.f32 0.5, %v7196
        %v7198 = vsub.f32 1.5, %v7197
        %v7199 = vmul.f32 %v7194, %v7198
        %vm7200 = vweird.f32 %v7115
        %vm7201 = vweird.f32 %v7194
        %vm7202 = vmor %vm7200, %vm7201
        %v7203 = vsel %vm7202, %v7194, %v7199
        %v7204 = vrsqrt.pop %v7116
        %v7205 = vmul.f32 %v7204, %v7116
        %v7206 = vmul.f32 %v7205, %v7204
        %v7207 = vmul.f32 0.5, %v7206
        %v7208 = vsub.f32 1.5, %v7207
        %v7209 = vmul.f32 %v7204, %v7208
        %vm7210 = vweird.f32 %v7116
        %vm7211 = vweird.f32 %v7204
        %vm7212 = vmor %vm7210, %vm7211
        %v7213 = vsel %vm7212, %v7204, %v7209
        %v7214 = vrsqrt.pop %v7117
        %v7215 = vmul.f32 %v7214, %v7117
        %v7216 = vmul.f32 %v7215, %v7214
        %v7217 = vmul.f32 0.5, %v7216
        %v7218 = vsub.f32 1.5, %v7217
        %v7219 = vmul.f32 %v7214, %v7218
        %vm7220 = vweird.f32 %v7117
        %vm7221 = vweird.f32 %v7214
        %vm7222 = vmor %vm7220, %vm7221
        %v7223 = vsel %vm7222, %v7214, %v7219
        %v7224 = vrsqrt.pop %v7118
        %v7225 = vmul.f32 %v7224, %v7118
        %v7226 = vmul.f32 %v7225, %v7224
        %v7227 = vmul.f32 0.5, %v7226
        %v7228 = vsub.f32 1.5, %v7227
        %v7229 = vmul.f32 %v7224, %v7228
        %vm7230 = vweird.f32 %v7118
        %vm7231 = vweird.f32 %v7224
        %vm7232 = vmor %vm7230, %vm7231
        %v7233 = vsel %vm7232, %v7224, %v7229
        %v7234 = vrsqrt.pop %v7119
        %v7235 = vmul.f32 %v7234, %v7119
        %v7236 = vmul.f32 %v7235, %v7234
        %v7237 = vmul.f32 0.5, %v7236
        %v7238 = vsub.f32 1.5, %v7237
        %v7239 = vmul.f32 %v7234, %v7238
        %vm7240 = vweird.f32 %v7119
        %vm7241 = vweird.f32 %v7234
        %vm7242 = vmor %vm7240, %vm7241
        %v7243 = vsel %vm7242, %v7234, %v7239
        %v7244 = vrsqrt.pop %v7120
        %v7245 = vmul.f32 %v7244, %v7120
        %v7246 = vmul.f32 %v7245, %v7244
        %v7247 = vmul.f32 0.5, %v7246
        %v7248 = vsub.f32 1.5, %v7247
        %v7249 = vmul.f32 %v7244, %v7248
        %vm7250 = vweird.f32 %v7120
        %vm7251 = vweird.f32 %v7244
        %vm7252 = vmor %vm7250, %vm7251
        %v7253 = vsel %vm7252, %v7244, %v7249
        %v7254 = vrsqrt.pop %v7121
        %v7255 = vmul.f32 %v7254, %v7121
        %v7256 = vmul.f32 %v7255, %v7254
        %v7257 = vmul.f32 0.5, %v7256
        %v7258 = vsub.f32 1.5, %v7257
        %v7259 = vmul.f32 %v7254, %v7258
        %vm7260 = vweird.f32 %v7121
        %vm7261 = vweird.f32 %v7254
        %vm7262 = vmor %vm7260, %vm7261
        %v7263 = vsel %vm7262, %v7254, %v7259
        %v7264 = vrsqrt.pop %v7122
        %v7265 = vmul.f32 %v7264, %v7122
        %v7266 = vmul.f32 %v7265, %v7264
        %v7267 = vmul.f32 0.5, %v7266
        %v7268 = vsub.f32 1.5, %v7267
        %v7269 = vmul.f32 %v7264, %v7268
        %vm7270 = vweird.f32 %v7122
        %vm7271 = vweird.f32 %v7264
        %vm7272 = vmor %vm7270, %vm7271
        %v7273 = vsel %vm7272, %v7264, %v7269
        %v7274 = vrsqrt.pop %v7123
        %v7275 = vmul.f32 %v7274, %v7123
        %v7276 = vmul.f32 %v7275, %v7274
        %v7277 = vmul.f32 0.5, %v7276
        %v7278 = vsub.f32 1.5, %v7277
        %v7279 = vmul.f32 %v7274, %v7278
        %vm7280 = vweird.f32 %v7123
        %vm7281 = vweird.f32 %v7274
        %vm7282 = vmor %vm7280, %vm7281
        %v7283 = vsel %vm7282, %v7274, %v7279
        %v7284 = vmul.f32 %v7092, %v7133
        %v7285 = vmul.f32 %v7093, %v7143
        %v7286 = vmul.f32 %v7094, %v7153
        %v7287 = vmul.f32 %v7095, %v7163
        %v7288 = vmul.f32 %v7096, %v7173
        %v7289 = vmul.f32 %v7097, %v7183
        %v7290 = vmul.f32 %v7098, %v7193
        %v7291 = vmul.f32 %v7099, %v7203
        %v7292 = vmul.f32 %v7100, %v7213
        %v7293 = vmul.f32 %v7101, %v7223
        %v7294 = vmul.f32 %v7102, %v7233
        %v7295 = vmul.f32 %v7103, %v7243
        %v7296 = vmul.f32 %v7104, %v7253
        %v7297 = vmul.f32 %v7105, %v7263
        %v7298 = vmul.f32 %v7106, %v7273
        %v7299 = vmul.f32 %v7107, %v7283
        %v7300 = vmul.f32 %v7284, 0.5
        %v7301 = vmul.f32 %v7285, 0.5
        %v7302 = vmul.f32 %v7286, 0.5
        %v7303 = vmul.f32 %v7287, 0.5
        %v7304 = vmul.f32 %v7288, 0.5
        %v7305 = vmul.f32 %v7289, 0.5
        %v7306 = vmul.f32 %v7290, 0.5
        %v7307 = vmul.f32 %v7291, 0.5
        %v7308 = vmul.f32 %v7292, 0.5
        %v7309 = vmul.f32 %v7293, 0.5
        %v7310 = vmul.f32 %v7294, 0.5
        %v7311 = vmul.f32 %v7295, 0.5
        %v7312 = vmul.f32 %v7296, 0.5
        %v7313 = vmul.f32 %v7297, 0.5
        %v7314 = vmul.f32 %v7298, 0.5
        %v7315 = vmul.f32 %v7299, 0.5
        %v7316 = vmul.f32 %v7284, 0.70710677
        %v7317 = vmul.f32 %v7285, 0.70710677
        %v7318 = vmul.f32 %v7286, 0.70710677
        %v7319 = vmul.f32 %v7287, 0.70710677
        %v7320 = vmul.f32 %v7288, 0.70710677
        %v7321 = vmul.f32 %v7289, 0.70710677
        %v7322 = vmul.f32 %v7290, 0.70710677
        %v7323 = vmul.f32 %v7291, 0.70710677
        %v7324 = vmul.f32 %v7292, 0.70710677
        %v7325 = vmul.f32 %v7293, 0.70710677
        %v7326 = vmul.f32 %v7294, 0.70710677
        %v7327 = vmul.f32 %v7295, 0.70710677
        %v7328 = vmul.f32 %v7296, 0.70710677
        %v7329 = vmul.f32 %v7297, 0.70710677
        %v7330 = vmul.f32 %v7298, 0.70710677
        %v7331 = vmul.f32 %v7299, 0.70710677
        %v7332 = vmul.f32 %v7316, %v7316
        %v7333 = vmin.f32 16.0, %v7332
        %v7334 = vmul.f32 %v7333, 2.1237322e-06
        %v7335 = vadd.f32 %v7334, 0.00028619796
        %v7336 = vmul.f32 %v7333, %v7335
        %v7337 = vadd.f32 %v7336, 0.0036580483
        %v7338 = vmul.f32 %v7333, %v7337
        %v7339 = vadd.f32 %v7338, 0.05243302
        %v7340 = vmul.f32 %v7333, %v7339
        %v7341 = vadd.f32 %v7340, 0.18741608
        %v7342 = vmul.f32 %v7333, %v7341
        %v7343 = vadd.f32 %v7342, 1.1283791
        %v7344 = vmul.f32 %v7316, %v7343
        %v7345 = vmul.f32 %v7333, 3.8918573e-05
        %v7346 = vadd.f32 %v7345, 0.001143296
        %v7347 = vmul.f32 %v7333, %v7346
        %v7348 = vadd.f32 %v7347, 0.014752088
        %v7349 = vmul.f32 %v7333, %v7348
        %v7350 = vadd.f32 %v7349, 0.112945676
        %v7351 = vmul.f32 %v7333, %v7350
        %v7352 = vadd.f32 %v7351, 0.4994258
        %v7353 = vmul.f32 %v7333, %v7352
        %v7354 = vadd.f32 %v7353, 1.0
        %v7355 = vrcp.pop %v7354
        %v7356 = vmul.f32 %v7354, %v7355
        %v7357 = vsub.f32 1.0, %v7356
        %v7358 = vmul.f32 %v7355, %v7357
        %v7359 = vadd.f32 %v7355, %v7358
        %vm7360 = vweird.f32 %v7354
        %vm7361 = vweird.f32 %v7355
        %vm7362 = vmor %vm7360, %vm7361
        %v7363 = vsel %vm7362, %v7355, %v7359
        %v7364 = vand.u32 2147483647, %v7354
        %vm7365 = vcmp.eq.f32.partialorder %v7364, 8.507059e+37
        %v7366 = vand.u32 %v7354, 2147483648
        %v7367 = vor.u32 1.1754944e-38, %v7366
        %v7368 = vsel %vm7365, %v7367, %v7363
        %v7369 = vmul.f32 %v7344, %v7368
        %v7370 = vmin.f32 %v7369, 1.0
        %v7371 = vmax.f32 %v7370, -1.0
        %v7372 = vmul.f32 %v7317, %v7317
        %v7373 = vmin.f32 16.0, %v7372
        %v7374 = vmul.f32 %v7373, 2.1237322e-06
        %v7375 = vadd.f32 %v7374, 0.00028619796
        %v7376 = vmul.f32 %v7373, %v7375
        %v7377 = vadd.f32 %v7376, 0.0036580483
        %v7378 = vmul.f32 %v7373, %v7377
        %v7379 = vadd.f32 %v7378, 0.05243302
        %v7380 = vmul.f32 %v7373, %v7379
        %v7381 = vadd.f32 %v7380, 0.18741608
        %v7382 = vmul.f32 %v7373, %v7381
        %v7383 = vadd.f32 %v7382, 1.1283791
        %v7384 = vmul.f32 %v7317, %v7383
        %v7385 = vmul.f32 %v7373, 3.8918573e-05
        %v7386 = vadd.f32 %v7385, 0.001143296
        %v7387 = vmul.f32 %v7373, %v7386
        %v7388 = vadd.f32 %v7387, 0.014752088
        %v7389 = vmul.f32 %v7373, %v7388
        %v7390 = vadd.f32 %v7389, 0.112945676
        %v7391 = vmul.f32 %v7373, %v7390
        %v7392 = vadd.f32 %v7391, 0.4994258
        %v7393 = vmul.f32 %v7373, %v7392
        %v7394 = vadd.f32 %v7393, 1.0
        %v7395 = vrcp.pop %v7394
        %v7396 = vmul.f32 %v7394, %v7395
        %v7397 = vsub.f32 1.0, %v7396
        %v7398 = vmul.f32 %v7395, %v7397
        %v7399 = vadd.f32 %v7395, %v7398
        %vm7400 = vweird.f32 %v7394
        %vm7401 = vweird.f32 %v7395
        %vm7402 = vmor %vm7400, %vm7401
        %v7403 = vsel %vm7402, %v7395, %v7399
        %v7404 = vand.u32 2147483647, %v7394
        %vm7405 = vcmp.eq.f32.partialorder %v7404, 8.507059e+37
        %v7406 = vand.u32 %v7394, 2147483648
        %v7407 = vor.u32 1.1754944e-38, %v7406
        %v7408 = vsel %vm7405, %v7407, %v7403
        %v7409 = vmul.f32 %v7384, %v7408
        %v7410 = vmin.f32 %v7409, 1.0
        %v7411 = vmax.f32 %v7410, -1.0
        %v7412 = vmul.f32 %v7318, %v7318
        %v7413 = vmin.f32 16.0, %v7412
        %v7414 = vmul.f32 %v7413, 2.1237322e-06
        %v7415 = vadd.f32 %v7414, 0.00028619796
        %v7416 = vmul.f32 %v7413, %v7415
        %v7417 = vadd.f32 %v7416, 0.0036580483
        %v7418 = vmul.f32 %v7413, %v7417
        %v7419 = vadd.f32 %v7418, 0.05243302
        %v7420 = vmul.f32 %v7413, %v7419
        %v7421 = vadd.f32 %v7420, 0.18741608
        %v7422 = vmul.f32 %v7413, %v7421
        %v7423 = vadd.f32 %v7422, 1.1283791
        %v7424 = vmul.f32 %v7318, %v7423
        %v7425 = vmul.f32 %v7413, 3.8918573e-05
        %v7426 = vadd.f32 %v7425, 0.001143296
        %v7427 = vmul.f32 %v7413, %v7426
        %v7428 = vadd.f32 %v7427, 0.014752088
        %v7429 = vmul.f32 %v7413, %v7428
        %v7430 = vadd.f32 %v7429, 0.112945676
        %v7431 = vmul.f32 %v7413, %v7430
        %v7432 = vadd.f32 %v7431, 0.4994258
        %v7433 = vmul.f32 %v7413, %v7432
        %v7434 = vadd.f32 %v7433, 1.0
        %v7435 = vrcp.pop %v7434
        %v7436 = vmul.f32 %v7434, %v7435
        %v7437 = vsub.f32 1.0, %v7436
        %v7438 = vmul.f32 %v7435, %v7437
        %v7439 = vadd.f32 %v7435, %v7438
        %vm7440 = vweird.f32 %v7434
        %vm7441 = vweird.f32 %v7435
        %vm7442 = vmor %vm7440, %vm7441
        %v7443 = vsel %vm7442, %v7435, %v7439
        %v7444 = vand.u32 2147483647, %v7434
        %vm7445 = vcmp.eq.f32.partialorder %v7444, 8.507059e+37
        %v7446 = vand.u32 %v7434, 2147483648
        %v7447 = vor.u32 1.1754944e-38, %v7446
        %v7448 = vsel %vm7445, %v7447, %v7443
        %v7449 = vmul.f32 %v7424, %v7448
        %v7450 = vmin.f32 %v7449, 1.0
        %v7451 = vmax.f32 %v7450, -1.0
        %v7452 = vmul.f32 %v7319, %v7319
        %v7453 = vmin.f32 16.0, %v7452
        %v7454 = vmul.f32 %v7453, 2.1237322e-06
        %v7455 = vadd.f32 %v7454, 0.00028619796
        %v7456 = vmul.f32 %v7453, %v7455
        %v7457 = vadd.f32 %v7456, 0.0036580483
        %v7458 = vmul.f32 %v7453, %v7457
        %v7459 = vadd.f32 %v7458, 0.05243302
        %v7460 = vmul.f32 %v7453, %v7459
        %v7461 = vadd.f32 %v7460, 0.18741608
        %v7462 = vmul.f32 %v7453, %v7461
        %v7463 = vadd.f32 %v7462, 1.1283791
        %v7464 = vmul.f32 %v7319, %v7463
        %v7465 = vmul.f32 %v7453, 3.8918573e-05
        %v7466 = vadd.f32 %v7465, 0.001143296
        %v7467 = vmul.f32 %v7453, %v7466
        %v7468 = vadd.f32 %v7467, 0.014752088
        %v7469 = vmul.f32 %v7453, %v7468
        %v7470 = vadd.f32 %v7469, 0.112945676
        %v7471 = vmul.f32 %v7453, %v7470
        %v7472 = vadd.f32 %v7471, 0.4994258
        %v7473 = vmul.f32 %v7453, %v7472
        %v7474 = vadd.f32 %v7473, 1.0
        %v7475 = vrcp.pop %v7474
        %v7476 = vmul.f32 %v7474, %v7475
        %v7477 = vsub.f32 1.0, %v7476
        %v7478 = vmul.f32 %v7475, %v7477
        %v7479 = vadd.f32 %v7475, %v7478
        %vm7480 = vweird.f32 %v7474
        %vm7481 = vweird.f32 %v7475
        %vm7482 = vmor %vm7480, %vm7481
        %v7483 = vsel %vm7482, %v7475, %v7479
        %v7484 = vand.u32 2147483647, %v7474
        %vm7485 = vcmp.eq.f32.partialorder %v7484, 8.507059e+37
        %v7486 = vand.u32 %v7474, 2147483648
        %v7487 = vor.u32 1.1754944e-38, %v7486
        %v7488 = vsel %vm7485, %v7487, %v7483
        %v7489 = vmul.f32 %v7464, %v7488
        %v7490 = vmin.f32 %v7489, 1.0
        %v7491 = vmax.f32 %v7490, -1.0
        %v7492 = vmul.f32 %v7320, %v7320
        %v7493 = vmin.f32 16.0, %v7492
        %v7494 = vmul.f32 %v7493, 2.1237322e-06
        %v7495 = vadd.f32 %v7494, 0.00028619796
        %v7496 = vmul.f32 %v7493, %v7495
        %v7497 = vadd.f32 %v7496, 0.0036580483
        %v7498 = vmul.f32 %v7493, %v7497
        %v7499 = vadd.f32 %v7498, 0.05243302
        %v7500 = vmul.f32 %v7493, %v7499
        %v7501 = vadd.f32 %v7500, 0.18741608
        %v7502 = vmul.f32 %v7493, %v7501
        %v7503 = vadd.f32 %v7502, 1.1283791
        %v7504 = vmul.f32 %v7320, %v7503
        %v7505 = vmul.f32 %v7493, 3.8918573e-05
        %v7506 = vadd.f32 %v7505, 0.001143296
        %v7507 = vmul.f32 %v7493, %v7506
        %v7508 = vadd.f32 %v7507, 0.014752088
        %v7509 = vmul.f32 %v7493, %v7508
        %v7510 = vadd.f32 %v7509, 0.112945676
        %v7511 = vmul.f32 %v7493, %v7510
        %v7512 = vadd.f32 %v7511, 0.4994258
        %v7513 = vmul.f32 %v7493, %v7512
        %v7514 = vadd.f32 %v7513, 1.0
        %v7515 = vrcp.pop %v7514
        %v7516 = vmul.f32 %v7514, %v7515
        %v7517 = vsub.f32 1.0, %v7516
        %v7518 = vmul.f32 %v7515, %v7517
        %v7519 = vadd.f32 %v7515, %v7518
        %vm7520 = vweird.f32 %v7514
        %vm7521 = vweird.f32 %v7515
        %vm7522 = vmor %vm7520, %vm7521
        %v7523 = vsel %vm7522, %v7515, %v7519
        %v7524 = vand.u32 2147483647, %v7514
        %vm7525 = vcmp.eq.f32.partialorder %v7524, 8.507059e+37
        %v7526 = vand.u32 %v7514, 2147483648
        %v7527 = vor.u32 1.1754944e-38, %v7526
        %v7528 = vsel %vm7525, %v7527, %v7523
        %v7529 = vmul.f32 %v7504, %v7528
        %v7530 = vmin.f32 %v7529, 1.0
        %v7531 = vmax.f32 %v7530, -1.0
        %v7532 = vmul.f32 %v7321, %v7321
        %v7533 = vmin.f32 16.0, %v7532
        %v7534 = vmul.f32 %v7533, 2.1237322e-06
        %v7535 = vadd.f32 %v7534, 0.00028619796
        %v7536 = vmul.f32 %v7533, %v7535
        %v7537 = vadd.f32 %v7536, 0.0036580483
        %v7538 = vmul.f32 %v7533, %v7537
        %v7539 = vadd.f32 %v7538, 0.05243302
        %v7540 = vmul.f32 %v7533, %v7539
        %v7541 = vadd.f32 %v7540, 0.18741608
        %v7542 = vmul.f32 %v7533, %v7541
        %v7543 = vadd.f32 %v7542, 1.1283791
        %v7544 = vmul.f32 %v7321, %v7543
        %v7545 = vmul.f32 %v7533, 3.8918573e-05
        %v7546 = vadd.f32 %v7545, 0.001143296
        %v7547 = vmul.f32 %v7533, %v7546
        %v7548 = vadd.f32 %v7547, 0.014752088
        %v7549 = vmul.f32 %v7533, %v7548
        %v7550 = vadd.f32 %v7549, 0.112945676
        %v7551 = vmul.f32 %v7533, %v7550
        %v7552 = vadd.f32 %v7551, 0.4994258
        %v7553 = vmul.f32 %v7533, %v7552
        %v7554 = vadd.f32 %v7553, 1.0
        %v7555 = vrcp.pop %v7554
        %v7556 = vmul.f32 %v7554, %v7555
        %v7557 = vsub.f32 1.0, %v7556
        %v7558 = vmul.f32 %v7555, %v7557
        %v7559 = vadd.f32 %v7555, %v7558
        %vm7560 = vweird.f32 %v7554
        %vm7561 = vweird.f32 %v7555
        %vm7562 = vmor %vm7560, %vm7561
        %v7563 = vsel %vm7562, %v7555, %v7559
        %v7564 = vand.u32 2147483647, %v7554
        %vm7565 = vcmp.eq.f32.partialorder %v7564, 8.507059e+37
        %v7566 = vand.u32 %v7554, 2147483648
        %v7567 = vor.u32 1.1754944e-38, %v7566
        %v7568 = vsel %vm7565, %v7567, %v7563
        %v7569 = vmul.f32 %v7544, %v7568
        %v7570 = vmin.f32 %v7569, 1.0
        %v7571 = vmax.f32 %v7570, -1.0
        %v7572 = vmul.f32 %v7322, %v7322
        %v7573 = vmin.f32 16.0, %v7572
        %v7574 = vmul.f32 %v7573, 2.1237322e-06
        %v7575 = vadd.f32 %v7574, 0.00028619796
        %v7576 = vmul.f32 %v7573, %v7575
        %v7577 = vadd.f32 %v7576, 0.0036580483
        %v7578 = vmul.f32 %v7573, %v7577
        %v7579 = vadd.f32 %v7578, 0.05243302
        %v7580 = vmul.f32 %v7573, %v7579
        %v7581 = vadd.f32 %v7580, 0.18741608
        %v7582 = vmul.f32 %v7573, %v7581
        %v7583 = vadd.f32 %v7582, 1.1283791
        %v7584 = vmul.f32 %v7322, %v7583
        %v7585 = vmul.f32 %v7573, 3.8918573e-05
        %v7586 = vadd.f32 %v7585, 0.001143296
        %v7587 = vmul.f32 %v7573, %v7586
        %v7588 = vadd.f32 %v7587, 0.014752088
        %v7589 = vmul.f32 %v7573, %v7588
        %v7590 = vadd.f32 %v7589, 0.112945676
        %v7591 = vmul.f32 %v7573, %v7590
        %v7592 = vadd.f32 %v7591, 0.4994258
        %v7593 = vmul.f32 %v7573, %v7592
        %v7594 = vadd.f32 %v7593, 1.0
        %v7595 = vrcp.pop %v7594
        %v7596 = vmul.f32 %v7594, %v7595
        %v7597 = vsub.f32 1.0, %v7596
        %v7598 = vmul.f32 %v7595, %v7597
        %v7599 = vadd.f32 %v7595, %v7598
        %vm7600 = vweird.f32 %v7594
        %vm7601 = vweird.f32 %v7595
        %vm7602 = vmor %vm7600, %vm7601
        %v7603 = vsel %vm7602, %v7595, %v7599
        %v7604 = vand.u32 2147483647, %v7594
        %vm7605 = vcmp.eq.f32.partialorder %v7604, 8.507059e+37
        %v7606 = vand.u32 %v7594, 2147483648
        %v7607 = vor.u32 1.1754944e-38, %v7606
        %v7608 = vsel %vm7605, %v7607, %v7603
        %v7609 = vmul.f32 %v7584, %v7608
        %v7610 = vmin.f32 %v7609, 1.0
        %v7611 = vmax.f32 %v7610, -1.0
        %v7612 = vmul.f32 %v7323, %v7323
        %v7613 = vmin.f32 16.0, %v7612
        %v7614 = vmul.f32 %v7613, 2.1237322e-06
        %v7615 = vadd.f32 %v7614, 0.00028619796
        %v7616 = vmul.f32 %v7613, %v7615
        %v7617 = vadd.f32 %v7616, 0.0036580483
        %v7618 = vmul.f32 %v7613, %v7617
        %v7619 = vadd.f32 %v7618, 0.05243302
        %v7620 = vmul.f32 %v7613, %v7619
        %v7621 = vadd.f32 %v7620, 0.18741608
        %v7622 = vmul.f32 %v7613, %v7621
        %v7623 = vadd.f32 %v7622, 1.1283791
        %v7624 = vmul.f32 %v7323, %v7623
        %v7625 = vmul.f32 %v7613, 3.8918573e-05
        %v7626 = vadd.f32 %v7625, 0.001143296
        %v7627 = vmul.f32 %v7613, %v7626
        %v7628 = vadd.f32 %v7627, 0.014752088
        %v7629 = vmul.f32 %v7613, %v7628
        %v7630 = vadd.f32 %v7629, 0.112945676
        %v7631 = vmul.f32 %v7613, %v7630
        %v7632 = vadd.f32 %v7631, 0.4994258
        %v7633 = vmul.f32 %v7613, %v7632
        %v7634 = vadd.f32 %v7633, 1.0
        %v7635 = vrcp.pop %v7634
        %v7636 = vmul.f32 %v7634, %v7635
        %v7637 = vsub.f32 1.0, %v7636
        %v7638 = vmul.f32 %v7635, %v7637
        %v7639 = vadd.f32 %v7635, %v7638
        %vm7640 = vweird.f32 %v7634
        %vm7641 = vweird.f32 %v7635
        %vm7642 = vmor %vm7640, %vm7641
        %v7643 = vsel %vm7642, %v7635, %v7639
        %v7644 = vand.u32 2147483647, %v7634
        %vm7645 = vcmp.eq.f32.partialorder %v7644, 8.507059e+37
        %v7646 = vand.u32 %v7634, 2147483648
        %v7647 = vor.u32 1.1754944e-38, %v7646
        %v7648 = vsel %vm7645, %v7647, %v7643
        %v7649 = vmul.f32 %v7624, %v7648
        %v7650 = vmin.f32 %v7649, 1.0
        %v7651 = vmax.f32 %v7650, -1.0
        %v7652 = vmul.f32 %v7324, %v7324
        %v7653 = vmin.f32 16.0, %v7652
        %v7654 = vmul.f32 %v7653, 2.1237322e-06
        %v7655 = vadd.f32 %v7654, 0.00028619796
        %v7656 = vmul.f32 %v7653, %v7655
        %v7657 = vadd.f32 %v7656, 0.0036580483
        %v7658 = vmul.f32 %v7653, %v7657
        %v7659 = vadd.f32 %v7658, 0.05243302
        %v7660 = vmul.f32 %v7653, %v7659
        %v7661 = vadd.f32 %v7660, 0.18741608
        %v7662 = vmul.f32 %v7653, %v7661
        %v7663 = vadd.f32 %v7662, 1.1283791
        %v7664 = vmul.f32 %v7324, %v7663
        %v7665 = vmul.f32 %v7653, 3.8918573e-05
        %v7666 = vadd.f32 %v7665, 0.001143296
        %v7667 = vmul.f32 %v7653, %v7666
        %v7668 = vadd.f32 %v7667, 0.014752088
        %v7669 = vmul.f32 %v7653, %v7668
        %v7670 = vadd.f32 %v7669, 0.112945676
        %v7671 = vmul.f32 %v7653, %v7670
        %v7672 = vadd.f32 %v7671, 0.4994258
        %v7673 = vmul.f32 %v7653, %v7672
        %v7674 = vadd.f32 %v7673, 1.0
        %v7675 = vrcp.pop %v7674
        %v7676 = vmul.f32 %v7674, %v7675
        %v7677 = vsub.f32 1.0, %v7676
        %v7678 = vmul.f32 %v7675, %v7677
        %v7679 = vadd.f32 %v7675, %v7678
        %vm7680 = vweird.f32 %v7674
        %vm7681 = vweird.f32 %v7675
        %vm7682 = vmor %vm7680, %vm7681
        %v7683 = vsel %vm7682, %v7675, %v7679
        %v7684 = vand.u32 2147483647, %v7674
        %vm7685 = vcmp.eq.f32.partialorder %v7684, 8.507059e+37
        %v7686 = vand.u32 %v7674, 2147483648
        %v7687 = vor.u32 1.1754944e-38, %v7686
        %v7688 = vsel %vm7685, %v7687, %v7683
        %v7689 = vmul.f32 %v7664, %v7688
        %v7690 = vmin.f32 %v7689, 1.0
        %v7691 = vmax.f32 %v7690, -1.0
        %v7692 = vmul.f32 %v7325, %v7325
        %v7693 = vmin.f32 16.0, %v7692
        %v7694 = vmul.f32 %v7693, 2.1237322e-06
        %v7695 = vadd.f32 %v7694, 0.00028619796
        %v7696 = vmul.f32 %v7693, %v7695
        %v7697 = vadd.f32 %v7696, 0.0036580483
        %v7698 = vmul.f32 %v7693, %v7697
        %v7699 = vadd.f32 %v7698, 0.05243302
        %v7700 = vmul.f32 %v7693, %v7699
        %v7701 = vadd.f32 %v7700, 0.18741608
        %v7702 = vmul.f32 %v7693, %v7701
        %v7703 = vadd.f32 %v7702, 1.1283791
        %v7704 = vmul.f32 %v7325, %v7703
        %v7705 = vmul.f32 %v7693, 3.8918573e-05
        %v7706 = vadd.f32 %v7705, 0.001143296
        %v7707 = vmul.f32 %v7693, %v7706
        %v7708 = vadd.f32 %v7707, 0.014752088
        %v7709 = vmul.f32 %v7693, %v7708
        %v7710 = vadd.f32 %v7709, 0.112945676
        %v7711 = vmul.f32 %v7693, %v7710
        %v7712 = vadd.f32 %v7711, 0.4994258
        %v7713 = vmul.f32 %v7693, %v7712
        %v7714 = vadd.f32 %v7713, 1.0
        %v7715 = vrcp.pop %v7714
        %v7716 = vmul.f32 %v7714, %v7715
        %v7717 = vsub.f32 1.0, %v7716
        %v7718 = vmul.f32 %v7715, %v7717
        %v7719 = vadd.f32 %v7715, %v7718
        %vm7720 = vweird.f32 %v7714
        %vm7721 = vweird.f32 %v7715
        %vm7722 = vmor %vm7720, %vm7721
        %v7723 = vsel %vm7722, %v7715, %v7719
        %v7724 = vand.u32 2147483647, %v7714
        %vm7725 = vcmp.eq.f32.partialorder %v7724, 8.507059e+37
        %v7726 = vand.u32 %v7714, 2147483648
        %v7727 = vor.u32 1.1754944e-38, %v7726
        %v7728 = vsel %vm7725, %v7727, %v7723
        %v7729 = vmul.f32 %v7704, %v7728
        %v7730 = vmin.f32 %v7729, 1.0
        %v7731 = vmax.f32 %v7730, -1.0
        %v7732 = vmul.f32 %v7326, %v7326
        %v7733 = vmin.f32 16.0, %v7732
        %v7734 = vmul.f32 %v7733, 2.1237322e-06
        %v7735 = vadd.f32 %v7734, 0.00028619796
        %v7736 = vmul.f32 %v7733, %v7735
        %v7737 = vadd.f32 %v7736, 0.0036580483
        %v7738 = vmul.f32 %v7733, %v7737
        %v7739 = vadd.f32 %v7738, 0.05243302
        %v7740 = vmul.f32 %v7733, %v7739
        %v7741 = vadd.f32 %v7740, 0.18741608
        %v7742 = vmul.f32 %v7733, %v7741
        %v7743 = vadd.f32 %v7742, 1.1283791
        %v7744 = vmul.f32 %v7326, %v7743
        %v7745 = vmul.f32 %v7733, 3.8918573e-05
        %v7746 = vadd.f32 %v7745, 0.001143296
        %v7747 = vmul.f32 %v7733, %v7746
        %v7748 = vadd.f32 %v7747, 0.014752088
        %v7749 = vmul.f32 %v7733, %v7748
        %v7750 = vadd.f32 %v7749, 0.112945676
        %v7751 = vmul.f32 %v7733, %v7750
        %v7752 = vadd.f32 %v7751, 0.4994258
        %v7753 = vmul.f32 %v7733, %v7752
        %v7754 = vadd.f32 %v7753, 1.0
        %v7755 = vrcp.pop %v7754
        %v7756 = vmul.f32 %v7754, %v7755
        %v7757 = vsub.f32 1.0, %v7756
        %v7758 = vmul.f32 %v7755, %v7757
        %v7759 = vadd.f32 %v7755, %v7758
        %vm7760 = vweird.f32 %v7754
        %vm7761 = vweird.f32 %v7755
        %vm7762 = vmor %vm7760, %vm7761
        %v7763 = vsel %vm7762, %v7755, %v7759
        %v7764 = vand.u32 2147483647, %v7754
        %vm7765 = vcmp.eq.f32.partialorder %v7764, 8.507059e+37
        %v7766 = vand.u32 %v7754, 2147483648
        %v7767 = vor.u32 1.1754944e-38, %v7766
        %v7768 = vsel %vm7765, %v7767, %v7763
        %v7769 = vmul.f32 %v7744, %v7768
        %v7770 = vmin.f32 %v7769, 1.0
        %v7771 = vmax.f32 %v7770, -1.0
        %v7772 = vmul.f32 %v7327, %v7327
        %v7773 = vmin.f32 16.0, %v7772
        %v7774 = vmul.f32 %v7773, 2.1237322e-06
        %v7775 = vadd.f32 %v7774, 0.00028619796
        %v7776 = vmul.f32 %v7773, %v7775
        %v7777 = vadd.f32 %v7776, 0.0036580483
        %v7778 = vmul.f32 %v7773, %v7777
        %v7779 = vadd.f32 %v7778, 0.05243302
        %v7780 = vmul.f32 %v7773, %v7779
        %v7781 = vadd.f32 %v7780, 0.18741608
        %v7782 = vmul.f32 %v7773, %v7781
        %v7783 = vadd.f32 %v7782, 1.1283791
        %v7784 = vmul.f32 %v7327, %v7783
        %v7785 = vmul.f32 %v7773, 3.8918573e-05
        %v7786 = vadd.f32 %v7785, 0.001143296
        %v7787 = vmul.f32 %v7773, %v7786
        %v7788 = vadd.f32 %v7787, 0.014752088
        %v7789 = vmul.f32 %v7773, %v7788
        %v7790 = vadd.f32 %v7789, 0.112945676
        %v7791 = vmul.f32 %v7773, %v7790
        %v7792 = vadd.f32 %v7791, 0.4994258
        %v7793 = vmul.f32 %v7773, %v7792
        %v7794 = vadd.f32 %v7793, 1.0
        %v7795 = vrcp.pop %v7794
        %v7796 = vmul.f32 %v7794, %v7795
        %v7797 = vsub.f32 1.0, %v7796
        %v7798 = vmul.f32 %v7795, %v7797
        %v7799 = vadd.f32 %v7795, %v7798
        %vm7800 = vweird.f32 %v7794
        %vm7801 = vweird.f32 %v7795
        %vm7802 = vmor %vm7800, %vm7801
        %v7803 = vsel %vm7802, %v7795, %v7799
        %v7804 = vand.u32 2147483647, %v7794
        %vm7805 = vcmp.eq.f32.partialorder %v7804, 8.507059e+37
        %v7806 = vand.u32 %v7794, 2147483648
        %v7807 = vor.u32 1.1754944e-38, %v7806
        %v7808 = vsel %vm7805, %v7807, %v7803
        %v7809 = vmul.f32 %v7784, %v7808
        %v7810 = vmin.f32 %v7809, 1.0
        %v7811 = vmax.f32 %v7810, -1.0
        %v7812 = vmul.f32 %v7328, %v7328
        %v7813 = vmin.f32 16.0, %v7812
        %v7814 = vmul.f32 %v7813, 2.1237322e-06
        %v7815 = vadd.f32 %v7814, 0.00028619796
        %v7816 = vmul.f32 %v7813, %v7815
        %v7817 = vadd.f32 %v7816, 0.0036580483
        %v7818 = vmul.f32 %v7813, %v7817
        %v7819 = vadd.f32 %v7818, 0.05243302
        %v7820 = vmul.f32 %v7813, %v7819
        %v7821 = vadd.f32 %v7820, 0.18741608
        %v7822 = vmul.f32 %v7813, %v7821
        %v7823 = vadd.f32 %v7822, 1.1283791
        %v7824 = vmul.f32 %v7328, %v7823
        %v7825 = vmul.f32 %v7813, 3.8918573e-05
        %v7826 = vadd.f32 %v7825, 0.001143296
        %v7827 = vmul.f32 %v7813, %v7826
        %v7828 = vadd.f32 %v7827, 0.014752088
        %v7829 = vmul.f32 %v7813, %v7828
        %v7830 = vadd.f32 %v7829, 0.112945676
        %v7831 = vmul.f32 %v7813, %v7830
        %v7832 = vadd.f32 %v7831, 0.4994258
        %v7833 = vmul.f32 %v7813, %v7832
        %v7834 = vadd.f32 %v7833, 1.0
        %v7835 = vrcp.pop %v7834
        %v7836 = vmul.f32 %v7834, %v7835
        %v7837 = vsub.f32 1.0, %v7836
        %v7838 = vmul.f32 %v7835, %v7837
        %v7839 = vadd.f32 %v7835, %v7838
        %vm7840 = vweird.f32 %v7834
        %vm7841 = vweird.f32 %v7835
        %vm7842 = vmor %vm7840, %vm7841
        %v7843 = vsel %vm7842, %v7835, %v7839
        %v7844 = vand.u32 2147483647, %v7834
        %vm7845 = vcmp.eq.f32.partialorder %v7844, 8.507059e+37
        %v7846 = vand.u32 %v7834, 2147483648
        %v7847 = vor.u32 1.1754944e-38, %v7846
        %v7848 = vsel %vm7845, %v7847, %v7843
        %v7849 = vmul.f32 %v7824, %v7848
        %v7850 = vmin.f32 %v7849, 1.0
        %v7851 = vmax.f32 %v7850, -1.0
        %v7852 = vmul.f32 %v7329, %v7329
        %v7853 = vmin.f32 16.0, %v7852
        %v7854 = vmul.f32 %v7853, 2.1237322e-06
        %v7855 = vadd.f32 %v7854, 0.00028619796
        %v7856 = vmul.f32 %v7853, %v7855
        %v7857 = vadd.f32 %v7856, 0.0036580483
        %v7858 = vmul.f32 %v7853, %v7857
        %v7859 = vadd.f32 %v7858, 0.05243302
        %v7860 = vmul.f32 %v7853, %v7859
        %v7861 = vadd.f32 %v7860, 0.18741608
        %v7862 = vmul.f32 %v7853, %v7861
        %v7863 = vadd.f32 %v7862, 1.1283791
        %v7864 = vmul.f32 %v7329, %v7863
        %v7865 = vmul.f32 %v7853, 3.8918573e-05
        %v7866 = vadd.f32 %v7865, 0.001143296
        %v7867 = vmul.f32 %v7853, %v7866
        %v7868 = vadd.f32 %v7867, 0.014752088
        %v7869 = vmul.f32 %v7853, %v7868
        %v7870 = vadd.f32 %v7869, 0.112945676
        %v7871 = vmul.f32 %v7853, %v7870
        %v7872 = vadd.f32 %v7871, 0.4994258
        %v7873 = vmul.f32 %v7853, %v7872
        %v7874 = vadd.f32 %v7873, 1.0
        %v7875 = vrcp.pop %v7874
        %v7876 = vmul.f32 %v7874, %v7875
        %v7877 = vsub.f32 1.0, %v7876
        %v7878 = vmul.f32 %v7875, %v7877
        %v7879 = vadd.f32 %v7875, %v7878
        %vm7880 = vweird.f32 %v7874
        %vm7881 = vweird.f32 %v7875
        %vm7882 = vmor %vm7880, %vm7881
        %v7883 = vsel %vm7882, %v7875, %v7879
        %v7884 = vand.u32 2147483647, %v7874
        %vm7885 = vcmp.eq.f32.partialorder %v7884, 8.507059e+37
        %v7886 = vand.u32 %v7874, 2147483648
        %v7887 = vor.u32 1.1754944e-38, %v7886
        %v7888 = vsel %vm7885, %v7887, %v7883
        %v7889 = vmul.f32 %v7864, %v7888
        %v7890 = vmin.f32 %v7889, 1.0
        %v7891 = vmax.f32 %v7890, -1.0
        %v7892 = vmul.f32 %v7330, %v7330
        %v7893 = vmin.f32 16.0, %v7892
        %v7894 = vmul.f32 %v7893, 2.1237322e-06
        %v7895 = vadd.f32 %v7894, 0.00028619796
        %v7896 = vmul.f32 %v7893, %v7895
        %v7897 = vadd.f32 %v7896, 0.0036580483
        %v7898 = vmul.f32 %v7893, %v7897
        %v7899 = vadd.f32 %v7898, 0.05243302
        %v7900 = vmul.f32 %v7893, %v7899
        %v7901 = vadd.f32 %v7900, 0.18741608
        %v7902 = vmul.f32 %v7893, %v7901
        %v7903 = vadd.f32 %v7902, 1.1283791
        %v7904 = vmul.f32 %v7330, %v7903
        %v7905 = vmul.f32 %v7893, 3.8918573e-05
        %v7906 = vadd.f32 %v7905, 0.001143296
        %v7907 = vmul.f32 %v7893, %v7906
        %v7908 = vadd.f32 %v7907, 0.014752088
        %v7909 = vmul.f32 %v7893, %v7908
        %v7910 = vadd.f32 %v7909, 0.112945676
        %v7911 = vmul.f32 %v7893, %v7910
        %v7912 = vadd.f32 %v7911, 0.4994258
        %v7913 = vmul.f32 %v7893, %v7912
        %v7914 = vadd.f32 %v7913, 1.0
        %v7915 = vrcp.pop %v7914
        %v7916 = vmul.f32 %v7914, %v7915
        %v7917 = vsub.f32 1.0, %v7916
        %v7918 = vmul.f32 %v7915, %v7917
        %v7919 = vadd.f32 %v7915, %v7918
        %vm7920 = vweird.f32 %v7914
        %vm7921 = vweird.f32 %v7915
        %vm7922 = vmor %vm7920, %vm7921
        %v7923 = vsel %vm7922, %v7915, %v7919
        %v7924 = vand.u32 2147483647, %v7914
        %vm7925 = vcmp.eq.f32.partialorder %v7924, 8.507059e+37
        %v7926 = vand.u32 %v7914, 2147483648
        %v7927 = vor.u32 1.1754944e-38, %v7926
        %v7928 = vsel %vm7925, %v7927, %v7923
        %v7929 = vmul.f32 %v7904, %v7928
        %v7930 = vmin.f32 %v7929, 1.0
        %v7931 = vmax.f32 %v7930, -1.0
        %v7932 = vmul.f32 %v7331, %v7331
        %v7933 = vmin.f32 16.0, %v7932
        %v7934 = vmul.f32 %v7933, 2.1237322e-06
        %v7935 = vadd.f32 %v7934, 0.00028619796
        %v7936 = vmul.f32 %v7933, %v7935
        %v7937 = vadd.f32 %v7936, 0.0036580483
        %v7938 = vmul.f32 %v7933, %v7937
        %v7939 = vadd.f32 %v7938, 0.05243302
        %v7940 = vmul.f32 %v7933, %v7939
        %v7941 = vadd.f32 %v7940, 0.18741608
        %v7942 = vmul.f32 %v7933, %v7941
        %v7943 = vadd.f32 %v7942, 1.1283791
        %v7944 = vmul.f32 %v7331, %v7943
        %v7945 = vmul.f32 %v7933, 3.8918573e-05
        %v7946 = vadd.f32 %v7945, 0.001143296
        %v7947 = vmul.f32 %v7933, %v7946
        %v7948 = vadd.f32 %v7947, 0.014752088
        %v7949 = vmul.f32 %v7933, %v7948
        %v7950 = vadd.f32 %v7949, 0.112945676
        %v7951 = vmul.f32 %v7933, %v7950
        %v7952 = vadd.f32 %v7951, 0.4994258
        %v7953 = vmul.f32 %v7933, %v7952
        %v7954 = vadd.f32 %v7953, 1.0
        %v7955 = vrcp.pop %v7954
        %v7956 = vmul.f32 %v7954, %v7955
        %v7957 = vsub.f32 1.0, %v7956
        %v7958 = vmul.f32 %v7955, %v7957
        %v7959 = vadd.f32 %v7955, %v7958
        %vm7960 = vweird.f32 %v7954
        %vm7961 = vweird.f32 %v7955
        %vm7962 = vmor %vm7960, %vm7961
        %v7963 = vsel %vm7962, %v7955, %v7959
        %v7964 = vand.u32 2147483647, %v7954
        %vm7965 = vcmp.eq.f32.partialorder %v7964, 8.507059e+37
        %v7966 = vand.u32 %v7954, 2147483648
        %v7967 = vor.u32 1.1754944e-38, %v7966
        %v7968 = vsel %vm7965, %v7967, %v7963
        %v7969 = vmul.f32 %v7944, %v7968
        %v7970 = vmin.f32 %v7969, 1.0
        %v7971 = vmax.f32 %v7970, -1.0
        %v7972 = vadd.f32 %v7371, 1.0
        %v7973 = vadd.f32 %v7411, 1.0
        %v7974 = vadd.f32 %v7451, 1.0
        %v7975 = vadd.f32 %v7491, 1.0
        %v7976 = vadd.f32 %v7531, 1.0
        %v7977 = vadd.f32 %v7571, 1.0
        %v7978 = vadd.f32 %v7611, 1.0
        %v7979 = vadd.f32 %v7651, 1.0
        %v7980 = vadd.f32 %v7691, 1.0
        %v7981 = vadd.f32 %v7731, 1.0
        %v7982 = vadd.f32 %v7771, 1.0
        %v7983 = vadd.f32 %v7811, 1.0
        %v7984 = vadd.f32 %v7851, 1.0
        %v7985 = vadd.f32 %v7891, 1.0
        %v7986 = vadd.f32 %v7931, 1.0
        %v7987 = vadd.f32 %v7971, 1.0
        %v7988 = vmul.f32 %v7300, %v7972
        %v7989 = vmul.f32 %v7301, %v7973
        %v7990 = vmul.f32 %v7302, %v7974
        %v7991 = vmul.f32 %v7303, %v7975
        %v7992 = vmul.f32 %v7304, %v7976
        %v7993 = vmul.f32 %v7305, %v7977
        %v7994 = vmul.f32 %v7306, %v7978
        %v7995 = vmul.f32 %v7307, %v7979
        %v7996 = vmul.f32 %v7308, %v7980
        %v7997 = vmul.f32 %v7309, %v7981
        %v7998 = vmul.f32 %v7310, %v7982
        %v7999 = vmul.f32 %v7311, %v7983
        %v8000 = vmul.f32 %v7312, %v7984
        %v8001 = vmul.f32 %v7313, %v7985
        %v8002 = vmul.f32 %v7314, %v7986
        %v8003 = vmul.f32 %v7315, %v7987
        %8004 = vst.msk [vmem:[%s524] sm:$0xff] %vm6899, %v7988
        %8005 = vst.msk [vmem:[%s524 + $0x8] sm:$0xff] %vm6899, %v7989
        %8006 = vst.msk [vmem:[%s524 + $0x10] sm:$0xff] %vm6899, %v7990
        %8007 = vst.msk [vmem:[%s524 + $0x18] sm:$0xff] %vm6899, %v7991
        %8008 = vst.msk [vmem:[%s524 + $0x20] sm:$0xff] %vm6899, %v7992
        %8009 = vst.msk [vmem:[%s524 + $0x28] sm:$0xff] %vm6899, %v7993
        %8010 = vst.msk [vmem:[%s524 + $0x30] sm:$0xff] %vm6899, %v7994
        %8011 = vst.msk [vmem:[%s524 + $0x38] sm:$0xff] %vm6899, %v7995
        %8012 = vst.msk [vmem:[%s524 + $0x40] sm:$0xff] %vm6899, %v7996
        %8013 = vst.msk [vmem:[%s524 + $0x48] sm:$0xff] %vm6899, %v7997
        %8014 = vst.msk [vmem:[%s524 + $0x50] sm:$0xff] %vm6899, %v7998
        %8015 = vst.msk [vmem:[%s524 + $0x58] sm:$0xff] %vm6899, %v7999
        %8016 = vst.msk [vmem:[%s524 + $0x60] sm:$0xff] %vm6899, %v8000
        %8017 = vst.msk [vmem:[%s524 + $0x68] sm:$0xff] %vm6899, %v8001
        %8018 = vst.msk [vmem:[%s524 + $0x70] sm:$0xff] %vm6899, %v8002
        %8019 = vst.msk [vmem:[%s524 + $0x78] sm:$0xff] %vm6899, %v8003
        %s8020 = sand.u32 %s256, 1
        %s8021 = scalar_lea.sflag [#allocation14], %s8020
        %s8022 = sand.u32 %s256, 1
        %s8023 = smul.addr %s8022, 64
        %s8024 = scalar_lea.vmem [#allocation15], %s8023
        %s8025 = sand.u32 %s33, 1
        %s8026 = scalar_lea.sflag [#allocation17], %s8025
        %s8027 = sand.u32 %s282, 1
        %s8028 = smul.addr %s8027, 32
        %s8029 = scalar_lea.vmem [#allocation16], %s8028
        %s8030 = sand.u32 %s33, 1
        %s8031 = scalar_lea.sflag [#allocation17], %s8030
        %s8032 = sand.u32 %s308, 1
        %s8033 = smul.addr %s8032, 32
        %s8034 = scalar_lea.vmem [#allocation18], %s8033
        %p8035 = scmp.lt.s32.totalorder %s33, 1
        %s8036 = scalar_select %p8035, %s33, 1
        %s8037 = smul.addr %s8036, 8
        %s8038 = smul.addr %s8037, 8
        %s8039 = scalar_lea.vmem %s13, %s8038
        %p8040 = scmp.lt.s32.totalorder %s33, 1
        %s8041 = scalar_select %p8040, %s33, 1
        %s8042 = smul.addr %s8041, 16
        %s8043 = smul.addr %s8042, 8
        %s8044 = scalar_lea.vmem %s14, %s8043
        // Predicated region
        $region65: #{tpu_custom_call.1} parent=59 // pred_check
          %p8045 = pneg %p266
        $region66: #{tpu_custom_call.1} parent=59 // pred_check_branch
          %8047 = sbr.rel (%p8045) target = $region68
        $region67: #{tpu_custom_call.1} parent=59 // pred_region
          %8049 = vsyncadd %s8021, 0
          %s8050 = smul.addr %s33, 8
          %s8051 = smul.addr %s8050, 8
          %s8052 = scalar_lea.hbm %s10, %s8051
          %s8054 = sshll.u32 %s8024, 4
          %s8055 = int_to_ptr.vmem [resolvable:$true] %s8054
          %s8056 = sshll.u32 %s8052, 4
          %s8057 = int_to_ptr.hbm [resolvable:$true] %s8056
          %8059 = dma.vmem_to_hbm [thread:$0]  %s8055, 1024, %s8057, %s8021
        $region68: #{tpu_custom_call.1} parent=59 // pred_fallthru
          _
        // Predicated region
        $region69: #{tpu_custom_call.1} parent=59 // pred_check
          %p8060 = pneg %p292
        $region70: #{tpu_custom_call.1} parent=59 // pred_check_branch
          %8062 = sbr.rel (%p8060) target = $region72
        $region71: #{tpu_custom_call.1} parent=59 // pred_region
          %8064 = vsyncadd %s8026, 0
          %s8065 = smul.addr %s33, 4
          %s8066 = smul.addr %s8065, 8
          %s8067 = scalar_lea.hbm %s11, %s8066
          %s8068 = sshll.u32 %s8029, 4
          %s8069 = int_to_ptr.vmem [resolvable:$true] %s8068
          %s8070 = sshll.u32 %s8067, 4
          %s8071 = int_to_ptr.hbm [resolvable:$true] %s8070
          %8076 = dma.vmem_to_hbm [thread:$0]  %s8069, 512, %s8071, %s8026, 256, 256, 16
        $region72: #{tpu_custom_call.1} parent=59 // pred_fallthru
          _
        // Predicated region
        $region73: #{tpu_custom_call.1} parent=59 // pred_check
          %p8077 = pneg %p318
        $region74: #{tpu_custom_call.1} parent=59 // pred_check_branch
          %8079 = sbr.rel (%p8077) target = $region76
        $region75: #{tpu_custom_call.1} parent=59 // pred_region
          %8081 = vsyncadd %s8031, 0
          %s8082 = smul.addr %s33, 4
          %s8083 = smul.addr %s8082, 8
          %s8084 = scalar_lea.hbm %s12, %s8083
          %s8085 = sshll.u32 %s8034, 4
          %s8086 = int_to_ptr.vmem [resolvable:$true] %s8085
          %s8087 = sshll.u32 %s8084, 4
          %s8088 = int_to_ptr.hbm [resolvable:$true] %s8087
          %8093 = dma.vmem_to_hbm [thread:$0]  %s8086, 512, %s8088, %s8031, 128, 128, 8
        $region76: #{tpu_custom_call.1} parent=59 // pred_fallthru
          _
        // Predicated region
        $region77: #{tpu_custom_call.1} parent=59 // pred_check
          %p8094 = pneg %p344
        $region78: #{tpu_custom_call.1} parent=59 // pred_check_branch
          %8096 = sbr.rel (%p8094) target = $region80
        $region79: #{tpu_custom_call.1} parent=59 // pred_region
          _
        $region80: #{tpu_custom_call.1} parent=59 // pred_fallthru
          _
        // Predicated region
        $region81: #{tpu_custom_call.1} parent=59 // pred_check
          %p8097 = pneg %p370
        $region82: #{tpu_custom_call.1} parent=59 // pred_check_branch
          %8099 = sbr.rel (%p8097) target = $region84
        $region83: #{tpu_custom_call.1} parent=59 // pred_region
          _
        $region84: #{tpu_custom_call.1} parent=59 // pred_fallthru
          _
      $region60: #{tpu_custom_call.1} parent=5 // pred_fallthru
        _
      %p8100 = scmp.le.s32.totalorder 2, %s28
      // Predicated region
      $region85: #{tpu_custom_call.1} parent=5 // pred_check
        %p8101 = pneg %p8100
      $region86: #{tpu_custom_call.1} parent=5 // pred_check_branch
        %8103 = sbr.rel (%p8101) target = $region88
      $region87: #{tpu_custom_call.1} parent=5 // pred_region
        %s8104 = ssub.s32 %s28, 2
        // Predicated region
        $region89: #{tpu_custom_call.1} parent=87 // pred_check
          %p8105 = pneg %p272
        $region90: #{tpu_custom_call.1} parent=87 // pred_check_branch
          %8107 = sbr.rel (%p8105) target = $region92
        $region91: #{tpu_custom_call.1} parent=87 // pred_region
          %s8108 = sand.u32 %s257, 1
          %s8109 = scalar_lea.sflag [#allocation14], %s8108
          %s8110 = sand.u32 %s257, 1
          %s8111 = smul.addr %s8110, 64
          %s8112 = scalar_lea.vmem [#allocation15], %s8111
          %8114 = dma.done %s8109, 1024
        $region92: #{tpu_custom_call.1} parent=87 // pred_fallthru
          _
        // Predicated region
        $region93: #{tpu_custom_call.1} parent=87 // pred_check
          %p8115 = pneg %p298
        $region94: #{tpu_custom_call.1} parent=87 // pred_check_branch
          %8117 = sbr.rel (%p8115) target = $region96
        $region95: #{tpu_custom_call.1} parent=87 // pred_region
          %s8118 = sand.u32 %s34, 1
          %s8119 = scalar_lea.sflag [#allocation17], %s8118
          %s8120 = sand.u32 %s283, 1
          %s8121 = smul.addr %s8120, 32
          %s8122 = scalar_lea.vmem [#allocation16], %s8121
          %8124 = dma.done %s8119, 512
        $region96: #{tpu_custom_call.1} parent=87 // pred_fallthru
          _
        // Predicated region
        $region97: #{tpu_custom_call.1} parent=87 // pred_check
          %p8125 = pneg %p324
        $region98: #{tpu_custom_call.1} parent=87 // pred_check_branch
          %8127 = sbr.rel (%p8125) target = $region100
        $region99: #{tpu_custom_call.1} parent=87 // pred_region
          %s8128 = sand.u32 %s34, 1
          %s8129 = scalar_lea.sflag [#allocation17], %s8128
          %s8130 = sand.u32 %s309, 1
          %s8131 = smul.addr %s8130, 32
          %s8132 = scalar_lea.vmem [#allocation18], %s8131
          %8134 = dma.done %s8129, 512
        $region100: #{tpu_custom_call.1} parent=87 // pred_fallthru
          _
        // Predicated region
        $region101: #{tpu_custom_call.1} parent=87 // pred_check
          %p8135 = pneg %p350
        $region102: #{tpu_custom_call.1} parent=87 // pred_check_branch
          %8137 = sbr.rel (%p8135) target = $region104
        $region103: #{tpu_custom_call.1} parent=87 // pred_region
          %p8138 = scmp.lt.s32.totalorder %s34, 1
          %s8139 = scalar_select %p8138, %s34, 1
          %s8140 = smul.addr %s8139, 8
          %s8141 = smul.addr %s8140, 8
          %s8142 = scalar_lea.vmem %s13, %s8141
        $region104: #{tpu_custom_call.1} parent=87 // pred_fallthru
          _
        // Predicated region
        $region105: #{tpu_custom_call.1} parent=87 // pred_check
          %p8143 = pneg %p376
        $region106: #{tpu_custom_call.1} parent=87 // pred_check_branch
          %8145 = sbr.rel (%p8143) target = $region108
        $region107: #{tpu_custom_call.1} parent=87 // pred_region
          %p8146 = scmp.lt.s32.totalorder %s34, 1
          %s8147 = scalar_select %p8146, %s34, 1
          %s8148 = smul.addr %s8147, 16
          %s8149 = smul.addr %s8148, 8
          %s8150 = scalar_lea.vmem %s14, %s8149
        $region108: #{tpu_custom_call.1} parent=87 // pred_fallthru
          _
      $region88: #{tpu_custom_call.1} parent=5 // pred_fallthru
        _
    $region6: #{tpu_custom_call.1} parent=1 // loop_footer
      %s32 = sadd.s32 1, %s28
    $region7: #{tpu_custom_call.1} parent=1 // loop_footer_branch
      %27 = sbr.rel target = $region3
    $region8: #{tpu_custom_call.1} parent=1 // loop_exit
      _
    %8151 = vsyncpa [#allocation13], 1
    %s8152 = scalar_lea.sflag [#allocation13], 1
    %8153 = vsyncpa %s8152, 1
    %8154 = vsyncpa [#allocation14], 1
    %s8155 = scalar_lea.sflag [#allocation14], 1
    %8156 = vsyncpa %s8155, 1
    %8157 = vsyncpa [#allocation17], 1
    %s8158 = scalar_lea.sflag [#allocation17], 1
    %8159 = vsyncpa %s8158, 1

</llo_original>
